<compile_context>
chip_gen: v6e
topology: v6e:2x2x1
jax: 0.10.0
libtpu: 0.0.40
codegen_flags: <defaults>
</compile_context>

<pallas_src>
import jax
import jax.numpy as jnp
from jax.experimental import pallas as pl
from jax.experimental.pallas import tpu as pltpu

_BN_EPS = 1e-5
_LANE = 128


def _pad_to(x, m=_LANE):
    return -(-x // m) * m


# ----------------------------------------------------------------------------
# Kernel: one grid step = one chunk of images stacked along the M (sublane) axis
# ----------------------------------------------------------------------------
def _make_fused_kernel(n_head, m_rows, wp, guard):
    # Tap offsets of a 3x3 'same' conv in the row-flattened padded layout.
    tap_offs = [(kh - 1) * wp + (kw - 1) for kh in range(3) for kw in range(3)]

    def silu(v):
        # SiLU(x) = x * sigmoid(x); exp + approx reciprocal both run on the EUP.
        return v * pl.reciprocal(1.0 + jnp.exp(-v), approx=True)

    def kernel(*args):
        x_ref = args[0]                      # (M, Kp) conv1 im2col patches
        cref = args[1:9]                     # w1,b1, w2,b2, w3,b3, w4,b4
        href = args[9:9 + 2 * n_head]        # head (w, b) pairs
        imask_ref = args[9 + 2 * n_head]     # (M, 1)  interior (non-border) rows
        gmask_ref = args[10 + 2 * n_head]    # (N, M)  GAP + decimate + split mask
        o_ref = args[11 + 2 * n_head]        # (N, n_classes)
        act_a, act_b = args[12 + 2 * n_head:]

        interior = imask_ref[...] > 0.0      # (M, 1) bool

        def finish(acc, b_ref):
            # bias + SiLU on interior rows; border rows forced to exact zero so
            # they act as the next conv's zero padding (and any garbage picked up
            # from the uninitialized guard region is discarded, never NaN'd).
            return jnp.where(interior, silu(acc + b_ref[...]), 0.0)

        # -- tail conv1 (3x3, s=2): single K=9*Cin matmul on host-built patches --
        y = jnp.dot(x_ref[...], cref[0][...], preferred_element_type=jnp.float32)
        act_a[pl.ds(guard, m_rows), :] = finish(y, cref[1])

        # -- 3x3 stride-1 conv on the padded flat layout: 9 shifted matmuls ------
        def conv3x3(src_ref, w_ref):
            acc = jnp.dot(src_ref[pl.ds(guard + tap_offs[0], m_rows), :],
                          w_ref[0], preferred_element_type=jnp.float32)
            for t in range(1, 9):
                acc = acc + jnp.dot(src_ref[pl.ds(guard + tap_offs[t], m_rows), :],
                                    w_ref[t], preferred_element_type=jnp.float32)
            return acc

        # tail conv2, conv3 (s=1); ping-pong A -> B -> A, one aligned store each.
        act_b[pl.ds(guard, m_rows), :] = finish(conv3x3(act_a, cref[2]), cref[3])
        act_a[pl.ds(guard, m_rows), :] = finish(conv3x3(act_b, cref[4]), cref[5])

        # backbone stem (3x3, s=2): computed densely at s=1; the stride-2
        # decimation is folded into the GAP mask below (cheaper than strided reads).
        y4 = finish(conv3x3(act_a, cref[6]), cref[7])

        # -- GAP o stride-2 decimation o per-image split: ONE matmul -------------
        act = jnp.dot(gmask_ref[...], y4, preferred_element_type=jnp.float32)

        # -- MLP head: [Linear + SiLU (+ Dropout: identity in eval)]*, Linear ----
        for l in range(n_head):
            w_ref, b_ref = href[2 * l], href[2 * l + 1]
            act = jnp.dot(act, w_ref[...],
                          preferred_element_type=jnp.float32) + b_ref[...]
            if l < n_head - 1:
                act = silu(act)
        o_ref[...] = act.astype(o_ref.dtype)

    return kernel


# ----------------------------------------------------------------------------
# Parameters: PyTorch-style init + one-time fold / pad / transpose
# ----------------------------------------------------------------------------
def init_params(key, in_chans=4, num_features=128, dims_head=(None, 32, 10)):
    keys = iter(jax.random.split(key, 32))

    def conv(cin, cout):
        return dict(
            conv_w=jax.random.normal(next(keys), (cout, cin, 3, 3), jnp.float32)
            * (1.0 / jnp.sqrt(9.0 * cin)),
            conv_b=jax.random.normal(next(keys), (cout,), jnp.float32) * 0.01,
            bn_gamma=jnp.ones((cout,), jnp.float32),
            bn_beta=jnp.zeros((cout,), jnp.float32),
            bn_mean=jnp.zeros((cout,), jnp.float32),
            bn_var=jnp.ones((cout,), jnp.float32),
        )

    def linear(din, dout):
        lim = 1.0 / float(din) ** 0.5
        return dict(
            w=jax.random.uniform(next(keys), (dout, din), jnp.float32, -lim, lim),
            b=jax.random.uniform(next(keys), (dout,), jnp.float32, -lim, lim),
        )

    dims = list(dims_head)
    if dims[0] is None:                     # cfg.NUM_CLASSES[0] is None -> num_features
        dims[0] = num_features
    return dict(
        tail=[conv(in_chans, 32), conv(32, 64), conv(64, 64)],
        backbone=conv(64, num_features),
        head=[linear(dims[i], dims[i + 1]) for i in range(len(dims) - 1)],
    )


def prepare_params(raw):
    """One-time constant transform (eval mode): fold BN into conv weights/bias,
    reshape to matmul layouts, zero-pad every channel dim to 128 lanes."""
    def fold(p):
        w = p["conv_w"]                                  # (Cout, Cin, 3, 3)
        cout, cin = w.shape[0], w.shape[1]
        scale = p["bn_gamma"] / jnp.sqrt(p["bn_var"] + _BN_EPS)
        wt = jnp.transpose(w, (2, 3, 1, 0)) * scale      # (3, 3, Cin, Cout)
        bias = (p["conv_b"] - p["bn_mean"]) * scale + p["bn_beta"]
        return wt, bias, cin, cout

    # conv1: (3,3,Cin,Cout) -> (9*Cin, Cout), padded to (Kp, Cp).
    wt, b, cin, cout = fold(raw["tail"][0])
    kp, cp1 = _pad_to(9 * cin), _pad_to(cout)
    w1 = jnp.zeros((kp, cp1), jnp.float32).at[:9 * cin, :cout].set(
        wt.reshape(9 * cin, cout))
    b1 = jnp.zeros((1, cp1), jnp.float32).at[0, :cout].set(b)
    conv_w, conv_b = [w1], [b1]

    # conv2, conv3, backbone stem: tap-major (9, Cin, Cout), lane-padded.
    for p in raw["tail"][1:] + [raw["backbone"]]:
        wt, b, cin, cout = fold(p)
        cpi, cpo = _pad_to(cin), _pad_to(cout)
        wm = jnp.zeros((9, cpi, cpo), jnp.float32).at[:, :cin, :cout].set(
            wt.reshape(9, cin, cout))
        bm = jnp.zeros((1, cpo), jnp.float32).at[0, :cout].set(b)
        conv_w.append(wm)
        conv_b.append(bm)

    # Head linears: pre-transposed; inputs always lane-padded, outputs padded for
    # all but the last layer (final logits keep their true width).
    head_w, head_b = [], []
    n_lin = len(raw["head"])
    for i, p in enumerate(raw["head"]):
        w, b = p["w"], p["b"]                            # (dout, din), (dout,)
        dout, din = w.shape
        dpi = _pad_to(din)
        dpo = dout if i == n_lin - 1 else _pad_to(dout)
        wm = jnp.zeros((dpi, dpo), jnp.float32).at[:din, :dout].set(jnp.transpose(w))
        bm = jnp.zeros((1, dpo), jnp.float32).at[0, :dout].set(b)
        head_w.append(wm)
        head_b.append(bm)

    return dict(conv_w=conv_w, conv_b=conv_b, head_w=head_w, head_b=head_b)


# ----------------------------------------------------------------------------
# Forward (cfg.SELF_TAIL=True, cfg.SELF_HEAD=True, inference mode)
# ----------------------------------------------------------------------------
def basic_image_model_forward(x_nchw, params, images_per_step=None):
    conv_w, conv_b = params["conv_w"], params["conv_b"]
    head_w, head_b = params["head_w"], params["head_b"]
    n_head = len(head_w)
    n_classes = head_w[-1].shape[1]
    kp = conv_w[0].shape[0]                 # lane-padded K of conv1 (9*Cin -> 128)
    cp = conv_w[0].shape[1]                 # lane-padded channel width of the tail

    B, cin, H, W = x_nchw.shape
    h1, w1 = (H - 1) // 2 + 1, (W - 1) // 2 + 1      # after tail conv1 (s=2, p=1)
    h2, w2 = (h1 - 1) // 2 + 1, (w1 - 1) // 2 + 1    # after backbone stem (s=2, p=1)
    hp, wp = h1 + 2, w1 + 2
    rpi = hp * wp                                     # padded rows per image

    # Images per grid step.  Bigger chunks amortize the ~0.35 us/step overhead;
    # on v7x prefer a value giving >= 2 grid steps so both TensorCores get work.
    n = images_per_step if images_per_step is not None else min(8, B)
    s = -(-B // n)                                    # grid steps
    b_pad = s * n
    m = n * rpi                                       # rows per chunk
    guard = _pad_to(wp + 1, 8)                        # shifted reads stay in-bounds

    # ---- host-side im2col for conv1 (layout plumbing; handles stride 2) --------
    xt = jnp.transpose(x_nchw, (0, 2, 3, 1)).astype(jnp.float32)   # NHWC
    xpd = jnp.pad(xt, ((0, 0), (1, 1), (1, 1), (0, 0)))
    taps = [xpd[:, kh:kh + 2 * h1:2, kw:kw + 2 * w1:2, :]
            for kh in range(3) for kw in range(3)]
    pat = jnp.stack(taps, axis=3).reshape(B, h1, w1, 9 * cin)
    pat = jnp.pad(pat, ((0, b_pad - B), (1, 1), (1, 1), (0, kp - 9 * cin)))
    pat = pat.reshape(b_pad, rpi, kp).reshape(s, m, kp)

    # ---- grid-constant masks -----------------------------------------------------
    ip = jnp.arange(hp)[:, None]
    jp = jnp.arange(wp)[None, :]
    interior = ((ip >= 1) & (ip <= h1) & (jp >= 1) & (jp <= w1)).astype(jnp.float32)
    imask = jnp.tile(interior.reshape(rpi), (n,)).reshape(m, 1)

    sel = jnp.zeros((hp, wp), jnp.float32)
    sel = sel.at[1:1 + 2 * h2:2, 1:1 + 2 * w2:2].set(1.0 / float(h2 * w2))
    gmask = jnp.kron(jnp.eye(n, dtype=jnp.float32), sel.reshape(1, rpi))   # (n, m)

    # ---- specs / operands --------------------------------------------------------
    in_specs = [pl.BlockSpec((None, m, kp), lambda i: (i, 0, 0))]
    operands = [pat]
    in_specs += [pl.BlockSpec(conv_w[0].shape, lambda i: (0, 0)),
                 pl.BlockSpec(conv_b[0].shape, lambda i: (0, 0))]
    operands += [conv_w[0], conv_b[0]]
    for l in range(1, 4):
        in_specs += [pl.BlockSpec(conv_w[l].shape, lambda i: (0, 0, 0)),
                     pl.BlockSpec(conv_b[l].shape, lambda i: (0, 0))]
        operands += [conv_w[l], conv_b[l]]
    for wt, bt in zip(head_w, head_b):
        in_specs += [pl.BlockSpec(wt.shape, lambda i: (0, 0)),
                     pl.BlockSpec(bt.shape, lambda i: (0, 0))]
        operands += [wt, bt]
    in_specs += [pl.BlockSpec((m, 1), lambda i: (0, 0)),
                 pl.BlockSpec((n, m), lambda i: (0, 0))]
    operands += [imask, gmask]

    kernel = _make_fused_kernel(n_head, m, wp, guard)

    # TODO(synk): create_model(cfg.NAME) instantiates an arbitrary timm backbone;
    # substituted here by a minimal representative stem (Conv s=2 + BN + SiLU + GAP).
    out = pl.pallas_call(
        kernel,
        out_shape=jax.ShapeDtypeStruct((s, n, n_classes), jnp.float32),
        grid=(s,),
        in_specs=in_specs,
        out_specs=pl.BlockSpec((None, n, n_classes), lambda i: (i, 0, 0)),
        scratch_shapes=[pltpu.VMEM((m + 2 * guard, cp), jnp.float32),
                        pltpu.VMEM((m + 2 * guard, cp), jnp.float32)],
        compiler_params=pltpu.CompilerParams(
            dimension_semantics=("parallel",)),
    )(*operands)
    return out.reshape(b_pad, n_classes)[:B]


if __name__ == "__main__":
    key = jax.random.PRNGKey(0)
    pkey, xkey = jax.random.split(key)
    raw = init_params(pkey, in_chans=4, num_features=128, dims_head=(None, 32, 10))
    params = prepare_params(raw)                         # one-time weight fold/pad
    x = jax.random.normal(xkey, (2, 4, 16, 16), jnp.float32)   # NCHW input
    out = jax.jit(basic_image_model_forward)(x, params)
    out = jax.block_until_ready(out)
    assert out.shape == (2, 10), out.shape
    assert bool(jnp.all(jnp.isfinite(out)))
    print("KERNEL_OK")
</pallas_src>

<mosaic_0001>
module attributes {stable_mosaic.version = 11 : i64} {
  func.func @kernel(%arg0: i32, %arg1: memref<1x200x128xf32, #tpu.memory_space<vmem>>, %arg2: memref<128x128xf32, #tpu.memory_space<vmem>>, %arg3: memref<1x128xf32, #tpu.memory_space<vmem>>, %arg4: memref<9x128x128xf32, #tpu.memory_space<vmem>>, %arg5: memref<1x128xf32, #tpu.memory_space<vmem>>, %arg6: memref<9x128x128xf32, #tpu.memory_space<vmem>>, %arg7: memref<1x128xf32, #tpu.memory_space<vmem>>, %arg8: memref<9x128x128xf32, #tpu.memory_space<vmem>>, %arg9: memref<1x128xf32, #tpu.memory_space<vmem>>, %arg10: memref<128x128xf32, #tpu.memory_space<vmem>>, %arg11: memref<1x128xf32, #tpu.memory_space<vmem>>, %arg12: memref<128x10xf32, #tpu.memory_space<vmem>>, %arg13: memref<1x10xf32, #tpu.memory_space<vmem>>, %arg14: memref<200x1xf32, #tpu.memory_space<vmem>>, %arg15: memref<2x200xf32, #tpu.memory_space<vmem>>, %arg16: memref<1x2x10xf32, #tpu.memory_space<vmem>>, %arg17: memref<232x128xf32, #tpu.memory_space<vmem>>, %arg18: memref<232x128xf32, #tpu.memory_space<vmem>>) attributes {dimension_semantics = [#tpu.dimension_semantics<parallel>], iteration_bounds = array<i64: 1>, scalar_prefetch = 0 : i64, scratch_operands = 2 : i64, tpu.core_type = #tpu.core_type<tc>, window_params = [{transform_indices = @transform_0, window_bounds = array<i64: 1, 200, 128>}, {pipeline_mode = #tpu.pipeline_mode<synchronous>, transform_indices = @transform_1, window_bounds = array<i64: 128, 128>}, {pipeline_mode = #tpu.pipeline_mode<synchronous>, transform_indices = @transform_2, window_bounds = array<i64: 1, 128>}, {pipeline_mode = #tpu.pipeline_mode<synchronous>, transform_indices = @transform_3, window_bounds = array<i64: 9, 128, 128>}, {pipeline_mode = #tpu.pipeline_mode<synchronous>, transform_indices = @transform_4, window_bounds = array<i64: 1, 128>}, {pipeline_mode = #tpu.pipeline_mode<synchronous>, transform_indices = @transform_5, window_bounds = array<i64: 9, 128, 128>}, {pipeline_mode = #tpu.pipeline_mode<synchronous>, transform_indices = @transform_6, window_bounds = array<i64: 1, 128>}, {pipeline_mode = #tpu.pipeline_mode<synchronous>, transform_indices = @transform_7, window_bounds = array<i64: 9, 128, 128>}, {pipeline_mode = #tpu.pipeline_mode<synchronous>, transform_indices = @transform_8, window_bounds = array<i64: 1, 128>}, {pipeline_mode = #tpu.pipeline_mode<synchronous>, transform_indices = @transform_9, window_bounds = array<i64: 128, 128>}, {pipeline_mode = #tpu.pipeline_mode<synchronous>, transform_indices = @transform_10, window_bounds = array<i64: 1, 128>}, {pipeline_mode = #tpu.pipeline_mode<synchronous>, transform_indices = @transform_11, window_bounds = array<i64: 128, 10>}, {pipeline_mode = #tpu.pipeline_mode<synchronous>, transform_indices = @transform_12, window_bounds = array<i64: 1, 10>}, {pipeline_mode = #tpu.pipeline_mode<synchronous>, transform_indices = @transform_13, window_bounds = array<i64: 200, 1>}, {pipeline_mode = #tpu.pipeline_mode<synchronous>, transform_indices = @transform_14, window_bounds = array<i64: 2, 200>}, {transform_indices = @transform_15, window_bounds = array<i64: 1, 2, 10>}]} {
    %c0 = arith.constant 0 : index
    %c0_0 = arith.constant 0 : index
    %0 = vector.load %arg14[%c0, %c0_0] : memref<200x1xf32, #tpu.memory_space<vmem>>, vector<200x1xf32>
    %cst = arith.constant 0.000000e+00 : f32
    %1 = vector.broadcast %cst : f32 to vector<200x1xf32>
    %2 = arith.cmpf ogt, %0, %1 : vector<200x1xf32>
    %c0_1 = arith.constant 0 : index
    %c0_2 = arith.constant 0 : index
    %c0_3 = arith.constant 0 : index
    %3 = vector.load %arg1[%c0_1, %c0_2, %c0_3] : memref<1x200x128xf32, #tpu.memory_space<vmem>>, vector<1x200x128xf32>
    %4 = vector.shape_cast %3 : vector<1x200x128xf32> to vector<200x128xf32>
    %c0_4 = arith.constant 0 : index
    %c0_5 = arith.constant 0 : index
    %5 = vector.load %arg2[%c0_4, %c0_5] : memref<128x128xf32, #tpu.memory_space<vmem>>, vector<128x128xf32>
    %cst_6 = arith.constant dense<0.000000e+00> : vector<200x128xf32>
    %6 = tpu.matmul %4, %5, %cst_6 {dimension_numbers = #tpu.dot_dimension_numbers<[1], [0], [0], [1], [0, 0, 1, 1], [], []>} : vector<200x128xf32>, vector<128x128xf32>, vector<200x128xf32> -> vector<200x128xf32>
    %c0_7 = arith.constant 0 : index
    %c0_8 = arith.constant 0 : index
    %7 = vector.load %arg3[%c0_7, %c0_8] : memref<1x128xf32, #tpu.memory_space<vmem>>, vector<1x128xf32>
    %8 = vector.broadcast %7 : vector<1x128xf32> to vector<200x128xf32>
    %9 = arith.addf %6, %8 : vector<200x128xf32>
    %cst_9 = arith.constant 0.000000e+00 : f32
    %10 = vector.broadcast %cst_9 : f32 to vector<200x128xf32>
    %11 = arith.subf %10, %9 : vector<200x128xf32>
    %12 = math.exp %11 : vector<200x128xf32>
    %cst_10 = arith.constant 1.000000e+00 : f32
    %13 = vector.broadcast %cst_10 : f32 to vector<200x128xf32>
    %14 = arith.addf %13, %12 : vector<200x128xf32>
    %15 = tpu.reciprocal %14 {approx = true} : vector<200x128xf32> -> vector<200x128xf32>
    %16 = arith.mulf %9, %15 : vector<200x128xf32>
    %cst_11 = arith.constant 0.000000e+00 : f32
    %17 = vector.shape_cast %2 : vector<200x1xi1> to vector<200x1xi1>
    %18 = vector.broadcast %17 : vector<200x1xi1> to vector<200x128xi1>
    %19 = vector.broadcast %cst_11 : f32 to vector<200x128xf32>
    %20 = arith.select %18, %16, %19 : vector<200x128xi1>, vector<200x128xf32>
    %c16 = arith.constant 16 : index
    %c0_12 = arith.constant 0 : index
    %21 = vector.load %arg17[%c16, %c0_12] : memref<232x128xf32, #tpu.memory_space<vmem>>, vector<200x128xf32>
    tpu.vector_store %arg17[%c16, %c0_12], %20 {strides = array<i32>} : memref<232x128xf32, #tpu.memory_space<vmem>>, vector<200x128xf32>,
    %c5 = arith.constant 5 : index
    %c0_13 = arith.constant 0 : index
    %22 = vector.load %arg17[%c5, %c0_13] : memref<232x128xf32, #tpu.memory_space<vmem>>, vector<200x128xf32>
    %c0_14 = arith.constant 0 : index
    %c0_15 = arith.constant 0 : index
    %c0_16 = arith.constant 0 : index
    %23 = vector.load %arg4[%c0_14, %c0_15, %c0_16] : memref<9x128x128xf32, #tpu.memory_space<vmem>>, vector<1x128x128xf32>
    %24 = vector.shape_cast %23 : vector<1x128x128xf32> to vector<128x128xf32>
    %cst_17 = arith.constant dense<0.000000e+00> : vector<200x128xf32>
    %25 = tpu.matmul %22, %24, %cst_17 {dimension_numbers = #tpu.dot_dimension_numbers<[1], [0], [0], [1], [0, 0, 1, 1], [], []>} : vector<200x128xf32>, vector<128x128xf32>, vector<200x128xf32> -> vector<200x128xf32>
    %c6 = arith.constant 6 : index
    %c0_18 = arith.constant 0 : index
    %26 = vector.load %arg17[%c6, %c0_18] : memref<232x128xf32, #tpu.memory_space<vmem>>, vector<200x128xf32>
    %c1 = arith.constant 1 : index
    %c0_19 = arith.constant 0 : index
    %c0_20 = arith.constant 0 : index
    %27 = vector.load %arg4[%c1, %c0_19, %c0_20] : memref<9x128x128xf32, #tpu.memory_space<vmem>>, vector<1x128x128xf32>
    %28 = vector.shape_cast %27 : vector<1x128x128xf32> to vector<128x128xf32>
    %cst_21 = arith.constant dense<0.000000e+00> : vector<200x128xf32>
    %29 = tpu.matmul %26, %28, %cst_21 {dimension_numbers = #tpu.dot_dimension_numbers<[1], [0], [0], [1], [0, 0, 1, 1], [], []>} : vector<200x128xf32>, vector<128x128xf32>, vector<200x128xf32> -> vector<200x128xf32>
    %30 = arith.addf %25, %29 : vector<200x128xf32>
    %c7 = arith.constant 7 : index
    %c0_22 = arith.constant 0 : index
    %31 = vector.load %arg17[%c7, %c0_22] : memref<232x128xf32, #tpu.memory_space<vmem>>, vector<200x128xf32>
    %c2 = arith.constant 2 : index
    %c0_23 = arith.constant 0 : index
    %c0_24 = arith.constant 0 : index
    %32 = vector.load %arg4[%c2, %c0_23, %c0_24] : memref<9x128x128xf32, #tpu.memory_space<vmem>>, vector<1x128x128xf32>
    %33 = vector.shape_cast %32 : vector<1x128x128xf32> to vector<128x128xf32>
    %cst_25 = arith.constant dense<0.000000e+00> : vector<200x128xf32>
    %34 = tpu.matmul %31, %33, %cst_25 {dimension_numbers = #tpu.dot_dimension_numbers<[1], [0], [0], [1], [0, 0, 1, 1], [], []>} : vector<200x128xf32>, vector<128x128xf32>, vector<200x128xf32> -> vector<200x128xf32>
    %35 = arith.addf %30, %34 : vector<200x128xf32>
    %c15 = arith.constant 15 : index
    %c0_26 = arith.constant 0 : index
    %36 = vector.load %arg17[%c15, %c0_26] : memref<232x128xf32, #tpu.memory_space<vmem>>, vector<200x128xf32>
    %c3 = arith.constant 3 : index
    %c0_27 = arith.constant 0 : index
    %c0_28 = arith.constant 0 : index
    %37 = vector.load %arg4[%c3, %c0_27, %c0_28] : memref<9x128x128xf32, #tpu.memory_space<vmem>>, vector<1x128x128xf32>
    %38 = vector.shape_cast %37 : vector<1x128x128xf32> to vector<128x128xf32>
    %cst_29 = arith.constant dense<0.000000e+00> : vector<200x128xf32>
    %39 = tpu.matmul %36, %38, %cst_29 {dimension_numbers = #tpu.dot_dimension_numbers<[1], [0], [0], [1], [0, 0, 1, 1], [], []>} : vector<200x128xf32>, vector<128x128xf32>, vector<200x128xf32> -> vector<200x128xf32>
    %40 = arith.addf %35, %39 : vector<200x128xf32>
    %c16_30 = arith.constant 16 : index
    %c0_31 = arith.constant 0 : index
    %41 = vector.load %arg17[%c16_30, %c0_31] : memref<232x128xf32, #tpu.memory_space<vmem>>, vector<200x128xf32>
    %c4 = arith.constant 4 : index
    %c0_32 = arith.constant 0 : index
    %c0_33 = arith.constant 0 : index
    %42 = vector.load %arg4[%c4, %c0_32, %c0_33] : memref<9x128x128xf32, #tpu.memory_space<vmem>>, vector<1x128x128xf32>
    %43 = vector.shape_cast %42 : vector<1x128x128xf32> to vector<128x128xf32>
    %cst_34 = arith.constant dense<0.000000e+00> : vector<200x128xf32>
    %44 = tpu.matmul %41, %43, %cst_34 {dimension_numbers = #tpu.dot_dimension_numbers<[1], [0], [0], [1], [0, 0, 1, 1], [], []>} : vector<200x128xf32>, vector<128x128xf32>, vector<200x128xf32> -> vector<200x128xf32>
    %45 = arith.addf %40, %44 : vector<200x128xf32>
    %c17 = arith.constant 17 : index
    %c0_35 = arith.constant 0 : index
    %46 = vector.load %arg17[%c17, %c0_35] : memref<232x128xf32, #tpu.memory_space<vmem>>, vector<200x128xf32>
    %c5_36 = arith.constant 5 : index
    %c0_37 = arith.constant 0 : index
    %c0_38 = arith.constant 0 : index
    %47 = vector.load %arg4[%c5_36, %c0_37, %c0_38] : memref<9x128x128xf32, #tpu.memory_space<vmem>>, vector<1x128x128xf32>
    %48 = vector.shape_cast %47 : vector<1x128x128xf32> to vector<128x128xf32>
    %cst_39 = arith.constant dense<0.000000e+00> : vector<200x128xf32>
    %49 = tpu.matmul %46, %48, %cst_39 {dimension_numbers = #tpu.dot_dimension_numbers<[1], [0], [0], [1], [0, 0, 1, 1], [], []>} : vector<200x128xf32>, vector<128x128xf32>, vector<200x128xf32> -> vector<200x128xf32>
    %50 = arith.addf %45, %49 : vector<200x128xf32>
    %c25 = arith.constant 25 : index
    %c0_40 = arith.constant 0 : index
    %51 = vector.load %arg17[%c25, %c0_40] : memref<232x128xf32, #tpu.memory_space<vmem>>, vector<200x128xf32>
    %c6_41 = arith.constant 6 : index
    %c0_42 = arith.constant 0 : index
    %c0_43 = arith.constant 0 : index
    %52 = vector.load %arg4[%c6_41, %c0_42, %c0_43] : memref<9x128x128xf32, #tpu.memory_space<vmem>>, vector<1x128x128xf32>
    %53 = vector.shape_cast %52 : vector<1x128x128xf32> to vector<128x128xf32>
    %cst_44 = arith.constant dense<0.000000e+00> : vector<200x128xf32>
    %54 = tpu.matmul %51, %53, %cst_44 {dimension_numbers = #tpu.dot_dimension_numbers<[1], [0], [0], [1], [0, 0, 1, 1], [], []>} : vector<200x128xf32>, vector<128x128xf32>, vector<200x128xf32> -> vector<200x128xf32>
    %55 = arith.addf %50, %54 : vector<200x128xf32>
    %c26 = arith.constant 26 : index
    %c0_45 = arith.constant 0 : index
    %56 = vector.load %arg17[%c26, %c0_45] : memref<232x128xf32, #tpu.memory_space<vmem>>, vector<200x128xf32>
    %c7_46 = arith.constant 7 : index
    %c0_47 = arith.constant 0 : index
    %c0_48 = arith.constant 0 : index
    %57 = vector.load %arg4[%c7_46, %c0_47, %c0_48] : memref<9x128x128xf32, #tpu.memory_space<vmem>>, vector<1x128x128xf32>
    %58 = vector.shape_cast %57 : vector<1x128x128xf32> to vector<128x128xf32>
    %cst_49 = arith.constant dense<0.000000e+00> : vector<200x128xf32>
    %59 = tpu.matmul %56, %58, %cst_49 {dimension_numbers = #tpu.dot_dimension_numbers<[1], [0], [0], [1], [0, 0, 1, 1], [], []>} : vector<200x128xf32>, vector<128x128xf32>, vector<200x128xf32> -> vector<200x128xf32>
    %60 = arith.addf %55, %59 : vector<200x128xf32>
    %c27 = arith.constant 27 : index
    %c0_50 = arith.constant 0 : index
    %61 = vector.load %arg17[%c27, %c0_50] : memref<232x128xf32, #tpu.memory_space<vmem>>, vector<200x128xf32>
    %c8 = arith.constant 8 : index
    %c0_51 = arith.constant 0 : index
    %c0_52 = arith.constant 0 : index
    %62 = vector.load %arg4[%c8, %c0_51, %c0_52] : memref<9x128x128xf32, #tpu.memory_space<vmem>>, vector<1x128x128xf32>
    %63 = vector.shape_cast %62 : vector<1x128x128xf32> to vector<128x128xf32>
    %cst_53 = arith.constant dense<0.000000e+00> : vector<200x128xf32>
    %64 = tpu.matmul %61, %63, %cst_53 {dimension_numbers = #tpu.dot_dimension_numbers<[1], [0], [0], [1], [0, 0, 1, 1], [], []>} : vector<200x128xf32>, vector<128x128xf32>, vector<200x128xf32> -> vector<200x128xf32>
    %65 = arith.addf %60, %64 : vector<200x128xf32>
    %c0_54 = arith.constant 0 : index
    %c0_55 = arith.constant 0 : index
    %66 = vector.load %arg5[%c0_54, %c0_55] : memref<1x128xf32, #tpu.memory_space<vmem>>, vector<1x128xf32>
    %67 = vector.broadcast %66 : vector<1x128xf32> to vector<200x128xf32>
    %68 = arith.addf %65, %67 : vector<200x128xf32>
    %cst_56 = arith.constant 0.000000e+00 : f32
    %69 = vector.broadcast %cst_56 : f32 to vector<200x128xf32>
    %70 = arith.subf %69, %68 : vector<200x128xf32>
    %71 = math.exp %70 : vector<200x128xf32>
    %cst_57 = arith.constant 1.000000e+00 : f32
    %72 = vector.broadcast %cst_57 : f32 to vector<200x128xf32>
    %73 = arith.addf %72, %71 : vector<200x128xf32>
    %74 = tpu.reciprocal %73 {approx = true} : vector<200x128xf32> -> vector<200x128xf32>
    %75 = arith.mulf %68, %74 : vector<200x128xf32>
    %cst_58 = arith.constant 0.000000e+00 : f32
    %76 = vector.shape_cast %2 : vector<200x1xi1> to vector<200x1xi1>
    %77 = vector.broadcast %76 : vector<200x1xi1> to vector<200x128xi1>
    %78 = vector.broadcast %cst_58 : f32 to vector<200x128xf32>
    %79 = arith.select %77, %75, %78 : vector<200x128xi1>, vector<200x128xf32>
    %c16_59 = arith.constant 16 : index
    %c0_60 = arith.constant 0 : index
    %80 = vector.load %arg18[%c16_59, %c0_60] : memref<232x128xf32, #tpu.memory_space<vmem>>, vector<200x128xf32>
    tpu.vector_store %arg18[%c16_59, %c0_60], %79 {strides = array<i32>} : memref<232x128xf32, #tpu.memory_space<vmem>>, vector<200x128xf32>,
    %c5_61 = arith.constant 5 : index
    %c0_62 = arith.constant 0 : index
    %81 = vector.load %arg18[%c5_61, %c0_62] : memref<232x128xf32, #tpu.memory_space<vmem>>, vector<200x128xf32>
    %c0_63 = arith.constant 0 : index
    %c0_64 = arith.constant 0 : index
    %c0_65 = arith.constant 0 : index
    %82 = vector.load %arg6[%c0_63, %c0_64, %c0_65] : memref<9x128x128xf32, #tpu.memory_space<vmem>>, vector<1x128x128xf32>
    %83 = vector.shape_cast %82 : vector<1x128x128xf32> to vector<128x128xf32>
    %cst_66 = arith.constant dense<0.000000e+00> : vector<200x128xf32>
    %84 = tpu.matmul %81, %83, %cst_66 {dimension_numbers = #tpu.dot_dimension_numbers<[1], [0], [0], [1], [0, 0, 1, 1], [], []>} : vector<200x128xf32>, vector<128x128xf32>, vector<200x128xf32> -> vector<200x128xf32>
    %c6_67 = arith.constant 6 : index
    %c0_68 = arith.constant 0 : index
    %85 = vector.load %arg18[%c6_67, %c0_68] : memref<232x128xf32, #tpu.memory_space<vmem>>, vector<200x128xf32>
    %c1_69 = arith.constant 1 : index
    %c0_70 = arith.constant 0 : index
    %c0_71 = arith.constant 0 : index
    %86 = vector.load %arg6[%c1_69, %c0_70, %c0_71] : memref<9x128x128xf32, #tpu.memory_space<vmem>>, vector<1x128x128xf32>
    %87 = vector.shape_cast %86 : vector<1x128x128xf32> to vector<128x128xf32>
    %cst_72 = arith.constant dense<0.000000e+00> : vector<200x128xf32>
    %88 = tpu.matmul %85, %87, %cst_72 {dimension_numbers = #tpu.dot_dimension_numbers<[1], [0], [0], [1], [0, 0, 1, 1], [], []>} : vector<200x128xf32>, vector<128x128xf32>, vector<200x128xf32> -> vector<200x128xf32>
    %89 = arith.addf %84, %88 : vector<200x128xf32>
    %c7_73 = arith.constant 7 : index
    %c0_74 = arith.constant 0 : index
    %90 = vector.load %arg18[%c7_73, %c0_74] : memref<232x128xf32, #tpu.memory_space<vmem>>, vector<200x128xf32>
    %c2_75 = arith.constant 2 : index
    %c0_76 = arith.constant 0 : index
    %c0_77 = arith.constant 0 : index
    %91 = vector.load %arg6[%c2_75, %c0_76, %c0_77] : memref<9x128x128xf32, #tpu.memory_space<vmem>>, vector<1x128x128xf32>
    %92 = vector.shape_cast %91 : vector<1x128x128xf32> to vector<128x128xf32>
    %cst_78 = arith.constant dense<0.000000e+00> : vector<200x128xf32>
    %93 = tpu.matmul %90, %92, %cst_78 {dimension_numbers = #tpu.dot_dimension_numbers<[1], [0], [0], [1], [0, 0, 1, 1], [], []>} : vector<200x128xf32>, vector<128x128xf32>, vector<200x128xf32> -> vector<200x128xf32>
    %94 = arith.addf %89, %93 : vector<200x128xf32>
    %c15_79 = arith.constant 15 : index
    %c0_80 = arith.constant 0 : index
    %95 = vector.load %arg18[%c15_79, %c0_80] : memref<232x128xf32, #tpu.memory_space<vmem>>, vector<200x128xf32>
    %c3_81 = arith.constant 3 : index
    %c0_82 = arith.constant 0 : index
    %c0_83 = arith.constant 0 : index
    %96 = vector.load %arg6[%c3_81, %c0_82, %c0_83] : memref<9x128x128xf32, #tpu.memory_space<vmem>>, vector<1x128x128xf32>
    %97 = vector.shape_cast %96 : vector<1x128x128xf32> to vector<128x128xf32>
    %cst_84 = arith.constant dense<0.000000e+00> : vector<200x128xf32>
    %98 = tpu.matmul %95, %97, %cst_84 {dimension_numbers = #tpu.dot_dimension_numbers<[1], [0], [0], [1], [0, 0, 1, 1], [], []>} : vector<200x128xf32>, vector<128x128xf32>, vector<200x128xf32> -> vector<200x128xf32>
    %99 = arith.addf %94, %98 : vector<200x128xf32>
    %c16_85 = arith.constant 16 : index
    %c0_86 = arith.constant 0 : index
    %100 = vector.load %arg18[%c16_85, %c0_86] : memref<232x128xf32, #tpu.memory_space<vmem>>, vector<200x128xf32>
    %c4_87 = arith.constant 4 : index
    %c0_88 = arith.constant 0 : index
    %c0_89 = arith.constant 0 : index
    %101 = vector.load %arg6[%c4_87, %c0_88, %c0_89] : memref<9x128x128xf32, #tpu.memory_space<vmem>>, vector<1x128x128xf32>
    %102 = vector.shape_cast %101 : vector<1x128x128xf32> to vector<128x128xf32>
    %cst_90 = arith.constant dense<0.000000e+00> : vector<200x128xf32>
    %103 = tpu.matmul %100, %102, %cst_90 {dimension_numbers = #tpu.dot_dimension_numbers<[1], [0], [0], [1], [0, 0, 1, 1], [], []>} : vector<200x128xf32>, vector<128x128xf32>, vector<200x128xf32> -> vector<200x128xf32>
    %104 = arith.addf %99, %103 : vector<200x128xf32>
    %c17_91 = arith.constant 17 : index
    %c0_92 = arith.constant 0 : index
    %105 = vector.load %arg18[%c17_91, %c0_92] : memref<232x128xf32, #tpu.memory_space<vmem>>, vector<200x128xf32>
    %c5_93 = arith.constant 5 : index
    %c0_94 = arith.constant 0 : index
    %c0_95 = arith.constant 0 : index
    %106 = vector.load %arg6[%c5_93, %c0_94, %c0_95] : memref<9x128x128xf32, #tpu.memory_space<vmem>>, vector<1x128x128xf32>
    %107 = vector.shape_cast %106 : vector<1x128x128xf32> to vector<128x128xf32>
    %cst_96 = arith.constant dense<0.000000e+00> : vector<200x128xf32>
    %108 = tpu.matmul %105, %107, %cst_96 {dimension_numbers = #tpu.dot_dimension_numbers<[1], [0], [0], [1], [0, 0, 1, 1], [], []>} : vector<200x128xf32>, vector<128x128xf32>, vector<200x128xf32> -> vector<200x128xf32>
    %109 = arith.addf %104, %108 : vector<200x128xf32>
    %c25_97 = arith.constant 25 : index
    %c0_98 = arith.constant 0 : index
    %110 = vector.load %arg18[%c25_97, %c0_98] : memref<232x128xf32, #tpu.memory_space<vmem>>, vector<200x128xf32>
    %c6_99 = arith.constant 6 : index
    %c0_100 = arith.constant 0 : index
    %c0_101 = arith.constant 0 : index
    %111 = vector.load %arg6[%c6_99, %c0_100, %c0_101] : memref<9x128x128xf32, #tpu.memory_space<vmem>>, vector<1x128x128xf32>
    %112 = vector.shape_cast %111 : vector<1x128x128xf32> to vector<128x128xf32>
    %cst_102 = arith.constant dense<0.000000e+00> : vector<200x128xf32>
    %113 = tpu.matmul %110, %112, %cst_102 {dimension_numbers = #tpu.dot_dimension_numbers<[1], [0], [0], [1], [0, 0, 1, 1], [], []>} : vector<200x128xf32>, vector<128x128xf32>, vector<200x128xf32> -> vector<200x128xf32>
    %114 = arith.addf %109, %113 : vector<200x128xf32>
    %c26_103 = arith.constant 26 : index
    %c0_104 = arith.constant 0 : index
    %115 = vector.load %arg18[%c26_103, %c0_104] : memref<232x128xf32, #tpu.memory_space<vmem>>, vector<200x128xf32>
    %c7_105 = arith.constant 7 : index
    %c0_106 = arith.constant 0 : index
    %c0_107 = arith.constant 0 : index
    %116 = vector.load %arg6[%c7_105, %c0_106, %c0_107] : memref<9x128x128xf32, #tpu.memory_space<vmem>>, vector<1x128x128xf32>
    %117 = vector.shape_cast %116 : vector<1x128x128xf32> to vector<128x128xf32>
    %cst_108 = arith.constant dense<0.000000e+00> : vector<200x128xf32>
    %118 = tpu.matmul %115, %117, %cst_108 {dimension_numbers = #tpu.dot_dimension_numbers<[1], [0], [0], [1], [0, 0, 1, 1], [], []>} : vector<200x128xf32>, vector<128x128xf32>, vector<200x128xf32> -> vector<200x128xf32>
    %119 = arith.addf %114, %118 : vector<200x128xf32>
    %c27_109 = arith.constant 27 : index
    %c0_110 = arith.constant 0 : index
    %120 = vector.load %arg18[%c27_109, %c0_110] : memref<232x128xf32, #tpu.memory_space<vmem>>, vector<200x128xf32>
    %c8_111 = arith.constant 8 : index
    %c0_112 = arith.constant 0 : index
    %c0_113 = arith.constant 0 : index
    %121 = vector.load %arg6[%c8_111, %c0_112, %c0_113] : memref<9x128x128xf32, #tpu.memory_space<vmem>>, vector<1x128x128xf32>
    %122 = vector.shape_cast %121 : vector<1x128x128xf32> to vector<128x128xf32>
    %cst_114 = arith.constant dense<0.000000e+00> : vector<200x128xf32>
    %123 = tpu.matmul %120, %122, %cst_114 {dimension_numbers = #tpu.dot_dimension_numbers<[1], [0], [0], [1], [0, 0, 1, 1], [], []>} : vector<200x128xf32>, vector<128x128xf32>, vector<200x128xf32> -> vector<200x128xf32>
    %124 = arith.addf %119, %123 : vector<200x128xf32>
    %c0_115 = arith.constant 0 : index
    %c0_116 = arith.constant 0 : index
    %125 = vector.load %arg7[%c0_115, %c0_116] : memref<1x128xf32, #tpu.memory_space<vmem>>, vector<1x128xf32>
    %126 = vector.broadcast %125 : vector<1x128xf32> to vector<200x128xf32>
    %127 = arith.addf %124, %126 : vector<200x128xf32>
    %cst_117 = arith.constant 0.000000e+00 : f32
    %128 = vector.broadcast %cst_117 : f32 to vector<200x128xf32>
    %129 = arith.subf %128, %127 : vector<200x128xf32>
    %130 = math.exp %129 : vector<200x128xf32>
    %cst_118 = arith.constant 1.000000e+00 : f32
    %131 = vector.broadcast %cst_118 : f32 to vector<200x128xf32>
    %132 = arith.addf %131, %130 : vector<200x128xf32>
    %133 = tpu.reciprocal %132 {approx = true} : vector<200x128xf32> -> vector<200x128xf32>
    %134 = arith.mulf %127, %133 : vector<200x128xf32>
    %cst_119 = arith.constant 0.000000e+00 : f32
    %135 = vector.shape_cast %2 : vector<200x1xi1> to vector<200x1xi1>
    %136 = vector.broadcast %135 : vector<200x1xi1> to vector<200x128xi1>
    %137 = vector.broadcast %cst_119 : f32 to vector<200x128xf32>
    %138 = arith.select %136, %134, %137 : vector<200x128xi1>, vector<200x128xf32>
    %c16_120 = arith.constant 16 : index
    %c0_121 = arith.constant 0 : index
    %139 = vector.load %arg17[%c16_120, %c0_121] : memref<232x128xf32, #tpu.memory_space<vmem>>, vector<200x128xf32>
    tpu.vector_store %arg17[%c16_120, %c0_121], %138 {strides = array<i32>} : memref<232x128xf32, #tpu.memory_space<vmem>>, vector<200x128xf32>,
    %c5_122 = arith.constant 5 : index
    %c0_123 = arith.constant 0 : index
    %140 = vector.load %arg17[%c5_122, %c0_123] : memref<232x128xf32, #tpu.memory_space<vmem>>, vector<200x128xf32>
    %c0_124 = arith.constant 0 : index
    %c0_125 = arith.constant 0 : index
    %c0_126 = arith.constant 0 : index
    %141 = vector.load %arg8[%c0_124, %c0_125, %c0_126] : memref<9x128x128xf32, #tpu.memory_space<vmem>>, vector<1x128x128xf32>
    %142 = vector.shape_cast %141 : vector<1x128x128xf32> to vector<128x128xf32>
    %cst_127 = arith.constant dense<0.000000e+00> : vector<200x128xf32>
    %143 = tpu.matmul %140, %142, %cst_127 {dimension_numbers = #tpu.dot_dimension_numbers<[1], [0], [0], [1], [0, 0, 1, 1], [], []>} : vector<200x128xf32>, vector<128x128xf32>, vector<200x128xf32> -> vector<200x128xf32>
    %c6_128 = arith.constant 6 : index
    %c0_129 = arith.constant 0 : index
    %144 = vector.load %arg17[%c6_128, %c0_129] : memref<232x128xf32, #tpu.memory_space<vmem>>, vector<200x128xf32>
    %c1_130 = arith.constant 1 : index
    %c0_131 = arith.constant 0 : index
    %c0_132 = arith.constant 0 : index
    %145 = vector.load %arg8[%c1_130, %c0_131, %c0_132] : memref<9x128x128xf32, #tpu.memory_space<vmem>>, vector<1x128x128xf32>
    %146 = vector.shape_cast %145 : vector<1x128x128xf32> to vector<128x128xf32>
    %cst_133 = arith.constant dense<0.000000e+00> : vector<200x128xf32>
    %147 = tpu.matmul %144, %146, %cst_133 {dimension_numbers = #tpu.dot_dimension_numbers<[1], [0], [0], [1], [0, 0, 1, 1], [], []>} : vector<200x128xf32>, vector<128x128xf32>, vector<200x128xf32> -> vector<200x128xf32>
    %148 = arith.addf %143, %147 : vector<200x128xf32>
    %c7_134 = arith.constant 7 : index
    %c0_135 = arith.constant 0 : index
    %149 = vector.load %arg17[%c7_134, %c0_135] : memref<232x128xf32, #tpu.memory_space<vmem>>, vector<200x128xf32>
    %c2_136 = arith.constant 2 : index
    %c0_137 = arith.constant 0 : index
    %c0_138 = arith.constant 0 : index
    %150 = vector.load %arg8[%c2_136, %c0_137, %c0_138] : memref<9x128x128xf32, #tpu.memory_space<vmem>>, vector<1x128x128xf32>
    %151 = vector.shape_cast %150 : vector<1x128x128xf32> to vector<128x128xf32>
    %cst_139 = arith.constant dense<0.000000e+00> : vector<200x128xf32>
    %152 = tpu.matmul %149, %151, %cst_139 {dimension_numbers = #tpu.dot_dimension_numbers<[1], [0], [0], [1], [0, 0, 1, 1], [], []>} : vector<200x128xf32>, vector<128x128xf32>, vector<200x128xf32> -> vector<200x128xf32>
    %153 = arith.addf %148, %152 : vector<200x128xf32>
    %c15_140 = arith.constant 15 : index
    %c0_141 = arith.constant 0 : index
    %154 = vector.load %arg17[%c15_140, %c0_141] : memref<232x128xf32, #tpu.memory_space<vmem>>, vector<200x128xf32>
    %c3_142 = arith.constant 3 : index
    %c0_143 = arith.constant 0 : index
    %c0_144 = arith.constant 0 : index
    %155 = vector.load %arg8[%c3_142, %c0_143, %c0_144] : memref<9x128x128xf32, #tpu.memory_space<vmem>>, vector<1x128x128xf32>
    %156 = vector.shape_cast %155 : vector<1x128x128xf32> to vector<128x128xf32>
    %cst_145 = arith.constant dense<0.000000e+00> : vector<200x128xf32>
    %157 = tpu.matmul %154, %156, %cst_145 {dimension_numbers = #tpu.dot_dimension_numbers<[1], [0], [0], [1], [0, 0, 1, 1], [], []>} : vector<200x128xf32>, vector<128x128xf32>, vector<200x128xf32> -> vector<200x128xf32>
    %158 = arith.addf %153, %157 : vector<200x128xf32>
    %c16_146 = arith.constant 16 : index
    %c0_147 = arith.constant 0 : index
    %159 = vector.load %arg17[%c16_146, %c0_147] : memref<232x128xf32, #tpu.memory_space<vmem>>, vector<200x128xf32>
    %c4_148 = arith.constant 4 : index
    %c0_149 = arith.constant 0 : index
    %c0_150 = arith.constant 0 : index
    %160 = vector.load %arg8[%c4_148, %c0_149, %c0_150] : memref<9x128x128xf32, #tpu.memory_space<vmem>>, vector<1x128x128xf32>
    %161 = vector.shape_cast %160 : vector<1x128x128xf32> to vector<128x128xf32>
    %cst_151 = arith.constant dense<0.000000e+00> : vector<200x128xf32>
    %162 = tpu.matmul %159, %161, %cst_151 {dimension_numbers = #tpu.dot_dimension_numbers<[1], [0], [0], [1], [0, 0, 1, 1], [], []>} : vector<200x128xf32>, vector<128x128xf32>, vector<200x128xf32> -> vector<200x128xf32>
    %163 = arith.addf %158, %162 : vector<200x128xf32>
    %c17_152 = arith.constant 17 : index
    %c0_153 = arith.constant 0 : index
    %164 = vector.load %arg17[%c17_152, %c0_153] : memref<232x128xf32, #tpu.memory_space<vmem>>, vector<200x128xf32>
    %c5_154 = arith.constant 5 : index
    %c0_155 = arith.constant 0 : index
    %c0_156 = arith.constant 0 : index
    %165 = vector.load %arg8[%c5_154, %c0_155, %c0_156] : memref<9x128x128xf32, #tpu.memory_space<vmem>>, vector<1x128x128xf32>
    %166 = vector.shape_cast %165 : vector<1x128x128xf32> to vector<128x128xf32>
    %cst_157 = arith.constant dense<0.000000e+00> : vector<200x128xf32>
    %167 = tpu.matmul %164, %166, %cst_157 {dimension_numbers = #tpu.dot_dimension_numbers<[1], [0], [0], [1], [0, 0, 1, 1], [], []>} : vector<200x128xf32>, vector<128x128xf32>, vector<200x128xf32> -> vector<200x128xf32>
    %168 = arith.addf %163, %167 : vector<200x128xf32>
    %c25_158 = arith.constant 25 : index
    %c0_159 = arith.constant 0 : index
    %169 = vector.load %arg17[%c25_158, %c0_159] : memref<232x128xf32, #tpu.memory_space<vmem>>, vector<200x128xf32>
    %c6_160 = arith.constant 6 : index
    %c0_161 = arith.constant 0 : index
    %c0_162 = arith.constant 0 : index
    %170 = vector.load %arg8[%c6_160, %c0_161, %c0_162] : memref<9x128x128xf32, #tpu.memory_space<vmem>>, vector<1x128x128xf32>
    %171 = vector.shape_cast %170 : vector<1x128x128xf32> to vector<128x128xf32>
    %cst_163 = arith.constant dense<0.000000e+00> : vector<200x128xf32>
    %172 = tpu.matmul %169, %171, %cst_163 {dimension_numbers = #tpu.dot_dimension_numbers<[1], [0], [0], [1], [0, 0, 1, 1], [], []>} : vector<200x128xf32>, vector<128x128xf32>, vector<200x128xf32> -> vector<200x128xf32>
    %173 = arith.addf %168, %172 : vector<200x128xf32>
    %c26_164 = arith.constant 26 : index
    %c0_165 = arith.constant 0 : index
    %174 = vector.load %arg17[%c26_164, %c0_165] : memref<232x128xf32, #tpu.memory_space<vmem>>, vector<200x128xf32>
    %c7_166 = arith.constant 7 : index
    %c0_167 = arith.constant 0 : index
    %c0_168 = arith.constant 0 : index
    %175 = vector.load %arg8[%c7_166, %c0_167, %c0_168] : memref<9x128x128xf32, #tpu.memory_space<vmem>>, vector<1x128x128xf32>
    %176 = vector.shape_cast %175 : vector<1x128x128xf32> to vector<128x128xf32>
    %cst_169 = arith.constant dense<0.000000e+00> : vector<200x128xf32>
    %177 = tpu.matmul %174, %176, %cst_169 {dimension_numbers = #tpu.dot_dimension_numbers<[1], [0], [0], [1], [0, 0, 1, 1], [], []>} : vector<200x128xf32>, vector<128x128xf32>, vector<200x128xf32> -> vector<200x128xf32>
    %178 = arith.addf %173, %177 : vector<200x128xf32>
    %c27_170 = arith.constant 27 : index
    %c0_171 = arith.constant 0 : index
    %179 = vector.load %arg17[%c27_170, %c0_171] : memref<232x128xf32, #tpu.memory_space<vmem>>, vector<200x128xf32>
    %c8_172 = arith.constant 8 : index
    %c0_173 = arith.constant 0 : index
    %c0_174 = arith.constant 0 : index
    %180 = vector.load %arg8[%c8_172, %c0_173, %c0_174] : memref<9x128x128xf32, #tpu.memory_space<vmem>>, vector<1x128x128xf32>
    %181 = vector.shape_cast %180 : vector<1x128x128xf32> to vector<128x128xf32>
    %cst_175 = arith.constant dense<0.000000e+00> : vector<200x128xf32>
    %182 = tpu.matmul %179, %181, %cst_175 {dimension_numbers = #tpu.dot_dimension_numbers<[1], [0], [0], [1], [0, 0, 1, 1], [], []>} : vector<200x128xf32>, vector<128x128xf32>, vector<200x128xf32> -> vector<200x128xf32>
    %183 = arith.addf %178, %182 : vector<200x128xf32>
    %c0_176 = arith.constant 0 : index
    %c0_177 = arith.constant 0 : index
    %184 = vector.load %arg9[%c0_176, %c0_177] : memref<1x128xf32, #tpu.memory_space<vmem>>, vector<1x128xf32>
    %185 = vector.broadcast %184 : vector<1x128xf32> to vector<200x128xf32>
    %186 = arith.addf %183, %185 : vector<200x128xf32>
    %cst_178 = arith.constant 0.000000e+00 : f32
    %187 = vector.broadcast %cst_178 : f32 to vector<200x128xf32>
    %188 = arith.subf %187, %186 : vector<200x128xf32>
    %189 = math.exp %188 : vector<200x128xf32>
    %cst_179 = arith.constant 1.000000e+00 : f32
    %190 = vector.broadcast %cst_179 : f32 to vector<200x128xf32>
    %191 = arith.addf %190, %189 : vector<200x128xf32>
    %192 = tpu.reciprocal %191 {approx = true} : vector<200x128xf32> -> vector<200x128xf32>
    %193 = arith.mulf %186, %192 : vector<200x128xf32>
    %cst_180 = arith.constant 0.000000e+00 : f32
    %194 = vector.shape_cast %2 : vector<200x1xi1> to vector<200x1xi1>
    %195 = vector.broadcast %194 : vector<200x1xi1> to vector<200x128xi1>
    %196 = vector.broadcast %cst_180 : f32 to vector<200x128xf32>
    %197 = arith.select %195, %193, %196 : vector<200x128xi1>, vector<200x128xf32>
    %c0_181 = arith.constant 0 : index
    %c0_182 = arith.constant 0 : index
    %198 = vector.load %arg15[%c0_181, %c0_182] : memref<2x200xf32, #tpu.memory_space<vmem>>, vector<2x200xf32>
    %cst_183 = arith.constant dense<0.000000e+00> : vector<2x128xf32>
    %199 = tpu.matmul %198, %197, %cst_183 {dimension_numbers = #tpu.dot_dimension_numbers<[1], [0], [0], [1], [0, 0, 1, 1], [], []>} : vector<2x200xf32>, vector<200x128xf32>, vector<2x128xf32> -> vector<2x128xf32>
    %c0_184 = arith.constant 0 : index
    %c0_185 = arith.constant 0 : index
    %200 = vector.load %arg10[%c0_184, %c0_185] : memref<128x128xf32, #tpu.memory_space<vmem>>, vector<128x128xf32>
    %cst_186 = arith.constant dense<0.000000e+00> : vector<2x128xf32>
    %201 = tpu.matmul %199, %200, %cst_186 {dimension_numbers = #tpu.dot_dimension_numbers<[1], [0], [0], [1], [0, 0, 1, 1], [], []>} : vector<2x128xf32>, vector<128x128xf32>, vector<2x128xf32> -> vector<2x128xf32>
    %c0_187 = arith.constant 0 : index
    %c0_188 = arith.constant 0 : index
    %202 = vector.load %arg11[%c0_187, %c0_188] : memref<1x128xf32, #tpu.memory_space<vmem>>, vector<1x128xf32>
    %203 = vector.broadcast %202 : vector<1x128xf32> to vector<2x128xf32>
    %204 = arith.addf %201, %203 : vector<2x128xf32>
    %cst_189 = arith.constant 0.000000e+00 : f32
    %205 = vector.broadcast %cst_189 : f32 to vector<2x128xf32>
    %206 = arith.subf %205, %204 : vector<2x128xf32>
    %207 = math.exp %206 : vector<2x128xf32>
    %cst_190 = arith.constant 1.000000e+00 : f32
    %208 = vector.broadcast %cst_190 : f32 to vector<2x128xf32>
    %209 = arith.addf %208, %207 : vector<2x128xf32>
    %210 = tpu.reciprocal %209 {approx = true} : vector<2x128xf32> -> vector<2x128xf32>
    %211 = arith.mulf %204, %210 : vector<2x128xf32>
    %c0_191 = arith.constant 0 : index
    %c0_192 = arith.constant 0 : index
    %212 = vector.load %arg12[%c0_191, %c0_192] : memref<128x10xf32, #tpu.memory_space<vmem>>, vector<128x10xf32>
    %cst_193 = arith.constant dense<0.000000e+00> : vector<2x10xf32>
    %213 = tpu.matmul %211, %212, %cst_193 {dimension_numbers = #tpu.dot_dimension_numbers<[1], [0], [0], [1], [0, 0, 1, 1], [], []>} : vector<2x128xf32>, vector<128x10xf32>, vector<2x10xf32> -> vector<2x10xf32>
    %c0_194 = arith.constant 0 : index
    %c0_195 = arith.constant 0 : index
    %214 = vector.load %arg13[%c0_194, %c0_195] : memref<1x10xf32, #tpu.memory_space<vmem>>, vector<1x10xf32>
    %215 = vector.broadcast %214 : vector<1x10xf32> to vector<2x10xf32>
    %216 = arith.addf %213, %215 : vector<2x10xf32>
    %c0_196 = arith.constant 0 : index
    %c0_197 = arith.constant 0 : index
    %c0_198 = arith.constant 0 : index
    %217 = vector.load %arg16[%c0_196, %c0_197, %c0_198] : memref<1x2x10xf32, #tpu.memory_space<vmem>>, vector<1x2x10xf32>
    %218 = vector.shape_cast %217 : vector<1x2x10xf32> to vector<2x10xf32>
    %219 = vector.shape_cast %216 : vector<2x10xf32> to vector<1x2x10xf32>
    tpu.vector_store %arg16[%c0_196, %c0_197, %c0_198], %219 {strides = array<i32>} : memref<1x2x10xf32, #tpu.memory_space<vmem>>, vector<1x2x10xf32>,
    return
  }
  func.func @transform_0(%arg0: i32) -> (i32, i32, i32) {
    %c0_i32 = arith.constant 0 : i32
    %c0_i32_0 = arith.constant 0 : i32
    %c0_i32_1 = arith.constant 0 : i32
    return %arg0, %c0_i32, %c0_i32_0 : i32, i32, i32
  }
  func.func @transform_1(%arg0: i32) -> (i32, i32) {
    %c0_i32 = arith.constant 0 : i32
    %c0_i32_0 = arith.constant 0 : i32
    %c0_i32_1 = arith.constant 0 : i32
    return %c0_i32, %c0_i32_0 : i32, i32
  }
  func.func @transform_2(%arg0: i32) -> (i32, i32) {
    %c0_i32 = arith.constant 0 : i32
    %c0_i32_0 = arith.constant 0 : i32
    %c0_i32_1 = arith.constant 0 : i32
    return %c0_i32, %c0_i32_0 : i32, i32
  }
  func.func @transform_3(%arg0: i32) -> (i32, i32, i32) {
    %c0_i32 = arith.constant 0 : i32
    %c0_i32_0 = arith.constant 0 : i32
    %c0_i32_1 = arith.constant 0 : i32
    %c0_i32_2 = arith.constant 0 : i32
    return %c0_i32, %c0_i32_0, %c0_i32_1 : i32, i32, i32
  }
  func.func @transform_4(%arg0: i32) -> (i32, i32) {
    %c0_i32 = arith.constant 0 : i32
    %c0_i32_0 = arith.constant 0 : i32
    %c0_i32_1 = arith.constant 0 : i32
    return %c0_i32, %c0_i32_0 : i32, i32
  }
  func.func @transform_5(%arg0: i32) -> (i32, i32, i32) {
    %c0_i32 = arith.constant 0 : i32
    %c0_i32_0 = arith.constant 0 : i32
    %c0_i32_1 = arith.constant 0 : i32
    %c0_i32_2 = arith.constant 0 : i32
    return %c0_i32, %c0_i32_0, %c0_i32_1 : i32, i32, i32
  }
  func.func @transform_6(%arg0: i32) -> (i32, i32) {
    %c0_i32 = arith.constant 0 : i32
    %c0_i32_0 = arith.constant 0 : i32
    %c0_i32_1 = arith.constant 0 : i32
    return %c0_i32, %c0_i32_0 : i32, i32
  }
  func.func @transform_7(%arg0: i32) -> (i32, i32, i32) {
    %c0_i32 = arith.constant 0 : i32
    %c0_i32_0 = arith.constant 0 : i32
    %c0_i32_1 = arith.constant 0 : i32
    %c0_i32_2 = arith.constant 0 : i32
    return %c0_i32, %c0_i32_0, %c0_i32_1 : i32, i32, i32
  }
  func.func @transform_8(%arg0: i32) -> (i32, i32) {
    %c0_i32 = arith.constant 0 : i32
    %c0_i32_0 = arith.constant 0 : i32
    %c0_i32_1 = arith.constant 0 : i32
    return %c0_i32, %c0_i32_0 : i32, i32
  }
  func.func @transform_9(%arg0: i32) -> (i32, i32) {
    %c0_i32 = arith.constant 0 : i32
    %c0_i32_0 = arith.constant 0 : i32
    %c0_i32_1 = arith.constant 0 : i32
    return %c0_i32, %c0_i32_0 : i32, i32
  }
  func.func @transform_10(%arg0: i32) -> (i32, i32) {
    %c0_i32 = arith.constant 0 : i32
    %c0_i32_0 = arith.constant 0 : i32
    %c0_i32_1 = arith.constant 0 : i32
    return %c0_i32, %c0_i32_0 : i32, i32
  }
  func.func @transform_11(%arg0: i32) -> (i32, i32) {
    %c0_i32 = arith.constant 0 : i32
    %c0_i32_0 = arith.constant 0 : i32
    %c0_i32_1 = arith.constant 0 : i32
    return %c0_i32, %c0_i32_0 : i32, i32
  }
  func.func @transform_12(%arg0: i32) -> (i32, i32) {
    %c0_i32 = arith.constant 0 : i32
    %c0_i32_0 = arith.constant 0 : i32
    %c0_i32_1 = arith.constant 0 : i32
    return %c0_i32, %c0_i32_0 : i32, i32
  }
  func.func @transform_13(%arg0: i32) -> (i32, i32) {
    %c0_i32 = arith.constant 0 : i32
    %c0_i32_0 = arith.constant 0 : i32
    %c0_i32_1 = arith.constant 0 : i32
    return %c0_i32, %c0_i32_0 : i32, i32
  }
  func.func @transform_14(%arg0: i32) -> (i32, i32) {
    %c0_i32 = arith.constant 0 : i32
    %c0_i32_0 = arith.constant 0 : i32
    %c0_i32_1 = arith.constant 0 : i32
    return %c0_i32, %c0_i32_0 : i32, i32
  }
  func.func @transform_15(%arg0: i32) -> (i32, i32, i32) {
    %c0_i32 = arith.constant 0 : i32
    %c0_i32_0 = arith.constant 0 : i32
    %c0_i32_1 = arith.constant 0 : i32
    return %arg0, %c0_i32, %c0_i32_0 : i32, i32, i32
  }
}

</mosaic_0001>

<llo_original>
// kernel: tile.6
$region0: #{tile.6}
  #allocation0 [shape = 's32[1]{0}', space=sflag, size = 0x4, scoped, tag = 'scoped memory for tile.6']
  %s0 = inlined_call_operand.vmem [shape: f32[100], index: 0, kind: input, shape index: {}]
  %s1 = inlined_call_operand.vmem [shape: f32[2,100], index: 1, kind: output, shape index: {}]
  // Predicated region
  $region2: #{tile.6} parent=0 // pred_check
    _
  $region3: #{tile.6} parent=0 // pred_check_branch
    %3 = sbr.rel (0) target = $region5
  $region4: #{tile.6} parent=0 // pred_region
    _
  $region5: #{tile.6} parent=0 // pred_fallthru
    _
  %v4 = vld [vmem:[%s0] ss:$0 sm:$0xff]
  %5 = vst [vmem:[%s1] sm:$0x3] %v4

// kernel: tile.0
$region0: #{tile.0}
  %s0 = inlined_call_operand.vmem [shape: f32[2,100], index: 0, kind: input, shape index: {}]
  %s1 = inlined_call_operand.vmem [shape: f32[200,1], index: 1, kind: output, shape index: {}]
  $region1: #{tile.0} parent=0
    #allocation0 [shape = 'u8[4096]{0}', space=vmem, size = 0x1000, scoped, tag = 'scoped mem for input reshape']
    %s3 = sshll.u32 1, 2
    %s4 = ssub.s32 %s3, 1
    %v5 = vld [vmem:[%s0] sm:%s4]
    %6 = vst [vmem:[#allocation0] sm:%s4] %v5
    %v7 = vld [vmem:[#allocation0] sm:$0x3]
    %vm8 = vcmask 7168
    %9 = vst.msk [vmem:[%s1] ss:$100 sm:$0x3] %vm8, %v7
    %v10 = vld [vmem:[#allocation0] sm:$0x3]
    %11 = vrot.lane.b32.xlu0 %v10, 127
    %v12 = vpop.permute.xlu0 %11
    %vm13 = vcmask 7168
    %s14 = scalar_lea.vmem %s1, 1
    %15 = vst.msk [vmem:[%s14] ss:$100 sm:$0x3] %vm13, %v12
    %v16 = vld [vmem:[#allocation0] sm:$0x3]
    %17 = vrot.lane.b32.xlu0 %v16, 126
    %v18 = vpop.permute.xlu0 %17
    %vm19 = vcmask 7168
    %s20 = scalar_lea.vmem %s1, 2
    %21 = vst.msk [vmem:[%s20] ss:$100 sm:$0x3] %vm19, %v18
    %v22 = vld [vmem:[#allocation0] sm:$0x3]
    %23 = vrot.lane.b32.xlu0 %v22, 125
    %v24 = vpop.permute.xlu0 %23
    %vm25 = vcmask 7168
    %s26 = scalar_lea.vmem %s1, 3
    %27 = vst.msk [vmem:[%s26] ss:$100 sm:$0x3] %vm25, %v24
    %v28 = vld [vmem:[#allocation0] sm:$0x3]
    %29 = vrot.lane.b32.xlu0 %v28, 124
    %v30 = vpop.permute.xlu0 %29
    %vm31 = vcmask 7168
    %s32 = scalar_lea.vmem %s1, 4
    %33 = vst.msk [vmem:[%s32] ss:$100 sm:$0x3] %vm31, %v30
    %v34 = vld [vmem:[#allocation0] sm:$0x3]
    %35 = vrot.lane.b32.xlu0 %v34, 123
    %v36 = vpop.permute.xlu0 %35
    %vm37 = vcmask 7168
    %s38 = scalar_lea.vmem %s1, 5
    %39 = vst.msk [vmem:[%s38] ss:$100 sm:$0x3] %vm37, %v36
    %v40 = vld [vmem:[#allocation0] sm:$0x3]
    %41 = vrot.lane.b32.xlu0 %v40, 122
    %v42 = vpop.permute.xlu0 %41
    %vm43 = vcmask 7168
    %s44 = scalar_lea.vmem %s1, 6
    %45 = vst.msk [vmem:[%s44] ss:$100 sm:$0x3] %vm43, %v42
    %v46 = vld [vmem:[#allocation0] sm:$0x3]
    %47 = vrot.lane.b32.xlu0 %v46, 121
    %v48 = vpop.permute.xlu0 %47
    %vm49 = vcmask 7168
    %s50 = scalar_lea.vmem %s1, 7
    %51 = vst.msk [vmem:[%s50] ss:$100 sm:$0x3] %vm49, %v48
    %v52 = vld [vmem:[#allocation0] sm:$0x3]
    %53 = vrot.lane.b32.xlu0 %v52, 120
    %v54 = vpop.permute.xlu0 %53
    %vm55 = vcmask 7168
    %s56 = scalar_lea.vmem %s1, 8
    %57 = vst.msk [vmem:[%s56] ss:$100 sm:$0x3] %vm55, %v54
    %v58 = vld [vmem:[#allocation0] sm:$0x3]
    %59 = vrot.lane.b32.xlu0 %v58, 119
    %v60 = vpop.permute.xlu0 %59
    %vm61 = vcmask 7168
    %s62 = scalar_lea.vmem %s1, 9
    %63 = vst.msk [vmem:[%s62] ss:$100 sm:$0x3] %vm61, %v60
    %v64 = vld [vmem:[#allocation0] sm:$0x3]
    %65 = vrot.lane.b32.xlu0 %v64, 118
    %v66 = vpop.permute.xlu0 %65
    %vm67 = vcmask 7168
    %s68 = scalar_lea.vmem %s1, 10
    %69 = vst.msk [vmem:[%s68] ss:$100 sm:$0x3] %vm67, %v66
    %v70 = vld [vmem:[#allocation0] sm:$0x3]
    %71 = vrot.lane.b32.xlu0 %v70, 117
    %v72 = vpop.permute.xlu0 %71
    %vm73 = vcmask 7168
    %s74 = scalar_lea.vmem %s1, 11
    %75 = vst.msk [vmem:[%s74] ss:$100 sm:$0x3] %vm73, %v72
    %v76 = vld [vmem:[#allocation0] sm:$0x3]
    %77 = vrot.lane.b32.xlu0 %v76, 116
    %v78 = vpop.permute.xlu0 %77
    %vm79 = vcmask 7168
    %s80 = scalar_lea.vmem %s1, 12
    %81 = vst.msk [vmem:[%s80] ss:$100 sm:$0x3] %vm79, %v78
    %v82 = vld [vmem:[#allocation0] sm:$0x3]
    %83 = vrot.lane.b32.xlu0 %v82, 115
    %v84 = vpop.permute.xlu0 %83
    %vm85 = vcmask 7168
    %s86 = scalar_lea.vmem %s1, 13
    %87 = vst.msk [vmem:[%s86] ss:$100 sm:$0x3] %vm85, %v84
    %v88 = vld [vmem:[#allocation0] sm:$0x3]
    %89 = vrot.lane.b32.xlu0 %v88, 114
    %v90 = vpop.permute.xlu0 %89
    %vm91 = vcmask 7168
    %s92 = scalar_lea.vmem %s1, 14
    %93 = vst.msk [vmem:[%s92] ss:$100 sm:$0x3] %vm91, %v90
    %v94 = vld [vmem:[#allocation0] sm:$0x3]
    %95 = vrot.lane.b32.xlu0 %v94, 113
    %v96 = vpop.permute.xlu0 %95
    %vm97 = vcmask 7168
    %s98 = scalar_lea.vmem %s1, 15
    %99 = vst.msk [vmem:[%s98] ss:$100 sm:$0x3] %vm97, %v96
    %v100 = vld [vmem:[#allocation0] sm:$0x3]
    %101 = vrot.lane.b32.xlu0 %v100, 112
    %v102 = vpop.permute.xlu0 %101
    %vm103 = vcmask 7168
    %s104 = scalar_lea.vmem %s1, 16
    %105 = vst.msk [vmem:[%s104] ss:$100 sm:$0x3] %vm103, %v102
    %v106 = vld [vmem:[#allocation0] sm:$0x3]
    %107 = vrot.lane.b32.xlu0 %v106, 111
    %v108 = vpop.permute.xlu0 %107
    %vm109 = vcmask 7168
    %s110 = scalar_lea.vmem %s1, 17
    %111 = vst.msk [vmem:[%s110] ss:$100 sm:$0x3] %vm109, %v108
    %v112 = vld [vmem:[#allocation0] sm:$0x3]
    %113 = vrot.lane.b32.xlu0 %v112, 110
    %v114 = vpop.permute.xlu0 %113
    %vm115 = vcmask 7168
    %s116 = scalar_lea.vmem %s1, 18
    %117 = vst.msk [vmem:[%s116] ss:$100 sm:$0x3] %vm115, %v114
    %v118 = vld [vmem:[#allocation0] sm:$0x3]
    %119 = vrot.lane.b32.xlu0 %v118, 109
    %v120 = vpop.permute.xlu0 %119
    %vm121 = vcmask 7168
    %s122 = scalar_lea.vmem %s1, 19
    %123 = vst.msk [vmem:[%s122] ss:$100 sm:$0x3] %vm121, %v120
    %v124 = vld [vmem:[#allocation0] sm:$0x3]
    %125 = vrot.lane.b32.xlu0 %v124, 108
    %v126 = vpop.permute.xlu0 %125
    %vm127 = vcmask 7168
    %s128 = scalar_lea.vmem %s1, 20
    %129 = vst.msk [vmem:[%s128] ss:$100 sm:$0x3] %vm127, %v126
    %v130 = vld [vmem:[#allocation0] sm:$0x3]
    %131 = vrot.lane.b32.xlu0 %v130, 107
    %v132 = vpop.permute.xlu0 %131
    %vm133 = vcmask 7168
    %s134 = scalar_lea.vmem %s1, 21
    %135 = vst.msk [vmem:[%s134] ss:$100 sm:$0x3] %vm133, %v132
    %v136 = vld [vmem:[#allocation0] sm:$0x3]
    %137 = vrot.lane.b32.xlu0 %v136, 106
    %v138 = vpop.permute.xlu0 %137
    %vm139 = vcmask 7168
    %s140 = scalar_lea.vmem %s1, 22
    %141 = vst.msk [vmem:[%s140] ss:$100 sm:$0x3] %vm139, %v138
    %v142 = vld [vmem:[#allocation0] sm:$0x3]
    %143 = vrot.lane.b32.xlu0 %v142, 105
    %v144 = vpop.permute.xlu0 %143
    %vm145 = vcmask 7168
    %s146 = scalar_lea.vmem %s1, 23
    %147 = vst.msk [vmem:[%s146] ss:$100 sm:$0x3] %vm145, %v144
    %v148 = vld [vmem:[#allocation0] sm:$0x3]
    %149 = vrot.lane.b32.xlu0 %v148, 104
    %v150 = vpop.permute.xlu0 %149
    %vm151 = vcmask 7168
    %s152 = scalar_lea.vmem %s1, 24
    %153 = vst.msk [vmem:[%s152] ss:$100 sm:$0x3] %vm151, %v150
    %v154 = vld [vmem:[#allocation0] sm:$0x3]
    %155 = vrot.lane.b32.xlu0 %v154, 103
    %v156 = vpop.permute.xlu0 %155
    %vm157 = vcmask 7168
    %s158 = scalar_lea.vmem %s1, 25
    %159 = vst.msk [vmem:[%s158] ss:$100 sm:$0x3] %vm157, %v156
    %v160 = vld [vmem:[#allocation0] sm:$0x3]
    %161 = vrot.lane.b32.xlu0 %v160, 102
    %v162 = vpop.permute.xlu0 %161
    %vm163 = vcmask 7168
    %s164 = scalar_lea.vmem %s1, 26
    %165 = vst.msk [vmem:[%s164] ss:$100 sm:$0x3] %vm163, %v162
    %v166 = vld [vmem:[#allocation0] sm:$0x3]
    %167 = vrot.lane.b32.xlu0 %v166, 101
    %v168 = vpop.permute.xlu0 %167
    %vm169 = vcmask 7168
    %s170 = scalar_lea.vmem %s1, 27
    %171 = vst.msk [vmem:[%s170] ss:$100 sm:$0x3] %vm169, %v168
    %s172 = scalar_lea.vmem [#allocation0], 1
    %s173 = smov 3
    %v174 = vld [vmem:[%s172] ss:$-1 sm:%s173]
    %175 = vrot.lane.b32.xlu0 %v174, 100
    %v176 = vpop.permute.xlu0 %175
    %vm177 = vcmask 7168
    %s178 = scalar_lea.vmem %s1, 128
    %179 = vst.msk [vmem:[%s178] ss:$-100 sm:$0x3] %vm177, %v176
    %s180 = scalar_lea.vmem [#allocation0], 1
    %s181 = smov 3
    %v182 = vld [vmem:[%s180] ss:$-1 sm:%s181]
    %183 = vrot.lane.b32.xlu0 %v182, 99
    %v184 = vpop.permute.xlu0 %183
    %vm185 = vcmask 7168
    %s186 = scalar_lea.vmem %s1, 129
    %187 = vst.msk [vmem:[%s186] ss:$-100 sm:$0x3] %vm185, %v184
    %s188 = scalar_lea.vmem [#allocation0], 1
    %s189 = smov 3
    %v190 = vld [vmem:[%s188] ss:$-1 sm:%s189]
    %191 = vrot.lane.b32.xlu0 %v190, 98
    %v192 = vpop.permute.xlu0 %191
    %vm193 = vcmask 7168
    %s194 = scalar_lea.vmem %s1, 130
    %195 = vst.msk [vmem:[%s194] ss:$-100 sm:$0x3] %vm193, %v192
    %s196 = scalar_lea.vmem [#allocation0], 1
    %s197 = smov 3
    %v198 = vld [vmem:[%s196] ss:$-1 sm:%s197]
    %199 = vrot.lane.b32.xlu0 %v198, 97
    %v200 = vpop.permute.xlu0 %199
    %vm201 = vcmask 7168
    %s202 = scalar_lea.vmem %s1, 131
    %203 = vst.msk [vmem:[%s202] ss:$-100 sm:$0x3] %vm201, %v200
    %v204 = vld [vmem:[#allocation0] sm:$0x3]
    %205 = vrot.lane.b32.xlu0 %v204, 96
    %v206 = vpop.permute.xlu0 %205
    %vm207 = vcmask 7168
    %s208 = scalar_lea.vmem %s1, 32
    %209 = vst.msk [vmem:[%s208] ss:$100 sm:$0x3] %vm207, %v206
    %v210 = vld [vmem:[#allocation0] sm:$0x3]
    %211 = vrot.lane.b32.xlu0 %v210, 95
    %v212 = vpop.permute.xlu0 %211
    %vm213 = vcmask 7168
    %s214 = scalar_lea.vmem %s1, 33
    %215 = vst.msk [vmem:[%s214] ss:$100 sm:$0x3] %vm213, %v212
    %v216 = vld [vmem:[#allocation0] sm:$0x3]
    %217 = vrot.lane.b32.xlu0 %v216, 94
    %v218 = vpop.permute.xlu0 %217
    %vm219 = vcmask 7168
    %s220 = scalar_lea.vmem %s1, 34
    %221 = vst.msk [vmem:[%s220] ss:$100 sm:$0x3] %vm219, %v218
    %v222 = vld [vmem:[#allocation0] sm:$0x3]
    %223 = vrot.lane.b32.xlu0 %v222, 93
    %v224 = vpop.permute.xlu0 %223
    %vm225 = vcmask 7168
    %s226 = scalar_lea.vmem %s1, 35
    %227 = vst.msk [vmem:[%s226] ss:$100 sm:$0x3] %vm225, %v224
    %v228 = vld [vmem:[#allocation0] sm:$0x3]
    %229 = vrot.lane.b32.xlu0 %v228, 92
    %v230 = vpop.permute.xlu0 %229
    %vm231 = vcmask 7168
    %s232 = scalar_lea.vmem %s1, 36
    %233 = vst.msk [vmem:[%s232] ss:$100 sm:$0x3] %vm231, %v230
    %v234 = vld [vmem:[#allocation0] sm:$0x3]
    %235 = vrot.lane.b32.xlu0 %v234, 91
    %v236 = vpop.permute.xlu0 %235
    %vm237 = vcmask 7168
    %s238 = scalar_lea.vmem %s1, 37
    %239 = vst.msk [vmem:[%s238] ss:$100 sm:$0x3] %vm237, %v236
    %v240 = vld [vmem:[#allocation0] sm:$0x3]
    %241 = vrot.lane.b32.xlu0 %v240, 90
    %v242 = vpop.permute.xlu0 %241
    %vm243 = vcmask 7168
    %s244 = scalar_lea.vmem %s1, 38
    %245 = vst.msk [vmem:[%s244] ss:$100 sm:$0x3] %vm243, %v242
    %v246 = vld [vmem:[#allocation0] sm:$0x3]
    %247 = vrot.lane.b32.xlu0 %v246, 89
    %v248 = vpop.permute.xlu0 %247
    %vm249 = vcmask 7168
    %s250 = scalar_lea.vmem %s1, 39
    %251 = vst.msk [vmem:[%s250] ss:$100 sm:$0x3] %vm249, %v248
    %v252 = vld [vmem:[#allocation0] sm:$0x3]
    %253 = vrot.lane.b32.xlu0 %v252, 88
    %v254 = vpop.permute.xlu0 %253
    %vm255 = vcmask 7168
    %s256 = scalar_lea.vmem %s1, 40
    %257 = vst.msk [vmem:[%s256] ss:$100 sm:$0x3] %vm255, %v254
    %v258 = vld [vmem:[#allocation0] sm:$0x3]
    %259 = vrot.lane.b32.xlu0 %v258, 87
    %v260 = vpop.permute.xlu0 %259
    %vm261 = vcmask 7168
    %s262 = scalar_lea.vmem %s1, 41
    %263 = vst.msk [vmem:[%s262] ss:$100 sm:$0x3] %vm261, %v260
    %v264 = vld [vmem:[#allocation0] sm:$0x3]
    %265 = vrot.lane.b32.xlu0 %v264, 86
    %v266 = vpop.permute.xlu0 %265
    %vm267 = vcmask 7168
    %s268 = scalar_lea.vmem %s1, 42
    %269 = vst.msk [vmem:[%s268] ss:$100 sm:$0x3] %vm267, %v266
    %v270 = vld [vmem:[#allocation0] sm:$0x3]
    %271 = vrot.lane.b32.xlu0 %v270, 85
    %v272 = vpop.permute.xlu0 %271
    %vm273 = vcmask 7168
    %s274 = scalar_lea.vmem %s1, 43
    %275 = vst.msk [vmem:[%s274] ss:$100 sm:$0x3] %vm273, %v272
    %v276 = vld [vmem:[#allocation0] sm:$0x3]
    %277 = vrot.lane.b32.xlu0 %v276, 84
    %v278 = vpop.permute.xlu0 %277
    %vm279 = vcmask 7168
    %s280 = scalar_lea.vmem %s1, 44
    %281 = vst.msk [vmem:[%s280] ss:$100 sm:$0x3] %vm279, %v278
    %v282 = vld [vmem:[#allocation0] sm:$0x3]
    %283 = vrot.lane.b32.xlu0 %v282, 83
    %v284 = vpop.permute.xlu0 %283
    %vm285 = vcmask 7168
    %s286 = scalar_lea.vmem %s1, 45
    %287 = vst.msk [vmem:[%s286] ss:$100 sm:$0x3] %vm285, %v284
    %v288 = vld [vmem:[#allocation0] sm:$0x3]
    %289 = vrot.lane.b32.xlu0 %v288, 82
    %v290 = vpop.permute.xlu0 %289
    %vm291 = vcmask 7168
    %s292 = scalar_lea.vmem %s1, 46
    %293 = vst.msk [vmem:[%s292] ss:$100 sm:$0x3] %vm291, %v290
    %v294 = vld [vmem:[#allocation0] sm:$0x3]
    %295 = vrot.lane.b32.xlu0 %v294, 81
    %v296 = vpop.permute.xlu0 %295
    %vm297 = vcmask 7168
    %s298 = scalar_lea.vmem %s1, 47
    %299 = vst.msk [vmem:[%s298] ss:$100 sm:$0x3] %vm297, %v296
    %v300 = vld [vmem:[#allocation0] sm:$0x3]
    %301 = vrot.lane.b32.xlu0 %v300, 80
    %v302 = vpop.permute.xlu0 %301
    %vm303 = vcmask 7168
    %s304 = scalar_lea.vmem %s1, 48
    %305 = vst.msk [vmem:[%s304] ss:$100 sm:$0x3] %vm303, %v302
    %v306 = vld [vmem:[#allocation0] sm:$0x3]
    %307 = vrot.lane.b32.xlu0 %v306, 79
    %v308 = vpop.permute.xlu0 %307
    %vm309 = vcmask 7168
    %s310 = scalar_lea.vmem %s1, 49
    %311 = vst.msk [vmem:[%s310] ss:$100 sm:$0x3] %vm309, %v308
    %v312 = vld [vmem:[#allocation0] sm:$0x3]
    %313 = vrot.lane.b32.xlu0 %v312, 78
    %v314 = vpop.permute.xlu0 %313
    %vm315 = vcmask 7168
    %s316 = scalar_lea.vmem %s1, 50
    %317 = vst.msk [vmem:[%s316] ss:$100 sm:$0x3] %vm315, %v314
    %v318 = vld [vmem:[#allocation0] sm:$0x3]
    %319 = vrot.lane.b32.xlu0 %v318, 77
    %v320 = vpop.permute.xlu0 %319
    %vm321 = vcmask 7168
    %s322 = scalar_lea.vmem %s1, 51
    %323 = vst.msk [vmem:[%s322] ss:$100 sm:$0x3] %vm321, %v320
    %v324 = vld [vmem:[#allocation0] sm:$0x3]
    %325 = vrot.lane.b32.xlu0 %v324, 76
    %v326 = vpop.permute.xlu0 %325
    %vm327 = vcmask 7168
    %s328 = scalar_lea.vmem %s1, 52
    %329 = vst.msk [vmem:[%s328] ss:$100 sm:$0x3] %vm327, %v326
    %v330 = vld [vmem:[#allocation0] sm:$0x3]
    %331 = vrot.lane.b32.xlu0 %v330, 75
    %v332 = vpop.permute.xlu0 %331
    %vm333 = vcmask 7168
    %s334 = scalar_lea.vmem %s1, 53
    %335 = vst.msk [vmem:[%s334] ss:$100 sm:$0x3] %vm333, %v332
    %v336 = vld [vmem:[#allocation0] sm:$0x3]
    %337 = vrot.lane.b32.xlu0 %v336, 74
    %v338 = vpop.permute.xlu0 %337
    %vm339 = vcmask 7168
    %s340 = scalar_lea.vmem %s1, 54
    %341 = vst.msk [vmem:[%s340] ss:$100 sm:$0x3] %vm339, %v338
    %v342 = vld [vmem:[#allocation0] sm:$0x3]
    %343 = vrot.lane.b32.xlu0 %v342, 73
    %v344 = vpop.permute.xlu0 %343
    %vm345 = vcmask 7168
    %s346 = scalar_lea.vmem %s1, 55
    %347 = vst.msk [vmem:[%s346] ss:$100 sm:$0x3] %vm345, %v344
    %v348 = vld [vmem:[#allocation0] sm:$0x3]
    %349 = vrot.lane.b32.xlu0 %v348, 72
    %v350 = vpop.permute.xlu0 %349
    %vm351 = vcmask 7168
    %s352 = scalar_lea.vmem %s1, 56
    %353 = vst.msk [vmem:[%s352] ss:$100 sm:$0x3] %vm351, %v350
    %v354 = vld [vmem:[#allocation0] sm:$0x3]
    %355 = vrot.lane.b32.xlu0 %v354, 71
    %v356 = vpop.permute.xlu0 %355
    %vm357 = vcmask 7168
    %s358 = scalar_lea.vmem %s1, 57
    %359 = vst.msk [vmem:[%s358] ss:$100 sm:$0x3] %vm357, %v356
    %v360 = vld [vmem:[#allocation0] sm:$0x3]
    %361 = vrot.lane.b32.xlu0 %v360, 70
    %v362 = vpop.permute.xlu0 %361
    %vm363 = vcmask 7168
    %s364 = scalar_lea.vmem %s1, 58
    %365 = vst.msk [vmem:[%s364] ss:$100 sm:$0x3] %vm363, %v362
    %v366 = vld [vmem:[#allocation0] sm:$0x3]
    %367 = vrot.lane.b32.xlu0 %v366, 69
    %v368 = vpop.permute.xlu0 %367
    %vm369 = vcmask 7168
    %s370 = scalar_lea.vmem %s1, 59
    %371 = vst.msk [vmem:[%s370] ss:$100 sm:$0x3] %vm369, %v368
    %s372 = scalar_lea.vmem [#allocation0], 1
    %s373 = smov 3
    %v374 = vld [vmem:[%s372] ss:$-1 sm:%s373]
    %375 = vrot.lane.b32.xlu0 %v374, 68
    %v376 = vpop.permute.xlu0 %375
    %vm377 = vcmask 7168
    %s378 = scalar_lea.vmem %s1, 160
    %379 = vst.msk [vmem:[%s378] ss:$-100 sm:$0x3] %vm377, %v376
    %s380 = scalar_lea.vmem [#allocation0], 1
    %s381 = smov 3
    %v382 = vld [vmem:[%s380] ss:$-1 sm:%s381]
    %383 = vrot.lane.b32.xlu0 %v382, 67
    %v384 = vpop.permute.xlu0 %383
    %vm385 = vcmask 7168
    %s386 = scalar_lea.vmem %s1, 161
    %387 = vst.msk [vmem:[%s386] ss:$-100 sm:$0x3] %vm385, %v384
    %s388 = scalar_lea.vmem [#allocation0], 1
    %s389 = smov 3
    %v390 = vld [vmem:[%s388] ss:$-1 sm:%s389]
    %391 = vrot.lane.b32.xlu0 %v390, 66
    %v392 = vpop.permute.xlu0 %391
    %vm393 = vcmask 7168
    %s394 = scalar_lea.vmem %s1, 162
    %395 = vst.msk [vmem:[%s394] ss:$-100 sm:$0x3] %vm393, %v392
    %s396 = scalar_lea.vmem [#allocation0], 1
    %s397 = smov 3
    %v398 = vld [vmem:[%s396] ss:$-1 sm:%s397]
    %399 = vrot.lane.b32.xlu0 %v398, 65
    %v400 = vpop.permute.xlu0 %399
    %vm401 = vcmask 7168
    %s402 = scalar_lea.vmem %s1, 163
    %403 = vst.msk [vmem:[%s402] ss:$-100 sm:$0x3] %vm401, %v400
    %v404 = vld [vmem:[#allocation0] sm:$0x3]
    %405 = vrot.lane.b32.xlu0 %v404, 64
    %v406 = vpop.permute.xlu0 %405
    %vm407 = vcmask 7168
    %s408 = scalar_lea.vmem %s1, 64
    %409 = vst.msk [vmem:[%s408] ss:$100 sm:$0x3] %vm407, %v406
    %v410 = vld [vmem:[#allocation0] sm:$0x3]
    %411 = vrot.lane.b32.xlu0 %v410, 63
    %v412 = vpop.permute.xlu0 %411
    %vm413 = vcmask 7168
    %s414 = scalar_lea.vmem %s1, 65
    %415 = vst.msk [vmem:[%s414] ss:$100 sm:$0x3] %vm413, %v412
    %v416 = vld [vmem:[#allocation0] sm:$0x3]
    %417 = vrot.lane.b32.xlu0 %v416, 62
    %v418 = vpop.permute.xlu0 %417
    %vm419 = vcmask 7168
    %s420 = scalar_lea.vmem %s1, 66
    %421 = vst.msk [vmem:[%s420] ss:$100 sm:$0x3] %vm419, %v418
    %v422 = vld [vmem:[#allocation0] sm:$0x3]
    %423 = vrot.lane.b32.xlu0 %v422, 61
    %v424 = vpop.permute.xlu0 %423
    %vm425 = vcmask 7168
    %s426 = scalar_lea.vmem %s1, 67
    %427 = vst.msk [vmem:[%s426] ss:$100 sm:$0x3] %vm425, %v424
    %v428 = vld [vmem:[#allocation0] sm:$0x3]
    %429 = vrot.lane.b32.xlu0 %v428, 60
    %v430 = vpop.permute.xlu0 %429
    %vm431 = vcmask 7168
    %s432 = scalar_lea.vmem %s1, 68
    %433 = vst.msk [vmem:[%s432] ss:$100 sm:$0x3] %vm431, %v430
    %v434 = vld [vmem:[#allocation0] sm:$0x3]
    %435 = vrot.lane.b32.xlu0 %v434, 59
    %v436 = vpop.permute.xlu0 %435
    %vm437 = vcmask 7168
    %s438 = scalar_lea.vmem %s1, 69
    %439 = vst.msk [vmem:[%s438] ss:$100 sm:$0x3] %vm437, %v436
    %v440 = vld [vmem:[#allocation0] sm:$0x3]
    %441 = vrot.lane.b32.xlu0 %v440, 58
    %v442 = vpop.permute.xlu0 %441
    %vm443 = vcmask 7168
    %s444 = scalar_lea.vmem %s1, 70
    %445 = vst.msk [vmem:[%s444] ss:$100 sm:$0x3] %vm443, %v442
    %v446 = vld [vmem:[#allocation0] sm:$0x3]
    %447 = vrot.lane.b32.xlu0 %v446, 57
    %v448 = vpop.permute.xlu0 %447
    %vm449 = vcmask 7168
    %s450 = scalar_lea.vmem %s1, 71
    %451 = vst.msk [vmem:[%s450] ss:$100 sm:$0x3] %vm449, %v448
    %v452 = vld [vmem:[#allocation0] sm:$0x3]
    %453 = vrot.lane.b32.xlu0 %v452, 56
    %v454 = vpop.permute.xlu0 %453
    %vm455 = vcmask 7168
    %s456 = scalar_lea.vmem %s1, 72
    %457 = vst.msk [vmem:[%s456] ss:$100 sm:$0x3] %vm455, %v454
    %v458 = vld [vmem:[#allocation0] sm:$0x3]
    %459 = vrot.lane.b32.xlu0 %v458, 55
    %v460 = vpop.permute.xlu0 %459
    %vm461 = vcmask 7168
    %s462 = scalar_lea.vmem %s1, 73
    %463 = vst.msk [vmem:[%s462] ss:$100 sm:$0x3] %vm461, %v460
    %v464 = vld [vmem:[#allocation0] sm:$0x3]
    %465 = vrot.lane.b32.xlu0 %v464, 54
    %v466 = vpop.permute.xlu0 %465
    %vm467 = vcmask 7168
    %s468 = scalar_lea.vmem %s1, 74
    %469 = vst.msk [vmem:[%s468] ss:$100 sm:$0x3] %vm467, %v466
    %v470 = vld [vmem:[#allocation0] sm:$0x3]
    %471 = vrot.lane.b32.xlu0 %v470, 53
    %v472 = vpop.permute.xlu0 %471
    %vm473 = vcmask 7168
    %s474 = scalar_lea.vmem %s1, 75
    %475 = vst.msk [vmem:[%s474] ss:$100 sm:$0x3] %vm473, %v472
    %v476 = vld [vmem:[#allocation0] sm:$0x3]
    %477 = vrot.lane.b32.xlu0 %v476, 52
    %v478 = vpop.permute.xlu0 %477
    %vm479 = vcmask 7168
    %s480 = scalar_lea.vmem %s1, 76
    %481 = vst.msk [vmem:[%s480] ss:$100 sm:$0x3] %vm479, %v478
    %v482 = vld [vmem:[#allocation0] sm:$0x3]
    %483 = vrot.lane.b32.xlu0 %v482, 51
    %v484 = vpop.permute.xlu0 %483
    %vm485 = vcmask 7168
    %s486 = scalar_lea.vmem %s1, 77
    %487 = vst.msk [vmem:[%s486] ss:$100 sm:$0x3] %vm485, %v484
    %v488 = vld [vmem:[#allocation0] sm:$0x3]
    %489 = vrot.lane.b32.xlu0 %v488, 50
    %v490 = vpop.permute.xlu0 %489
    %vm491 = vcmask 7168
    %s492 = scalar_lea.vmem %s1, 78
    %493 = vst.msk [vmem:[%s492] ss:$100 sm:$0x3] %vm491, %v490
    %v494 = vld [vmem:[#allocation0] sm:$0x3]
    %495 = vrot.lane.b32.xlu0 %v494, 49
    %v496 = vpop.permute.xlu0 %495
    %vm497 = vcmask 7168
    %s498 = scalar_lea.vmem %s1, 79
    %499 = vst.msk [vmem:[%s498] ss:$100 sm:$0x3] %vm497, %v496
    %v500 = vld [vmem:[#allocation0] sm:$0x3]
    %501 = vrot.lane.b32.xlu0 %v500, 48
    %v502 = vpop.permute.xlu0 %501
    %vm503 = vcmask 7168
    %s504 = scalar_lea.vmem %s1, 80
    %505 = vst.msk [vmem:[%s504] ss:$100 sm:$0x3] %vm503, %v502
    %v506 = vld [vmem:[#allocation0] sm:$0x3]
    %507 = vrot.lane.b32.xlu0 %v506, 47
    %v508 = vpop.permute.xlu0 %507
    %vm509 = vcmask 7168
    %s510 = scalar_lea.vmem %s1, 81
    %511 = vst.msk [vmem:[%s510] ss:$100 sm:$0x3] %vm509, %v508
    %v512 = vld [vmem:[#allocation0] sm:$0x3]
    %513 = vrot.lane.b32.xlu0 %v512, 46
    %v514 = vpop.permute.xlu0 %513
    %vm515 = vcmask 7168
    %s516 = scalar_lea.vmem %s1, 82
    %517 = vst.msk [vmem:[%s516] ss:$100 sm:$0x3] %vm515, %v514
    %v518 = vld [vmem:[#allocation0] sm:$0x3]
    %519 = vrot.lane.b32.xlu0 %v518, 45
    %v520 = vpop.permute.xlu0 %519
    %vm521 = vcmask 7168
    %s522 = scalar_lea.vmem %s1, 83
    %523 = vst.msk [vmem:[%s522] ss:$100 sm:$0x3] %vm521, %v520
    %v524 = vld [vmem:[#allocation0] sm:$0x3]
    %525 = vrot.lane.b32.xlu0 %v524, 44
    %v526 = vpop.permute.xlu0 %525
    %vm527 = vcmask 7168
    %s528 = scalar_lea.vmem %s1, 84
    %529 = vst.msk [vmem:[%s528] ss:$100 sm:$0x3] %vm527, %v526
    %v530 = vld [vmem:[#allocation0] sm:$0x3]
    %531 = vrot.lane.b32.xlu0 %v530, 43
    %v532 = vpop.permute.xlu0 %531
    %vm533 = vcmask 7168
    %s534 = scalar_lea.vmem %s1, 85
    %535 = vst.msk [vmem:[%s534] ss:$100 sm:$0x3] %vm533, %v532
    %v536 = vld [vmem:[#allocation0] sm:$0x3]
    %537 = vrot.lane.b32.xlu0 %v536, 42
    %v538 = vpop.permute.xlu0 %537
    %vm539 = vcmask 7168
    %s540 = scalar_lea.vmem %s1, 86
    %541 = vst.msk [vmem:[%s540] ss:$100 sm:$0x3] %vm539, %v538
    %v542 = vld [vmem:[#allocation0] sm:$0x3]
    %543 = vrot.lane.b32.xlu0 %v542, 41
    %v544 = vpop.permute.xlu0 %543
    %vm545 = vcmask 7168
    %s546 = scalar_lea.vmem %s1, 87
    %547 = vst.msk [vmem:[%s546] ss:$100 sm:$0x3] %vm545, %v544
    %v548 = vld [vmem:[#allocation0] sm:$0x3]
    %549 = vrot.lane.b32.xlu0 %v548, 40
    %v550 = vpop.permute.xlu0 %549
    %vm551 = vcmask 7168
    %s552 = scalar_lea.vmem %s1, 88
    %553 = vst.msk [vmem:[%s552] ss:$100 sm:$0x3] %vm551, %v550
    %v554 = vld [vmem:[#allocation0] sm:$0x3]
    %555 = vrot.lane.b32.xlu0 %v554, 39
    %v556 = vpop.permute.xlu0 %555
    %vm557 = vcmask 7168
    %s558 = scalar_lea.vmem %s1, 89
    %559 = vst.msk [vmem:[%s558] ss:$100 sm:$0x3] %vm557, %v556
    %v560 = vld [vmem:[#allocation0] sm:$0x3]
    %561 = vrot.lane.b32.xlu0 %v560, 38
    %v562 = vpop.permute.xlu0 %561
    %vm563 = vcmask 7168
    %s564 = scalar_lea.vmem %s1, 90
    %565 = vst.msk [vmem:[%s564] ss:$100 sm:$0x3] %vm563, %v562
    %v566 = vld [vmem:[#allocation0] sm:$0x3]
    %567 = vrot.lane.b32.xlu0 %v566, 37
    %v568 = vpop.permute.xlu0 %567
    %vm569 = vcmask 7168
    %s570 = scalar_lea.vmem %s1, 91
    %571 = vst.msk [vmem:[%s570] ss:$100 sm:$0x3] %vm569, %v568
    %s572 = scalar_lea.vmem [#allocation0], 1
    %s573 = smov 3
    %v574 = vld [vmem:[%s572] ss:$-1 sm:%s573]
    %575 = vrot.lane.b32.xlu0 %v574, 36
    %v576 = vpop.permute.xlu0 %575
    %vm577 = vcmask 7168
    %s578 = scalar_lea.vmem %s1, 192
    %579 = vst.msk [vmem:[%s578] ss:$-100 sm:$0x3] %vm577, %v576
    %s580 = scalar_lea.vmem [#allocation0], 1
    %s581 = smov 3
    %v582 = vld [vmem:[%s580] ss:$-1 sm:%s581]
    %583 = vrot.lane.b32.xlu0 %v582, 35
    %v584 = vpop.permute.xlu0 %583
    %vm585 = vcmask 7168
    %s586 = scalar_lea.vmem %s1, 193
    %587 = vst.msk [vmem:[%s586] ss:$-100 sm:$0x3] %vm585, %v584
    %s588 = scalar_lea.vmem [#allocation0], 1
    %s589 = smov 3
    %v590 = vld [vmem:[%s588] ss:$-1 sm:%s589]
    %591 = vrot.lane.b32.xlu0 %v590, 34
    %v592 = vpop.permute.xlu0 %591
    %vm593 = vcmask 7168
    %s594 = scalar_lea.vmem %s1, 194
    %595 = vst.msk [vmem:[%s594] ss:$-100 sm:$0x3] %vm593, %v592
    %s596 = scalar_lea.vmem [#allocation0], 1
    %s597 = smov 3
    %v598 = vld [vmem:[%s596] ss:$-1 sm:%s597]
    %599 = vrot.lane.b32.xlu0 %v598, 33
    %v600 = vpop.permute.xlu0 %599
    %vm601 = vcmask 7168
    %s602 = scalar_lea.vmem %s1, 195
    %603 = vst.msk [vmem:[%s602] ss:$-100 sm:$0x3] %vm601, %v600
    %v604 = vld [vmem:[#allocation0] sm:$0x3]
    %605 = vrot.lane.b32.xlu0 %v604, 32
    %v606 = vpop.permute.xlu0 %605
    %vm607 = vcmask 7168
    %s608 = scalar_lea.vmem %s1, 96
    %609 = vst.msk [vmem:[%s608] ss:$100 sm:$0x3] %vm607, %v606
    %v610 = vld [vmem:[#allocation0] sm:$0x3]
    %611 = vrot.lane.b32.xlu0 %v610, 31
    %v612 = vpop.permute.xlu0 %611
    %vm613 = vcmask 7168
    %s614 = scalar_lea.vmem %s1, 97
    %615 = vst.msk [vmem:[%s614] ss:$100 sm:$0x3] %vm613, %v612
    %v616 = vld [vmem:[#allocation0] sm:$0x3]
    %617 = vrot.lane.b32.xlu0 %v616, 30
    %v618 = vpop.permute.xlu0 %617
    %vm619 = vcmask 7168
    %s620 = scalar_lea.vmem %s1, 98
    %621 = vst.msk [vmem:[%s620] ss:$100 sm:$0x3] %vm619, %v618
    %v622 = vld [vmem:[#allocation0] sm:$0x3]
    %623 = vrot.lane.b32.xlu0 %v622, 29
    %v624 = vpop.permute.xlu0 %623
    %vm625 = vcmask 7168
    %s626 = scalar_lea.vmem %s1, 99
    %627 = vst.msk [vmem:[%s626] ss:$100 sm:$0x3] %vm625, %v624

// kernel: basic_image_model_forward.1
$region0: #{basic_image_model_forward.1}
  #allocation0 [shape = 'u32[]', space=smem, size = 0x4, offset = 0x4, fixed_abs, tag = 'smem constant byte address 0x4 - core index']
  #allocation1 [shape = 'u32[144,128]{1,0:T(1,128)}', space=vmem, size = 0x12000, scoped, tag = 'internal scratch']
  #allocation2 [shape = 'f32[232,128]{1,0:T(8,128)}', space=vmem, size = 0x1d000, scoped, tag = 'scratch operand']
  #allocation3 [shape = 'f32[232,128]{1,0:T(8,128)}', space=vmem, size = 0x1d000, scoped, tag = 'scratch operand']
  %s0 = inlined_call_operand.vmem [shape: f32[1,200,128], index: 0, kind: input, shape index: {}]
  %s1 = inlined_call_operand.vmem [shape: f32[128,128], index: 1, kind: input, shape index: {}]
  %s2 = inlined_call_operand.vmem [shape: f32[1,128], index: 2, kind: input, shape index: {}]
  %s3 = inlined_call_operand.vmem [shape: f32[9,128,128], index: 3, kind: input, shape index: {}]
  %s4 = inlined_call_operand.vmem [shape: f32[1,128], index: 4, kind: input, shape index: {}]
  %s5 = inlined_call_operand.vmem [shape: f32[9,128,128], index: 5, kind: input, shape index: {}]
  %s6 = inlined_call_operand.vmem [shape: f32[1,128], index: 6, kind: input, shape index: {}]
  %s7 = inlined_call_operand.vmem [shape: f32[9,128,128], index: 7, kind: input, shape index: {}]
  %s8 = inlined_call_operand.vmem [shape: f32[1,128], index: 8, kind: input, shape index: {}]
  %s9 = inlined_call_operand.vmem [shape: f32[128,128], index: 9, kind: input, shape index: {}]
  %s10 = inlined_call_operand.vmem [shape: f32[1,128], index: 10, kind: input, shape index: {}]
  %s11 = inlined_call_operand.vmem [shape: f32[128,10], index: 11, kind: input, shape index: {}]
  %s12 = inlined_call_operand.vmem [shape: f32[1,10], index: 12, kind: input, shape index: {}]
  %s13 = inlined_call_operand.vmem [shape: f32[200,1], index: 13, kind: input, shape index: {}]
  %s14 = inlined_call_operand.vmem [shape: f32[2,200], index: 14, kind: input, shape index: {}]
  %s15 = inlined_call_operand.hbm [shape: f32[1,2,10], index: 15, kind: output, shape index: {}]
  %s16 = sld [smem:[#allocation0]]
  $region70: #{basic_image_model_forward.1} parent=0
    _
  %s18 = ssub.s32 1, %s16
  %s19 = scalar_select 0, %s18, %s16
  $region1: #{basic_image_model_forward.1} parent=0
    #allocation4 [shape = 'u8[1024]{0}', space=vmem, size = 0x400, scoped, tag = 'output window, operand 0, single buffered']
    #allocation5 [shape = 's32[1]{0}', space=sflag, size = 0x4, scoped, tag = 'scoped memory for basic_image_model_forward.1']
    %20 = vsyncpa [#allocation5], 0
    // Predicated region
    $region2: #{basic_image_model_forward.1} parent=1 // pred_check
      _
    $region3: #{basic_image_model_forward.1} parent=1 // pred_check_branch
      %22 = sbr.rel (0) target = $region5
    $region4: #{basic_image_model_forward.1} parent=1 // pred_region
      _
    $region5: #{basic_image_model_forward.1} parent=1 // pred_fallthru
      _
    // Predicated region
    $region6: #{basic_image_model_forward.1} parent=1 // pred_check
      _
    $region7: #{basic_image_model_forward.1} parent=1 // pred_check_branch
      %24 = sbr.rel (0) target = $region9
    $region8: #{basic_image_model_forward.1} parent=1 // pred_region
      _
    $region9: #{basic_image_model_forward.1} parent=1 // pred_fallthru
      _
    // Predicated region
    $region10: #{basic_image_model_forward.1} parent=1 // pred_check
      _
    $region11: #{basic_image_model_forward.1} parent=1 // pred_check_branch
      %26 = sbr.rel (0) target = $region13
    $region12: #{basic_image_model_forward.1} parent=1 // pred_region
      _
    $region13: #{basic_image_model_forward.1} parent=1 // pred_fallthru
      _
    // Predicated region
    $region14: #{basic_image_model_forward.1} parent=1 // pred_check
      _
    $region15: #{basic_image_model_forward.1} parent=1 // pred_check_branch
      %28 = sbr.rel (0) target = $region17
    $region16: #{basic_image_model_forward.1} parent=1 // pred_region
      _
    $region17: #{basic_image_model_forward.1} parent=1 // pred_fallthru
      _
    // Predicated region
    $region18: #{basic_image_model_forward.1} parent=1 // pred_check
      _
    $region19: #{basic_image_model_forward.1} parent=1 // pred_check_branch
      %30 = sbr.rel (0) target = $region21
    $region20: #{basic_image_model_forward.1} parent=1 // pred_region
      _
    $region21: #{basic_image_model_forward.1} parent=1 // pred_fallthru
      _
    // Predicated region
    $region22: #{basic_image_model_forward.1} parent=1 // pred_check
      _
    $region23: #{basic_image_model_forward.1} parent=1 // pred_check_branch
      %32 = sbr.rel (0) target = $region25
    $region24: #{basic_image_model_forward.1} parent=1 // pred_region
      _
    $region25: #{basic_image_model_forward.1} parent=1 // pred_fallthru
      _
    // Predicated region
    $region26: #{basic_image_model_forward.1} parent=1 // pred_check
      _
    $region27: #{basic_image_model_forward.1} parent=1 // pred_check_branch
      %34 = sbr.rel (0) target = $region29
    $region28: #{basic_image_model_forward.1} parent=1 // pred_region
      _
    $region29: #{basic_image_model_forward.1} parent=1 // pred_fallthru
      _
    // Predicated region
    $region30: #{basic_image_model_forward.1} parent=1 // pred_check
      _
    $region31: #{basic_image_model_forward.1} parent=1 // pred_check_branch
      %36 = sbr.rel (0) target = $region33
    $region32: #{basic_image_model_forward.1} parent=1 // pred_region
      _
    $region33: #{basic_image_model_forward.1} parent=1 // pred_fallthru
      _
    // Predicated region
    $region34: #{basic_image_model_forward.1} parent=1 // pred_check
      _
    $region35: #{basic_image_model_forward.1} parent=1 // pred_check_branch
      %38 = sbr.rel (0) target = $region37
    $region36: #{basic_image_model_forward.1} parent=1 // pred_region
      _
    $region37: #{basic_image_model_forward.1} parent=1 // pred_fallthru
      _
    // Predicated region
    $region38: #{basic_image_model_forward.1} parent=1 // pred_check
      _
    $region39: #{basic_image_model_forward.1} parent=1 // pred_check_branch
      %40 = sbr.rel (0) target = $region41
    $region40: #{basic_image_model_forward.1} parent=1 // pred_region
      _
    $region41: #{basic_image_model_forward.1} parent=1 // pred_fallthru
      _
    // Predicated region
    $region42: #{basic_image_model_forward.1} parent=1 // pred_check
      _
    $region43: #{basic_image_model_forward.1} parent=1 // pred_check_branch
      %42 = sbr.rel (0) target = $region45
    $region44: #{basic_image_model_forward.1} parent=1 // pred_region
      _
    $region45: #{basic_image_model_forward.1} parent=1 // pred_fallthru
      _
    // Predicated region
    $region46: #{basic_image_model_forward.1} parent=1 // pred_check
      _
    $region47: #{basic_image_model_forward.1} parent=1 // pred_check_branch
      %44 = sbr.rel (0) target = $region49
    $region48: #{basic_image_model_forward.1} parent=1 // pred_region
      _
    $region49: #{basic_image_model_forward.1} parent=1 // pred_fallthru
      _
    // Predicated region
    $region50: #{basic_image_model_forward.1} parent=1 // pred_check
      _
    $region51: #{basic_image_model_forward.1} parent=1 // pred_check_branch
      %46 = sbr.rel (0) target = $region53
    $region52: #{basic_image_model_forward.1} parent=1 // pred_region
      _
    $region53: #{basic_image_model_forward.1} parent=1 // pred_fallthru
      _
    // Predicated region
    $region54: #{basic_image_model_forward.1} parent=1 // pred_check
      _
    $region55: #{basic_image_model_forward.1} parent=1 // pred_check_branch
      %48 = sbr.rel (0) target = $region57
    $region56: #{basic_image_model_forward.1} parent=1 // pred_region
      _
    $region57: #{basic_image_model_forward.1} parent=1 // pred_fallthru
      _
    // Predicated region
    $region58: #{basic_image_model_forward.1} parent=1 // pred_check
      _
    $region59: #{basic_image_model_forward.1} parent=1 // pred_check_branch
      %50 = sbr.rel (0) target = $region61
    $region60: #{basic_image_model_forward.1} parent=1 // pred_region
      _
    $region61: #{basic_image_model_forward.1} parent=1 // pred_fallthru
      _
    %v51 = vld [vmem:[%s13] sm:$0xff]
    %v52 = vld [vmem:[%s13 + $0x8] sm:$0xff]
    %v53 = vld [vmem:[%s13 + $0x10] sm:$0xff]
    %v54 = vld [vmem:[%s13 + $0x18] sm:$0xff]
    %v55 = vld [vmem:[%s13 + $0x20] sm:$0xff]
    %v56 = vld [vmem:[%s13 + $0x28] sm:$0xff]
    %v57 = vld [vmem:[%s13 + $0x30] sm:$0xff]
    %v58 = vld [vmem:[%s13 + $0x38] sm:$0xff]
    %v59 = vld [vmem:[%s13 + $0x40] sm:$0xff]
    %v60 = vld [vmem:[%s13 + $0x48] sm:$0xff]
    %v61 = vld [vmem:[%s13 + $0x50] sm:$0xff]
    %v62 = vld [vmem:[%s13 + $0x58] sm:$0xff]
    %v63 = vld [vmem:[%s13 + $0x60] sm:$0xff]
    %v64 = vld [vmem:[%s13 + $0x68] sm:$0xff]
    %v65 = vld [vmem:[%s13 + $0x70] sm:$0xff]
    %v66 = vld [vmem:[%s13 + $0x78] sm:$0xff]
    %v67 = vld [vmem:[%s13 + $0x80] sm:$0xff]
    %v68 = vld [vmem:[%s13 + $0x88] sm:$0xff]
    %v69 = vld [vmem:[%s13 + $0x90] sm:$0xff]
    %v70 = vld [vmem:[%s13 + $0x98] sm:$0xff]
    %v71 = vld [vmem:[%s13 + $0xa0] sm:$0xff]
    %v72 = vld [vmem:[%s13 + $0xa8] sm:$0xff]
    %v73 = vld [vmem:[%s13 + $0xb0] sm:$0xff]
    %v74 = vld [vmem:[%s13 + $0xb8] sm:$0xff]
    %v75 = vld [vmem:[%s13 + $0xc0] sm:$0xff]
    %vm76 = vcmp.gt.f32.partialorder %v51, 0.0
    %vm77 = vcmp.gt.f32.partialorder %v52, 0.0
    %vm78 = vcmp.gt.f32.partialorder %v53, 0.0
    %vm79 = vcmp.gt.f32.partialorder %v54, 0.0
    %vm80 = vcmp.gt.f32.partialorder %v55, 0.0
    %vm81 = vcmp.gt.f32.partialorder %v56, 0.0
    %vm82 = vcmp.gt.f32.partialorder %v57, 0.0
    %vm83 = vcmp.gt.f32.partialorder %v58, 0.0
    %vm84 = vcmp.gt.f32.partialorder %v59, 0.0
    %vm85 = vcmp.gt.f32.partialorder %v60, 0.0
    %vm86 = vcmp.gt.f32.partialorder %v61, 0.0
    %vm87 = vcmp.gt.f32.partialorder %v62, 0.0
    %vm88 = vcmp.gt.f32.partialorder %v63, 0.0
    %vm89 = vcmp.gt.f32.partialorder %v64, 0.0
    %vm90 = vcmp.gt.f32.partialorder %v65, 0.0
    %vm91 = vcmp.gt.f32.partialorder %v66, 0.0
    %vm92 = vcmp.gt.f32.partialorder %v67, 0.0
    %vm93 = vcmp.gt.f32.partialorder %v68, 0.0
    %vm94 = vcmp.gt.f32.partialorder %v69, 0.0
    %vm95 = vcmp.gt.f32.partialorder %v70, 0.0
    %vm96 = vcmp.gt.f32.partialorder %v71, 0.0
    %vm97 = vcmp.gt.f32.partialorder %v72, 0.0
    %vm98 = vcmp.gt.f32.partialorder %v73, 0.0
    %vm99 = vcmp.gt.f32.partialorder %v74, 0.0
    %vm100 = vcmp.gt.f32.partialorder %v75, 0.0
    %v101 = vld [vmem:[%s0] sm:$0xff]
    %v102 = vld [vmem:[%s0 + $0x8] sm:$0xff]
    %v103 = vld [vmem:[%s0 + $0x10] sm:$0xff]
    %v104 = vld [vmem:[%s0 + $0x18] sm:$0xff]
    %v105 = vld [vmem:[%s0 + $0x20] sm:$0xff]
    %v106 = vld [vmem:[%s0 + $0x28] sm:$0xff]
    %v107 = vld [vmem:[%s0 + $0x30] sm:$0xff]
    %v108 = vld [vmem:[%s0 + $0x38] sm:$0xff]
    %v109 = vld [vmem:[%s0 + $0x40] sm:$0xff]
    %v110 = vld [vmem:[%s0 + $0x48] sm:$0xff]
    %v111 = vld [vmem:[%s0 + $0x50] sm:$0xff]
    %v112 = vld [vmem:[%s0 + $0x58] sm:$0xff]
    %v113 = vld [vmem:[%s0 + $0x60] sm:$0xff]
    %v114 = vld [vmem:[%s0 + $0x68] sm:$0xff]
    %v115 = vld [vmem:[%s0 + $0x70] sm:$0xff]
    %v116 = vld [vmem:[%s0 + $0x78] sm:$0xff]
    %v117 = vld [vmem:[%s0 + $0x80] sm:$0xff]
    %v118 = vld [vmem:[%s0 + $0x88] sm:$0xff]
    %v119 = vld [vmem:[%s0 + $0x90] sm:$0xff]
    %v120 = vld [vmem:[%s0 + $0x98] sm:$0xff]
    %v121 = vld [vmem:[%s0 + $0xa0] sm:$0xff]
    %v122 = vld [vmem:[%s0 + $0xa8] sm:$0xff]
    %v123 = vld [vmem:[%s0 + $0xb0] sm:$0xff]
    %v124 = vld [vmem:[%s0 + $0xb8] sm:$0xff]
    %v125 = vld [vmem:[%s0 + $0xc0] sm:$0xff]
    %v126 = vld [vmem:[%s1] sm:$0xff]
    %v127 = vld [vmem:[%s1 + $0x8] sm:$0xff]
    %v128 = vld [vmem:[%s1 + $0x10] sm:$0xff]
    %v129 = vld [vmem:[%s1 + $0x18] sm:$0xff]
    %v130 = vld [vmem:[%s1 + $0x20] sm:$0xff]
    %v131 = vld [vmem:[%s1 + $0x28] sm:$0xff]
    %v132 = vld [vmem:[%s1 + $0x30] sm:$0xff]
    %v133 = vld [vmem:[%s1 + $0x38] sm:$0xff]
    %v134 = vld [vmem:[%s1 + $0x40] sm:$0xff]
    %v135 = vld [vmem:[%s1 + $0x48] sm:$0xff]
    %v136 = vld [vmem:[%s1 + $0x50] sm:$0xff]
    %v137 = vld [vmem:[%s1 + $0x58] sm:$0xff]
    %v138 = vld [vmem:[%s1 + $0x60] sm:$0xff]
    %v139 = vld [vmem:[%s1 + $0x68] sm:$0xff]
    %v140 = vld [vmem:[%s1 + $0x70] sm:$0xff]
    %v141 = vld [vmem:[%s1 + $0x78] sm:$0xff]
    %v142 = vld [vmem:[%s2] sm:$0x1]
    %v144 = vlaneseq
    %v145 = vshrl.u32 %v144, 7
    %v146 = vsub.s32 0, %v145
    %v147 = vrot.slane %v142, %v146
    %149 = vmatprep.subr.mxu0 0.0
    %150 = vmatpush1.msra.mxu0 %v141
    %151 = vmatprep.subr.mxu0 0.0
    %152 = vmatpush1.msra.mxu0 %v140
    %153 = vmatprep.subr.mxu0 0.0
    %154 = vmatpush1.msra.mxu0 %v139
    %155 = vmatprep.subr.mxu0 0.0
    %156 = vmatpush1.msra.mxu0 %v138
    %157 = vmatprep.subr.mxu0 0.0
    %158 = vmatpush1.msra.mxu0 %v137
    %159 = vmatprep.subr.mxu0 0.0
    %160 = vmatpush1.msra.mxu0 %v136
    %161 = vmatprep.subr.mxu0 0.0
    %162 = vmatpush1.msra.mxu0 %v135
    %163 = vmatprep.subr.mxu0 0.0
    %164 = vmatpush1.msra.mxu0 %v134
    %165 = vmatprep.subr.mxu0 0.0
    %166 = vmatpush1.msra.mxu0 %v133
    %167 = vmatprep.subr.mxu0 0.0
    %168 = vmatpush1.msra.mxu0 %v132
    %169 = vmatprep.subr.mxu0 0.0
    %170 = vmatpush1.msra.mxu0 %v131
    %171 = vmatprep.subr.mxu0 0.0
    %172 = vmatpush1.msra.mxu0 %v130
    %173 = vmatprep.subr.mxu0 0.0
    %174 = vmatpush1.msra.mxu0 %v129
    %175 = vmatprep.subr.mxu0 0.0
    %176 = vmatpush1.msra.mxu0 %v128
    %177 = vmatprep.subr.mxu0 0.0
    %178 = vmatpush1.msra.mxu0 %v127
    %179 = vmatprep.subr.mxu0 0.0
    %180 = vmatpush1.msra.mxu0 %v126
    %181 = vmatprep.subr.mxu0 0.0
    %182 = vmatpush2.msra.mxu0 0.0
    %183 = vmatprep.subr.mxu0 0.0
    %184 = vmatpush2.msra.mxu0 0.0
    %185 = vmatprep.subr.mxu0 0.0
    %186 = vmatpush2.msra.mxu0 0.0
    %187 = vmatprep.subr.mxu0 0.0
    %188 = vmatpush2.msra.mxu0 0.0
    %189 = vmatprep.subr.mxu0 0.0
    %190 = vmatpush2.msra.mxu0 0.0
    %191 = vmatprep.subr.mxu0 0.0
    %192 = vmatpush2.msra.mxu0 0.0
    %193 = vmatprep.subr.mxu0 0.0
    %194 = vmatpush2.msra.mxu0 0.0
    %195 = vmatprep.subr.mxu0 0.0
    %196 = vmatpush2.msra.mxu0 0.0
    %197 = vmatprep.subr.mxu0 0.0
    %198 = vmatpush2.msra.mxu0 0.0
    %199 = vmatprep.subr.mxu0 0.0
    %200 = vmatpush2.msra.mxu0 0.0
    %201 = vmatprep.subr.mxu0 0.0
    %202 = vmatpush2.msra.mxu0 0.0
    %203 = vmatprep.subr.mxu0 0.0
    %204 = vmatpush2.msra.mxu0 0.0
    %205 = vmatprep.subr.mxu0 0.0
    %206 = vmatpush2.msra.mxu0 0.0
    %207 = vmatprep.subr.mxu0 0.0
    %208 = vmatpush2.msra.mxu0 0.0
    %209 = vmatprep.subr.mxu0 0.0
    %210 = vmatpush2.msra.mxu0 0.0
    %211 = vmatprep.subr.mxu0 0.0
    %212 = vmatpush2.msra.mxu0 0.0
    %213 = vmatprep.mubr.f32.mxu0 0.0
    %214 = vmatmul.mubr.f32.gmra.mxu0 %v101
    %v215 = vpop.f32.mrf.mxu0
    %v216 = vadd.f32 %v147, %v215
    %v217 = vpop.f32.mrf.mxu0
    %218 = vmatprep.mubr.f32.mxu0 0.0
    %219 = vmatmul.mubr.f32.gmra.mxu0 %v102
    %v220 = vpop.f32.mrf.mxu0
    %v221 = vadd.f32 %v147, %v220
    %v222 = vpop.f32.mrf.mxu0
    %223 = vmatprep.mubr.f32.mxu0 0.0
    %224 = vmatmul.mubr.f32.gmra.mxu0 %v103
    %v225 = vpop.f32.mrf.mxu0
    %v226 = vadd.f32 %v147, %v225
    %v227 = vpop.f32.mrf.mxu0
    %228 = vmatprep.mubr.f32.mxu0 0.0
    %229 = vmatmul.mubr.f32.gmra.mxu0 %v104
    %v230 = vpop.f32.mrf.mxu0
    %v231 = vadd.f32 %v147, %v230
    %v232 = vpop.f32.mrf.mxu0
    %233 = vmatprep.mubr.f32.mxu0 0.0
    %234 = vmatmul.mubr.f32.gmra.mxu0 %v105
    %v235 = vpop.f32.mrf.mxu0
    %v236 = vadd.f32 %v147, %v235
    %v237 = vpop.f32.mrf.mxu0
    %238 = vmatprep.mubr.f32.mxu0 0.0
    %239 = vmatmul.mubr.f32.gmra.mxu0 %v106
    %v240 = vpop.f32.mrf.mxu0
    %v241 = vadd.f32 %v147, %v240
    %v242 = vpop.f32.mrf.mxu0
    %243 = vmatprep.mubr.f32.mxu0 0.0
    %244 = vmatmul.mubr.f32.gmra.mxu0 %v107
    %v245 = vpop.f32.mrf.mxu0
    %v246 = vadd.f32 %v147, %v245
    %v247 = vpop.f32.mrf.mxu0
    %248 = vmatprep.mubr.f32.mxu0 0.0
    %249 = vmatmul.mubr.f32.gmra.mxu0 %v108
    %v250 = vpop.f32.mrf.mxu0
    %v251 = vadd.f32 %v147, %v250
    %v252 = vpop.f32.mrf.mxu0
    %253 = vmatprep.mubr.f32.mxu0 0.0
    %254 = vmatmul.mubr.f32.gmra.mxu0 %v109
    %v255 = vpop.f32.mrf.mxu0
    %v256 = vadd.f32 %v147, %v255
    %v257 = vpop.f32.mrf.mxu0
    %258 = vmatprep.mubr.f32.mxu0 0.0
    %259 = vmatmul.mubr.f32.gmra.mxu0 %v110
    %v260 = vpop.f32.mrf.mxu0
    %v261 = vadd.f32 %v147, %v260
    %v262 = vpop.f32.mrf.mxu0
    %263 = vmatprep.mubr.f32.mxu0 0.0
    %264 = vmatmul.mubr.f32.gmra.mxu0 %v111
    %v265 = vpop.f32.mrf.mxu0
    %v266 = vadd.f32 %v147, %v265
    %v267 = vpop.f32.mrf.mxu0
    %268 = vmatprep.mubr.f32.mxu0 0.0
    %269 = vmatmul.mubr.f32.gmra.mxu0 %v112
    %v270 = vpop.f32.mrf.mxu0
    %v271 = vadd.f32 %v147, %v270
    %v272 = vpop.f32.mrf.mxu0
    %273 = vmatprep.mubr.f32.mxu0 0.0
    %274 = vmatmul.mubr.f32.gmra.mxu0 %v113
    %v275 = vpop.f32.mrf.mxu0
    %v276 = vadd.f32 %v147, %v275
    %v277 = vpop.f32.mrf.mxu0
    %278 = vmatprep.mubr.f32.mxu0 0.0
    %279 = vmatmul.mubr.f32.gmra.mxu0 %v114
    %v280 = vpop.f32.mrf.mxu0
    %v281 = vadd.f32 %v147, %v280
    %v282 = vpop.f32.mrf.mxu0
    %283 = vmatprep.mubr.f32.mxu0 0.0
    %284 = vmatmul.mubr.f32.gmra.mxu0 %v115
    %v285 = vpop.f32.mrf.mxu0
    %v286 = vadd.f32 %v147, %v285
    %v287 = vpop.f32.mrf.mxu0
    %288 = vmatprep.mubr.f32.mxu0 0.0
    %289 = vmatmul.mubr.f32.gmra.mxu0 %v116
    %v290 = vpop.f32.mrf.mxu0
    %v291 = vadd.f32 %v147, %v290
    %v292 = vpop.f32.mrf.mxu0
    %293 = vmatprep.mubr.f32.mxu0 0.0
    %294 = vmatmul.mubr.f32.gmra.mxu0 %v117
    %v295 = vpop.f32.mrf.mxu0
    %v296 = vadd.f32 %v147, %v295
    %v297 = vpop.f32.mrf.mxu0
    %298 = vmatprep.mubr.f32.mxu0 0.0
    %299 = vmatmul.mubr.f32.gmra.mxu0 %v118
    %v300 = vpop.f32.mrf.mxu0
    %v301 = vadd.f32 %v147, %v300
    %v302 = vpop.f32.mrf.mxu0
    %303 = vmatprep.mubr.f32.mxu0 0.0
    %304 = vmatmul.mubr.f32.gmra.mxu0 %v119
    %v305 = vpop.f32.mrf.mxu0
    %v306 = vadd.f32 %v147, %v305
    %v307 = vpop.f32.mrf.mxu0
    %308 = vmatprep.mubr.f32.mxu0 0.0
    %309 = vmatmul.mubr.f32.gmra.mxu0 %v120
    %v310 = vpop.f32.mrf.mxu0
    %v311 = vadd.f32 %v147, %v310
    %v312 = vpop.f32.mrf.mxu0
    %313 = vmatprep.mubr.f32.mxu0 0.0
    %314 = vmatmul.mubr.f32.gmra.mxu0 %v121
    %v315 = vpop.f32.mrf.mxu0
    %v316 = vadd.f32 %v147, %v315
    %v317 = vpop.f32.mrf.mxu0
    %318 = vmatprep.mubr.f32.mxu0 0.0
    %319 = vmatmul.mubr.f32.gmra.mxu0 %v122
    %v320 = vpop.f32.mrf.mxu0
    %v321 = vadd.f32 %v147, %v320
    %v322 = vpop.f32.mrf.mxu0
    %323 = vmatprep.mubr.f32.mxu0 0.0
    %324 = vmatmul.mubr.f32.gmra.mxu0 %v123
    %v325 = vpop.f32.mrf.mxu0
    %v326 = vadd.f32 %v147, %v325
    %v327 = vpop.f32.mrf.mxu0
    %328 = vmatprep.mubr.f32.mxu0 0.0
    %329 = vmatmul.mubr.f32.gmra.mxu0 %v124
    %v330 = vpop.f32.mrf.mxu0
    %v331 = vadd.f32 %v147, %v330
    %v332 = vpop.f32.mrf.mxu0
    %333 = vmatprep.mubr.f32.mxu0 0.0
    %334 = vmatmul.mubr.f32.gmra.mxu0 %v125
    %v335 = vpop.f32.mrf.mxu0
    %v336 = vadd.f32 %v147, %v335
    %v337 = vpop.f32.mrf.mxu0
    %338 = vdwg.mxu0
    %v339 = vsub.f32 0.0, %v216
    %v340 = vsub.f32 0.0, %v221
    %v341 = vsub.f32 0.0, %v226
    %v342 = vsub.f32 0.0, %v231
    %v343 = vsub.f32 0.0, %v236
    %v344 = vsub.f32 0.0, %v241
    %v345 = vsub.f32 0.0, %v246
    %v346 = vsub.f32 0.0, %v251
    %v347 = vsub.f32 0.0, %v256
    %v348 = vsub.f32 0.0, %v261
    %v349 = vsub.f32 0.0, %v266
    %v350 = vsub.f32 0.0, %v271
    %v351 = vsub.f32 0.0, %v276
    %v352 = vsub.f32 0.0, %v281
    %v353 = vsub.f32 0.0, %v286
    %v354 = vsub.f32 0.0, %v291
    %v355 = vsub.f32 0.0, %v296
    %v356 = vsub.f32 0.0, %v301
    %v357 = vsub.f32 0.0, %v306
    %v358 = vsub.f32 0.0, %v311
    %v359 = vsub.f32 0.0, %v316
    %v360 = vsub.f32 0.0, %v321
    %v361 = vsub.f32 0.0, %v326
    %v362 = vsub.f32 0.0, %v331
    %v363 = vsub.f32 0.0, %v336
    %v364 = vmul.f32 %v339, 1.442695
    %v365 = vpow.pop %v364
    %v366 = vmul.f32 %v340, 1.442695
    %v367 = vpow.pop %v366
    %v368 = vmul.f32 %v341, 1.442695
    %v369 = vpow.pop %v368
    %v370 = vmul.f32 %v342, 1.442695
    %v371 = vpow.pop %v370
    %v372 = vmul.f32 %v343, 1.442695
    %v373 = vpow.pop %v372
    %v374 = vmul.f32 %v344, 1.442695
    %v375 = vpow.pop %v374
    %v376 = vmul.f32 %v345, 1.442695
    %v377 = vpow.pop %v376
    %v378 = vmul.f32 %v346, 1.442695
    %v379 = vpow.pop %v378
    %v380 = vmul.f32 %v347, 1.442695
    %v381 = vpow.pop %v380
    %v382 = vmul.f32 %v348, 1.442695
    %v383 = vpow.pop %v382
    %v384 = vmul.f32 %v349, 1.442695
    %v385 = vpow.pop %v384
    %v386 = vmul.f32 %v350, 1.442695
    %v387 = vpow.pop %v386
    %v388 = vmul.f32 %v351, 1.442695
    %v389 = vpow.pop %v388
    %v390 = vmul.f32 %v352, 1.442695
    %v391 = vpow.pop %v390
    %v392 = vmul.f32 %v353, 1.442695
    %v393 = vpow.pop %v392
    %v394 = vmul.f32 %v354, 1.442695
    %v395 = vpow.pop %v394
    %v396 = vmul.f32 %v355, 1.442695
    %v397 = vpow.pop %v396
    %v398 = vmul.f32 %v356, 1.442695
    %v399 = vpow.pop %v398
    %v400 = vmul.f32 %v357, 1.442695
    %v401 = vpow.pop %v400
    %v402 = vmul.f32 %v358, 1.442695
    %v403 = vpow.pop %v402
    %v404 = vmul.f32 %v359, 1.442695
    %v405 = vpow.pop %v404
    %v406 = vmul.f32 %v360, 1.442695
    %v407 = vpow.pop %v406
    %v408 = vmul.f32 %v361, 1.442695
    %v409 = vpow.pop %v408
    %v410 = vmul.f32 %v362, 1.442695
    %v411 = vpow.pop %v410
    %v412 = vmul.f32 %v363, 1.442695
    %v413 = vpow.pop %v412
    %v414 = vadd.f32 %v365, 1.0
    %v415 = vadd.f32 %v367, 1.0
    %v416 = vadd.f32 %v369, 1.0
    %v417 = vadd.f32 %v371, 1.0
    %v418 = vadd.f32 %v373, 1.0
    %v419 = vadd.f32 %v375, 1.0
    %v420 = vadd.f32 %v377, 1.0
    %v421 = vadd.f32 %v379, 1.0
    %v422 = vadd.f32 %v381, 1.0
    %v423 = vadd.f32 %v383, 1.0
    %v424 = vadd.f32 %v385, 1.0
    %v425 = vadd.f32 %v387, 1.0
    %v426 = vadd.f32 %v389, 1.0
    %v427 = vadd.f32 %v391, 1.0
    %v428 = vadd.f32 %v393, 1.0
    %v429 = vadd.f32 %v395, 1.0
    %v430 = vadd.f32 %v397, 1.0
    %v431 = vadd.f32 %v399, 1.0
    %v432 = vadd.f32 %v401, 1.0
    %v433 = vadd.f32 %v403, 1.0
    %v434 = vadd.f32 %v405, 1.0
    %v435 = vadd.f32 %v407, 1.0
    %v436 = vadd.f32 %v409, 1.0
    %v437 = vadd.f32 %v411, 1.0
    %v438 = vadd.f32 %v413, 1.0
    %v439 = vrcp.pop %v414
    %v440 = vrcp.pop %v415
    %v441 = vrcp.pop %v416
    %v442 = vrcp.pop %v417
    %v443 = vrcp.pop %v418
    %v444 = vrcp.pop %v419
    %v445 = vrcp.pop %v420
    %v446 = vrcp.pop %v421
    %v447 = vrcp.pop %v422
    %v448 = vrcp.pop %v423
    %v449 = vrcp.pop %v424
    %v450 = vrcp.pop %v425
    %v451 = vrcp.pop %v426
    %v452 = vrcp.pop %v427
    %v453 = vrcp.pop %v428
    %v454 = vrcp.pop %v429
    %v455 = vrcp.pop %v430
    %v456 = vrcp.pop %v431
    %v457 = vrcp.pop %v432
    %v458 = vrcp.pop %v433
    %v459 = vrcp.pop %v434
    %v460 = vrcp.pop %v435
    %v461 = vrcp.pop %v436
    %v462 = vrcp.pop %v437
    %v463 = vrcp.pop %v438
    %v464 = vmul.f32 %v216, %v439
    %v465 = vmul.f32 %v221, %v440
    %v466 = vmul.f32 %v226, %v441
    %v467 = vmul.f32 %v231, %v442
    %v468 = vmul.f32 %v236, %v443
    %v469 = vmul.f32 %v241, %v444
    %v470 = vmul.f32 %v246, %v445
    %v471 = vmul.f32 %v251, %v446
    %v472 = vmul.f32 %v256, %v447
    %v473 = vmul.f32 %v261, %v448
    %v474 = vmul.f32 %v266, %v449
    %v475 = vmul.f32 %v271, %v450
    %v476 = vmul.f32 %v276, %v451
    %v477 = vmul.f32 %v281, %v452
    %v478 = vmul.f32 %v286, %v453
    %v479 = vmul.f32 %v291, %v454
    %v480 = vmul.f32 %v296, %v455
    %v481 = vmul.f32 %v301, %v456
    %v482 = vmul.f32 %v306, %v457
    %v483 = vmul.f32 %v311, %v458
    %v484 = vmul.f32 %v316, %v459
    %v485 = vmul.f32 %v321, %v460
    %v486 = vmul.f32 %v326, %v461
    %v487 = vmul.f32 %v331, %v462
    %v488 = vmul.f32 %v336, %v463
    %v489 = vsel %vm76, 1, 0
    %v490 = vsel %vm77, 1, 0
    %v491 = vsel %vm78, 1, 0
    %v492 = vsel %vm79, 1, 0
    %v493 = vsel %vm80, 1, 0
    %v494 = vsel %vm81, 1, 0
    %v495 = vsel %vm82, 1, 0
    %v496 = vsel %vm83, 1, 0
    %v497 = vsel %vm84, 1, 0
    %v498 = vsel %vm85, 1, 0
    %v499 = vsel %vm86, 1, 0
    %v500 = vsel %vm87, 1, 0
    %v501 = vsel %vm88, 1, 0
    %v502 = vsel %vm89, 1, 0
    %v503 = vsel %vm90, 1, 0
    %v504 = vsel %vm91, 1, 0
    %v505 = vsel %vm92, 1, 0
    %v506 = vsel %vm93, 1, 0
    %v507 = vsel %vm94, 1, 0
    %v508 = vsel %vm95, 1, 0
    %v509 = vsel %vm96, 1, 0
    %v510 = vsel %vm97, 1, 0
    %v511 = vsel %vm98, 1, 0
    %v512 = vsel %vm99, 1, 0
    %v513 = vsel %vm100, 1, 0
    %514 = vset.pattern.permute.xlu0 0
    %515 = vperm.xlu0 %514, %v489
    %v516 = vpop.permute.xlu0 %515
    %517 = vset.pattern.permute.xlu0 0
    %518 = vperm.xlu0 %517, %v490
    %v519 = vpop.permute.xlu0 %518
    %520 = vset.pattern.permute.xlu0 0
    %521 = vperm.xlu0 %520, %v491
    %v522 = vpop.permute.xlu0 %521
    %523 = vset.pattern.permute.xlu0 0
    %524 = vperm.xlu0 %523, %v492
    %v525 = vpop.permute.xlu0 %524
    %526 = vset.pattern.permute.xlu0 0
    %527 = vperm.xlu0 %526, %v493
    %v528 = vpop.permute.xlu0 %527
    %529 = vset.pattern.permute.xlu0 0
    %530 = vperm.xlu0 %529, %v494
    %v531 = vpop.permute.xlu0 %530
    %532 = vset.pattern.permute.xlu0 0
    %533 = vperm.xlu0 %532, %v495
    %v534 = vpop.permute.xlu0 %533
    %535 = vset.pattern.permute.xlu0 0
    %536 = vperm.xlu0 %535, %v496
    %v537 = vpop.permute.xlu0 %536
    %538 = vset.pattern.permute.xlu0 0
    %539 = vperm.xlu0 %538, %v497
    %v540 = vpop.permute.xlu0 %539
    %541 = vset.pattern.permute.xlu0 0
    %542 = vperm.xlu0 %541, %v498
    %v543 = vpop.permute.xlu0 %542
    %544 = vset.pattern.permute.xlu0 0
    %545 = vperm.xlu0 %544, %v499
    %v546 = vpop.permute.xlu0 %545
    %547 = vset.pattern.permute.xlu0 0
    %548 = vperm.xlu0 %547, %v500
    %v549 = vpop.permute.xlu0 %548
    %550 = vset.pattern.permute.xlu0 0
    %551 = vperm.xlu0 %550, %v501
    %v552 = vpop.permute.xlu0 %551
    %553 = vset.pattern.permute.xlu0 0
    %554 = vperm.xlu0 %553, %v502
    %v555 = vpop.permute.xlu0 %554
    %556 = vset.pattern.permute.xlu0 0
    %557 = vperm.xlu0 %556, %v503
    %v558 = vpop.permute.xlu0 %557
    %559 = vset.pattern.permute.xlu0 0
    %560 = vperm.xlu0 %559, %v504
    %v561 = vpop.permute.xlu0 %560
    %562 = vset.pattern.permute.xlu0 0
    %563 = vperm.xlu0 %562, %v505
    %v564 = vpop.permute.xlu0 %563
    %565 = vset.pattern.permute.xlu0 0
    %566 = vperm.xlu0 %565, %v506
    %v567 = vpop.permute.xlu0 %566
    %568 = vset.pattern.permute.xlu0 0
    %569 = vperm.xlu0 %568, %v507
    %v570 = vpop.permute.xlu0 %569
    %571 = vset.pattern.permute.xlu0 0
    %572 = vperm.xlu0 %571, %v508
    %v573 = vpop.permute.xlu0 %572
    %574 = vset.pattern.permute.xlu0 0
    %575 = vperm.xlu0 %574, %v509
    %v576 = vpop.permute.xlu0 %575
    %577 = vset.pattern.permute.xlu0 0
    %578 = vperm.xlu0 %577, %v510
    %v579 = vpop.permute.xlu0 %578
    %580 = vset.pattern.permute.xlu0 0
    %581 = vperm.xlu0 %580, %v511
    %v582 = vpop.permute.xlu0 %581
    %583 = vset.pattern.permute.xlu0 0
    %584 = vperm.xlu0 %583, %v512
    %v585 = vpop.permute.xlu0 %584
    %586 = vset.pattern.permute.xlu0 0
    %587 = vperm.xlu0 %586, %v513
    %v588 = vpop.permute.xlu0 %587
    %vm589 = vcmp.eq.s32.totalorder %v516, 1
    %vm590 = vcmp.eq.s32.totalorder %v519, 1
    %vm591 = vcmp.eq.s32.totalorder %v522, 1
    %vm592 = vcmp.eq.s32.totalorder %v525, 1
    %vm593 = vcmp.eq.s32.totalorder %v528, 1
    %vm594 = vcmp.eq.s32.totalorder %v531, 1
    %vm595 = vcmp.eq.s32.totalorder %v534, 1
    %vm596 = vcmp.eq.s32.totalorder %v537, 1
    %vm597 = vcmp.eq.s32.totalorder %v540, 1
    %vm598 = vcmp.eq.s32.totalorder %v543, 1
    %vm599 = vcmp.eq.s32.totalorder %v546, 1
    %vm600 = vcmp.eq.s32.totalorder %v549, 1
    %vm601 = vcmp.eq.s32.totalorder %v552, 1
    %vm602 = vcmp.eq.s32.totalorder %v555, 1
    %vm603 = vcmp.eq.s32.totalorder %v558, 1
    %vm604 = vcmp.eq.s32.totalorder %v561, 1
    %vm605 = vcmp.eq.s32.totalorder %v564, 1
    %vm606 = vcmp.eq.s32.totalorder %v567, 1
    %vm607 = vcmp.eq.s32.totalorder %v570, 1
    %vm608 = vcmp.eq.s32.totalorder %v573, 1
    %vm609 = vcmp.eq.s32.totalorder %v576, 1
    %vm610 = vcmp.eq.s32.totalorder %v579, 1
    %vm611 = vcmp.eq.s32.totalorder %v582, 1
    %vm612 = vcmp.eq.s32.totalorder %v585, 1
    %vm613 = vcmp.eq.s32.totalorder %v588, 1
    %v614 = vsel %vm589, %v464, 0.0
    %v615 = vsel %vm590, %v465, 0.0
    %v616 = vsel %vm591, %v466, 0.0
    %v617 = vsel %vm592, %v467, 0.0
    %v618 = vsel %vm593, %v468, 0.0
    %v619 = vsel %vm594, %v469, 0.0
    %v620 = vsel %vm595, %v470, 0.0
    %v621 = vsel %vm596, %v471, 0.0
    %v622 = vsel %vm597, %v472, 0.0
    %v623 = vsel %vm598, %v473, 0.0
    %v624 = vsel %vm599, %v474, 0.0
    %v625 = vsel %vm600, %v475, 0.0
    %v626 = vsel %vm601, %v476, 0.0
    %v627 = vsel %vm602, %v477, 0.0
    %v628 = vsel %vm603, %v478, 0.0
    %v629 = vsel %vm604, %v479, 0.0
    %v630 = vsel %vm605, %v480, 0.0
    %v631 = vsel %vm606, %v481, 0.0
    %v632 = vsel %vm607, %v482, 0.0
    %v633 = vsel %vm608, %v483, 0.0
    %v634 = vsel %vm609, %v484, 0.0
    %v635 = vsel %vm610, %v485, 0.0
    %v636 = vsel %vm611, %v486, 0.0
    %v637 = vsel %vm612, %v487, 0.0
    %v638 = vsel %vm613, %v488, 0.0
    %639 = vst [vmem:[#allocation2 + $0x10] sm:$0xff] %v614
    %640 = vst [vmem:[#allocation2 + $0x18] sm:$0xff] %v615
    %641 = vst [vmem:[#allocation2 + $0x20] sm:$0xff] %v616
    %642 = vst [vmem:[#allocation2 + $0x28] sm:$0xff] %v617
    %643 = vst [vmem:[#allocation2 + $0x30] sm:$0xff] %v618
    %644 = vst [vmem:[#allocation2 + $0x38] sm:$0xff] %v619
    %645 = vst [vmem:[#allocation2 + $0x40] sm:$0xff] %v620
    %646 = vst [vmem:[#allocation2 + $0x48] sm:$0xff] %v621
    %647 = vst [vmem:[#allocation2 + $0x50] sm:$0xff] %v622
    %648 = vst [vmem:[#allocation2 + $0x58] sm:$0xff] %v623
    %649 = vst [vmem:[#allocation2 + $0x60] sm:$0xff] %v624
    %650 = vst [vmem:[#allocation2 + $0x68] sm:$0xff] %v625
    %651 = vst [vmem:[#allocation2 + $0x70] sm:$0xff] %v626
    %652 = vst [vmem:[#allocation2 + $0x78] sm:$0xff] %v627
    %653 = vst [vmem:[#allocation2 + $0x80] sm:$0xff] %v628
    %654 = vst [vmem:[#allocation2 + $0x88] sm:$0xff] %v629
    %655 = vst [vmem:[#allocation2 + $0x90] sm:$0xff] %v630
    %656 = vst [vmem:[#allocation2 + $0x98] sm:$0xff] %v631
    %657 = vst [vmem:[#allocation2 + $0xa0] sm:$0xff] %v632
    %658 = vst [vmem:[#allocation2 + $0xa8] sm:$0xff] %v633
    %659 = vst [vmem:[#allocation2 + $0xb0] sm:$0xff] %v634
    %660 = vst [vmem:[#allocation2 + $0xb8] sm:$0xff] %v635
    %661 = vst [vmem:[#allocation2 + $0xc0] sm:$0xff] %v636
    %662 = vst [vmem:[#allocation2 + $0xc8] sm:$0xff] %v637
    %663 = vst [vmem:[#allocation2 + $0xd0] sm:$0xff] %v638
    %v664 = vld [vmem:[#allocation2 + $0x5] sm:$0xff]
    %v665 = vld [vmem:[#allocation2 + $0xd] sm:$0xff]
    %v666 = vld [vmem:[#allocation2 + $0x15] sm:$0xff]
    %v667 = vld [vmem:[#allocation2 + $0x1d] sm:$0xff]
    %v668 = vld [vmem:[#allocation2 + $0x25] sm:$0xff]
    %v669 = vld [vmem:[#allocation2 + $0x2d] sm:$0xff]
    %v670 = vld [vmem:[#allocation2 + $0x35] sm:$0xff]
    %v671 = vld [vmem:[#allocation2 + $0x3d] sm:$0xff]
    %v672 = vld [vmem:[#allocation2 + $0x45] sm:$0xff]
    %v673 = vld [vmem:[#allocation2 + $0x4d] sm:$0xff]
    %v674 = vld [vmem:[#allocation2 + $0x55] sm:$0xff]
    %v675 = vld [vmem:[#allocation2 + $0x5d] sm:$0xff]
    %v676 = vld [vmem:[#allocation2 + $0x65] sm:$0xff]
    %v677 = vld [vmem:[#allocation2 + $0x6d] sm:$0xff]
    %v678 = vld [vmem:[#allocation2 + $0x75] sm:$0xff]
    %v679 = vld [vmem:[#allocation2 + $0x7d] sm:$0xff]
    %v680 = vld [vmem:[#allocation2 + $0x85] sm:$0xff]
    %v681 = vld [vmem:[#allocation2 + $0x8d] sm:$0xff]
    %v682 = vld [vmem:[#allocation2 + $0x95] sm:$0xff]
    %v683 = vld [vmem:[#allocation2 + $0x9d] sm:$0xff]
    %v684 = vld [vmem:[#allocation2 + $0xa5] sm:$0xff]
    %v685 = vld [vmem:[#allocation2 + $0xad] sm:$0xff]
    %v686 = vld [vmem:[#allocation2 + $0xb5] sm:$0xff]
    %v687 = vld [vmem:[#allocation2 + $0xbd] sm:$0xff]
    %v688 = vld [vmem:[#allocation2 + $0xc5] sm:$0xff]
    %v689 = vld [vmem:[%s3] sm:$0xff]
    %v690 = vld [vmem:[%s3 + $0x8] sm:$0xff]
    %v691 = vld [vmem:[%s3 + $0x10] sm:$0xff]
    %v692 = vld [vmem:[%s3 + $0x18] sm:$0xff]
    %v693 = vld [vmem:[%s3 + $0x20] sm:$0xff]
    %v694 = vld [vmem:[%s3 + $0x28] sm:$0xff]
    %v695 = vld [vmem:[%s3 + $0x30] sm:$0xff]
    %v696 = vld [vmem:[%s3 + $0x38] sm:$0xff]
    %v697 = vld [vmem:[%s3 + $0x40] sm:$0xff]
    %v698 = vld [vmem:[%s3 + $0x48] sm:$0xff]
    %v699 = vld [vmem:[%s3 + $0x50] sm:$0xff]
    %v700 = vld [vmem:[%s3 + $0x58] sm:$0xff]
    %v701 = vld [vmem:[%s3 + $0x60] sm:$0xff]
    %v702 = vld [vmem:[%s3 + $0x68] sm:$0xff]
    %v703 = vld [vmem:[%s3 + $0x70] sm:$0xff]
    %v704 = vld [vmem:[%s3 + $0x78] sm:$0xff]
    %v705 = vld [vmem:[#allocation2 + $0x6] sm:$0xff]
    %v706 = vld [vmem:[#allocation2 + $0xe] sm:$0xff]
    %v707 = vld [vmem:[#allocation2 + $0x16] sm:$0xff]
    %v708 = vld [vmem:[#allocation2 + $0x1e] sm:$0xff]
    %v709 = vld [vmem:[#allocation2 + $0x26] sm:$0xff]
    %v710 = vld [vmem:[#allocation2 + $0x2e] sm:$0xff]
    %v711 = vld [vmem:[#allocation2 + $0x36] sm:$0xff]
    %v712 = vld [vmem:[#allocation2 + $0x3e] sm:$0xff]
    %v713 = vld [vmem:[#allocation2 + $0x46] sm:$0xff]
    %v714 = vld [vmem:[#allocation2 + $0x4e] sm:$0xff]
    %v715 = vld [vmem:[#allocation2 + $0x56] sm:$0xff]
    %v716 = vld [vmem:[#allocation2 + $0x5e] sm:$0xff]
    %v717 = vld [vmem:[#allocation2 + $0x66] sm:$0xff]
    %v718 = vld [vmem:[#allocation2 + $0x6e] sm:$0xff]
    %v719 = vld [vmem:[#allocation2 + $0x76] sm:$0xff]
    %v720 = vld [vmem:[#allocation2 + $0x7e] sm:$0xff]
    %v721 = vld [vmem:[#allocation2 + $0x86] sm:$0xff]
    %v722 = vld [vmem:[#allocation2 + $0x8e] sm:$0xff]
    %v723 = vld [vmem:[#allocation2 + $0x96] sm:$0xff]
    %v724 = vld [vmem:[#allocation2 + $0x9e] sm:$0xff]
    %v725 = vld [vmem:[#allocation2 + $0xa6] sm:$0xff]
    %v726 = vld [vmem:[#allocation2 + $0xae] sm:$0xff]
    %v727 = vld [vmem:[#allocation2 + $0xb6] sm:$0xff]
    %v728 = vld [vmem:[#allocation2 + $0xbe] sm:$0xff]
    %v729 = vld [vmem:[#allocation2 + $0xc6] sm:$0xff]
    %s730 = scalar_lea.vmem %s3, 128
    %v731 = vld [vmem:[%s730] sm:$0xff]
    %v732 = vld [vmem:[%s730 + $0x8] sm:$0xff]
    %v733 = vld [vmem:[%s730 + $0x10] sm:$0xff]
    %v734 = vld [vmem:[%s730 + $0x18] sm:$0xff]
    %v735 = vld [vmem:[%s730 + $0x20] sm:$0xff]
    %v736 = vld [vmem:[%s730 + $0x28] sm:$0xff]
    %v737 = vld [vmem:[%s730 + $0x30] sm:$0xff]
    %v738 = vld [vmem:[%s730 + $0x38] sm:$0xff]
    %v739 = vld [vmem:[%s730 + $0x40] sm:$0xff]
    %v740 = vld [vmem:[%s730 + $0x48] sm:$0xff]
    %v741 = vld [vmem:[%s730 + $0x50] sm:$0xff]
    %v742 = vld [vmem:[%s730 + $0x58] sm:$0xff]
    %v743 = vld [vmem:[%s730 + $0x60] sm:$0xff]
    %v744 = vld [vmem:[%s730 + $0x68] sm:$0xff]
    %v745 = vld [vmem:[%s730 + $0x70] sm:$0xff]
    %v746 = vld [vmem:[%s730 + $0x78] sm:$0xff]
    %747 = vmatprep.subr.mxu0 0.0
    %748 = vmatpush1.msra.mxu0 %v746
    %749 = vmatprep.subr.mxu0 0.0
    %750 = vmatpush1.msra.mxu0 %v745
    %751 = vmatprep.subr.mxu0 0.0
    %752 = vmatpush1.msra.mxu0 %v744
    %753 = vmatprep.subr.mxu0 0.0
    %754 = vmatpush1.msra.mxu0 %v743
    %755 = vmatprep.subr.mxu0 0.0
    %756 = vmatpush1.msra.mxu0 %v742
    %757 = vmatprep.subr.mxu0 0.0
    %758 = vmatpush1.msra.mxu0 %v741
    %759 = vmatprep.subr.mxu0 0.0
    %760 = vmatpush1.msra.mxu0 %v740
    %761 = vmatprep.subr.mxu0 0.0
    %762 = vmatpush1.msra.mxu0 %v739
    %763 = vmatprep.subr.mxu0 0.0
    %764 = vmatpush1.msra.mxu0 %v738
    %765 = vmatprep.subr.mxu0 0.0
    %766 = vmatpush1.msra.mxu0 %v737
    %767 = vmatprep.subr.mxu0 0.0
    %768 = vmatpush1.msra.mxu0 %v736
    %769 = vmatprep.subr.mxu0 0.0
    %770 = vmatpush1.msra.mxu0 %v735
    %771 = vmatprep.subr.mxu0 0.0
    %772 = vmatpush1.msra.mxu0 %v734
    %773 = vmatprep.subr.mxu0 0.0
    %774 = vmatpush1.msra.mxu0 %v733
    %775 = vmatprep.subr.mxu0 0.0
    %776 = vmatpush1.msra.mxu0 %v732
    %777 = vmatprep.subr.mxu0 0.0
    %778 = vmatpush1.msra.mxu0 %v731
    %779 = vmatprep.subr.mxu0 0.0
    %780 = vmatpush2.msra.mxu0 0.0
    %781 = vmatprep.subr.mxu0 0.0
    %782 = vmatpush2.msra.mxu0 0.0
    %783 = vmatprep.subr.mxu0 0.0
    %784 = vmatpush2.msra.mxu0 0.0
    %785 = vmatprep.subr.mxu0 0.0
    %786 = vmatpush2.msra.mxu0 0.0
    %787 = vmatprep.subr.mxu0 0.0
    %788 = vmatpush2.msra.mxu0 0.0
    %789 = vmatprep.subr.mxu0 0.0
    %790 = vmatpush2.msra.mxu0 0.0
    %791 = vmatprep.subr.mxu0 0.0
    %792 = vmatpush2.msra.mxu0 0.0
    %793 = vmatprep.subr.mxu0 0.0
    %794 = vmatpush2.msra.mxu0 0.0
    %795 = vmatprep.subr.mxu0 0.0
    %796 = vmatpush2.msra.mxu0 0.0
    %797 = vmatprep.subr.mxu0 0.0
    %798 = vmatpush2.msra.mxu0 0.0
    %799 = vmatprep.subr.mxu0 0.0
    %800 = vmatpush2.msra.mxu0 0.0
    %801 = vmatprep.subr.mxu0 0.0
    %802 = vmatpush2.msra.mxu0 0.0
    %803 = vmatprep.subr.mxu0 0.0
    %804 = vmatpush2.msra.mxu0 0.0
    %805 = vmatprep.subr.mxu0 0.0
    %806 = vmatpush2.msra.mxu0 0.0
    %807 = vmatprep.subr.mxu0 0.0
    %808 = vmatpush2.msra.mxu0 0.0
    %809 = vmatprep.subr.mxu0 0.0
    %810 = vmatpush2.msra.mxu0 0.0
    %811 = vmatprep.mubr.f32.mxu0 0.0
    %812 = vmatmul.mubr.f32.gmra.mxu0 %v705
    %v813 = vpop.f32.mrf.mxu0
    %v814 = vadd.f32 0.0, %v813
    %v815 = vpop.f32.mrf.mxu0
    %816 = vmatprep.mubr.f32.mxu0 0.0
    %817 = vmatmul.mubr.f32.gmra.mxu0 %v706
    %v818 = vpop.f32.mrf.mxu0
    %v819 = vadd.f32 0.0, %v818
    %v820 = vpop.f32.mrf.mxu0
    %821 = vmatprep.mubr.f32.mxu0 0.0
    %822 = vmatmul.mubr.f32.gmra.mxu0 %v707
    %v823 = vpop.f32.mrf.mxu0
    %v824 = vadd.f32 0.0, %v823
    %v825 = vpop.f32.mrf.mxu0
    %826 = vmatprep.mubr.f32.mxu0 0.0
    %827 = vmatmul.mubr.f32.gmra.mxu0 %v708
    %v828 = vpop.f32.mrf.mxu0
    %v829 = vadd.f32 0.0, %v828
    %v830 = vpop.f32.mrf.mxu0
    %831 = vmatprep.mubr.f32.mxu0 0.0
    %832 = vmatmul.mubr.f32.gmra.mxu0 %v709
    %v833 = vpop.f32.mrf.mxu0
    %v834 = vadd.f32 0.0, %v833
    %v835 = vpop.f32.mrf.mxu0
    %836 = vmatprep.mubr.f32.mxu0 0.0
    %837 = vmatmul.mubr.f32.gmra.mxu0 %v710
    %v838 = vpop.f32.mrf.mxu0
    %v839 = vadd.f32 0.0, %v838
    %v840 = vpop.f32.mrf.mxu0
    %841 = vmatprep.mubr.f32.mxu0 0.0
    %842 = vmatmul.mubr.f32.gmra.mxu0 %v711
    %v843 = vpop.f32.mrf.mxu0
    %v844 = vadd.f32 0.0, %v843
    %v845 = vpop.f32.mrf.mxu0
    %846 = vmatprep.mubr.f32.mxu0 0.0
    %847 = vmatmul.mubr.f32.gmra.mxu0 %v712
    %v848 = vpop.f32.mrf.mxu0
    %v849 = vadd.f32 0.0, %v848
    %v850 = vpop.f32.mrf.mxu0
    %851 = vmatprep.mubr.f32.mxu0 0.0
    %852 = vmatmul.mubr.f32.gmra.mxu0 %v713
    %v853 = vpop.f32.mrf.mxu0
    %v854 = vadd.f32 0.0, %v853
    %v855 = vpop.f32.mrf.mxu0
    %856 = vmatprep.mubr.f32.mxu0 0.0
    %857 = vmatmul.mubr.f32.gmra.mxu0 %v714
    %v858 = vpop.f32.mrf.mxu0
    %v859 = vadd.f32 0.0, %v858
    %v860 = vpop.f32.mrf.mxu0
    %861 = vmatprep.mubr.f32.mxu0 0.0
    %862 = vmatmul.mubr.f32.gmra.mxu0 %v715
    %v863 = vpop.f32.mrf.mxu0
    %v864 = vadd.f32 0.0, %v863
    %v865 = vpop.f32.mrf.mxu0
    %866 = vmatprep.mubr.f32.mxu0 0.0
    %867 = vmatmul.mubr.f32.gmra.mxu0 %v716
    %v868 = vpop.f32.mrf.mxu0
    %v869 = vadd.f32 0.0, %v868
    %v870 = vpop.f32.mrf.mxu0
    %871 = vmatprep.mubr.f32.mxu0 0.0
    %872 = vmatmul.mubr.f32.gmra.mxu0 %v717
    %v873 = vpop.f32.mrf.mxu0
    %v874 = vadd.f32 0.0, %v873
    %v875 = vpop.f32.mrf.mxu0
    %876 = vmatprep.mubr.f32.mxu0 0.0
    %877 = vmatmul.mubr.f32.gmra.mxu0 %v718
    %v878 = vpop.f32.mrf.mxu0
    %v879 = vadd.f32 0.0, %v878
    %v880 = vpop.f32.mrf.mxu0
    %881 = vmatprep.mubr.f32.mxu0 0.0
    %882 = vmatmul.mubr.f32.gmra.mxu0 %v719
    %v883 = vpop.f32.mrf.mxu0
    %v884 = vadd.f32 0.0, %v883
    %v885 = vpop.f32.mrf.mxu0
    %886 = vmatprep.mubr.f32.mxu0 0.0
    %887 = vmatmul.mubr.f32.gmra.mxu0 %v720
    %v888 = vpop.f32.mrf.mxu0
    %v889 = vadd.f32 0.0, %v888
    %v890 = vpop.f32.mrf.mxu0
    %891 = vmatprep.mubr.f32.mxu0 0.0
    %892 = vmatmul.mubr.f32.gmra.mxu0 %v721
    %v893 = vpop.f32.mrf.mxu0
    %v894 = vadd.f32 0.0, %v893
    %v895 = vpop.f32.mrf.mxu0
    %896 = vmatprep.mubr.f32.mxu0 0.0
    %897 = vmatmul.mubr.f32.gmra.mxu0 %v722
    %v898 = vpop.f32.mrf.mxu0
    %v899 = vadd.f32 0.0, %v898
    %v900 = vpop.f32.mrf.mxu0
    %901 = vmatprep.mubr.f32.mxu0 0.0
    %902 = vmatmul.mubr.f32.gmra.mxu0 %v723
    %v903 = vpop.f32.mrf.mxu0
    %v904 = vadd.f32 0.0, %v903
    %v905 = vpop.f32.mrf.mxu0
    %906 = vmatprep.mubr.f32.mxu0 0.0
    %907 = vmatmul.mubr.f32.gmra.mxu0 %v724
    %v908 = vpop.f32.mrf.mxu0
    %v909 = vadd.f32 0.0, %v908
    %v910 = vpop.f32.mrf.mxu0
    %911 = vmatprep.mubr.f32.mxu0 0.0
    %912 = vmatmul.mubr.f32.gmra.mxu0 %v725
    %v913 = vpop.f32.mrf.mxu0
    %v914 = vadd.f32 0.0, %v913
    %v915 = vpop.f32.mrf.mxu0
    %916 = vmatprep.mubr.f32.mxu0 0.0
    %917 = vmatmul.mubr.f32.gmra.mxu0 %v726
    %v918 = vpop.f32.mrf.mxu0
    %v919 = vadd.f32 0.0, %v918
    %v920 = vpop.f32.mrf.mxu0
    %921 = vmatprep.mubr.f32.mxu0 0.0
    %922 = vmatmul.mubr.f32.gmra.mxu0 %v727
    %v923 = vpop.f32.mrf.mxu0
    %v924 = vadd.f32 0.0, %v923
    %v925 = vpop.f32.mrf.mxu0
    %926 = vmatprep.mubr.f32.mxu0 0.0
    %927 = vmatmul.mubr.f32.gmra.mxu0 %v728
    %v928 = vpop.f32.mrf.mxu0
    %v929 = vadd.f32 0.0, %v928
    %v930 = vpop.f32.mrf.mxu0
    %931 = vmatprep.mubr.f32.mxu0 0.0
    %932 = vmatmul.mubr.f32.gmra.mxu0 %v729
    %v933 = vpop.f32.mrf.mxu0
    %v934 = vadd.f32 0.0, %v933
    %v935 = vpop.f32.mrf.mxu0
    %936 = vdwg.mxu0
    %937 = vmatprep.subr.mxu0 0.0
    %938 = vmatpush1.msra.mxu0 %v704
    %939 = vmatprep.subr.mxu0 0.0
    %940 = vmatpush1.msra.mxu0 %v703
    %941 = vmatprep.subr.mxu0 0.0
    %942 = vmatpush1.msra.mxu0 %v702
    %943 = vmatprep.subr.mxu0 0.0
    %944 = vmatpush1.msra.mxu0 %v701
    %945 = vmatprep.subr.mxu0 0.0
    %946 = vmatpush1.msra.mxu0 %v700
    %947 = vmatprep.subr.mxu0 0.0
    %948 = vmatpush1.msra.mxu0 %v699
    %949 = vmatprep.subr.mxu0 0.0
    %950 = vmatpush1.msra.mxu0 %v698
    %951 = vmatprep.subr.mxu0 0.0
    %952 = vmatpush1.msra.mxu0 %v697
    %953 = vmatprep.subr.mxu0 0.0
    %954 = vmatpush1.msra.mxu0 %v696
    %955 = vmatprep.subr.mxu0 0.0
    %956 = vmatpush1.msra.mxu0 %v695
    %957 = vmatprep.subr.mxu0 0.0
    %958 = vmatpush1.msra.mxu0 %v694
    %959 = vmatprep.subr.mxu0 0.0
    %960 = vmatpush1.msra.mxu0 %v693
    %961 = vmatprep.subr.mxu0 0.0
    %962 = vmatpush1.msra.mxu0 %v692
    %963 = vmatprep.subr.mxu0 0.0
    %964 = vmatpush1.msra.mxu0 %v691
    %965 = vmatprep.subr.mxu0 0.0
    %966 = vmatpush1.msra.mxu0 %v690
    %967 = vmatprep.subr.mxu0 0.0
    %968 = vmatpush1.msra.mxu0 %v689
    %969 = vmatprep.subr.mxu0 0.0
    %970 = vmatpush2.msra.mxu0 0.0
    %971 = vmatprep.subr.mxu0 0.0
    %972 = vmatpush2.msra.mxu0 0.0
    %973 = vmatprep.subr.mxu0 0.0
    %974 = vmatpush2.msra.mxu0 0.0
    %975 = vmatprep.subr.mxu0 0.0
    %976 = vmatpush2.msra.mxu0 0.0
    %977 = vmatprep.subr.mxu0 0.0
    %978 = vmatpush2.msra.mxu0 0.0
    %979 = vmatprep.subr.mxu0 0.0
    %980 = vmatpush2.msra.mxu0 0.0
    %981 = vmatprep.subr.mxu0 0.0
    %982 = vmatpush2.msra.mxu0 0.0
    %983 = vmatprep.subr.mxu0 0.0
    %984 = vmatpush2.msra.mxu0 0.0
    %985 = vmatprep.subr.mxu0 0.0
    %986 = vmatpush2.msra.mxu0 0.0
    %987 = vmatprep.subr.mxu0 0.0
    %988 = vmatpush2.msra.mxu0 0.0
    %989 = vmatprep.subr.mxu0 0.0
    %990 = vmatpush2.msra.mxu0 0.0
    %991 = vmatprep.subr.mxu0 0.0
    %992 = vmatpush2.msra.mxu0 0.0
    %993 = vmatprep.subr.mxu0 0.0
    %994 = vmatpush2.msra.mxu0 0.0
    %995 = vmatprep.subr.mxu0 0.0
    %996 = vmatpush2.msra.mxu0 0.0
    %997 = vmatprep.subr.mxu0 0.0
    %998 = vmatpush2.msra.mxu0 0.0
    %999 = vmatprep.subr.mxu0 0.0
    %1000 = vmatpush2.msra.mxu0 0.0
    %1001 = vmatprep.mubr.f32.mxu0 0.0
    %1002 = vmatmul.mubr.f32.gmra.mxu0 %v664
    %v1003 = vpop.f32.mrf.mxu0
    %v1004 = vadd.f32 %v814, %v1003
    %v1005 = vpop.f32.mrf.mxu0
    %1006 = vmatprep.mubr.f32.mxu0 0.0
    %1007 = vmatmul.mubr.f32.gmra.mxu0 %v665
    %v1008 = vpop.f32.mrf.mxu0
    %v1009 = vadd.f32 %v819, %v1008
    %v1010 = vpop.f32.mrf.mxu0
    %1011 = vmatprep.mubr.f32.mxu0 0.0
    %1012 = vmatmul.mubr.f32.gmra.mxu0 %v666
    %v1013 = vpop.f32.mrf.mxu0
    %v1014 = vadd.f32 %v824, %v1013
    %v1015 = vpop.f32.mrf.mxu0
    %1016 = vmatprep.mubr.f32.mxu0 0.0
    %1017 = vmatmul.mubr.f32.gmra.mxu0 %v667
    %v1018 = vpop.f32.mrf.mxu0
    %v1019 = vadd.f32 %v829, %v1018
    %v1020 = vpop.f32.mrf.mxu0
    %1021 = vmatprep.mubr.f32.mxu0 0.0
    %1022 = vmatmul.mubr.f32.gmra.mxu0 %v668
    %v1023 = vpop.f32.mrf.mxu0
    %v1024 = vadd.f32 %v834, %v1023
    %v1025 = vpop.f32.mrf.mxu0
    %1026 = vmatprep.mubr.f32.mxu0 0.0
    %1027 = vmatmul.mubr.f32.gmra.mxu0 %v669
    %v1028 = vpop.f32.mrf.mxu0
    %v1029 = vadd.f32 %v839, %v1028
    %v1030 = vpop.f32.mrf.mxu0
    %1031 = vmatprep.mubr.f32.mxu0 0.0
    %1032 = vmatmul.mubr.f32.gmra.mxu0 %v670
    %v1033 = vpop.f32.mrf.mxu0
    %v1034 = vadd.f32 %v844, %v1033
    %v1035 = vpop.f32.mrf.mxu0
    %1036 = vmatprep.mubr.f32.mxu0 0.0
    %1037 = vmatmul.mubr.f32.gmra.mxu0 %v671
    %v1038 = vpop.f32.mrf.mxu0
    %v1039 = vadd.f32 %v849, %v1038
    %v1040 = vpop.f32.mrf.mxu0
    %1041 = vmatprep.mubr.f32.mxu0 0.0
    %1042 = vmatmul.mubr.f32.gmra.mxu0 %v672
    %v1043 = vpop.f32.mrf.mxu0
    %v1044 = vadd.f32 %v854, %v1043
    %v1045 = vpop.f32.mrf.mxu0
    %1046 = vmatprep.mubr.f32.mxu0 0.0
    %1047 = vmatmul.mubr.f32.gmra.mxu0 %v673
    %v1048 = vpop.f32.mrf.mxu0
    %v1049 = vadd.f32 %v859, %v1048
    %v1050 = vpop.f32.mrf.mxu0
    %1051 = vmatprep.mubr.f32.mxu0 0.0
    %1052 = vmatmul.mubr.f32.gmra.mxu0 %v674
    %v1053 = vpop.f32.mrf.mxu0
    %v1054 = vadd.f32 %v864, %v1053
    %v1055 = vpop.f32.mrf.mxu0
    %1056 = vmatprep.mubr.f32.mxu0 0.0
    %1057 = vmatmul.mubr.f32.gmra.mxu0 %v675
    %v1058 = vpop.f32.mrf.mxu0
    %v1059 = vadd.f32 %v869, %v1058
    %v1060 = vpop.f32.mrf.mxu0
    %1061 = vmatprep.mubr.f32.mxu0 0.0
    %1062 = vmatmul.mubr.f32.gmra.mxu0 %v676
    %v1063 = vpop.f32.mrf.mxu0
    %v1064 = vadd.f32 %v874, %v1063
    %v1065 = vpop.f32.mrf.mxu0
    %1066 = vmatprep.mubr.f32.mxu0 0.0
    %1067 = vmatmul.mubr.f32.gmra.mxu0 %v677
    %v1068 = vpop.f32.mrf.mxu0
    %v1069 = vadd.f32 %v879, %v1068
    %v1070 = vpop.f32.mrf.mxu0
    %1071 = vmatprep.mubr.f32.mxu0 0.0
    %1072 = vmatmul.mubr.f32.gmra.mxu0 %v678
    %v1073 = vpop.f32.mrf.mxu0
    %v1074 = vadd.f32 %v884, %v1073
    %v1075 = vpop.f32.mrf.mxu0
    %1076 = vmatprep.mubr.f32.mxu0 0.0
    %1077 = vmatmul.mubr.f32.gmra.mxu0 %v679
    %v1078 = vpop.f32.mrf.mxu0
    %v1079 = vadd.f32 %v889, %v1078
    %v1080 = vpop.f32.mrf.mxu0
    %1081 = vmatprep.mubr.f32.mxu0 0.0
    %1082 = vmatmul.mubr.f32.gmra.mxu0 %v680
    %v1083 = vpop.f32.mrf.mxu0
    %v1084 = vadd.f32 %v894, %v1083
    %v1085 = vpop.f32.mrf.mxu0
    %1086 = vmatprep.mubr.f32.mxu0 0.0
    %1087 = vmatmul.mubr.f32.gmra.mxu0 %v681
    %v1088 = vpop.f32.mrf.mxu0
    %v1089 = vadd.f32 %v899, %v1088
    %v1090 = vpop.f32.mrf.mxu0
    %1091 = vmatprep.mubr.f32.mxu0 0.0
    %1092 = vmatmul.mubr.f32.gmra.mxu0 %v682
    %v1093 = vpop.f32.mrf.mxu0
    %v1094 = vadd.f32 %v904, %v1093
    %v1095 = vpop.f32.mrf.mxu0
    %1096 = vmatprep.mubr.f32.mxu0 0.0
    %1097 = vmatmul.mubr.f32.gmra.mxu0 %v683
    %v1098 = vpop.f32.mrf.mxu0
    %v1099 = vadd.f32 %v909, %v1098
    %v1100 = vpop.f32.mrf.mxu0
    %1101 = vmatprep.mubr.f32.mxu0 0.0
    %1102 = vmatmul.mubr.f32.gmra.mxu0 %v684
    %v1103 = vpop.f32.mrf.mxu0
    %v1104 = vadd.f32 %v914, %v1103
    %v1105 = vpop.f32.mrf.mxu0
    %1106 = vmatprep.mubr.f32.mxu0 0.0
    %1107 = vmatmul.mubr.f32.gmra.mxu0 %v685
    %v1108 = vpop.f32.mrf.mxu0
    %v1109 = vadd.f32 %v919, %v1108
    %v1110 = vpop.f32.mrf.mxu0
    %1111 = vmatprep.mubr.f32.mxu0 0.0
    %1112 = vmatmul.mubr.f32.gmra.mxu0 %v686
    %v1113 = vpop.f32.mrf.mxu0
    %v1114 = vadd.f32 %v924, %v1113
    %v1115 = vpop.f32.mrf.mxu0
    %1116 = vmatprep.mubr.f32.mxu0 0.0
    %1117 = vmatmul.mubr.f32.gmra.mxu0 %v687
    %v1118 = vpop.f32.mrf.mxu0
    %v1119 = vadd.f32 %v929, %v1118
    %v1120 = vpop.f32.mrf.mxu0
    %1121 = vmatprep.mubr.f32.mxu0 0.0
    %1122 = vmatmul.mubr.f32.gmra.mxu0 %v688
    %v1123 = vpop.f32.mrf.mxu0
    %v1124 = vadd.f32 %v934, %v1123
    %v1125 = vpop.f32.mrf.mxu0
    %1126 = vdwg.mxu0
    %v1127 = vld [vmem:[#allocation2 + $0x7] sm:$0xff]
    %v1128 = vld [vmem:[#allocation2 + $0xf] sm:$0xff]
    %v1129 = vld [vmem:[#allocation2 + $0x17] sm:$0xff]
    %v1130 = vld [vmem:[#allocation2 + $0x1f] sm:$0xff]
    %v1131 = vld [vmem:[#allocation2 + $0x27] sm:$0xff]
    %v1132 = vld [vmem:[#allocation2 + $0x2f] sm:$0xff]
    %v1133 = vld [vmem:[#allocation2 + $0x37] sm:$0xff]
    %v1134 = vld [vmem:[#allocation2 + $0x3f] sm:$0xff]
    %v1135 = vld [vmem:[#allocation2 + $0x47] sm:$0xff]
    %v1136 = vld [vmem:[#allocation2 + $0x4f] sm:$0xff]
    %v1137 = vld [vmem:[#allocation2 + $0x57] sm:$0xff]
    %v1138 = vld [vmem:[#allocation2 + $0x5f] sm:$0xff]
    %v1139 = vld [vmem:[#allocation2 + $0x67] sm:$0xff]
    %v1140 = vld [vmem:[#allocation2 + $0x6f] sm:$0xff]
    %v1141 = vld [vmem:[#allocation2 + $0x77] sm:$0xff]
    %v1142 = vld [vmem:[#allocation2 + $0x7f] sm:$0xff]
    %v1143 = vld [vmem:[#allocation2 + $0x87] sm:$0xff]
    %v1144 = vld [vmem:[#allocation2 + $0x8f] sm:$0xff]
    %v1145 = vld [vmem:[#allocation2 + $0x97] sm:$0xff]
    %v1146 = vld [vmem:[#allocation2 + $0x9f] sm:$0xff]
    %v1147 = vld [vmem:[#allocation2 + $0xa7] sm:$0xff]
    %v1148 = vld [vmem:[#allocation2 + $0xaf] sm:$0xff]
    %v1149 = vld [vmem:[#allocation2 + $0xb7] sm:$0xff]
    %v1150 = vld [vmem:[#allocation2 + $0xbf] sm:$0xff]
    %v1151 = vld [vmem:[#allocation2 + $0xc7] sm:$0xff]
    %s1152 = scalar_lea.vmem %s3, 256
    %v1153 = vld [vmem:[%s1152] sm:$0xff]
    %v1154 = vld [vmem:[%s1152 + $0x8] sm:$0xff]
    %v1155 = vld [vmem:[%s1152 + $0x10] sm:$0xff]
    %v1156 = vld [vmem:[%s1152 + $0x18] sm:$0xff]
    %v1157 = vld [vmem:[%s1152 + $0x20] sm:$0xff]
    %v1158 = vld [vmem:[%s1152 + $0x28] sm:$0xff]
    %v1159 = vld [vmem:[%s1152 + $0x30] sm:$0xff]
    %v1160 = vld [vmem:[%s1152 + $0x38] sm:$0xff]
    %v1161 = vld [vmem:[%s1152 + $0x40] sm:$0xff]
    %v1162 = vld [vmem:[%s1152 + $0x48] sm:$0xff]
    %v1163 = vld [vmem:[%s1152 + $0x50] sm:$0xff]
    %v1164 = vld [vmem:[%s1152 + $0x58] sm:$0xff]
    %v1165 = vld [vmem:[%s1152 + $0x60] sm:$0xff]
    %v1166 = vld [vmem:[%s1152 + $0x68] sm:$0xff]
    %v1167 = vld [vmem:[%s1152 + $0x70] sm:$0xff]
    %v1168 = vld [vmem:[%s1152 + $0x78] sm:$0xff]
    %1169 = vmatprep.subr.mxu0 0.0
    %1170 = vmatpush1.msra.mxu0 %v1168
    %1171 = vmatprep.subr.mxu0 0.0
    %1172 = vmatpush1.msra.mxu0 %v1167
    %1173 = vmatprep.subr.mxu0 0.0
    %1174 = vmatpush1.msra.mxu0 %v1166
    %1175 = vmatprep.subr.mxu0 0.0
    %1176 = vmatpush1.msra.mxu0 %v1165
    %1177 = vmatprep.subr.mxu0 0.0
    %1178 = vmatpush1.msra.mxu0 %v1164
    %1179 = vmatprep.subr.mxu0 0.0
    %1180 = vmatpush1.msra.mxu0 %v1163
    %1181 = vmatprep.subr.mxu0 0.0
    %1182 = vmatpush1.msra.mxu0 %v1162
    %1183 = vmatprep.subr.mxu0 0.0
    %1184 = vmatpush1.msra.mxu0 %v1161
    %1185 = vmatprep.subr.mxu0 0.0
    %1186 = vmatpush1.msra.mxu0 %v1160
    %1187 = vmatprep.subr.mxu0 0.0
    %1188 = vmatpush1.msra.mxu0 %v1159
    %1189 = vmatprep.subr.mxu0 0.0
    %1190 = vmatpush1.msra.mxu0 %v1158
    %1191 = vmatprep.subr.mxu0 0.0
    %1192 = vmatpush1.msra.mxu0 %v1157
    %1193 = vmatprep.subr.mxu0 0.0
    %1194 = vmatpush1.msra.mxu0 %v1156
    %1195 = vmatprep.subr.mxu0 0.0
    %1196 = vmatpush1.msra.mxu0 %v1155
    %1197 = vmatprep.subr.mxu0 0.0
    %1198 = vmatpush1.msra.mxu0 %v1154
    %1199 = vmatprep.subr.mxu0 0.0
    %1200 = vmatpush1.msra.mxu0 %v1153
    %1201 = vmatprep.subr.mxu0 0.0
    %1202 = vmatpush2.msra.mxu0 0.0
    %1203 = vmatprep.subr.mxu0 0.0
    %1204 = vmatpush2.msra.mxu0 0.0
    %1205 = vmatprep.subr.mxu0 0.0
    %1206 = vmatpush2.msra.mxu0 0.0
    %1207 = vmatprep.subr.mxu0 0.0
    %1208 = vmatpush2.msra.mxu0 0.0
    %1209 = vmatprep.subr.mxu0 0.0
    %1210 = vmatpush2.msra.mxu0 0.0
    %1211 = vmatprep.subr.mxu0 0.0
    %1212 = vmatpush2.msra.mxu0 0.0
    %1213 = vmatprep.subr.mxu0 0.0
    %1214 = vmatpush2.msra.mxu0 0.0
    %1215 = vmatprep.subr.mxu0 0.0
    %1216 = vmatpush2.msra.mxu0 0.0
    %1217 = vmatprep.subr.mxu0 0.0
    %1218 = vmatpush2.msra.mxu0 0.0
    %1219 = vmatprep.subr.mxu0 0.0
    %1220 = vmatpush2.msra.mxu0 0.0
    %1221 = vmatprep.subr.mxu0 0.0
    %1222 = vmatpush2.msra.mxu0 0.0
    %1223 = vmatprep.subr.mxu0 0.0
    %1224 = vmatpush2.msra.mxu0 0.0
    %1225 = vmatprep.subr.mxu0 0.0
    %1226 = vmatpush2.msra.mxu0 0.0
    %1227 = vmatprep.subr.mxu0 0.0
    %1228 = vmatpush2.msra.mxu0 0.0
    %1229 = vmatprep.subr.mxu0 0.0
    %1230 = vmatpush2.msra.mxu0 0.0
    %1231 = vmatprep.subr.mxu0 0.0
    %1232 = vmatpush2.msra.mxu0 0.0
    %1233 = vmatprep.mubr.f32.mxu0 0.0
    %1234 = vmatmul.mubr.f32.gmra.mxu0 %v1127
    %v1235 = vpop.f32.mrf.mxu0
    %v1236 = vadd.f32 0.0, %v1235
    %v1237 = vpop.f32.mrf.mxu0
    %1238 = vmatprep.mubr.f32.mxu0 0.0
    %1239 = vmatmul.mubr.f32.gmra.mxu0 %v1128
    %v1240 = vpop.f32.mrf.mxu0
    %v1241 = vadd.f32 0.0, %v1240
    %v1242 = vpop.f32.mrf.mxu0
    %1243 = vmatprep.mubr.f32.mxu0 0.0
    %1244 = vmatmul.mubr.f32.gmra.mxu0 %v1129
    %v1245 = vpop.f32.mrf.mxu0
    %v1246 = vadd.f32 0.0, %v1245
    %v1247 = vpop.f32.mrf.mxu0
    %1248 = vmatprep.mubr.f32.mxu0 0.0
    %1249 = vmatmul.mubr.f32.gmra.mxu0 %v1130
    %v1250 = vpop.f32.mrf.mxu0
    %v1251 = vadd.f32 0.0, %v1250
    %v1252 = vpop.f32.mrf.mxu0
    %1253 = vmatprep.mubr.f32.mxu0 0.0
    %1254 = vmatmul.mubr.f32.gmra.mxu0 %v1131
    %v1255 = vpop.f32.mrf.mxu0
    %v1256 = vadd.f32 0.0, %v1255
    %v1257 = vpop.f32.mrf.mxu0
    %1258 = vmatprep.mubr.f32.mxu0 0.0
    %1259 = vmatmul.mubr.f32.gmra.mxu0 %v1132
    %v1260 = vpop.f32.mrf.mxu0
    %v1261 = vadd.f32 0.0, %v1260
    %v1262 = vpop.f32.mrf.mxu0
    %1263 = vmatprep.mubr.f32.mxu0 0.0
    %1264 = vmatmul.mubr.f32.gmra.mxu0 %v1133
    %v1265 = vpop.f32.mrf.mxu0
    %v1266 = vadd.f32 0.0, %v1265
    %v1267 = vpop.f32.mrf.mxu0
    %1268 = vmatprep.mubr.f32.mxu0 0.0
    %1269 = vmatmul.mubr.f32.gmra.mxu0 %v1134
    %v1270 = vpop.f32.mrf.mxu0
    %v1271 = vadd.f32 0.0, %v1270
    %v1272 = vpop.f32.mrf.mxu0
    %1273 = vmatprep.mubr.f32.mxu0 0.0
    %1274 = vmatmul.mubr.f32.gmra.mxu0 %v1135
    %v1275 = vpop.f32.mrf.mxu0
    %v1276 = vadd.f32 0.0, %v1275
    %v1277 = vpop.f32.mrf.mxu0
    %1278 = vmatprep.mubr.f32.mxu0 0.0
    %1279 = vmatmul.mubr.f32.gmra.mxu0 %v1136
    %v1280 = vpop.f32.mrf.mxu0
    %v1281 = vadd.f32 0.0, %v1280
    %v1282 = vpop.f32.mrf.mxu0
    %1283 = vmatprep.mubr.f32.mxu0 0.0
    %1284 = vmatmul.mubr.f32.gmra.mxu0 %v1137
    %v1285 = vpop.f32.mrf.mxu0
    %v1286 = vadd.f32 0.0, %v1285
    %v1287 = vpop.f32.mrf.mxu0
    %1288 = vmatprep.mubr.f32.mxu0 0.0
    %1289 = vmatmul.mubr.f32.gmra.mxu0 %v1138
    %v1290 = vpop.f32.mrf.mxu0
    %v1291 = vadd.f32 0.0, %v1290
    %v1292 = vpop.f32.mrf.mxu0
    %1293 = vmatprep.mubr.f32.mxu0 0.0
    %1294 = vmatmul.mubr.f32.gmra.mxu0 %v1139
    %v1295 = vpop.f32.mrf.mxu0
    %v1296 = vadd.f32 0.0, %v1295
    %v1297 = vpop.f32.mrf.mxu0
    %1298 = vmatprep.mubr.f32.mxu0 0.0
    %1299 = vmatmul.mubr.f32.gmra.mxu0 %v1140
    %v1300 = vpop.f32.mrf.mxu0
    %v1301 = vadd.f32 0.0, %v1300
    %v1302 = vpop.f32.mrf.mxu0
    %1303 = vmatprep.mubr.f32.mxu0 0.0
    %1304 = vmatmul.mubr.f32.gmra.mxu0 %v1141
    %v1305 = vpop.f32.mrf.mxu0
    %v1306 = vadd.f32 0.0, %v1305
    %v1307 = vpop.f32.mrf.mxu0
    %1308 = vmatprep.mubr.f32.mxu0 0.0
    %1309 = vmatmul.mubr.f32.gmra.mxu0 %v1142
    %v1310 = vpop.f32.mrf.mxu0
    %v1311 = vadd.f32 0.0, %v1310
    %v1312 = vpop.f32.mrf.mxu0
    %1313 = vmatprep.mubr.f32.mxu0 0.0
    %1314 = vmatmul.mubr.f32.gmra.mxu0 %v1143
    %v1315 = vpop.f32.mrf.mxu0
    %v1316 = vadd.f32 0.0, %v1315
    %v1317 = vpop.f32.mrf.mxu0
    %1318 = vmatprep.mubr.f32.mxu0 0.0
    %1319 = vmatmul.mubr.f32.gmra.mxu0 %v1144
    %v1320 = vpop.f32.mrf.mxu0
    %v1321 = vadd.f32 0.0, %v1320
    %v1322 = vpop.f32.mrf.mxu0
    %1323 = vmatprep.mubr.f32.mxu0 0.0
    %1324 = vmatmul.mubr.f32.gmra.mxu0 %v1145
    %v1325 = vpop.f32.mrf.mxu0
    %v1326 = vadd.f32 0.0, %v1325
    %v1327 = vpop.f32.mrf.mxu0
    %1328 = vmatprep.mubr.f32.mxu0 0.0
    %1329 = vmatmul.mubr.f32.gmra.mxu0 %v1146
    %v1330 = vpop.f32.mrf.mxu0
    %v1331 = vadd.f32 0.0, %v1330
    %v1332 = vpop.f32.mrf.mxu0
    %1333 = vmatprep.mubr.f32.mxu0 0.0
    %1334 = vmatmul.mubr.f32.gmra.mxu0 %v1147
    %v1335 = vpop.f32.mrf.mxu0
    %v1336 = vadd.f32 0.0, %v1335
    %v1337 = vpop.f32.mrf.mxu0
    %1338 = vmatprep.mubr.f32.mxu0 0.0
    %1339 = vmatmul.mubr.f32.gmra.mxu0 %v1148
    %v1340 = vpop.f32.mrf.mxu0
    %v1341 = vadd.f32 0.0, %v1340
    %v1342 = vpop.f32.mrf.mxu0
    %1343 = vmatprep.mubr.f32.mxu0 0.0
    %1344 = vmatmul.mubr.f32.gmra.mxu0 %v1149
    %v1345 = vpop.f32.mrf.mxu0
    %v1346 = vadd.f32 0.0, %v1345
    %v1347 = vpop.f32.mrf.mxu0
    %1348 = vmatprep.mubr.f32.mxu0 0.0
    %1349 = vmatmul.mubr.f32.gmra.mxu0 %v1150
    %v1350 = vpop.f32.mrf.mxu0
    %v1351 = vadd.f32 0.0, %v1350
    %v1352 = vpop.f32.mrf.mxu0
    %1353 = vmatprep.mubr.f32.mxu0 0.0
    %1354 = vmatmul.mubr.f32.gmra.mxu0 %v1151
    %v1355 = vpop.f32.mrf.mxu0
    %v1356 = vadd.f32 0.0, %v1355
    %v1357 = vpop.f32.mrf.mxu0
    %1358 = vdwg.mxu0
    %v1359 = vadd.f32 %v1004, %v1236
    %v1360 = vadd.f32 %v1009, %v1241
    %v1361 = vadd.f32 %v1014, %v1246
    %v1362 = vadd.f32 %v1019, %v1251
    %v1363 = vadd.f32 %v1024, %v1256
    %v1364 = vadd.f32 %v1029, %v1261
    %v1365 = vadd.f32 %v1034, %v1266
    %v1366 = vadd.f32 %v1039, %v1271
    %v1367 = vadd.f32 %v1044, %v1276
    %v1368 = vadd.f32 %v1049, %v1281
    %v1369 = vadd.f32 %v1054, %v1286
    %v1370 = vadd.f32 %v1059, %v1291
    %v1371 = vadd.f32 %v1064, %v1296
    %v1372 = vadd.f32 %v1069, %v1301
    %v1373 = vadd.f32 %v1074, %v1306
    %v1374 = vadd.f32 %v1079, %v1311
    %v1375 = vadd.f32 %v1084, %v1316
    %v1376 = vadd.f32 %v1089, %v1321
    %v1377 = vadd.f32 %v1094, %v1326
    %v1378 = vadd.f32 %v1099, %v1331
    %v1379 = vadd.f32 %v1104, %v1336
    %v1380 = vadd.f32 %v1109, %v1341
    %v1381 = vadd.f32 %v1114, %v1346
    %v1382 = vadd.f32 %v1119, %v1351
    %v1383 = vadd.f32 %v1124, %v1356
    %v1384 = vld [vmem:[#allocation2 + $0xf] sm:$0xff]
    %v1385 = vld [vmem:[#allocation2 + $0x17] sm:$0xff]
    %v1386 = vld [vmem:[#allocation2 + $0x1f] sm:$0xff]
    %v1387 = vld [vmem:[#allocation2 + $0x27] sm:$0xff]
    %v1388 = vld [vmem:[#allocation2 + $0x2f] sm:$0xff]
    %v1389 = vld [vmem:[#allocation2 + $0x37] sm:$0xff]
    %v1390 = vld [vmem:[#allocation2 + $0x3f] sm:$0xff]
    %v1391 = vld [vmem:[#allocation2 + $0x47] sm:$0xff]
    %v1392 = vld [vmem:[#allocation2 + $0x4f] sm:$0xff]
    %v1393 = vld [vmem:[#allocation2 + $0x57] sm:$0xff]
    %v1394 = vld [vmem:[#allocation2 + $0x5f] sm:$0xff]
    %v1395 = vld [vmem:[#allocation2 + $0x67] sm:$0xff]
    %v1396 = vld [vmem:[#allocation2 + $0x6f] sm:$0xff]
    %v1397 = vld [vmem:[#allocation2 + $0x77] sm:$0xff]
    %v1398 = vld [vmem:[#allocation2 + $0x7f] sm:$0xff]
    %v1399 = vld [vmem:[#allocation2 + $0x87] sm:$0xff]
    %v1400 = vld [vmem:[#allocation2 + $0x8f] sm:$0xff]
    %v1401 = vld [vmem:[#allocation2 + $0x97] sm:$0xff]
    %v1402 = vld [vmem:[#allocation2 + $0x9f] sm:$0xff]
    %v1403 = vld [vmem:[#allocation2 + $0xa7] sm:$0xff]
    %v1404 = vld [vmem:[#allocation2 + $0xaf] sm:$0xff]
    %v1405 = vld [vmem:[#allocation2 + $0xb7] sm:$0xff]
    %v1406 = vld [vmem:[#allocation2 + $0xbf] sm:$0xff]
    %v1407 = vld [vmem:[#allocation2 + $0xc7] sm:$0xff]
    %v1408 = vld [vmem:[#allocation2 + $0xcf] sm:$0xff]
    %s1409 = scalar_lea.vmem %s3, 384
    %v1410 = vld [vmem:[%s1409] sm:$0xff]
    %v1411 = vld [vmem:[%s1409 + $0x8] sm:$0xff]
    %v1412 = vld [vmem:[%s1409 + $0x10] sm:$0xff]
    %v1413 = vld [vmem:[%s1409 + $0x18] sm:$0xff]
    %v1414 = vld [vmem:[%s1409 + $0x20] sm:$0xff]
    %v1415 = vld [vmem:[%s1409 + $0x28] sm:$0xff]
    %v1416 = vld [vmem:[%s1409 + $0x30] sm:$0xff]
    %v1417 = vld [vmem:[%s1409 + $0x38] sm:$0xff]
    %v1418 = vld [vmem:[%s1409 + $0x40] sm:$0xff]
    %v1419 = vld [vmem:[%s1409 + $0x48] sm:$0xff]
    %v1420 = vld [vmem:[%s1409 + $0x50] sm:$0xff]
    %v1421 = vld [vmem:[%s1409 + $0x58] sm:$0xff]
    %v1422 = vld [vmem:[%s1409 + $0x60] sm:$0xff]
    %v1423 = vld [vmem:[%s1409 + $0x68] sm:$0xff]
    %v1424 = vld [vmem:[%s1409 + $0x70] sm:$0xff]
    %v1425 = vld [vmem:[%s1409 + $0x78] sm:$0xff]
    %1426 = vmatprep.subr.mxu0 0.0
    %1427 = vmatpush1.msra.mxu0 %v1425
    %1428 = vmatprep.subr.mxu0 0.0
    %1429 = vmatpush1.msra.mxu0 %v1424
    %1430 = vmatprep.subr.mxu0 0.0
    %1431 = vmatpush1.msra.mxu0 %v1423
    %1432 = vmatprep.subr.mxu0 0.0
    %1433 = vmatpush1.msra.mxu0 %v1422
    %1434 = vmatprep.subr.mxu0 0.0
    %1435 = vmatpush1.msra.mxu0 %v1421
    %1436 = vmatprep.subr.mxu0 0.0
    %1437 = vmatpush1.msra.mxu0 %v1420
    %1438 = vmatprep.subr.mxu0 0.0
    %1439 = vmatpush1.msra.mxu0 %v1419
    %1440 = vmatprep.subr.mxu0 0.0
    %1441 = vmatpush1.msra.mxu0 %v1418
    %1442 = vmatprep.subr.mxu0 0.0
    %1443 = vmatpush1.msra.mxu0 %v1417
    %1444 = vmatprep.subr.mxu0 0.0
    %1445 = vmatpush1.msra.mxu0 %v1416
    %1446 = vmatprep.subr.mxu0 0.0
    %1447 = vmatpush1.msra.mxu0 %v1415
    %1448 = vmatprep.subr.mxu0 0.0
    %1449 = vmatpush1.msra.mxu0 %v1414
    %1450 = vmatprep.subr.mxu0 0.0
    %1451 = vmatpush1.msra.mxu0 %v1413
    %1452 = vmatprep.subr.mxu0 0.0
    %1453 = vmatpush1.msra.mxu0 %v1412
    %1454 = vmatprep.subr.mxu0 0.0
    %1455 = vmatpush1.msra.mxu0 %v1411
    %1456 = vmatprep.subr.mxu0 0.0
    %1457 = vmatpush1.msra.mxu0 %v1410
    %1458 = vmatprep.subr.mxu0 0.0
    %1459 = vmatpush2.msra.mxu0 0.0
    %1460 = vmatprep.subr.mxu0 0.0
    %1461 = vmatpush2.msra.mxu0 0.0
    %1462 = vmatprep.subr.mxu0 0.0
    %1463 = vmatpush2.msra.mxu0 0.0
    %1464 = vmatprep.subr.mxu0 0.0
    %1465 = vmatpush2.msra.mxu0 0.0
    %1466 = vmatprep.subr.mxu0 0.0
    %1467 = vmatpush2.msra.mxu0 0.0
    %1468 = vmatprep.subr.mxu0 0.0
    %1469 = vmatpush2.msra.mxu0 0.0
    %1470 = vmatprep.subr.mxu0 0.0
    %1471 = vmatpush2.msra.mxu0 0.0
    %1472 = vmatprep.subr.mxu0 0.0
    %1473 = vmatpush2.msra.mxu0 0.0
    %1474 = vmatprep.subr.mxu0 0.0
    %1475 = vmatpush2.msra.mxu0 0.0
    %1476 = vmatprep.subr.mxu0 0.0
    %1477 = vmatpush2.msra.mxu0 0.0
    %1478 = vmatprep.subr.mxu0 0.0
    %1479 = vmatpush2.msra.mxu0 0.0
    %1480 = vmatprep.subr.mxu0 0.0
    %1481 = vmatpush2.msra.mxu0 0.0
    %1482 = vmatprep.subr.mxu0 0.0
    %1483 = vmatpush2.msra.mxu0 0.0
    %1484 = vmatprep.subr.mxu0 0.0
    %1485 = vmatpush2.msra.mxu0 0.0
    %1486 = vmatprep.subr.mxu0 0.0
    %1487 = vmatpush2.msra.mxu0 0.0
    %1488 = vmatprep.subr.mxu0 0.0
    %1489 = vmatpush2.msra.mxu0 0.0
    %1490 = vmatprep.mubr.f32.mxu0 0.0
    %1491 = vmatmul.mubr.f32.gmra.mxu0 %v1384
    %v1492 = vpop.f32.mrf.mxu0
    %v1493 = vadd.f32 0.0, %v1492
    %v1494 = vpop.f32.mrf.mxu0
    %1495 = vmatprep.mubr.f32.mxu0 0.0
    %1496 = vmatmul.mubr.f32.gmra.mxu0 %v1385
    %v1497 = vpop.f32.mrf.mxu0
    %v1498 = vadd.f32 0.0, %v1497
    %v1499 = vpop.f32.mrf.mxu0
    %1500 = vmatprep.mubr.f32.mxu0 0.0
    %1501 = vmatmul.mubr.f32.gmra.mxu0 %v1386
    %v1502 = vpop.f32.mrf.mxu0
    %v1503 = vadd.f32 0.0, %v1502
    %v1504 = vpop.f32.mrf.mxu0
    %1505 = vmatprep.mubr.f32.mxu0 0.0
    %1506 = vmatmul.mubr.f32.gmra.mxu0 %v1387
    %v1507 = vpop.f32.mrf.mxu0
    %v1508 = vadd.f32 0.0, %v1507
    %v1509 = vpop.f32.mrf.mxu0
    %1510 = vmatprep.mubr.f32.mxu0 0.0
    %1511 = vmatmul.mubr.f32.gmra.mxu0 %v1388
    %v1512 = vpop.f32.mrf.mxu0
    %v1513 = vadd.f32 0.0, %v1512
    %v1514 = vpop.f32.mrf.mxu0
    %1515 = vmatprep.mubr.f32.mxu0 0.0
    %1516 = vmatmul.mubr.f32.gmra.mxu0 %v1389
    %v1517 = vpop.f32.mrf.mxu0
    %v1518 = vadd.f32 0.0, %v1517
    %v1519 = vpop.f32.mrf.mxu0
    %1520 = vmatprep.mubr.f32.mxu0 0.0
    %1521 = vmatmul.mubr.f32.gmra.mxu0 %v1390
    %v1522 = vpop.f32.mrf.mxu0
    %v1523 = vadd.f32 0.0, %v1522
    %v1524 = vpop.f32.mrf.mxu0
    %1525 = vmatprep.mubr.f32.mxu0 0.0
    %1526 = vmatmul.mubr.f32.gmra.mxu0 %v1391
    %v1527 = vpop.f32.mrf.mxu0
    %v1528 = vadd.f32 0.0, %v1527
    %v1529 = vpop.f32.mrf.mxu0
    %1530 = vmatprep.mubr.f32.mxu0 0.0
    %1531 = vmatmul.mubr.f32.gmra.mxu0 %v1392
    %v1532 = vpop.f32.mrf.mxu0
    %v1533 = vadd.f32 0.0, %v1532
    %v1534 = vpop.f32.mrf.mxu0
    %1535 = vmatprep.mubr.f32.mxu0 0.0
    %1536 = vmatmul.mubr.f32.gmra.mxu0 %v1393
    %v1537 = vpop.f32.mrf.mxu0
    %v1538 = vadd.f32 0.0, %v1537
    %v1539 = vpop.f32.mrf.mxu0
    %1540 = vmatprep.mubr.f32.mxu0 0.0
    %1541 = vmatmul.mubr.f32.gmra.mxu0 %v1394
    %v1542 = vpop.f32.mrf.mxu0
    %v1543 = vadd.f32 0.0, %v1542
    %v1544 = vpop.f32.mrf.mxu0
    %1545 = vmatprep.mubr.f32.mxu0 0.0
    %1546 = vmatmul.mubr.f32.gmra.mxu0 %v1395
    %v1547 = vpop.f32.mrf.mxu0
    %v1548 = vadd.f32 0.0, %v1547
    %v1549 = vpop.f32.mrf.mxu0
    %1550 = vmatprep.mubr.f32.mxu0 0.0
    %1551 = vmatmul.mubr.f32.gmra.mxu0 %v1396
    %v1552 = vpop.f32.mrf.mxu0
    %v1553 = vadd.f32 0.0, %v1552
    %v1554 = vpop.f32.mrf.mxu0
    %1555 = vmatprep.mubr.f32.mxu0 0.0
    %1556 = vmatmul.mubr.f32.gmra.mxu0 %v1397
    %v1557 = vpop.f32.mrf.mxu0
    %v1558 = vadd.f32 0.0, %v1557
    %v1559 = vpop.f32.mrf.mxu0
    %1560 = vmatprep.mubr.f32.mxu0 0.0
    %1561 = vmatmul.mubr.f32.gmra.mxu0 %v1398
    %v1562 = vpop.f32.mrf.mxu0
    %v1563 = vadd.f32 0.0, %v1562
    %v1564 = vpop.f32.mrf.mxu0
    %1565 = vmatprep.mubr.f32.mxu0 0.0
    %1566 = vmatmul.mubr.f32.gmra.mxu0 %v1399
    %v1567 = vpop.f32.mrf.mxu0
    %v1568 = vadd.f32 0.0, %v1567
    %v1569 = vpop.f32.mrf.mxu0
    %1570 = vmatprep.mubr.f32.mxu0 0.0
    %1571 = vmatmul.mubr.f32.gmra.mxu0 %v1400
    %v1572 = vpop.f32.mrf.mxu0
    %v1573 = vadd.f32 0.0, %v1572
    %v1574 = vpop.f32.mrf.mxu0
    %1575 = vmatprep.mubr.f32.mxu0 0.0
    %1576 = vmatmul.mubr.f32.gmra.mxu0 %v1401
    %v1577 = vpop.f32.mrf.mxu0
    %v1578 = vadd.f32 0.0, %v1577
    %v1579 = vpop.f32.mrf.mxu0
    %1580 = vmatprep.mubr.f32.mxu0 0.0
    %1581 = vmatmul.mubr.f32.gmra.mxu0 %v1402
    %v1582 = vpop.f32.mrf.mxu0
    %v1583 = vadd.f32 0.0, %v1582
    %v1584 = vpop.f32.mrf.mxu0
    %1585 = vmatprep.mubr.f32.mxu0 0.0
    %1586 = vmatmul.mubr.f32.gmra.mxu0 %v1403
    %v1587 = vpop.f32.mrf.mxu0
    %v1588 = vadd.f32 0.0, %v1587
    %v1589 = vpop.f32.mrf.mxu0
    %1590 = vmatprep.mubr.f32.mxu0 0.0
    %1591 = vmatmul.mubr.f32.gmra.mxu0 %v1404
    %v1592 = vpop.f32.mrf.mxu0
    %v1593 = vadd.f32 0.0, %v1592
    %v1594 = vpop.f32.mrf.mxu0
    %1595 = vmatprep.mubr.f32.mxu0 0.0
    %1596 = vmatmul.mubr.f32.gmra.mxu0 %v1405
    %v1597 = vpop.f32.mrf.mxu0
    %v1598 = vadd.f32 0.0, %v1597
    %v1599 = vpop.f32.mrf.mxu0
    %1600 = vmatprep.mubr.f32.mxu0 0.0
    %1601 = vmatmul.mubr.f32.gmra.mxu0 %v1406
    %v1602 = vpop.f32.mrf.mxu0
    %v1603 = vadd.f32 0.0, %v1602
    %v1604 = vpop.f32.mrf.mxu0
    %1605 = vmatprep.mubr.f32.mxu0 0.0
    %1606 = vmatmul.mubr.f32.gmra.mxu0 %v1407
    %v1607 = vpop.f32.mrf.mxu0
    %v1608 = vadd.f32 0.0, %v1607
    %v1609 = vpop.f32.mrf.mxu0
    %1610 = vmatprep.mubr.f32.mxu0 0.0
    %1611 = vmatmul.mubr.f32.gmra.mxu0 %v1408
    %v1612 = vpop.f32.mrf.mxu0
    %v1613 = vadd.f32 0.0, %v1612
    %v1614 = vpop.f32.mrf.mxu0
    %1615 = vdwg.mxu0
    %v1616 = vadd.f32 %v1359, %v1493
    %v1617 = vadd.f32 %v1360, %v1498
    %v1618 = vadd.f32 %v1361, %v1503
    %v1619 = vadd.f32 %v1362, %v1508
    %v1620 = vadd.f32 %v1363, %v1513
    %v1621 = vadd.f32 %v1364, %v1518
    %v1622 = vadd.f32 %v1365, %v1523
    %v1623 = vadd.f32 %v1366, %v1528
    %v1624 = vadd.f32 %v1367, %v1533
    %v1625 = vadd.f32 %v1368, %v1538
    %v1626 = vadd.f32 %v1369, %v1543
    %v1627 = vadd.f32 %v1370, %v1548
    %v1628 = vadd.f32 %v1371, %v1553
    %v1629 = vadd.f32 %v1372, %v1558
    %v1630 = vadd.f32 %v1373, %v1563
    %v1631 = vadd.f32 %v1374, %v1568
    %v1632 = vadd.f32 %v1375, %v1573
    %v1633 = vadd.f32 %v1376, %v1578
    %v1634 = vadd.f32 %v1377, %v1583
    %v1635 = vadd.f32 %v1378, %v1588
    %v1636 = vadd.f32 %v1379, %v1593
    %v1637 = vadd.f32 %v1380, %v1598
    %v1638 = vadd.f32 %v1381, %v1603
    %v1639 = vadd.f32 %v1382, %v1608
    %v1640 = vadd.f32 %v1383, %v1613
    %v1641 = vld [vmem:[#allocation2 + $0x10] sm:$0xff]
    %v1642 = vld [vmem:[#allocation2 + $0x18] sm:$0xff]
    %v1643 = vld [vmem:[#allocation2 + $0x20] sm:$0xff]
    %v1644 = vld [vmem:[#allocation2 + $0x28] sm:$0xff]
    %v1645 = vld [vmem:[#allocation2 + $0x30] sm:$0xff]
    %v1646 = vld [vmem:[#allocation2 + $0x38] sm:$0xff]
    %v1647 = vld [vmem:[#allocation2 + $0x40] sm:$0xff]
    %v1648 = vld [vmem:[#allocation2 + $0x48] sm:$0xff]
    %v1649 = vld [vmem:[#allocation2 + $0x50] sm:$0xff]
    %v1650 = vld [vmem:[#allocation2 + $0x58] sm:$0xff]
    %v1651 = vld [vmem:[#allocation2 + $0x60] sm:$0xff]
    %v1652 = vld [vmem:[#allocation2 + $0x68] sm:$0xff]
    %v1653 = vld [vmem:[#allocation2 + $0x70] sm:$0xff]
    %v1654 = vld [vmem:[#allocation2 + $0x78] sm:$0xff]
    %v1655 = vld [vmem:[#allocation2 + $0x80] sm:$0xff]
    %v1656 = vld [vmem:[#allocation2 + $0x88] sm:$0xff]
    %v1657 = vld [vmem:[#allocation2 + $0x90] sm:$0xff]
    %v1658 = vld [vmem:[#allocation2 + $0x98] sm:$0xff]
    %v1659 = vld [vmem:[#allocation2 + $0xa0] sm:$0xff]
    %v1660 = vld [vmem:[#allocation2 + $0xa8] sm:$0xff]
    %v1661 = vld [vmem:[#allocation2 + $0xb0] sm:$0xff]
    %v1662 = vld [vmem:[#allocation2 + $0xb8] sm:$0xff]
    %v1663 = vld [vmem:[#allocation2 + $0xc0] sm:$0xff]
    %v1664 = vld [vmem:[#allocation2 + $0xc8] sm:$0xff]
    %v1665 = vld [vmem:[#allocation2 + $0xd0] sm:$0xff]
    %s1666 = scalar_lea.vmem %s3, 512
    %v1667 = vld [vmem:[%s1666] sm:$0xff]
    %v1668 = vld [vmem:[%s1666 + $0x8] sm:$0xff]
    %v1669 = vld [vmem:[%s1666 + $0x10] sm:$0xff]
    %v1670 = vld [vmem:[%s1666 + $0x18] sm:$0xff]
    %v1671 = vld [vmem:[%s1666 + $0x20] sm:$0xff]
    %v1672 = vld [vmem:[%s1666 + $0x28] sm:$0xff]
    %v1673 = vld [vmem:[%s1666 + $0x30] sm:$0xff]
    %v1674 = vld [vmem:[%s1666 + $0x38] sm:$0xff]
    %v1675 = vld [vmem:[%s1666 + $0x40] sm:$0xff]
    %v1676 = vld [vmem:[%s1666 + $0x48] sm:$0xff]
    %v1677 = vld [vmem:[%s1666 + $0x50] sm:$0xff]
    %v1678 = vld [vmem:[%s1666 + $0x58] sm:$0xff]
    %v1679 = vld [vmem:[%s1666 + $0x60] sm:$0xff]
    %v1680 = vld [vmem:[%s1666 + $0x68] sm:$0xff]
    %v1681 = vld [vmem:[%s1666 + $0x70] sm:$0xff]
    %v1682 = vld [vmem:[%s1666 + $0x78] sm:$0xff]
    %1683 = vmatprep.subr.mxu0 0.0
    %1684 = vmatpush1.msra.mxu0 %v1682
    %1685 = vmatprep.subr.mxu0 0.0
    %1686 = vmatpush1.msra.mxu0 %v1681
    %1687 = vmatprep.subr.mxu0 0.0
    %1688 = vmatpush1.msra.mxu0 %v1680
    %1689 = vmatprep.subr.mxu0 0.0
    %1690 = vmatpush1.msra.mxu0 %v1679
    %1691 = vmatprep.subr.mxu0 0.0
    %1692 = vmatpush1.msra.mxu0 %v1678
    %1693 = vmatprep.subr.mxu0 0.0
    %1694 = vmatpush1.msra.mxu0 %v1677
    %1695 = vmatprep.subr.mxu0 0.0
    %1696 = vmatpush1.msra.mxu0 %v1676
    %1697 = vmatprep.subr.mxu0 0.0
    %1698 = vmatpush1.msra.mxu0 %v1675
    %1699 = vmatprep.subr.mxu0 0.0
    %1700 = vmatpush1.msra.mxu0 %v1674
    %1701 = vmatprep.subr.mxu0 0.0
    %1702 = vmatpush1.msra.mxu0 %v1673
    %1703 = vmatprep.subr.mxu0 0.0
    %1704 = vmatpush1.msra.mxu0 %v1672
    %1705 = vmatprep.subr.mxu0 0.0
    %1706 = vmatpush1.msra.mxu0 %v1671
    %1707 = vmatprep.subr.mxu0 0.0
    %1708 = vmatpush1.msra.mxu0 %v1670
    %1709 = vmatprep.subr.mxu0 0.0
    %1710 = vmatpush1.msra.mxu0 %v1669
    %1711 = vmatprep.subr.mxu0 0.0
    %1712 = vmatpush1.msra.mxu0 %v1668
    %1713 = vmatprep.subr.mxu0 0.0
    %1714 = vmatpush1.msra.mxu0 %v1667
    %1715 = vmatprep.subr.mxu0 0.0
    %1716 = vmatpush2.msra.mxu0 0.0
    %1717 = vmatprep.subr.mxu0 0.0
    %1718 = vmatpush2.msra.mxu0 0.0
    %1719 = vmatprep.subr.mxu0 0.0
    %1720 = vmatpush2.msra.mxu0 0.0
    %1721 = vmatprep.subr.mxu0 0.0
    %1722 = vmatpush2.msra.mxu0 0.0
    %1723 = vmatprep.subr.mxu0 0.0
    %1724 = vmatpush2.msra.mxu0 0.0
    %1725 = vmatprep.subr.mxu0 0.0
    %1726 = vmatpush2.msra.mxu0 0.0
    %1727 = vmatprep.subr.mxu0 0.0
    %1728 = vmatpush2.msra.mxu0 0.0
    %1729 = vmatprep.subr.mxu0 0.0
    %1730 = vmatpush2.msra.mxu0 0.0
    %1731 = vmatprep.subr.mxu0 0.0
    %1732 = vmatpush2.msra.mxu0 0.0
    %1733 = vmatprep.subr.mxu0 0.0
    %1734 = vmatpush2.msra.mxu0 0.0
    %1735 = vmatprep.subr.mxu0 0.0
    %1736 = vmatpush2.msra.mxu0 0.0
    %1737 = vmatprep.subr.mxu0 0.0
    %1738 = vmatpush2.msra.mxu0 0.0
    %1739 = vmatprep.subr.mxu0 0.0
    %1740 = vmatpush2.msra.mxu0 0.0
    %1741 = vmatprep.subr.mxu0 0.0
    %1742 = vmatpush2.msra.mxu0 0.0
    %1743 = vmatprep.subr.mxu0 0.0
    %1744 = vmatpush2.msra.mxu0 0.0
    %1745 = vmatprep.subr.mxu0 0.0
    %1746 = vmatpush2.msra.mxu0 0.0
    %1747 = vmatprep.mubr.f32.mxu0 0.0
    %1748 = vmatmul.mubr.f32.gmra.mxu0 %v1641
    %v1749 = vpop.f32.mrf.mxu0
    %v1750 = vadd.f32 0.0, %v1749
    %v1751 = vpop.f32.mrf.mxu0
    %1752 = vmatprep.mubr.f32.mxu0 0.0
    %1753 = vmatmul.mubr.f32.gmra.mxu0 %v1642
    %v1754 = vpop.f32.mrf.mxu0
    %v1755 = vadd.f32 0.0, %v1754
    %v1756 = vpop.f32.mrf.mxu0
    %1757 = vmatprep.mubr.f32.mxu0 0.0
    %1758 = vmatmul.mubr.f32.gmra.mxu0 %v1643
    %v1759 = vpop.f32.mrf.mxu0
    %v1760 = vadd.f32 0.0, %v1759
    %v1761 = vpop.f32.mrf.mxu0
    %1762 = vmatprep.mubr.f32.mxu0 0.0
    %1763 = vmatmul.mubr.f32.gmra.mxu0 %v1644
    %v1764 = vpop.f32.mrf.mxu0
    %v1765 = vadd.f32 0.0, %v1764
    %v1766 = vpop.f32.mrf.mxu0
    %1767 = vmatprep.mubr.f32.mxu0 0.0
    %1768 = vmatmul.mubr.f32.gmra.mxu0 %v1645
    %v1769 = vpop.f32.mrf.mxu0
    %v1770 = vadd.f32 0.0, %v1769
    %v1771 = vpop.f32.mrf.mxu0
    %1772 = vmatprep.mubr.f32.mxu0 0.0
    %1773 = vmatmul.mubr.f32.gmra.mxu0 %v1646
    %v1774 = vpop.f32.mrf.mxu0
    %v1775 = vadd.f32 0.0, %v1774
    %v1776 = vpop.f32.mrf.mxu0
    %1777 = vmatprep.mubr.f32.mxu0 0.0
    %1778 = vmatmul.mubr.f32.gmra.mxu0 %v1647
    %v1779 = vpop.f32.mrf.mxu0
    %v1780 = vadd.f32 0.0, %v1779
    %v1781 = vpop.f32.mrf.mxu0
    %1782 = vmatprep.mubr.f32.mxu0 0.0
    %1783 = vmatmul.mubr.f32.gmra.mxu0 %v1648
    %v1784 = vpop.f32.mrf.mxu0
    %v1785 = vadd.f32 0.0, %v1784
    %v1786 = vpop.f32.mrf.mxu0
    %1787 = vmatprep.mubr.f32.mxu0 0.0
    %1788 = vmatmul.mubr.f32.gmra.mxu0 %v1649
    %v1789 = vpop.f32.mrf.mxu0
    %v1790 = vadd.f32 0.0, %v1789
    %v1791 = vpop.f32.mrf.mxu0
    %1792 = vmatprep.mubr.f32.mxu0 0.0
    %1793 = vmatmul.mubr.f32.gmra.mxu0 %v1650
    %v1794 = vpop.f32.mrf.mxu0
    %v1795 = vadd.f32 0.0, %v1794
    %v1796 = vpop.f32.mrf.mxu0
    %1797 = vmatprep.mubr.f32.mxu0 0.0
    %1798 = vmatmul.mubr.f32.gmra.mxu0 %v1651
    %v1799 = vpop.f32.mrf.mxu0
    %v1800 = vadd.f32 0.0, %v1799
    %v1801 = vpop.f32.mrf.mxu0
    %1802 = vmatprep.mubr.f32.mxu0 0.0
    %1803 = vmatmul.mubr.f32.gmra.mxu0 %v1652
    %v1804 = vpop.f32.mrf.mxu0
    %v1805 = vadd.f32 0.0, %v1804
    %v1806 = vpop.f32.mrf.mxu0
    %1807 = vmatprep.mubr.f32.mxu0 0.0
    %1808 = vmatmul.mubr.f32.gmra.mxu0 %v1653
    %v1809 = vpop.f32.mrf.mxu0
    %v1810 = vadd.f32 0.0, %v1809
    %v1811 = vpop.f32.mrf.mxu0
    %1812 = vmatprep.mubr.f32.mxu0 0.0
    %1813 = vmatmul.mubr.f32.gmra.mxu0 %v1654
    %v1814 = vpop.f32.mrf.mxu0
    %v1815 = vadd.f32 0.0, %v1814
    %v1816 = vpop.f32.mrf.mxu0
    %1817 = vmatprep.mubr.f32.mxu0 0.0
    %1818 = vmatmul.mubr.f32.gmra.mxu0 %v1655
    %v1819 = vpop.f32.mrf.mxu0
    %v1820 = vadd.f32 0.0, %v1819
    %v1821 = vpop.f32.mrf.mxu0
    %1822 = vmatprep.mubr.f32.mxu0 0.0
    %1823 = vmatmul.mubr.f32.gmra.mxu0 %v1656
    %v1824 = vpop.f32.mrf.mxu0
    %v1825 = vadd.f32 0.0, %v1824
    %v1826 = vpop.f32.mrf.mxu0
    %1827 = vmatprep.mubr.f32.mxu0 0.0
    %1828 = vmatmul.mubr.f32.gmra.mxu0 %v1657
    %v1829 = vpop.f32.mrf.mxu0
    %v1830 = vadd.f32 0.0, %v1829
    %v1831 = vpop.f32.mrf.mxu0
    %1832 = vmatprep.mubr.f32.mxu0 0.0
    %1833 = vmatmul.mubr.f32.gmra.mxu0 %v1658
    %v1834 = vpop.f32.mrf.mxu0
    %v1835 = vadd.f32 0.0, %v1834
    %v1836 = vpop.f32.mrf.mxu0
    %1837 = vmatprep.mubr.f32.mxu0 0.0
    %1838 = vmatmul.mubr.f32.gmra.mxu0 %v1659
    %v1839 = vpop.f32.mrf.mxu0
    %v1840 = vadd.f32 0.0, %v1839
    %v1841 = vpop.f32.mrf.mxu0
    %1842 = vmatprep.mubr.f32.mxu0 0.0
    %1843 = vmatmul.mubr.f32.gmra.mxu0 %v1660
    %v1844 = vpop.f32.mrf.mxu0
    %v1845 = vadd.f32 0.0, %v1844
    %v1846 = vpop.f32.mrf.mxu0
    %1847 = vmatprep.mubr.f32.mxu0 0.0
    %1848 = vmatmul.mubr.f32.gmra.mxu0 %v1661
    %v1849 = vpop.f32.mrf.mxu0
    %v1850 = vadd.f32 0.0, %v1849
    %v1851 = vpop.f32.mrf.mxu0
    %1852 = vmatprep.mubr.f32.mxu0 0.0
    %1853 = vmatmul.mubr.f32.gmra.mxu0 %v1662
    %v1854 = vpop.f32.mrf.mxu0
    %v1855 = vadd.f32 0.0, %v1854
    %v1856 = vpop.f32.mrf.mxu0
    %1857 = vmatprep.mubr.f32.mxu0 0.0
    %1858 = vmatmul.mubr.f32.gmra.mxu0 %v1663
    %v1859 = vpop.f32.mrf.mxu0
    %v1860 = vadd.f32 0.0, %v1859
    %v1861 = vpop.f32.mrf.mxu0
    %1862 = vmatprep.mubr.f32.mxu0 0.0
    %1863 = vmatmul.mubr.f32.gmra.mxu0 %v1664
    %v1864 = vpop.f32.mrf.mxu0
    %v1865 = vadd.f32 0.0, %v1864
    %v1866 = vpop.f32.mrf.mxu0
    %1867 = vmatprep.mubr.f32.mxu0 0.0
    %1868 = vmatmul.mubr.f32.gmra.mxu0 %v1665
    %v1869 = vpop.f32.mrf.mxu0
    %v1870 = vadd.f32 0.0, %v1869
    %v1871 = vpop.f32.mrf.mxu0
    %1872 = vdwg.mxu0
    %v1873 = vadd.f32 %v1616, %v1750
    %v1874 = vadd.f32 %v1617, %v1755
    %v1875 = vadd.f32 %v1618, %v1760
    %v1876 = vadd.f32 %v1619, %v1765
    %v1877 = vadd.f32 %v1620, %v1770
    %v1878 = vadd.f32 %v1621, %v1775
    %v1879 = vadd.f32 %v1622, %v1780
    %v1880 = vadd.f32 %v1623, %v1785
    %v1881 = vadd.f32 %v1624, %v1790
    %v1882 = vadd.f32 %v1625, %v1795
    %v1883 = vadd.f32 %v1626, %v1800
    %v1884 = vadd.f32 %v1627, %v1805
    %v1885 = vadd.f32 %v1628, %v1810
    %v1886 = vadd.f32 %v1629, %v1815
    %v1887 = vadd.f32 %v1630, %v1820
    %v1888 = vadd.f32 %v1631, %v1825
    %v1889 = vadd.f32 %v1632, %v1830
    %v1890 = vadd.f32 %v1633, %v1835
    %v1891 = vadd.f32 %v1634, %v1840
    %v1892 = vadd.f32 %v1635, %v1845
    %v1893 = vadd.f32 %v1636, %v1850
    %v1894 = vadd.f32 %v1637, %v1855
    %v1895 = vadd.f32 %v1638, %v1860
    %v1896 = vadd.f32 %v1639, %v1865
    %v1897 = vadd.f32 %v1640, %v1870
    %v1898 = vld [vmem:[#allocation2 + $0x11] sm:$0xff]
    %v1899 = vld [vmem:[#allocation2 + $0x19] sm:$0xff]
    %v1900 = vld [vmem:[#allocation2 + $0x21] sm:$0xff]
    %v1901 = vld [vmem:[#allocation2 + $0x29] sm:$0xff]
    %v1902 = vld [vmem:[#allocation2 + $0x31] sm:$0xff]
    %v1903 = vld [vmem:[#allocation2 + $0x39] sm:$0xff]
    %v1904 = vld [vmem:[#allocation2 + $0x41] sm:$0xff]
    %v1905 = vld [vmem:[#allocation2 + $0x49] sm:$0xff]
    %v1906 = vld [vmem:[#allocation2 + $0x51] sm:$0xff]
    %v1907 = vld [vmem:[#allocation2 + $0x59] sm:$0xff]
    %v1908 = vld [vmem:[#allocation2 + $0x61] sm:$0xff]
    %v1909 = vld [vmem:[#allocation2 + $0x69] sm:$0xff]
    %v1910 = vld [vmem:[#allocation2 + $0x71] sm:$0xff]
    %v1911 = vld [vmem:[#allocation2 + $0x79] sm:$0xff]
    %v1912 = vld [vmem:[#allocation2 + $0x81] sm:$0xff]
    %v1913 = vld [vmem:[#allocation2 + $0x89] sm:$0xff]
    %v1914 = vld [vmem:[#allocation2 + $0x91] sm:$0xff]
    %v1915 = vld [vmem:[#allocation2 + $0x99] sm:$0xff]
    %v1916 = vld [vmem:[#allocation2 + $0xa1] sm:$0xff]
    %v1917 = vld [vmem:[#allocation2 + $0xa9] sm:$0xff]
    %v1918 = vld [vmem:[#allocation2 + $0xb1] sm:$0xff]
    %v1919 = vld [vmem:[#allocation2 + $0xb9] sm:$0xff]
    %v1920 = vld [vmem:[#allocation2 + $0xc1] sm:$0xff]
    %v1921 = vld [vmem:[#allocation2 + $0xc9] sm:$0xff]
    %v1922 = vld [vmem:[#allocation2 + $0xd1] sm:$0xff]
    %s1923 = scalar_lea.vmem %s3, 640
    %v1924 = vld [vmem:[%s1923] sm:$0xff]
    %v1925 = vld [vmem:[%s1923 + $0x8] sm:$0xff]
    %v1926 = vld [vmem:[%s1923 + $0x10] sm:$0xff]
    %v1927 = vld [vmem:[%s1923 + $0x18] sm:$0xff]
    %v1928 = vld [vmem:[%s1923 + $0x20] sm:$0xff]
    %v1929 = vld [vmem:[%s1923 + $0x28] sm:$0xff]
    %v1930 = vld [vmem:[%s1923 + $0x30] sm:$0xff]
    %v1931 = vld [vmem:[%s1923 + $0x38] sm:$0xff]
    %v1932 = vld [vmem:[%s1923 + $0x40] sm:$0xff]
    %v1933 = vld [vmem:[%s1923 + $0x48] sm:$0xff]
    %v1934 = vld [vmem:[%s1923 + $0x50] sm:$0xff]
    %v1935 = vld [vmem:[%s1923 + $0x58] sm:$0xff]
    %v1936 = vld [vmem:[%s1923 + $0x60] sm:$0xff]
    %v1937 = vld [vmem:[%s1923 + $0x68] sm:$0xff]
    %v1938 = vld [vmem:[%s1923 + $0x70] sm:$0xff]
    %v1939 = vld [vmem:[%s1923 + $0x78] sm:$0xff]
    %1940 = vmatprep.subr.mxu0 0.0
    %1941 = vmatpush1.msra.mxu0 %v1939
    %1942 = vmatprep.subr.mxu0 0.0
    %1943 = vmatpush1.msra.mxu0 %v1938
    %1944 = vmatprep.subr.mxu0 0.0
    %1945 = vmatpush1.msra.mxu0 %v1937
    %1946 = vmatprep.subr.mxu0 0.0
    %1947 = vmatpush1.msra.mxu0 %v1936
    %1948 = vmatprep.subr.mxu0 0.0
    %1949 = vmatpush1.msra.mxu0 %v1935
    %1950 = vmatprep.subr.mxu0 0.0
    %1951 = vmatpush1.msra.mxu0 %v1934
    %1952 = vmatprep.subr.mxu0 0.0
    %1953 = vmatpush1.msra.mxu0 %v1933
    %1954 = vmatprep.subr.mxu0 0.0
    %1955 = vmatpush1.msra.mxu0 %v1932
    %1956 = vmatprep.subr.mxu0 0.0
    %1957 = vmatpush1.msra.mxu0 %v1931
    %1958 = vmatprep.subr.mxu0 0.0
    %1959 = vmatpush1.msra.mxu0 %v1930
    %1960 = vmatprep.subr.mxu0 0.0
    %1961 = vmatpush1.msra.mxu0 %v1929
    %1962 = vmatprep.subr.mxu0 0.0
    %1963 = vmatpush1.msra.mxu0 %v1928
    %1964 = vmatprep.subr.mxu0 0.0
    %1965 = vmatpush1.msra.mxu0 %v1927
    %1966 = vmatprep.subr.mxu0 0.0
    %1967 = vmatpush1.msra.mxu0 %v1926
    %1968 = vmatprep.subr.mxu0 0.0
    %1969 = vmatpush1.msra.mxu0 %v1925
    %1970 = vmatprep.subr.mxu0 0.0
    %1971 = vmatpush1.msra.mxu0 %v1924
    %1972 = vmatprep.subr.mxu0 0.0
    %1973 = vmatpush2.msra.mxu0 0.0
    %1974 = vmatprep.subr.mxu0 0.0
    %1975 = vmatpush2.msra.mxu0 0.0
    %1976 = vmatprep.subr.mxu0 0.0
    %1977 = vmatpush2.msra.mxu0 0.0
    %1978 = vmatprep.subr.mxu0 0.0
    %1979 = vmatpush2.msra.mxu0 0.0
    %1980 = vmatprep.subr.mxu0 0.0
    %1981 = vmatpush2.msra.mxu0 0.0
    %1982 = vmatprep.subr.mxu0 0.0
    %1983 = vmatpush2.msra.mxu0 0.0
    %1984 = vmatprep.subr.mxu0 0.0
    %1985 = vmatpush2.msra.mxu0 0.0
    %1986 = vmatprep.subr.mxu0 0.0
    %1987 = vmatpush2.msra.mxu0 0.0
    %1988 = vmatprep.subr.mxu0 0.0
    %1989 = vmatpush2.msra.mxu0 0.0
    %1990 = vmatprep.subr.mxu0 0.0
    %1991 = vmatpush2.msra.mxu0 0.0
    %1992 = vmatprep.subr.mxu0 0.0
    %1993 = vmatpush2.msra.mxu0 0.0
    %1994 = vmatprep.subr.mxu0 0.0
    %1995 = vmatpush2.msra.mxu0 0.0
    %1996 = vmatprep.subr.mxu0 0.0
    %1997 = vmatpush2.msra.mxu0 0.0
    %1998 = vmatprep.subr.mxu0 0.0
    %1999 = vmatpush2.msra.mxu0 0.0
    %2000 = vmatprep.subr.mxu0 0.0
    %2001 = vmatpush2.msra.mxu0 0.0
    %2002 = vmatprep.subr.mxu0 0.0
    %2003 = vmatpush2.msra.mxu0 0.0
    %2004 = vmatprep.mubr.f32.mxu0 0.0
    %2005 = vmatmul.mubr.f32.gmra.mxu0 %v1898
    %v2006 = vpop.f32.mrf.mxu0
    %v2007 = vadd.f32 0.0, %v2006
    %v2008 = vpop.f32.mrf.mxu0
    %2009 = vmatprep.mubr.f32.mxu0 0.0
    %2010 = vmatmul.mubr.f32.gmra.mxu0 %v1899
    %v2011 = vpop.f32.mrf.mxu0
    %v2012 = vadd.f32 0.0, %v2011
    %v2013 = vpop.f32.mrf.mxu0
    %2014 = vmatprep.mubr.f32.mxu0 0.0
    %2015 = vmatmul.mubr.f32.gmra.mxu0 %v1900
    %v2016 = vpop.f32.mrf.mxu0
    %v2017 = vadd.f32 0.0, %v2016
    %v2018 = vpop.f32.mrf.mxu0
    %2019 = vmatprep.mubr.f32.mxu0 0.0
    %2020 = vmatmul.mubr.f32.gmra.mxu0 %v1901
    %v2021 = vpop.f32.mrf.mxu0
    %v2022 = vadd.f32 0.0, %v2021
    %v2023 = vpop.f32.mrf.mxu0
    %2024 = vmatprep.mubr.f32.mxu0 0.0
    %2025 = vmatmul.mubr.f32.gmra.mxu0 %v1902
    %v2026 = vpop.f32.mrf.mxu0
    %v2027 = vadd.f32 0.0, %v2026
    %v2028 = vpop.f32.mrf.mxu0
    %2029 = vmatprep.mubr.f32.mxu0 0.0
    %2030 = vmatmul.mubr.f32.gmra.mxu0 %v1903
    %v2031 = vpop.f32.mrf.mxu0
    %v2032 = vadd.f32 0.0, %v2031
    %v2033 = vpop.f32.mrf.mxu0
    %2034 = vmatprep.mubr.f32.mxu0 0.0
    %2035 = vmatmul.mubr.f32.gmra.mxu0 %v1904
    %v2036 = vpop.f32.mrf.mxu0
    %v2037 = vadd.f32 0.0, %v2036
    %v2038 = vpop.f32.mrf.mxu0
    %2039 = vmatprep.mubr.f32.mxu0 0.0
    %2040 = vmatmul.mubr.f32.gmra.mxu0 %v1905
    %v2041 = vpop.f32.mrf.mxu0
    %v2042 = vadd.f32 0.0, %v2041
    %v2043 = vpop.f32.mrf.mxu0
    %2044 = vmatprep.mubr.f32.mxu0 0.0
    %2045 = vmatmul.mubr.f32.gmra.mxu0 %v1906
    %v2046 = vpop.f32.mrf.mxu0
    %v2047 = vadd.f32 0.0, %v2046
    %v2048 = vpop.f32.mrf.mxu0
    %2049 = vmatprep.mubr.f32.mxu0 0.0
    %2050 = vmatmul.mubr.f32.gmra.mxu0 %v1907
    %v2051 = vpop.f32.mrf.mxu0
    %v2052 = vadd.f32 0.0, %v2051
    %v2053 = vpop.f32.mrf.mxu0
    %2054 = vmatprep.mubr.f32.mxu0 0.0
    %2055 = vmatmul.mubr.f32.gmra.mxu0 %v1908
    %v2056 = vpop.f32.mrf.mxu0
    %v2057 = vadd.f32 0.0, %v2056
    %v2058 = vpop.f32.mrf.mxu0
    %2059 = vmatprep.mubr.f32.mxu0 0.0
    %2060 = vmatmul.mubr.f32.gmra.mxu0 %v1909
    %v2061 = vpop.f32.mrf.mxu0
    %v2062 = vadd.f32 0.0, %v2061
    %v2063 = vpop.f32.mrf.mxu0
    %2064 = vmatprep.mubr.f32.mxu0 0.0
    %2065 = vmatmul.mubr.f32.gmra.mxu0 %v1910
    %v2066 = vpop.f32.mrf.mxu0
    %v2067 = vadd.f32 0.0, %v2066
    %v2068 = vpop.f32.mrf.mxu0
    %2069 = vmatprep.mubr.f32.mxu0 0.0
    %2070 = vmatmul.mubr.f32.gmra.mxu0 %v1911
    %v2071 = vpop.f32.mrf.mxu0
    %v2072 = vadd.f32 0.0, %v2071
    %v2073 = vpop.f32.mrf.mxu0
    %2074 = vmatprep.mubr.f32.mxu0 0.0
    %2075 = vmatmul.mubr.f32.gmra.mxu0 %v1912
    %v2076 = vpop.f32.mrf.mxu0
    %v2077 = vadd.f32 0.0, %v2076
    %v2078 = vpop.f32.mrf.mxu0
    %2079 = vmatprep.mubr.f32.mxu0 0.0
    %2080 = vmatmul.mubr.f32.gmra.mxu0 %v1913
    %v2081 = vpop.f32.mrf.mxu0
    %v2082 = vadd.f32 0.0, %v2081
    %v2083 = vpop.f32.mrf.mxu0
    %2084 = vmatprep.mubr.f32.mxu0 0.0
    %2085 = vmatmul.mubr.f32.gmra.mxu0 %v1914
    %v2086 = vpop.f32.mrf.mxu0
    %v2087 = vadd.f32 0.0, %v2086
    %v2088 = vpop.f32.mrf.mxu0
    %2089 = vmatprep.mubr.f32.mxu0 0.0
    %2090 = vmatmul.mubr.f32.gmra.mxu0 %v1915
    %v2091 = vpop.f32.mrf.mxu0
    %v2092 = vadd.f32 0.0, %v2091
    %v2093 = vpop.f32.mrf.mxu0
    %2094 = vmatprep.mubr.f32.mxu0 0.0
    %2095 = vmatmul.mubr.f32.gmra.mxu0 %v1916
    %v2096 = vpop.f32.mrf.mxu0
    %v2097 = vadd.f32 0.0, %v2096
    %v2098 = vpop.f32.mrf.mxu0
    %2099 = vmatprep.mubr.f32.mxu0 0.0
    %2100 = vmatmul.mubr.f32.gmra.mxu0 %v1917
    %v2101 = vpop.f32.mrf.mxu0
    %v2102 = vadd.f32 0.0, %v2101
    %v2103 = vpop.f32.mrf.mxu0
    %2104 = vmatprep.mubr.f32.mxu0 0.0
    %2105 = vmatmul.mubr.f32.gmra.mxu0 %v1918
    %v2106 = vpop.f32.mrf.mxu0
    %v2107 = vadd.f32 0.0, %v2106
    %v2108 = vpop.f32.mrf.mxu0
    %2109 = vmatprep.mubr.f32.mxu0 0.0
    %2110 = vmatmul.mubr.f32.gmra.mxu0 %v1919
    %v2111 = vpop.f32.mrf.mxu0
    %v2112 = vadd.f32 0.0, %v2111
    %v2113 = vpop.f32.mrf.mxu0
    %2114 = vmatprep.mubr.f32.mxu0 0.0
    %2115 = vmatmul.mubr.f32.gmra.mxu0 %v1920
    %v2116 = vpop.f32.mrf.mxu0
    %v2117 = vadd.f32 0.0, %v2116
    %v2118 = vpop.f32.mrf.mxu0
    %2119 = vmatprep.mubr.f32.mxu0 0.0
    %2120 = vmatmul.mubr.f32.gmra.mxu0 %v1921
    %v2121 = vpop.f32.mrf.mxu0
    %v2122 = vadd.f32 0.0, %v2121
    %v2123 = vpop.f32.mrf.mxu0
    %2124 = vmatprep.mubr.f32.mxu0 0.0
    %2125 = vmatmul.mubr.f32.gmra.mxu0 %v1922
    %v2126 = vpop.f32.mrf.mxu0
    %v2127 = vadd.f32 0.0, %v2126
    %v2128 = vpop.f32.mrf.mxu0
    %2129 = vdwg.mxu0
    %v2130 = vadd.f32 %v1873, %v2007
    %v2131 = vadd.f32 %v1874, %v2012
    %v2132 = vadd.f32 %v1875, %v2017
    %v2133 = vadd.f32 %v1876, %v2022
    %v2134 = vadd.f32 %v1877, %v2027
    %v2135 = vadd.f32 %v1878, %v2032
    %v2136 = vadd.f32 %v1879, %v2037
    %v2137 = vadd.f32 %v1880, %v2042
    %v2138 = vadd.f32 %v1881, %v2047
    %v2139 = vadd.f32 %v1882, %v2052
    %v2140 = vadd.f32 %v1883, %v2057
    %v2141 = vadd.f32 %v1884, %v2062
    %v2142 = vadd.f32 %v1885, %v2067
    %v2143 = vadd.f32 %v1886, %v2072
    %v2144 = vadd.f32 %v1887, %v2077
    %v2145 = vadd.f32 %v1888, %v2082
    %v2146 = vadd.f32 %v1889, %v2087
    %v2147 = vadd.f32 %v1890, %v2092
    %v2148 = vadd.f32 %v1891, %v2097
    %v2149 = vadd.f32 %v1892, %v2102
    %v2150 = vadd.f32 %v1893, %v2107
    %v2151 = vadd.f32 %v1894, %v2112
    %v2152 = vadd.f32 %v1895, %v2117
    %v2153 = vadd.f32 %v1896, %v2122
    %v2154 = vadd.f32 %v1897, %v2127
    %v2155 = vld [vmem:[#allocation2 + $0x19] sm:$0xff]
    %v2156 = vld [vmem:[#allocation2 + $0x21] sm:$0xff]
    %v2157 = vld [vmem:[#allocation2 + $0x29] sm:$0xff]
    %v2158 = vld [vmem:[#allocation2 + $0x31] sm:$0xff]
    %v2159 = vld [vmem:[#allocation2 + $0x39] sm:$0xff]
    %v2160 = vld [vmem:[#allocation2 + $0x41] sm:$0xff]
    %v2161 = vld [vmem:[#allocation2 + $0x49] sm:$0xff]
    %v2162 = vld [vmem:[#allocation2 + $0x51] sm:$0xff]
    %v2163 = vld [vmem:[#allocation2 + $0x59] sm:$0xff]
    %v2164 = vld [vmem:[#allocation2 + $0x61] sm:$0xff]
    %v2165 = vld [vmem:[#allocation2 + $0x69] sm:$0xff]
    %v2166 = vld [vmem:[#allocation2 + $0x71] sm:$0xff]
    %v2167 = vld [vmem:[#allocation2 + $0x79] sm:$0xff]
    %v2168 = vld [vmem:[#allocation2 + $0x81] sm:$0xff]
    %v2169 = vld [vmem:[#allocation2 + $0x89] sm:$0xff]
    %v2170 = vld [vmem:[#allocation2 + $0x91] sm:$0xff]
    %v2171 = vld [vmem:[#allocation2 + $0x99] sm:$0xff]
    %v2172 = vld [vmem:[#allocation2 + $0xa1] sm:$0xff]
    %v2173 = vld [vmem:[#allocation2 + $0xa9] sm:$0xff]
    %v2174 = vld [vmem:[#allocation2 + $0xb1] sm:$0xff]
    %v2175 = vld [vmem:[#allocation2 + $0xb9] sm:$0xff]
    %v2176 = vld [vmem:[#allocation2 + $0xc1] sm:$0xff]
    %v2177 = vld [vmem:[#allocation2 + $0xc9] sm:$0xff]
    %v2178 = vld [vmem:[#allocation2 + $0xd1] sm:$0xff]
    %v2179 = vld [vmem:[#allocation2 + $0xd9] sm:$0xff]
    %s2180 = scalar_lea.vmem %s3, 768
    %v2181 = vld [vmem:[%s2180] sm:$0xff]
    %v2182 = vld [vmem:[%s2180 + $0x8] sm:$0xff]
    %v2183 = vld [vmem:[%s2180 + $0x10] sm:$0xff]
    %v2184 = vld [vmem:[%s2180 + $0x18] sm:$0xff]
    %v2185 = vld [vmem:[%s2180 + $0x20] sm:$0xff]
    %v2186 = vld [vmem:[%s2180 + $0x28] sm:$0xff]
    %v2187 = vld [vmem:[%s2180 + $0x30] sm:$0xff]
    %v2188 = vld [vmem:[%s2180 + $0x38] sm:$0xff]
    %v2189 = vld [vmem:[%s2180 + $0x40] sm:$0xff]
    %v2190 = vld [vmem:[%s2180 + $0x48] sm:$0xff]
    %v2191 = vld [vmem:[%s2180 + $0x50] sm:$0xff]
    %v2192 = vld [vmem:[%s2180 + $0x58] sm:$0xff]
    %v2193 = vld [vmem:[%s2180 + $0x60] sm:$0xff]
    %v2194 = vld [vmem:[%s2180 + $0x68] sm:$0xff]
    %v2195 = vld [vmem:[%s2180 + $0x70] sm:$0xff]
    %v2196 = vld [vmem:[%s2180 + $0x78] sm:$0xff]
    %2197 = vmatprep.subr.mxu0 0.0
    %2198 = vmatpush1.msra.mxu0 %v2196
    %2199 = vmatprep.subr.mxu0 0.0
    %2200 = vmatpush1.msra.mxu0 %v2195
    %2201 = vmatprep.subr.mxu0 0.0
    %2202 = vmatpush1.msra.mxu0 %v2194
    %2203 = vmatprep.subr.mxu0 0.0
    %2204 = vmatpush1.msra.mxu0 %v2193
    %2205 = vmatprep.subr.mxu0 0.0
    %2206 = vmatpush1.msra.mxu0 %v2192
    %2207 = vmatprep.subr.mxu0 0.0
    %2208 = vmatpush1.msra.mxu0 %v2191
    %2209 = vmatprep.subr.mxu0 0.0
    %2210 = vmatpush1.msra.mxu0 %v2190
    %2211 = vmatprep.subr.mxu0 0.0
    %2212 = vmatpush1.msra.mxu0 %v2189
    %2213 = vmatprep.subr.mxu0 0.0
    %2214 = vmatpush1.msra.mxu0 %v2188
    %2215 = vmatprep.subr.mxu0 0.0
    %2216 = vmatpush1.msra.mxu0 %v2187
    %2217 = vmatprep.subr.mxu0 0.0
    %2218 = vmatpush1.msra.mxu0 %v2186
    %2219 = vmatprep.subr.mxu0 0.0
    %2220 = vmatpush1.msra.mxu0 %v2185
    %2221 = vmatprep.subr.mxu0 0.0
    %2222 = vmatpush1.msra.mxu0 %v2184
    %2223 = vmatprep.subr.mxu0 0.0
    %2224 = vmatpush1.msra.mxu0 %v2183
    %2225 = vmatprep.subr.mxu0 0.0
    %2226 = vmatpush1.msra.mxu0 %v2182
    %2227 = vmatprep.subr.mxu0 0.0
    %2228 = vmatpush1.msra.mxu0 %v2181
    %2229 = vmatprep.subr.mxu0 0.0
    %2230 = vmatpush2.msra.mxu0 0.0
    %2231 = vmatprep.subr.mxu0 0.0
    %2232 = vmatpush2.msra.mxu0 0.0
    %2233 = vmatprep.subr.mxu0 0.0
    %2234 = vmatpush2.msra.mxu0 0.0
    %2235 = vmatprep.subr.mxu0 0.0
    %2236 = vmatpush2.msra.mxu0 0.0
    %2237 = vmatprep.subr.mxu0 0.0
    %2238 = vmatpush2.msra.mxu0 0.0
    %2239 = vmatprep.subr.mxu0 0.0
    %2240 = vmatpush2.msra.mxu0 0.0
    %2241 = vmatprep.subr.mxu0 0.0
    %2242 = vmatpush2.msra.mxu0 0.0
    %2243 = vmatprep.subr.mxu0 0.0
    %2244 = vmatpush2.msra.mxu0 0.0
    %2245 = vmatprep.subr.mxu0 0.0
    %2246 = vmatpush2.msra.mxu0 0.0
    %2247 = vmatprep.subr.mxu0 0.0
    %2248 = vmatpush2.msra.mxu0 0.0
    %2249 = vmatprep.subr.mxu0 0.0
    %2250 = vmatpush2.msra.mxu0 0.0
    %2251 = vmatprep.subr.mxu0 0.0
    %2252 = vmatpush2.msra.mxu0 0.0
    %2253 = vmatprep.subr.mxu0 0.0
    %2254 = vmatpush2.msra.mxu0 0.0
    %2255 = vmatprep.subr.mxu0 0.0
    %2256 = vmatpush2.msra.mxu0 0.0
    %2257 = vmatprep.subr.mxu0 0.0
    %2258 = vmatpush2.msra.mxu0 0.0
    %2259 = vmatprep.subr.mxu0 0.0
    %2260 = vmatpush2.msra.mxu0 0.0
    %2261 = vmatprep.mubr.f32.mxu0 0.0
    %2262 = vmatmul.mubr.f32.gmra.mxu0 %v2155
    %v2263 = vpop.f32.mrf.mxu0
    %v2264 = vadd.f32 0.0, %v2263
    %v2265 = vpop.f32.mrf.mxu0
    %2266 = vmatprep.mubr.f32.mxu0 0.0
    %2267 = vmatmul.mubr.f32.gmra.mxu0 %v2156
    %v2268 = vpop.f32.mrf.mxu0
    %v2269 = vadd.f32 0.0, %v2268
    %v2270 = vpop.f32.mrf.mxu0
    %2271 = vmatprep.mubr.f32.mxu0 0.0
    %2272 = vmatmul.mubr.f32.gmra.mxu0 %v2157
    %v2273 = vpop.f32.mrf.mxu0
    %v2274 = vadd.f32 0.0, %v2273
    %v2275 = vpop.f32.mrf.mxu0
    %2276 = vmatprep.mubr.f32.mxu0 0.0
    %2277 = vmatmul.mubr.f32.gmra.mxu0 %v2158
    %v2278 = vpop.f32.mrf.mxu0
    %v2279 = vadd.f32 0.0, %v2278
    %v2280 = vpop.f32.mrf.mxu0
    %2281 = vmatprep.mubr.f32.mxu0 0.0
    %2282 = vmatmul.mubr.f32.gmra.mxu0 %v2159
    %v2283 = vpop.f32.mrf.mxu0
    %v2284 = vadd.f32 0.0, %v2283
    %v2285 = vpop.f32.mrf.mxu0
    %2286 = vmatprep.mubr.f32.mxu0 0.0
    %2287 = vmatmul.mubr.f32.gmra.mxu0 %v2160
    %v2288 = vpop.f32.mrf.mxu0
    %v2289 = vadd.f32 0.0, %v2288
    %v2290 = vpop.f32.mrf.mxu0
    %2291 = vmatprep.mubr.f32.mxu0 0.0
    %2292 = vmatmul.mubr.f32.gmra.mxu0 %v2161
    %v2293 = vpop.f32.mrf.mxu0
    %v2294 = vadd.f32 0.0, %v2293
    %v2295 = vpop.f32.mrf.mxu0
    %2296 = vmatprep.mubr.f32.mxu0 0.0
    %2297 = vmatmul.mubr.f32.gmra.mxu0 %v2162
    %v2298 = vpop.f32.mrf.mxu0
    %v2299 = vadd.f32 0.0, %v2298
    %v2300 = vpop.f32.mrf.mxu0
    %2301 = vmatprep.mubr.f32.mxu0 0.0
    %2302 = vmatmul.mubr.f32.gmra.mxu0 %v2163
    %v2303 = vpop.f32.mrf.mxu0
    %v2304 = vadd.f32 0.0, %v2303
    %v2305 = vpop.f32.mrf.mxu0
    %2306 = vmatprep.mubr.f32.mxu0 0.0
    %2307 = vmatmul.mubr.f32.gmra.mxu0 %v2164
    %v2308 = vpop.f32.mrf.mxu0
    %v2309 = vadd.f32 0.0, %v2308
    %v2310 = vpop.f32.mrf.mxu0
    %2311 = vmatprep.mubr.f32.mxu0 0.0
    %2312 = vmatmul.mubr.f32.gmra.mxu0 %v2165
    %v2313 = vpop.f32.mrf.mxu0
    %v2314 = vadd.f32 0.0, %v2313
    %v2315 = vpop.f32.mrf.mxu0
    %2316 = vmatprep.mubr.f32.mxu0 0.0
    %2317 = vmatmul.mubr.f32.gmra.mxu0 %v2166
    %v2318 = vpop.f32.mrf.mxu0
    %v2319 = vadd.f32 0.0, %v2318
    %v2320 = vpop.f32.mrf.mxu0
    %2321 = vmatprep.mubr.f32.mxu0 0.0
    %2322 = vmatmul.mubr.f32.gmra.mxu0 %v2167
    %v2323 = vpop.f32.mrf.mxu0
    %v2324 = vadd.f32 0.0, %v2323
    %v2325 = vpop.f32.mrf.mxu0
    %2326 = vmatprep.mubr.f32.mxu0 0.0
    %2327 = vmatmul.mubr.f32.gmra.mxu0 %v2168
    %v2328 = vpop.f32.mrf.mxu0
    %v2329 = vadd.f32 0.0, %v2328
    %v2330 = vpop.f32.mrf.mxu0
    %2331 = vmatprep.mubr.f32.mxu0 0.0
    %2332 = vmatmul.mubr.f32.gmra.mxu0 %v2169
    %v2333 = vpop.f32.mrf.mxu0
    %v2334 = vadd.f32 0.0, %v2333
    %v2335 = vpop.f32.mrf.mxu0
    %2336 = vmatprep.mubr.f32.mxu0 0.0
    %2337 = vmatmul.mubr.f32.gmra.mxu0 %v2170
    %v2338 = vpop.f32.mrf.mxu0
    %v2339 = vadd.f32 0.0, %v2338
    %v2340 = vpop.f32.mrf.mxu0
    %2341 = vmatprep.mubr.f32.mxu0 0.0
    %2342 = vmatmul.mubr.f32.gmra.mxu0 %v2171
    %v2343 = vpop.f32.mrf.mxu0
    %v2344 = vadd.f32 0.0, %v2343
    %v2345 = vpop.f32.mrf.mxu0
    %2346 = vmatprep.mubr.f32.mxu0 0.0
    %2347 = vmatmul.mubr.f32.gmra.mxu0 %v2172
    %v2348 = vpop.f32.mrf.mxu0
    %v2349 = vadd.f32 0.0, %v2348
    %v2350 = vpop.f32.mrf.mxu0
    %2351 = vmatprep.mubr.f32.mxu0 0.0
    %2352 = vmatmul.mubr.f32.gmra.mxu0 %v2173
    %v2353 = vpop.f32.mrf.mxu0
    %v2354 = vadd.f32 0.0, %v2353
    %v2355 = vpop.f32.mrf.mxu0
    %2356 = vmatprep.mubr.f32.mxu0 0.0
    %2357 = vmatmul.mubr.f32.gmra.mxu0 %v2174
    %v2358 = vpop.f32.mrf.mxu0
    %v2359 = vadd.f32 0.0, %v2358
    %v2360 = vpop.f32.mrf.mxu0
    %2361 = vmatprep.mubr.f32.mxu0 0.0
    %2362 = vmatmul.mubr.f32.gmra.mxu0 %v2175
    %v2363 = vpop.f32.mrf.mxu0
    %v2364 = vadd.f32 0.0, %v2363
    %v2365 = vpop.f32.mrf.mxu0
    %2366 = vmatprep.mubr.f32.mxu0 0.0
    %2367 = vmatmul.mubr.f32.gmra.mxu0 %v2176
    %v2368 = vpop.f32.mrf.mxu0
    %v2369 = vadd.f32 0.0, %v2368
    %v2370 = vpop.f32.mrf.mxu0
    %2371 = vmatprep.mubr.f32.mxu0 0.0
    %2372 = vmatmul.mubr.f32.gmra.mxu0 %v2177
    %v2373 = vpop.f32.mrf.mxu0
    %v2374 = vadd.f32 0.0, %v2373
    %v2375 = vpop.f32.mrf.mxu0
    %2376 = vmatprep.mubr.f32.mxu0 0.0
    %2377 = vmatmul.mubr.f32.gmra.mxu0 %v2178
    %v2378 = vpop.f32.mrf.mxu0
    %v2379 = vadd.f32 0.0, %v2378
    %v2380 = vpop.f32.mrf.mxu0
    %2381 = vmatprep.mubr.f32.mxu0 0.0
    %2382 = vmatmul.mubr.f32.gmra.mxu0 %v2179
    %v2383 = vpop.f32.mrf.mxu0
    %v2384 = vadd.f32 0.0, %v2383
    %v2385 = vpop.f32.mrf.mxu0
    %2386 = vdwg.mxu0
    %v2387 = vadd.f32 %v2130, %v2264
    %v2388 = vadd.f32 %v2131, %v2269
    %v2389 = vadd.f32 %v2132, %v2274
    %v2390 = vadd.f32 %v2133, %v2279
    %v2391 = vadd.f32 %v2134, %v2284
    %v2392 = vadd.f32 %v2135, %v2289
    %v2393 = vadd.f32 %v2136, %v2294
    %v2394 = vadd.f32 %v2137, %v2299
    %v2395 = vadd.f32 %v2138, %v2304
    %v2396 = vadd.f32 %v2139, %v2309
    %v2397 = vadd.f32 %v2140, %v2314
    %v2398 = vadd.f32 %v2141, %v2319
    %v2399 = vadd.f32 %v2142, %v2324
    %v2400 = vadd.f32 %v2143, %v2329
    %v2401 = vadd.f32 %v2144, %v2334
    %v2402 = vadd.f32 %v2145, %v2339
    %v2403 = vadd.f32 %v2146, %v2344
    %v2404 = vadd.f32 %v2147, %v2349
    %v2405 = vadd.f32 %v2148, %v2354
    %v2406 = vadd.f32 %v2149, %v2359
    %v2407 = vadd.f32 %v2150, %v2364
    %v2408 = vadd.f32 %v2151, %v2369
    %v2409 = vadd.f32 %v2152, %v2374
    %v2410 = vadd.f32 %v2153, %v2379
    %v2411 = vadd.f32 %v2154, %v2384
    %v2412 = vld [vmem:[#allocation2 + $0x1a] sm:$0xff]
    %v2413 = vld [vmem:[#allocation2 + $0x22] sm:$0xff]
    %v2414 = vld [vmem:[#allocation2 + $0x2a] sm:$0xff]
    %v2415 = vld [vmem:[#allocation2 + $0x32] sm:$0xff]
    %v2416 = vld [vmem:[#allocation2 + $0x3a] sm:$0xff]
    %v2417 = vld [vmem:[#allocation2 + $0x42] sm:$0xff]
    %v2418 = vld [vmem:[#allocation2 + $0x4a] sm:$0xff]
    %v2419 = vld [vmem:[#allocation2 + $0x52] sm:$0xff]
    %v2420 = vld [vmem:[#allocation2 + $0x5a] sm:$0xff]
    %v2421 = vld [vmem:[#allocation2 + $0x62] sm:$0xff]
    %v2422 = vld [vmem:[#allocation2 + $0x6a] sm:$0xff]
    %v2423 = vld [vmem:[#allocation2 + $0x72] sm:$0xff]
    %v2424 = vld [vmem:[#allocation2 + $0x7a] sm:$0xff]
    %v2425 = vld [vmem:[#allocation2 + $0x82] sm:$0xff]
    %v2426 = vld [vmem:[#allocation2 + $0x8a] sm:$0xff]
    %v2427 = vld [vmem:[#allocation2 + $0x92] sm:$0xff]
    %v2428 = vld [vmem:[#allocation2 + $0x9a] sm:$0xff]
    %v2429 = vld [vmem:[#allocation2 + $0xa2] sm:$0xff]
    %v2430 = vld [vmem:[#allocation2 + $0xaa] sm:$0xff]
    %v2431 = vld [vmem:[#allocation2 + $0xb2] sm:$0xff]
    %v2432 = vld [vmem:[#allocation2 + $0xba] sm:$0xff]
    %v2433 = vld [vmem:[#allocation2 + $0xc2] sm:$0xff]
    %v2434 = vld [vmem:[#allocation2 + $0xca] sm:$0xff]
    %v2435 = vld [vmem:[#allocation2 + $0xd2] sm:$0xff]
    %v2436 = vld [vmem:[#allocation2 + $0xda] sm:$0xff]
    %s2437 = scalar_lea.vmem %s3, 896
    %v2438 = vld [vmem:[%s2437] sm:$0xff]
    %v2439 = vld [vmem:[%s2437 + $0x8] sm:$0xff]
    %v2440 = vld [vmem:[%s2437 + $0x10] sm:$0xff]
    %v2441 = vld [vmem:[%s2437 + $0x18] sm:$0xff]
    %v2442 = vld [vmem:[%s2437 + $0x20] sm:$0xff]
    %v2443 = vld [vmem:[%s2437 + $0x28] sm:$0xff]
    %v2444 = vld [vmem:[%s2437 + $0x30] sm:$0xff]
    %v2445 = vld [vmem:[%s2437 + $0x38] sm:$0xff]
    %v2446 = vld [vmem:[%s2437 + $0x40] sm:$0xff]
    %v2447 = vld [vmem:[%s2437 + $0x48] sm:$0xff]
    %v2448 = vld [vmem:[%s2437 + $0x50] sm:$0xff]
    %v2449 = vld [vmem:[%s2437 + $0x58] sm:$0xff]
    %v2450 = vld [vmem:[%s2437 + $0x60] sm:$0xff]
    %v2451 = vld [vmem:[%s2437 + $0x68] sm:$0xff]
    %v2452 = vld [vmem:[%s2437 + $0x70] sm:$0xff]
    %v2453 = vld [vmem:[%s2437 + $0x78] sm:$0xff]
    %2454 = vmatprep.subr.mxu0 0.0
    %2455 = vmatpush1.msra.mxu0 %v2453
    %2456 = vmatprep.subr.mxu0 0.0
    %2457 = vmatpush1.msra.mxu0 %v2452
    %2458 = vmatprep.subr.mxu0 0.0
    %2459 = vmatpush1.msra.mxu0 %v2451
    %2460 = vmatprep.subr.mxu0 0.0
    %2461 = vmatpush1.msra.mxu0 %v2450
    %2462 = vmatprep.subr.mxu0 0.0
    %2463 = vmatpush1.msra.mxu0 %v2449
    %2464 = vmatprep.subr.mxu0 0.0
    %2465 = vmatpush1.msra.mxu0 %v2448
    %2466 = vmatprep.subr.mxu0 0.0
    %2467 = vmatpush1.msra.mxu0 %v2447
    %2468 = vmatprep.subr.mxu0 0.0
    %2469 = vmatpush1.msra.mxu0 %v2446
    %2470 = vmatprep.subr.mxu0 0.0
    %2471 = vmatpush1.msra.mxu0 %v2445
    %2472 = vmatprep.subr.mxu0 0.0
    %2473 = vmatpush1.msra.mxu0 %v2444
    %2474 = vmatprep.subr.mxu0 0.0
    %2475 = vmatpush1.msra.mxu0 %v2443
    %2476 = vmatprep.subr.mxu0 0.0
    %2477 = vmatpush1.msra.mxu0 %v2442
    %2478 = vmatprep.subr.mxu0 0.0
    %2479 = vmatpush1.msra.mxu0 %v2441
    %2480 = vmatprep.subr.mxu0 0.0
    %2481 = vmatpush1.msra.mxu0 %v2440
    %2482 = vmatprep.subr.mxu0 0.0
    %2483 = vmatpush1.msra.mxu0 %v2439
    %2484 = vmatprep.subr.mxu0 0.0
    %2485 = vmatpush1.msra.mxu0 %v2438
    %2486 = vmatprep.subr.mxu0 0.0
    %2487 = vmatpush2.msra.mxu0 0.0
    %2488 = vmatprep.subr.mxu0 0.0
    %2489 = vmatpush2.msra.mxu0 0.0
    %2490 = vmatprep.subr.mxu0 0.0
    %2491 = vmatpush2.msra.mxu0 0.0
    %2492 = vmatprep.subr.mxu0 0.0
    %2493 = vmatpush2.msra.mxu0 0.0
    %2494 = vmatprep.subr.mxu0 0.0
    %2495 = vmatpush2.msra.mxu0 0.0
    %2496 = vmatprep.subr.mxu0 0.0
    %2497 = vmatpush2.msra.mxu0 0.0
    %2498 = vmatprep.subr.mxu0 0.0
    %2499 = vmatpush2.msra.mxu0 0.0
    %2500 = vmatprep.subr.mxu0 0.0
    %2501 = vmatpush2.msra.mxu0 0.0
    %2502 = vmatprep.subr.mxu0 0.0
    %2503 = vmatpush2.msra.mxu0 0.0
    %2504 = vmatprep.subr.mxu0 0.0
    %2505 = vmatpush2.msra.mxu0 0.0
    %2506 = vmatprep.subr.mxu0 0.0
    %2507 = vmatpush2.msra.mxu0 0.0
    %2508 = vmatprep.subr.mxu0 0.0
    %2509 = vmatpush2.msra.mxu0 0.0
    %2510 = vmatprep.subr.mxu0 0.0
    %2511 = vmatpush2.msra.mxu0 0.0
    %2512 = vmatprep.subr.mxu0 0.0
    %2513 = vmatpush2.msra.mxu0 0.0
    %2514 = vmatprep.subr.mxu0 0.0
    %2515 = vmatpush2.msra.mxu0 0.0
    %2516 = vmatprep.subr.mxu0 0.0
    %2517 = vmatpush2.msra.mxu0 0.0
    %2518 = vmatprep.mubr.f32.mxu0 0.0
    %2519 = vmatmul.mubr.f32.gmra.mxu0 %v2412
    %v2520 = vpop.f32.mrf.mxu0
    %v2521 = vadd.f32 0.0, %v2520
    %v2522 = vpop.f32.mrf.mxu0
    %2523 = vmatprep.mubr.f32.mxu0 0.0
    %2524 = vmatmul.mubr.f32.gmra.mxu0 %v2413
    %v2525 = vpop.f32.mrf.mxu0
    %v2526 = vadd.f32 0.0, %v2525
    %v2527 = vpop.f32.mrf.mxu0
    %2528 = vmatprep.mubr.f32.mxu0 0.0
    %2529 = vmatmul.mubr.f32.gmra.mxu0 %v2414
    %v2530 = vpop.f32.mrf.mxu0
    %v2531 = vadd.f32 0.0, %v2530
    %v2532 = vpop.f32.mrf.mxu0
    %2533 = vmatprep.mubr.f32.mxu0 0.0
    %2534 = vmatmul.mubr.f32.gmra.mxu0 %v2415
    %v2535 = vpop.f32.mrf.mxu0
    %v2536 = vadd.f32 0.0, %v2535
    %v2537 = vpop.f32.mrf.mxu0
    %2538 = vmatprep.mubr.f32.mxu0 0.0
    %2539 = vmatmul.mubr.f32.gmra.mxu0 %v2416
    %v2540 = vpop.f32.mrf.mxu0
    %v2541 = vadd.f32 0.0, %v2540
    %v2542 = vpop.f32.mrf.mxu0
    %2543 = vmatprep.mubr.f32.mxu0 0.0
    %2544 = vmatmul.mubr.f32.gmra.mxu0 %v2417
    %v2545 = vpop.f32.mrf.mxu0
    %v2546 = vadd.f32 0.0, %v2545
    %v2547 = vpop.f32.mrf.mxu0
    %2548 = vmatprep.mubr.f32.mxu0 0.0
    %2549 = vmatmul.mubr.f32.gmra.mxu0 %v2418
    %v2550 = vpop.f32.mrf.mxu0
    %v2551 = vadd.f32 0.0, %v2550
    %v2552 = vpop.f32.mrf.mxu0
    %2553 = vmatprep.mubr.f32.mxu0 0.0
    %2554 = vmatmul.mubr.f32.gmra.mxu0 %v2419
    %v2555 = vpop.f32.mrf.mxu0
    %v2556 = vadd.f32 0.0, %v2555
    %v2557 = vpop.f32.mrf.mxu0
    %2558 = vmatprep.mubr.f32.mxu0 0.0
    %2559 = vmatmul.mubr.f32.gmra.mxu0 %v2420
    %v2560 = vpop.f32.mrf.mxu0
    %v2561 = vadd.f32 0.0, %v2560
    %v2562 = vpop.f32.mrf.mxu0
    %2563 = vmatprep.mubr.f32.mxu0 0.0
    %2564 = vmatmul.mubr.f32.gmra.mxu0 %v2421
    %v2565 = vpop.f32.mrf.mxu0
    %v2566 = vadd.f32 0.0, %v2565
    %v2567 = vpop.f32.mrf.mxu0
    %2568 = vmatprep.mubr.f32.mxu0 0.0
    %2569 = vmatmul.mubr.f32.gmra.mxu0 %v2422
    %v2570 = vpop.f32.mrf.mxu0
    %v2571 = vadd.f32 0.0, %v2570
    %v2572 = vpop.f32.mrf.mxu0
    %2573 = vmatprep.mubr.f32.mxu0 0.0
    %2574 = vmatmul.mubr.f32.gmra.mxu0 %v2423
    %v2575 = vpop.f32.mrf.mxu0
    %v2576 = vadd.f32 0.0, %v2575
    %v2577 = vpop.f32.mrf.mxu0
    %2578 = vmatprep.mubr.f32.mxu0 0.0
    %2579 = vmatmul.mubr.f32.gmra.mxu0 %v2424
    %v2580 = vpop.f32.mrf.mxu0
    %v2581 = vadd.f32 0.0, %v2580
    %v2582 = vpop.f32.mrf.mxu0
    %2583 = vmatprep.mubr.f32.mxu0 0.0
    %2584 = vmatmul.mubr.f32.gmra.mxu0 %v2425
    %v2585 = vpop.f32.mrf.mxu0
    %v2586 = vadd.f32 0.0, %v2585
    %v2587 = vpop.f32.mrf.mxu0
    %2588 = vmatprep.mubr.f32.mxu0 0.0
    %2589 = vmatmul.mubr.f32.gmra.mxu0 %v2426
    %v2590 = vpop.f32.mrf.mxu0
    %v2591 = vadd.f32 0.0, %v2590
    %v2592 = vpop.f32.mrf.mxu0
    %2593 = vmatprep.mubr.f32.mxu0 0.0
    %2594 = vmatmul.mubr.f32.gmra.mxu0 %v2427
    %v2595 = vpop.f32.mrf.mxu0
    %v2596 = vadd.f32 0.0, %v2595
    %v2597 = vpop.f32.mrf.mxu0
    %2598 = vmatprep.mubr.f32.mxu0 0.0
    %2599 = vmatmul.mubr.f32.gmra.mxu0 %v2428
    %v2600 = vpop.f32.mrf.mxu0
    %v2601 = vadd.f32 0.0, %v2600
    %v2602 = vpop.f32.mrf.mxu0
    %2603 = vmatprep.mubr.f32.mxu0 0.0
    %2604 = vmatmul.mubr.f32.gmra.mxu0 %v2429
    %v2605 = vpop.f32.mrf.mxu0
    %v2606 = vadd.f32 0.0, %v2605
    %v2607 = vpop.f32.mrf.mxu0
    %2608 = vmatprep.mubr.f32.mxu0 0.0
    %2609 = vmatmul.mubr.f32.gmra.mxu0 %v2430
    %v2610 = vpop.f32.mrf.mxu0
    %v2611 = vadd.f32 0.0, %v2610
    %v2612 = vpop.f32.mrf.mxu0
    %2613 = vmatprep.mubr.f32.mxu0 0.0
    %2614 = vmatmul.mubr.f32.gmra.mxu0 %v2431
    %v2615 = vpop.f32.mrf.mxu0
    %v2616 = vadd.f32 0.0, %v2615
    %v2617 = vpop.f32.mrf.mxu0
    %2618 = vmatprep.mubr.f32.mxu0 0.0
    %2619 = vmatmul.mubr.f32.gmra.mxu0 %v2432
    %v2620 = vpop.f32.mrf.mxu0
    %v2621 = vadd.f32 0.0, %v2620
    %v2622 = vpop.f32.mrf.mxu0
    %2623 = vmatprep.mubr.f32.mxu0 0.0
    %2624 = vmatmul.mubr.f32.gmra.mxu0 %v2433
    %v2625 = vpop.f32.mrf.mxu0
    %v2626 = vadd.f32 0.0, %v2625
    %v2627 = vpop.f32.mrf.mxu0
    %2628 = vmatprep.mubr.f32.mxu0 0.0
    %2629 = vmatmul.mubr.f32.gmra.mxu0 %v2434
    %v2630 = vpop.f32.mrf.mxu0
    %v2631 = vadd.f32 0.0, %v2630
    %v2632 = vpop.f32.mrf.mxu0
    %2633 = vmatprep.mubr.f32.mxu0 0.0
    %2634 = vmatmul.mubr.f32.gmra.mxu0 %v2435
    %v2635 = vpop.f32.mrf.mxu0
    %v2636 = vadd.f32 0.0, %v2635
    %v2637 = vpop.f32.mrf.mxu0
    %2638 = vmatprep.mubr.f32.mxu0 0.0
    %2639 = vmatmul.mubr.f32.gmra.mxu0 %v2436
    %v2640 = vpop.f32.mrf.mxu0
    %v2641 = vadd.f32 0.0, %v2640
    %v2642 = vpop.f32.mrf.mxu0
    %2643 = vdwg.mxu0
    %v2644 = vadd.f32 %v2387, %v2521
    %v2645 = vadd.f32 %v2388, %v2526
    %v2646 = vadd.f32 %v2389, %v2531
    %v2647 = vadd.f32 %v2390, %v2536
    %v2648 = vadd.f32 %v2391, %v2541
    %v2649 = vadd.f32 %v2392, %v2546
    %v2650 = vadd.f32 %v2393, %v2551
    %v2651 = vadd.f32 %v2394, %v2556
    %v2652 = vadd.f32 %v2395, %v2561
    %v2653 = vadd.f32 %v2396, %v2566
    %v2654 = vadd.f32 %v2397, %v2571
    %v2655 = vadd.f32 %v2398, %v2576
    %v2656 = vadd.f32 %v2399, %v2581
    %v2657 = vadd.f32 %v2400, %v2586
    %v2658 = vadd.f32 %v2401, %v2591
    %v2659 = vadd.f32 %v2402, %v2596
    %v2660 = vadd.f32 %v2403, %v2601
    %v2661 = vadd.f32 %v2404, %v2606
    %v2662 = vadd.f32 %v2405, %v2611
    %v2663 = vadd.f32 %v2406, %v2616
    %v2664 = vadd.f32 %v2407, %v2621
    %v2665 = vadd.f32 %v2408, %v2626
    %v2666 = vadd.f32 %v2409, %v2631
    %v2667 = vadd.f32 %v2410, %v2636
    %v2668 = vadd.f32 %v2411, %v2641
    %v2669 = vld [vmem:[#allocation2 + $0x1b] sm:$0xff]
    %v2670 = vld [vmem:[#allocation2 + $0x23] sm:$0xff]
    %v2671 = vld [vmem:[#allocation2 + $0x2b] sm:$0xff]
    %v2672 = vld [vmem:[#allocation2 + $0x33] sm:$0xff]
    %v2673 = vld [vmem:[#allocation2 + $0x3b] sm:$0xff]
    %v2674 = vld [vmem:[#allocation2 + $0x43] sm:$0xff]
    %v2675 = vld [vmem:[#allocation2 + $0x4b] sm:$0xff]
    %v2676 = vld [vmem:[#allocation2 + $0x53] sm:$0xff]
    %v2677 = vld [vmem:[#allocation2 + $0x5b] sm:$0xff]
    %v2678 = vld [vmem:[#allocation2 + $0x63] sm:$0xff]
    %v2679 = vld [vmem:[#allocation2 + $0x6b] sm:$0xff]
    %v2680 = vld [vmem:[#allocation2 + $0x73] sm:$0xff]
    %v2681 = vld [vmem:[#allocation2 + $0x7b] sm:$0xff]
    %v2682 = vld [vmem:[#allocation2 + $0x83] sm:$0xff]
    %v2683 = vld [vmem:[#allocation2 + $0x8b] sm:$0xff]
    %v2684 = vld [vmem:[#allocation2 + $0x93] sm:$0xff]
    %v2685 = vld [vmem:[#allocation2 + $0x9b] sm:$0xff]
    %v2686 = vld [vmem:[#allocation2 + $0xa3] sm:$0xff]
    %v2687 = vld [vmem:[#allocation2 + $0xab] sm:$0xff]
    %v2688 = vld [vmem:[#allocation2 + $0xb3] sm:$0xff]
    %v2689 = vld [vmem:[#allocation2 + $0xbb] sm:$0xff]
    %v2690 = vld [vmem:[#allocation2 + $0xc3] sm:$0xff]
    %v2691 = vld [vmem:[#allocation2 + $0xcb] sm:$0xff]
    %v2692 = vld [vmem:[#allocation2 + $0xd3] sm:$0xff]
    %v2693 = vld [vmem:[#allocation2 + $0xdb] sm:$0xff]
    %s2694 = scalar_lea.vmem %s3, 1024
    %v2695 = vld [vmem:[%s2694] sm:$0xff]
    %v2696 = vld [vmem:[%s2694 + $0x8] sm:$0xff]
    %v2697 = vld [vmem:[%s2694 + $0x10] sm:$0xff]
    %v2698 = vld [vmem:[%s2694 + $0x18] sm:$0xff]
    %v2699 = vld [vmem:[%s2694 + $0x20] sm:$0xff]
    %v2700 = vld [vmem:[%s2694 + $0x28] sm:$0xff]
    %v2701 = vld [vmem:[%s2694 + $0x30] sm:$0xff]
    %v2702 = vld [vmem:[%s2694 + $0x38] sm:$0xff]
    %v2703 = vld [vmem:[%s2694 + $0x40] sm:$0xff]
    %v2704 = vld [vmem:[%s2694 + $0x48] sm:$0xff]
    %v2705 = vld [vmem:[%s2694 + $0x50] sm:$0xff]
    %v2706 = vld [vmem:[%s2694 + $0x58] sm:$0xff]
    %v2707 = vld [vmem:[%s2694 + $0x60] sm:$0xff]
    %v2708 = vld [vmem:[%s2694 + $0x68] sm:$0xff]
    %v2709 = vld [vmem:[%s2694 + $0x70] sm:$0xff]
    %v2710 = vld [vmem:[%s2694 + $0x78] sm:$0xff]
    %2711 = vmatprep.subr.mxu0 0.0
    %2712 = vmatpush1.msra.mxu0 %v2710
    %2713 = vmatprep.subr.mxu0 0.0
    %2714 = vmatpush1.msra.mxu0 %v2709
    %2715 = vmatprep.subr.mxu0 0.0
    %2716 = vmatpush1.msra.mxu0 %v2708
    %2717 = vmatprep.subr.mxu0 0.0
    %2718 = vmatpush1.msra.mxu0 %v2707
    %2719 = vmatprep.subr.mxu0 0.0
    %2720 = vmatpush1.msra.mxu0 %v2706
    %2721 = vmatprep.subr.mxu0 0.0
    %2722 = vmatpush1.msra.mxu0 %v2705
    %2723 = vmatprep.subr.mxu0 0.0
    %2724 = vmatpush1.msra.mxu0 %v2704
    %2725 = vmatprep.subr.mxu0 0.0
    %2726 = vmatpush1.msra.mxu0 %v2703
    %2727 = vmatprep.subr.mxu0 0.0
    %2728 = vmatpush1.msra.mxu0 %v2702
    %2729 = vmatprep.subr.mxu0 0.0
    %2730 = vmatpush1.msra.mxu0 %v2701
    %2731 = vmatprep.subr.mxu0 0.0
    %2732 = vmatpush1.msra.mxu0 %v2700
    %2733 = vmatprep.subr.mxu0 0.0
    %2734 = vmatpush1.msra.mxu0 %v2699
    %2735 = vmatprep.subr.mxu0 0.0
    %2736 = vmatpush1.msra.mxu0 %v2698
    %2737 = vmatprep.subr.mxu0 0.0
    %2738 = vmatpush1.msra.mxu0 %v2697
    %2739 = vmatprep.subr.mxu0 0.0
    %2740 = vmatpush1.msra.mxu0 %v2696
    %2741 = vmatprep.subr.mxu0 0.0
    %2742 = vmatpush1.msra.mxu0 %v2695
    %2743 = vmatprep.subr.mxu0 0.0
    %2744 = vmatpush2.msra.mxu0 0.0
    %2745 = vmatprep.subr.mxu0 0.0
    %2746 = vmatpush2.msra.mxu0 0.0
    %2747 = vmatprep.subr.mxu0 0.0
    %2748 = vmatpush2.msra.mxu0 0.0
    %2749 = vmatprep.subr.mxu0 0.0
    %2750 = vmatpush2.msra.mxu0 0.0
    %2751 = vmatprep.subr.mxu0 0.0
    %2752 = vmatpush2.msra.mxu0 0.0
    %2753 = vmatprep.subr.mxu0 0.0
    %2754 = vmatpush2.msra.mxu0 0.0
    %2755 = vmatprep.subr.mxu0 0.0
    %2756 = vmatpush2.msra.mxu0 0.0
    %2757 = vmatprep.subr.mxu0 0.0
    %2758 = vmatpush2.msra.mxu0 0.0
    %2759 = vmatprep.subr.mxu0 0.0
    %2760 = vmatpush2.msra.mxu0 0.0
    %2761 = vmatprep.subr.mxu0 0.0
    %2762 = vmatpush2.msra.mxu0 0.0
    %2763 = vmatprep.subr.mxu0 0.0
    %2764 = vmatpush2.msra.mxu0 0.0
    %2765 = vmatprep.subr.mxu0 0.0
    %2766 = vmatpush2.msra.mxu0 0.0
    %2767 = vmatprep.subr.mxu0 0.0
    %2768 = vmatpush2.msra.mxu0 0.0
    %2769 = vmatprep.subr.mxu0 0.0
    %2770 = vmatpush2.msra.mxu0 0.0
    %2771 = vmatprep.subr.mxu0 0.0
    %2772 = vmatpush2.msra.mxu0 0.0
    %2773 = vmatprep.subr.mxu0 0.0
    %2774 = vmatpush2.msra.mxu0 0.0
    %2775 = vmatprep.mubr.f32.mxu0 0.0
    %2776 = vmatmul.mubr.f32.gmra.mxu0 %v2669
    %v2777 = vpop.f32.mrf.mxu0
    %v2778 = vadd.f32 0.0, %v2777
    %v2779 = vpop.f32.mrf.mxu0
    %2780 = vmatprep.mubr.f32.mxu0 0.0
    %2781 = vmatmul.mubr.f32.gmra.mxu0 %v2670
    %v2782 = vpop.f32.mrf.mxu0
    %v2783 = vadd.f32 0.0, %v2782
    %v2784 = vpop.f32.mrf.mxu0
    %2785 = vmatprep.mubr.f32.mxu0 0.0
    %2786 = vmatmul.mubr.f32.gmra.mxu0 %v2671
    %v2787 = vpop.f32.mrf.mxu0
    %v2788 = vadd.f32 0.0, %v2787
    %v2789 = vpop.f32.mrf.mxu0
    %2790 = vmatprep.mubr.f32.mxu0 0.0
    %2791 = vmatmul.mubr.f32.gmra.mxu0 %v2672
    %v2792 = vpop.f32.mrf.mxu0
    %v2793 = vadd.f32 0.0, %v2792
    %v2794 = vpop.f32.mrf.mxu0
    %2795 = vmatprep.mubr.f32.mxu0 0.0
    %2796 = vmatmul.mubr.f32.gmra.mxu0 %v2673
    %v2797 = vpop.f32.mrf.mxu0
    %v2798 = vadd.f32 0.0, %v2797
    %v2799 = vpop.f32.mrf.mxu0
    %2800 = vmatprep.mubr.f32.mxu0 0.0
    %2801 = vmatmul.mubr.f32.gmra.mxu0 %v2674
    %v2802 = vpop.f32.mrf.mxu0
    %v2803 = vadd.f32 0.0, %v2802
    %v2804 = vpop.f32.mrf.mxu0
    %2805 = vmatprep.mubr.f32.mxu0 0.0
    %2806 = vmatmul.mubr.f32.gmra.mxu0 %v2675
    %v2807 = vpop.f32.mrf.mxu0
    %v2808 = vadd.f32 0.0, %v2807
    %v2809 = vpop.f32.mrf.mxu0
    %2810 = vmatprep.mubr.f32.mxu0 0.0
    %2811 = vmatmul.mubr.f32.gmra.mxu0 %v2676
    %v2812 = vpop.f32.mrf.mxu0
    %v2813 = vadd.f32 0.0, %v2812
    %v2814 = vpop.f32.mrf.mxu0
    %2815 = vmatprep.mubr.f32.mxu0 0.0
    %2816 = vmatmul.mubr.f32.gmra.mxu0 %v2677
    %v2817 = vpop.f32.mrf.mxu0
    %v2818 = vadd.f32 0.0, %v2817
    %v2819 = vpop.f32.mrf.mxu0
    %2820 = vmatprep.mubr.f32.mxu0 0.0
    %2821 = vmatmul.mubr.f32.gmra.mxu0 %v2678
    %v2822 = vpop.f32.mrf.mxu0
    %v2823 = vadd.f32 0.0, %v2822
    %v2824 = vpop.f32.mrf.mxu0
    %2825 = vmatprep.mubr.f32.mxu0 0.0
    %2826 = vmatmul.mubr.f32.gmra.mxu0 %v2679
    %v2827 = vpop.f32.mrf.mxu0
    %v2828 = vadd.f32 0.0, %v2827
    %v2829 = vpop.f32.mrf.mxu0
    %2830 = vmatprep.mubr.f32.mxu0 0.0
    %2831 = vmatmul.mubr.f32.gmra.mxu0 %v2680
    %v2832 = vpop.f32.mrf.mxu0
    %v2833 = vadd.f32 0.0, %v2832
    %v2834 = vpop.f32.mrf.mxu0
    %2835 = vmatprep.mubr.f32.mxu0 0.0
    %2836 = vmatmul.mubr.f32.gmra.mxu0 %v2681
    %v2837 = vpop.f32.mrf.mxu0
    %v2838 = vadd.f32 0.0, %v2837
    %v2839 = vpop.f32.mrf.mxu0
    %2840 = vmatprep.mubr.f32.mxu0 0.0
    %2841 = vmatmul.mubr.f32.gmra.mxu0 %v2682
    %v2842 = vpop.f32.mrf.mxu0
    %v2843 = vadd.f32 0.0, %v2842
    %v2844 = vpop.f32.mrf.mxu0
    %2845 = vmatprep.mubr.f32.mxu0 0.0
    %2846 = vmatmul.mubr.f32.gmra.mxu0 %v2683
    %v2847 = vpop.f32.mrf.mxu0
    %v2848 = vadd.f32 0.0, %v2847
    %v2849 = vpop.f32.mrf.mxu0
    %2850 = vmatprep.mubr.f32.mxu0 0.0
    %2851 = vmatmul.mubr.f32.gmra.mxu0 %v2684
    %v2852 = vpop.f32.mrf.mxu0
    %v2853 = vadd.f32 0.0, %v2852
    %v2854 = vpop.f32.mrf.mxu0
    %2855 = vmatprep.mubr.f32.mxu0 0.0
    %2856 = vmatmul.mubr.f32.gmra.mxu0 %v2685
    %v2857 = vpop.f32.mrf.mxu0
    %v2858 = vadd.f32 0.0, %v2857
    %v2859 = vpop.f32.mrf.mxu0
    %2860 = vmatprep.mubr.f32.mxu0 0.0
    %2861 = vmatmul.mubr.f32.gmra.mxu0 %v2686
    %v2862 = vpop.f32.mrf.mxu0
    %v2863 = vadd.f32 0.0, %v2862
    %v2864 = vpop.f32.mrf.mxu0
    %2865 = vmatprep.mubr.f32.mxu0 0.0
    %2866 = vmatmul.mubr.f32.gmra.mxu0 %v2687
    %v2867 = vpop.f32.mrf.mxu0
    %v2868 = vadd.f32 0.0, %v2867
    %v2869 = vpop.f32.mrf.mxu0
    %2870 = vmatprep.mubr.f32.mxu0 0.0
    %2871 = vmatmul.mubr.f32.gmra.mxu0 %v2688
    %v2872 = vpop.f32.mrf.mxu0
    %v2873 = vadd.f32 0.0, %v2872
    %v2874 = vpop.f32.mrf.mxu0
    %2875 = vmatprep.mubr.f32.mxu0 0.0
    %2876 = vmatmul.mubr.f32.gmra.mxu0 %v2689
    %v2877 = vpop.f32.mrf.mxu0
    %v2878 = vadd.f32 0.0, %v2877
    %v2879 = vpop.f32.mrf.mxu0
    %2880 = vmatprep.mubr.f32.mxu0 0.0
    %2881 = vmatmul.mubr.f32.gmra.mxu0 %v2690
    %v2882 = vpop.f32.mrf.mxu0
    %v2883 = vadd.f32 0.0, %v2882
    %v2884 = vpop.f32.mrf.mxu0
    %2885 = vmatprep.mubr.f32.mxu0 0.0
    %2886 = vmatmul.mubr.f32.gmra.mxu0 %v2691
    %v2887 = vpop.f32.mrf.mxu0
    %v2888 = vadd.f32 0.0, %v2887
    %v2889 = vpop.f32.mrf.mxu0
    %2890 = vmatprep.mubr.f32.mxu0 0.0
    %2891 = vmatmul.mubr.f32.gmra.mxu0 %v2692
    %v2892 = vpop.f32.mrf.mxu0
    %v2893 = vadd.f32 0.0, %v2892
    %v2894 = vpop.f32.mrf.mxu0
    %2895 = vmatprep.mubr.f32.mxu0 0.0
    %2896 = vmatmul.mubr.f32.gmra.mxu0 %v2693
    %v2897 = vpop.f32.mrf.mxu0
    %v2898 = vadd.f32 0.0, %v2897
    %v2899 = vpop.f32.mrf.mxu0
    %2900 = vdwg.mxu0
    %v2901 = vadd.f32 %v2644, %v2778
    %v2902 = vadd.f32 %v2645, %v2783
    %v2903 = vadd.f32 %v2646, %v2788
    %v2904 = vadd.f32 %v2647, %v2793
    %v2905 = vadd.f32 %v2648, %v2798
    %v2906 = vadd.f32 %v2649, %v2803
    %v2907 = vadd.f32 %v2650, %v2808
    %v2908 = vadd.f32 %v2651, %v2813
    %v2909 = vadd.f32 %v2652, %v2818
    %v2910 = vadd.f32 %v2653, %v2823
    %v2911 = vadd.f32 %v2654, %v2828
    %v2912 = vadd.f32 %v2655, %v2833
    %v2913 = vadd.f32 %v2656, %v2838
    %v2914 = vadd.f32 %v2657, %v2843
    %v2915 = vadd.f32 %v2658, %v2848
    %v2916 = vadd.f32 %v2659, %v2853
    %v2917 = vadd.f32 %v2660, %v2858
    %v2918 = vadd.f32 %v2661, %v2863
    %v2919 = vadd.f32 %v2662, %v2868
    %v2920 = vadd.f32 %v2663, %v2873
    %v2921 = vadd.f32 %v2664, %v2878
    %v2922 = vadd.f32 %v2665, %v2883
    %v2923 = vadd.f32 %v2666, %v2888
    %v2924 = vadd.f32 %v2667, %v2893
    %v2925 = vadd.f32 %v2668, %v2898
    %v2926 = vld [vmem:[%s4] sm:$0x1]
    %v2928 = vlaneseq
    %v2929 = vshrl.u32 %v2928, 7
    %v2930 = vsub.s32 0, %v2929
    %v2931 = vrot.slane %v2926, %v2930
    %v2933 = vadd.f32 %v2901, %v2931
    %v2934 = vadd.f32 %v2902, %v2931
    %v2935 = vadd.f32 %v2903, %v2931
    %v2936 = vadd.f32 %v2904, %v2931
    %v2937 = vadd.f32 %v2905, %v2931
    %v2938 = vadd.f32 %v2906, %v2931
    %v2939 = vadd.f32 %v2907, %v2931
    %v2940 = vadd.f32 %v2908, %v2931
    %v2941 = vadd.f32 %v2909, %v2931
    %v2942 = vadd.f32 %v2910, %v2931
    %v2943 = vadd.f32 %v2911, %v2931
    %v2944 = vadd.f32 %v2912, %v2931
    %v2945 = vadd.f32 %v2913, %v2931
    %v2946 = vadd.f32 %v2914, %v2931
    %v2947 = vadd.f32 %v2915, %v2931
    %v2948 = vadd.f32 %v2916, %v2931
    %v2949 = vadd.f32 %v2917, %v2931
    %v2950 = vadd.f32 %v2918, %v2931
    %v2951 = vadd.f32 %v2919, %v2931
    %v2952 = vadd.f32 %v2920, %v2931
    %v2953 = vadd.f32 %v2921, %v2931
    %v2954 = vadd.f32 %v2922, %v2931
    %v2955 = vadd.f32 %v2923, %v2931
    %v2956 = vadd.f32 %v2924, %v2931
    %v2957 = vadd.f32 %v2925, %v2931
    %v2958 = vsub.f32 0.0, %v2933
    %v2959 = vsub.f32 0.0, %v2934
    %v2960 = vsub.f32 0.0, %v2935
    %v2961 = vsub.f32 0.0, %v2936
    %v2962 = vsub.f32 0.0, %v2937
    %v2963 = vsub.f32 0.0, %v2938
    %v2964 = vsub.f32 0.0, %v2939
    %v2965 = vsub.f32 0.0, %v2940
    %v2966 = vsub.f32 0.0, %v2941
    %v2967 = vsub.f32 0.0, %v2942
    %v2968 = vsub.f32 0.0, %v2943
    %v2969 = vsub.f32 0.0, %v2944
    %v2970 = vsub.f32 0.0, %v2945
    %v2971 = vsub.f32 0.0, %v2946
    %v2972 = vsub.f32 0.0, %v2947
    %v2973 = vsub.f32 0.0, %v2948
    %v2974 = vsub.f32 0.0, %v2949
    %v2975 = vsub.f32 0.0, %v2950
    %v2976 = vsub.f32 0.0, %v2951
    %v2977 = vsub.f32 0.0, %v2952
    %v2978 = vsub.f32 0.0, %v2953
    %v2979 = vsub.f32 0.0, %v2954
    %v2980 = vsub.f32 0.0, %v2955
    %v2981 = vsub.f32 0.0, %v2956
    %v2982 = vsub.f32 0.0, %v2957
    %v2983 = vmul.f32 %v2958, 1.442695
    %v2984 = vpow.pop %v2983
    %v2985 = vmul.f32 %v2959, 1.442695
    %v2986 = vpow.pop %v2985
    %v2987 = vmul.f32 %v2960, 1.442695
    %v2988 = vpow.pop %v2987
    %v2989 = vmul.f32 %v2961, 1.442695
    %v2990 = vpow.pop %v2989
    %v2991 = vmul.f32 %v2962, 1.442695
    %v2992 = vpow.pop %v2991
    %v2993 = vmul.f32 %v2963, 1.442695
    %v2994 = vpow.pop %v2993
    %v2995 = vmul.f32 %v2964, 1.442695
    %v2996 = vpow.pop %v2995
    %v2997 = vmul.f32 %v2965, 1.442695
    %v2998 = vpow.pop %v2997
    %v2999 = vmul.f32 %v2966, 1.442695
    %v3000 = vpow.pop %v2999
    %v3001 = vmul.f32 %v2967, 1.442695
    %v3002 = vpow.pop %v3001
    %v3003 = vmul.f32 %v2968, 1.442695
    %v3004 = vpow.pop %v3003
    %v3005 = vmul.f32 %v2969, 1.442695
    %v3006 = vpow.pop %v3005
    %v3007 = vmul.f32 %v2970, 1.442695
    %v3008 = vpow.pop %v3007
    %v3009 = vmul.f32 %v2971, 1.442695
    %v3010 = vpow.pop %v3009
    %v3011 = vmul.f32 %v2972, 1.442695
    %v3012 = vpow.pop %v3011
    %v3013 = vmul.f32 %v2973, 1.442695
    %v3014 = vpow.pop %v3013
    %v3015 = vmul.f32 %v2974, 1.442695
    %v3016 = vpow.pop %v3015
    %v3017 = vmul.f32 %v2975, 1.442695
    %v3018 = vpow.pop %v3017
    %v3019 = vmul.f32 %v2976, 1.442695
    %v3020 = vpow.pop %v3019
    %v3021 = vmul.f32 %v2977, 1.442695
    %v3022 = vpow.pop %v3021
    %v3023 = vmul.f32 %v2978, 1.442695
    %v3024 = vpow.pop %v3023
    %v3025 = vmul.f32 %v2979, 1.442695
    %v3026 = vpow.pop %v3025
    %v3027 = vmul.f32 %v2980, 1.442695
    %v3028 = vpow.pop %v3027
    %v3029 = vmul.f32 %v2981, 1.442695
    %v3030 = vpow.pop %v3029
    %v3031 = vmul.f32 %v2982, 1.442695
    %v3032 = vpow.pop %v3031
    %v3033 = vadd.f32 %v2984, 1.0
    %v3034 = vadd.f32 %v2986, 1.0
    %v3035 = vadd.f32 %v2988, 1.0
    %v3036 = vadd.f32 %v2990, 1.0
    %v3037 = vadd.f32 %v2992, 1.0
    %v3038 = vadd.f32 %v2994, 1.0
    %v3039 = vadd.f32 %v2996, 1.0
    %v3040 = vadd.f32 %v2998, 1.0
    %v3041 = vadd.f32 %v3000, 1.0
    %v3042 = vadd.f32 %v3002, 1.0
    %v3043 = vadd.f32 %v3004, 1.0
    %v3044 = vadd.f32 %v3006, 1.0
    %v3045 = vadd.f32 %v3008, 1.0
    %v3046 = vadd.f32 %v3010, 1.0
    %v3047 = vadd.f32 %v3012, 1.0
    %v3048 = vadd.f32 %v3014, 1.0
    %v3049 = vadd.f32 %v3016, 1.0
    %v3050 = vadd.f32 %v3018, 1.0
    %v3051 = vadd.f32 %v3020, 1.0
    %v3052 = vadd.f32 %v3022, 1.0
    %v3053 = vadd.f32 %v3024, 1.0
    %v3054 = vadd.f32 %v3026, 1.0
    %v3055 = vadd.f32 %v3028, 1.0
    %v3056 = vadd.f32 %v3030, 1.0
    %v3057 = vadd.f32 %v3032, 1.0
    %v3058 = vrcp.pop %v3033
    %v3059 = vrcp.pop %v3034
    %v3060 = vrcp.pop %v3035
    %v3061 = vrcp.pop %v3036
    %v3062 = vrcp.pop %v3037
    %v3063 = vrcp.pop %v3038
    %v3064 = vrcp.pop %v3039
    %v3065 = vrcp.pop %v3040
    %v3066 = vrcp.pop %v3041
    %v3067 = vrcp.pop %v3042
    %v3068 = vrcp.pop %v3043
    %v3069 = vrcp.pop %v3044
    %v3070 = vrcp.pop %v3045
    %v3071 = vrcp.pop %v3046
    %v3072 = vrcp.pop %v3047
    %v3073 = vrcp.pop %v3048
    %v3074 = vrcp.pop %v3049
    %v3075 = vrcp.pop %v3050
    %v3076 = vrcp.pop %v3051
    %v3077 = vrcp.pop %v3052
    %v3078 = vrcp.pop %v3053
    %v3079 = vrcp.pop %v3054
    %v3080 = vrcp.pop %v3055
    %v3081 = vrcp.pop %v3056
    %v3082 = vrcp.pop %v3057
    %v3083 = vmul.f32 %v2933, %v3058
    %v3084 = vmul.f32 %v2934, %v3059
    %v3085 = vmul.f32 %v2935, %v3060
    %v3086 = vmul.f32 %v2936, %v3061
    %v3087 = vmul.f32 %v2937, %v3062
    %v3088 = vmul.f32 %v2938, %v3063
    %v3089 = vmul.f32 %v2939, %v3064
    %v3090 = vmul.f32 %v2940, %v3065
    %v3091 = vmul.f32 %v2941, %v3066
    %v3092 = vmul.f32 %v2942, %v3067
    %v3093 = vmul.f32 %v2943, %v3068
    %v3094 = vmul.f32 %v2944, %v3069
    %v3095 = vmul.f32 %v2945, %v3070
    %v3096 = vmul.f32 %v2946, %v3071
    %v3097 = vmul.f32 %v2947, %v3072
    %v3098 = vmul.f32 %v2948, %v3073
    %v3099 = vmul.f32 %v2949, %v3074
    %v3100 = vmul.f32 %v2950, %v3075
    %v3101 = vmul.f32 %v2951, %v3076
    %v3102 = vmul.f32 %v2952, %v3077
    %v3103 = vmul.f32 %v2953, %v3078
    %v3104 = vmul.f32 %v2954, %v3079
    %v3105 = vmul.f32 %v2955, %v3080
    %v3106 = vmul.f32 %v2956, %v3081
    %v3107 = vmul.f32 %v2957, %v3082
    %v3108 = vsel %vm589, %v3083, 0.0
    %v3109 = vsel %vm590, %v3084, 0.0
    %v3110 = vsel %vm591, %v3085, 0.0
    %v3111 = vsel %vm592, %v3086, 0.0
    %v3112 = vsel %vm593, %v3087, 0.0
    %v3113 = vsel %vm594, %v3088, 0.0
    %v3114 = vsel %vm595, %v3089, 0.0
    %v3115 = vsel %vm596, %v3090, 0.0
    %v3116 = vsel %vm597, %v3091, 0.0
    %v3117 = vsel %vm598, %v3092, 0.0
    %v3118 = vsel %vm599, %v3093, 0.0
    %v3119 = vsel %vm600, %v3094, 0.0
    %v3120 = vsel %vm601, %v3095, 0.0
    %v3121 = vsel %vm602, %v3096, 0.0
    %v3122 = vsel %vm603, %v3097, 0.0
    %v3123 = vsel %vm604, %v3098, 0.0
    %v3124 = vsel %vm605, %v3099, 0.0
    %v3125 = vsel %vm606, %v3100, 0.0
    %v3126 = vsel %vm607, %v3101, 0.0
    %v3127 = vsel %vm608, %v3102, 0.0
    %v3128 = vsel %vm609, %v3103, 0.0
    %v3129 = vsel %vm610, %v3104, 0.0
    %v3130 = vsel %vm611, %v3105, 0.0
    %v3131 = vsel %vm612, %v3106, 0.0
    %v3132 = vsel %vm613, %v3107, 0.0
    %3133 = vst [vmem:[#allocation3 + $0x10] sm:$0xff] %v3108
    %3134 = vst [vmem:[#allocation3 + $0x18] sm:$0xff] %v3109
    %3135 = vst [vmem:[#allocation3 + $0x20] sm:$0xff] %v3110
    %3136 = vst [vmem:[#allocation3 + $0x28] sm:$0xff] %v3111
    %3137 = vst [vmem:[#allocation3 + $0x30] sm:$0xff] %v3112
    %3138 = vst [vmem:[#allocation3 + $0x38] sm:$0xff] %v3113
    %3139 = vst [vmem:[#allocation3 + $0x40] sm:$0xff] %v3114
    %3140 = vst [vmem:[#allocation3 + $0x48] sm:$0xff] %v3115
    %3141 = vst [vmem:[#allocation3 + $0x50] sm:$0xff] %v3116
    %3142 = vst [vmem:[#allocation3 + $0x58] sm:$0xff] %v3117
    %3143 = vst [vmem:[#allocation3 + $0x60] sm:$0xff] %v3118
    %3144 = vst [vmem:[#allocation3 + $0x68] sm:$0xff] %v3119
    %3145 = vst [vmem:[#allocation3 + $0x70] sm:$0xff] %v3120
    %3146 = vst [vmem:[#allocation3 + $0x78] sm:$0xff] %v3121
    %3147 = vst [vmem:[#allocation3 + $0x80] sm:$0xff] %v3122
    %3148 = vst [vmem:[#allocation3 + $0x88] sm:$0xff] %v3123
    %3149 = vst [vmem:[#allocation3 + $0x90] sm:$0xff] %v3124
    %3150 = vst [vmem:[#allocation3 + $0x98] sm:$0xff] %v3125
    %3151 = vst [vmem:[#allocation3 + $0xa0] sm:$0xff] %v3126
    %3152 = vst [vmem:[#allocation3 + $0xa8] sm:$0xff] %v3127
    %3153 = vst [vmem:[#allocation3 + $0xb0] sm:$0xff] %v3128
    %3154 = vst [vmem:[#allocation3 + $0xb8] sm:$0xff] %v3129
    %3155 = vst [vmem:[#allocation3 + $0xc0] sm:$0xff] %v3130
    %3156 = vst [vmem:[#allocation3 + $0xc8] sm:$0xff] %v3131
    %3157 = vst [vmem:[#allocation3 + $0xd0] sm:$0xff] %v3132
    %v3158 = vld [vmem:[#allocation3 + $0x5] sm:$0xff]
    %v3159 = vld [vmem:[#allocation3 + $0xd] sm:$0xff]
    %v3160 = vld [vmem:[#allocation3 + $0x15] sm:$0xff]
    %v3161 = vld [vmem:[#allocation3 + $0x1d] sm:$0xff]
    %v3162 = vld [vmem:[#allocation3 + $0x25] sm:$0xff]
    %v3163 = vld [vmem:[#allocation3 + $0x2d] sm:$0xff]
    %v3164 = vld [vmem:[#allocation3 + $0x35] sm:$0xff]
    %v3165 = vld [vmem:[#allocation3 + $0x3d] sm:$0xff]
    %v3166 = vld [vmem:[#allocation3 + $0x45] sm:$0xff]
    %v3167 = vld [vmem:[#allocation3 + $0x4d] sm:$0xff]
    %v3168 = vld [vmem:[#allocation3 + $0x55] sm:$0xff]
    %v3169 = vld [vmem:[#allocation3 + $0x5d] sm:$0xff]
    %v3170 = vld [vmem:[#allocation3 + $0x65] sm:$0xff]
    %v3171 = vld [vmem:[#allocation3 + $0x6d] sm:$0xff]
    %v3172 = vld [vmem:[#allocation3 + $0x75] sm:$0xff]
    %v3173 = vld [vmem:[#allocation3 + $0x7d] sm:$0xff]
    %v3174 = vld [vmem:[#allocation3 + $0x85] sm:$0xff]
    %v3175 = vld [vmem:[#allocation3 + $0x8d] sm:$0xff]
    %v3176 = vld [vmem:[#allocation3 + $0x95] sm:$0xff]
    %v3177 = vld [vmem:[#allocation3 + $0x9d] sm:$0xff]
    %v3178 = vld [vmem:[#allocation3 + $0xa5] sm:$0xff]
    %v3179 = vld [vmem:[#allocation3 + $0xad] sm:$0xff]
    %v3180 = vld [vmem:[#allocation3 + $0xb5] sm:$0xff]
    %v3181 = vld [vmem:[#allocation3 + $0xbd] sm:$0xff]
    %v3182 = vld [vmem:[#allocation3 + $0xc5] sm:$0xff]
    %v3183 = vld [vmem:[%s5] sm:$0xff]
    %v3184 = vld [vmem:[%s5 + $0x8] sm:$0xff]
    %v3185 = vld [vmem:[%s5 + $0x10] sm:$0xff]
    %v3186 = vld [vmem:[%s5 + $0x18] sm:$0xff]
    %v3187 = vld [vmem:[%s5 + $0x20] sm:$0xff]
    %v3188 = vld [vmem:[%s5 + $0x28] sm:$0xff]
    %v3189 = vld [vmem:[%s5 + $0x30] sm:$0xff]
    %v3190 = vld [vmem:[%s5 + $0x38] sm:$0xff]
    %v3191 = vld [vmem:[%s5 + $0x40] sm:$0xff]
    %v3192 = vld [vmem:[%s5 + $0x48] sm:$0xff]
    %v3193 = vld [vmem:[%s5 + $0x50] sm:$0xff]
    %v3194 = vld [vmem:[%s5 + $0x58] sm:$0xff]
    %v3195 = vld [vmem:[%s5 + $0x60] sm:$0xff]
    %v3196 = vld [vmem:[%s5 + $0x68] sm:$0xff]
    %v3197 = vld [vmem:[%s5 + $0x70] sm:$0xff]
    %v3198 = vld [vmem:[%s5 + $0x78] sm:$0xff]
    %v3199 = vld [vmem:[#allocation3 + $0x6] sm:$0xff]
    %v3200 = vld [vmem:[#allocation3 + $0xe] sm:$0xff]
    %v3201 = vld [vmem:[#allocation3 + $0x16] sm:$0xff]
    %v3202 = vld [vmem:[#allocation3 + $0x1e] sm:$0xff]
    %v3203 = vld [vmem:[#allocation3 + $0x26] sm:$0xff]
    %v3204 = vld [vmem:[#allocation3 + $0x2e] sm:$0xff]
    %v3205 = vld [vmem:[#allocation3 + $0x36] sm:$0xff]
    %v3206 = vld [vmem:[#allocation3 + $0x3e] sm:$0xff]
    %v3207 = vld [vmem:[#allocation3 + $0x46] sm:$0xff]
    %v3208 = vld [vmem:[#allocation3 + $0x4e] sm:$0xff]
    %v3209 = vld [vmem:[#allocation3 + $0x56] sm:$0xff]
    %v3210 = vld [vmem:[#allocation3 + $0x5e] sm:$0xff]
    %v3211 = vld [vmem:[#allocation3 + $0x66] sm:$0xff]
    %v3212 = vld [vmem:[#allocation3 + $0x6e] sm:$0xff]
    %v3213 = vld [vmem:[#allocation3 + $0x76] sm:$0xff]
    %v3214 = vld [vmem:[#allocation3 + $0x7e] sm:$0xff]
    %v3215 = vld [vmem:[#allocation3 + $0x86] sm:$0xff]
    %v3216 = vld [vmem:[#allocation3 + $0x8e] sm:$0xff]
    %v3217 = vld [vmem:[#allocation3 + $0x96] sm:$0xff]
    %v3218 = vld [vmem:[#allocation3 + $0x9e] sm:$0xff]
    %v3219 = vld [vmem:[#allocation3 + $0xa6] sm:$0xff]
    %v3220 = vld [vmem:[#allocation3 + $0xae] sm:$0xff]
    %v3221 = vld [vmem:[#allocation3 + $0xb6] sm:$0xff]
    %v3222 = vld [vmem:[#allocation3 + $0xbe] sm:$0xff]
    %v3223 = vld [vmem:[#allocation3 + $0xc6] sm:$0xff]
    %s3224 = scalar_lea.vmem %s5, 128
    %v3225 = vld [vmem:[%s3224] sm:$0xff]
    %v3226 = vld [vmem:[%s3224 + $0x8] sm:$0xff]
    %v3227 = vld [vmem:[%s3224 + $0x10] sm:$0xff]
    %v3228 = vld [vmem:[%s3224 + $0x18] sm:$0xff]
    %v3229 = vld [vmem:[%s3224 + $0x20] sm:$0xff]
    %v3230 = vld [vmem:[%s3224 + $0x28] sm:$0xff]
    %v3231 = vld [vmem:[%s3224 + $0x30] sm:$0xff]
    %v3232 = vld [vmem:[%s3224 + $0x38] sm:$0xff]
    %v3233 = vld [vmem:[%s3224 + $0x40] sm:$0xff]
    %v3234 = vld [vmem:[%s3224 + $0x48] sm:$0xff]
    %v3235 = vld [vmem:[%s3224 + $0x50] sm:$0xff]
    %v3236 = vld [vmem:[%s3224 + $0x58] sm:$0xff]
    %v3237 = vld [vmem:[%s3224 + $0x60] sm:$0xff]
    %v3238 = vld [vmem:[%s3224 + $0x68] sm:$0xff]
    %v3239 = vld [vmem:[%s3224 + $0x70] sm:$0xff]
    %v3240 = vld [vmem:[%s3224 + $0x78] sm:$0xff]
    %3241 = vmatprep.subr.mxu0 0.0
    %3242 = vmatpush1.msra.mxu0 %v3240
    %3243 = vmatprep.subr.mxu0 0.0
    %3244 = vmatpush1.msra.mxu0 %v3239
    %3245 = vmatprep.subr.mxu0 0.0
    %3246 = vmatpush1.msra.mxu0 %v3238
    %3247 = vmatprep.subr.mxu0 0.0
    %3248 = vmatpush1.msra.mxu0 %v3237
    %3249 = vmatprep.subr.mxu0 0.0
    %3250 = vmatpush1.msra.mxu0 %v3236
    %3251 = vmatprep.subr.mxu0 0.0
    %3252 = vmatpush1.msra.mxu0 %v3235
    %3253 = vmatprep.subr.mxu0 0.0
    %3254 = vmatpush1.msra.mxu0 %v3234
    %3255 = vmatprep.subr.mxu0 0.0
    %3256 = vmatpush1.msra.mxu0 %v3233
    %3257 = vmatprep.subr.mxu0 0.0
    %3258 = vmatpush1.msra.mxu0 %v3232
    %3259 = vmatprep.subr.mxu0 0.0
    %3260 = vmatpush1.msra.mxu0 %v3231
    %3261 = vmatprep.subr.mxu0 0.0
    %3262 = vmatpush1.msra.mxu0 %v3230
    %3263 = vmatprep.subr.mxu0 0.0
    %3264 = vmatpush1.msra.mxu0 %v3229
    %3265 = vmatprep.subr.mxu0 0.0
    %3266 = vmatpush1.msra.mxu0 %v3228
    %3267 = vmatprep.subr.mxu0 0.0
    %3268 = vmatpush1.msra.mxu0 %v3227
    %3269 = vmatprep.subr.mxu0 0.0
    %3270 = vmatpush1.msra.mxu0 %v3226
    %3271 = vmatprep.subr.mxu0 0.0
    %3272 = vmatpush1.msra.mxu0 %v3225
    %3273 = vmatprep.subr.mxu0 0.0
    %3274 = vmatpush2.msra.mxu0 0.0
    %3275 = vmatprep.subr.mxu0 0.0
    %3276 = vmatpush2.msra.mxu0 0.0
    %3277 = vmatprep.subr.mxu0 0.0
    %3278 = vmatpush2.msra.mxu0 0.0
    %3279 = vmatprep.subr.mxu0 0.0
    %3280 = vmatpush2.msra.mxu0 0.0
    %3281 = vmatprep.subr.mxu0 0.0
    %3282 = vmatpush2.msra.mxu0 0.0
    %3283 = vmatprep.subr.mxu0 0.0
    %3284 = vmatpush2.msra.mxu0 0.0
    %3285 = vmatprep.subr.mxu0 0.0
    %3286 = vmatpush2.msra.mxu0 0.0
    %3287 = vmatprep.subr.mxu0 0.0
    %3288 = vmatpush2.msra.mxu0 0.0
    %3289 = vmatprep.subr.mxu0 0.0
    %3290 = vmatpush2.msra.mxu0 0.0
    %3291 = vmatprep.subr.mxu0 0.0
    %3292 = vmatpush2.msra.mxu0 0.0
    %3293 = vmatprep.subr.mxu0 0.0
    %3294 = vmatpush2.msra.mxu0 0.0
    %3295 = vmatprep.subr.mxu0 0.0
    %3296 = vmatpush2.msra.mxu0 0.0
    %3297 = vmatprep.subr.mxu0 0.0
    %3298 = vmatpush2.msra.mxu0 0.0
    %3299 = vmatprep.subr.mxu0 0.0
    %3300 = vmatpush2.msra.mxu0 0.0
    %3301 = vmatprep.subr.mxu0 0.0
    %3302 = vmatpush2.msra.mxu0 0.0
    %3303 = vmatprep.subr.mxu0 0.0
    %3304 = vmatpush2.msra.mxu0 0.0
    %3305 = vmatprep.mubr.f32.mxu0 0.0
    %3306 = vmatmul.mubr.f32.gmra.mxu0 %v3199
    %v3307 = vpop.f32.mrf.mxu0
    %v3308 = vadd.f32 0.0, %v3307
    %v3309 = vpop.f32.mrf.mxu0
    %3310 = vmatprep.mubr.f32.mxu0 0.0
    %3311 = vmatmul.mubr.f32.gmra.mxu0 %v3200
    %v3312 = vpop.f32.mrf.mxu0
    %v3313 = vadd.f32 0.0, %v3312
    %v3314 = vpop.f32.mrf.mxu0
    %3315 = vmatprep.mubr.f32.mxu0 0.0
    %3316 = vmatmul.mubr.f32.gmra.mxu0 %v3201
    %v3317 = vpop.f32.mrf.mxu0
    %v3318 = vadd.f32 0.0, %v3317
    %v3319 = vpop.f32.mrf.mxu0
    %3320 = vmatprep.mubr.f32.mxu0 0.0
    %3321 = vmatmul.mubr.f32.gmra.mxu0 %v3202
    %v3322 = vpop.f32.mrf.mxu0
    %v3323 = vadd.f32 0.0, %v3322
    %v3324 = vpop.f32.mrf.mxu0
    %3325 = vmatprep.mubr.f32.mxu0 0.0
    %3326 = vmatmul.mubr.f32.gmra.mxu0 %v3203
    %v3327 = vpop.f32.mrf.mxu0
    %v3328 = vadd.f32 0.0, %v3327
    %v3329 = vpop.f32.mrf.mxu0
    %3330 = vmatprep.mubr.f32.mxu0 0.0
    %3331 = vmatmul.mubr.f32.gmra.mxu0 %v3204
    %v3332 = vpop.f32.mrf.mxu0
    %v3333 = vadd.f32 0.0, %v3332
    %v3334 = vpop.f32.mrf.mxu0
    %3335 = vmatprep.mubr.f32.mxu0 0.0
    %3336 = vmatmul.mubr.f32.gmra.mxu0 %v3205
    %v3337 = vpop.f32.mrf.mxu0
    %v3338 = vadd.f32 0.0, %v3337
    %v3339 = vpop.f32.mrf.mxu0
    %3340 = vmatprep.mubr.f32.mxu0 0.0
    %3341 = vmatmul.mubr.f32.gmra.mxu0 %v3206
    %v3342 = vpop.f32.mrf.mxu0
    %v3343 = vadd.f32 0.0, %v3342
    %v3344 = vpop.f32.mrf.mxu0
    %3345 = vmatprep.mubr.f32.mxu0 0.0
    %3346 = vmatmul.mubr.f32.gmra.mxu0 %v3207
    %v3347 = vpop.f32.mrf.mxu0
    %v3348 = vadd.f32 0.0, %v3347
    %v3349 = vpop.f32.mrf.mxu0
    %3350 = vmatprep.mubr.f32.mxu0 0.0
    %3351 = vmatmul.mubr.f32.gmra.mxu0 %v3208
    %v3352 = vpop.f32.mrf.mxu0
    %v3353 = vadd.f32 0.0, %v3352
    %v3354 = vpop.f32.mrf.mxu0
    %3355 = vmatprep.mubr.f32.mxu0 0.0
    %3356 = vmatmul.mubr.f32.gmra.mxu0 %v3209
    %v3357 = vpop.f32.mrf.mxu0
    %v3358 = vadd.f32 0.0, %v3357
    %v3359 = vpop.f32.mrf.mxu0
    %3360 = vmatprep.mubr.f32.mxu0 0.0
    %3361 = vmatmul.mubr.f32.gmra.mxu0 %v3210
    %v3362 = vpop.f32.mrf.mxu0
    %v3363 = vadd.f32 0.0, %v3362
    %v3364 = vpop.f32.mrf.mxu0
    %3365 = vmatprep.mubr.f32.mxu0 0.0
    %3366 = vmatmul.mubr.f32.gmra.mxu0 %v3211
    %v3367 = vpop.f32.mrf.mxu0
    %v3368 = vadd.f32 0.0, %v3367
    %v3369 = vpop.f32.mrf.mxu0
    %3370 = vmatprep.mubr.f32.mxu0 0.0
    %3371 = vmatmul.mubr.f32.gmra.mxu0 %v3212
    %v3372 = vpop.f32.mrf.mxu0
    %v3373 = vadd.f32 0.0, %v3372
    %v3374 = vpop.f32.mrf.mxu0
    %3375 = vmatprep.mubr.f32.mxu0 0.0
    %3376 = vmatmul.mubr.f32.gmra.mxu0 %v3213
    %v3377 = vpop.f32.mrf.mxu0
    %v3378 = vadd.f32 0.0, %v3377
    %v3379 = vpop.f32.mrf.mxu0
    %3380 = vmatprep.mubr.f32.mxu0 0.0
    %3381 = vmatmul.mubr.f32.gmra.mxu0 %v3214
    %v3382 = vpop.f32.mrf.mxu0
    %v3383 = vadd.f32 0.0, %v3382
    %v3384 = vpop.f32.mrf.mxu0
    %3385 = vmatprep.mubr.f32.mxu0 0.0
    %3386 = vmatmul.mubr.f32.gmra.mxu0 %v3215
    %v3387 = vpop.f32.mrf.mxu0
    %v3388 = vadd.f32 0.0, %v3387
    %v3389 = vpop.f32.mrf.mxu0
    %3390 = vmatprep.mubr.f32.mxu0 0.0
    %3391 = vmatmul.mubr.f32.gmra.mxu0 %v3216
    %v3392 = vpop.f32.mrf.mxu0
    %v3393 = vadd.f32 0.0, %v3392
    %v3394 = vpop.f32.mrf.mxu0
    %3395 = vmatprep.mubr.f32.mxu0 0.0
    %3396 = vmatmul.mubr.f32.gmra.mxu0 %v3217
    %v3397 = vpop.f32.mrf.mxu0
    %v3398 = vadd.f32 0.0, %v3397
    %v3399 = vpop.f32.mrf.mxu0
    %3400 = vmatprep.mubr.f32.mxu0 0.0
    %3401 = vmatmul.mubr.f32.gmra.mxu0 %v3218
    %v3402 = vpop.f32.mrf.mxu0
    %v3403 = vadd.f32 0.0, %v3402
    %v3404 = vpop.f32.mrf.mxu0
    %3405 = vmatprep.mubr.f32.mxu0 0.0
    %3406 = vmatmul.mubr.f32.gmra.mxu0 %v3219
    %v3407 = vpop.f32.mrf.mxu0
    %v3408 = vadd.f32 0.0, %v3407
    %v3409 = vpop.f32.mrf.mxu0
    %3410 = vmatprep.mubr.f32.mxu0 0.0
    %3411 = vmatmul.mubr.f32.gmra.mxu0 %v3220
    %v3412 = vpop.f32.mrf.mxu0
    %v3413 = vadd.f32 0.0, %v3412
    %v3414 = vpop.f32.mrf.mxu0
    %3415 = vmatprep.mubr.f32.mxu0 0.0
    %3416 = vmatmul.mubr.f32.gmra.mxu0 %v3221
    %v3417 = vpop.f32.mrf.mxu0
    %v3418 = vadd.f32 0.0, %v3417
    %v3419 = vpop.f32.mrf.mxu0
    %3420 = vmatprep.mubr.f32.mxu0 0.0
    %3421 = vmatmul.mubr.f32.gmra.mxu0 %v3222
    %v3422 = vpop.f32.mrf.mxu0
    %v3423 = vadd.f32 0.0, %v3422
    %v3424 = vpop.f32.mrf.mxu0
    %3425 = vmatprep.mubr.f32.mxu0 0.0
    %3426 = vmatmul.mubr.f32.gmra.mxu0 %v3223
    %v3427 = vpop.f32.mrf.mxu0
    %v3428 = vadd.f32 0.0, %v3427
    %v3429 = vpop.f32.mrf.mxu0
    %3430 = vdwg.mxu0
    %3431 = vmatprep.subr.mxu0 0.0
    %3432 = vmatpush1.msra.mxu0 %v3198
    %3433 = vmatprep.subr.mxu0 0.0
    %3434 = vmatpush1.msra.mxu0 %v3197
    %3435 = vmatprep.subr.mxu0 0.0
    %3436 = vmatpush1.msra.mxu0 %v3196
    %3437 = vmatprep.subr.mxu0 0.0
    %3438 = vmatpush1.msra.mxu0 %v3195
    %3439 = vmatprep.subr.mxu0 0.0
    %3440 = vmatpush1.msra.mxu0 %v3194
    %3441 = vmatprep.subr.mxu0 0.0
    %3442 = vmatpush1.msra.mxu0 %v3193
    %3443 = vmatprep.subr.mxu0 0.0
    %3444 = vmatpush1.msra.mxu0 %v3192
    %3445 = vmatprep.subr.mxu0 0.0
    %3446 = vmatpush1.msra.mxu0 %v3191
    %3447 = vmatprep.subr.mxu0 0.0
    %3448 = vmatpush1.msra.mxu0 %v3190
    %3449 = vmatprep.subr.mxu0 0.0
    %3450 = vmatpush1.msra.mxu0 %v3189
    %3451 = vmatprep.subr.mxu0 0.0
    %3452 = vmatpush1.msra.mxu0 %v3188
    %3453 = vmatprep.subr.mxu0 0.0
    %3454 = vmatpush1.msra.mxu0 %v3187
    %3455 = vmatprep.subr.mxu0 0.0
    %3456 = vmatpush1.msra.mxu0 %v3186
    %3457 = vmatprep.subr.mxu0 0.0
    %3458 = vmatpush1.msra.mxu0 %v3185
    %3459 = vmatprep.subr.mxu0 0.0
    %3460 = vmatpush1.msra.mxu0 %v3184
    %3461 = vmatprep.subr.mxu0 0.0
    %3462 = vmatpush1.msra.mxu0 %v3183
    %3463 = vmatprep.subr.mxu0 0.0
    %3464 = vmatpush2.msra.mxu0 0.0
    %3465 = vmatprep.subr.mxu0 0.0
    %3466 = vmatpush2.msra.mxu0 0.0
    %3467 = vmatprep.subr.mxu0 0.0
    %3468 = vmatpush2.msra.mxu0 0.0
    %3469 = vmatprep.subr.mxu0 0.0
    %3470 = vmatpush2.msra.mxu0 0.0
    %3471 = vmatprep.subr.mxu0 0.0
    %3472 = vmatpush2.msra.mxu0 0.0
    %3473 = vmatprep.subr.mxu0 0.0
    %3474 = vmatpush2.msra.mxu0 0.0
    %3475 = vmatprep.subr.mxu0 0.0
    %3476 = vmatpush2.msra.mxu0 0.0
    %3477 = vmatprep.subr.mxu0 0.0
    %3478 = vmatpush2.msra.mxu0 0.0
    %3479 = vmatprep.subr.mxu0 0.0
    %3480 = vmatpush2.msra.mxu0 0.0
    %3481 = vmatprep.subr.mxu0 0.0
    %3482 = vmatpush2.msra.mxu0 0.0
    %3483 = vmatprep.subr.mxu0 0.0
    %3484 = vmatpush2.msra.mxu0 0.0
    %3485 = vmatprep.subr.mxu0 0.0
    %3486 = vmatpush2.msra.mxu0 0.0
    %3487 = vmatprep.subr.mxu0 0.0
    %3488 = vmatpush2.msra.mxu0 0.0
    %3489 = vmatprep.subr.mxu0 0.0
    %3490 = vmatpush2.msra.mxu0 0.0
    %3491 = vmatprep.subr.mxu0 0.0
    %3492 = vmatpush2.msra.mxu0 0.0
    %3493 = vmatprep.subr.mxu0 0.0
    %3494 = vmatpush2.msra.mxu0 0.0
    %3495 = vmatprep.mubr.f32.mxu0 0.0
    %3496 = vmatmul.mubr.f32.gmra.mxu0 %v3158
    %v3497 = vpop.f32.mrf.mxu0
    %v3498 = vadd.f32 %v3308, %v3497
    %v3499 = vpop.f32.mrf.mxu0
    %3500 = vmatprep.mubr.f32.mxu0 0.0
    %3501 = vmatmul.mubr.f32.gmra.mxu0 %v3159
    %v3502 = vpop.f32.mrf.mxu0
    %v3503 = vadd.f32 %v3313, %v3502
    %v3504 = vpop.f32.mrf.mxu0
    %3505 = vmatprep.mubr.f32.mxu0 0.0
    %3506 = vmatmul.mubr.f32.gmra.mxu0 %v3160
    %v3507 = vpop.f32.mrf.mxu0
    %v3508 = vadd.f32 %v3318, %v3507
    %v3509 = vpop.f32.mrf.mxu0
    %3510 = vmatprep.mubr.f32.mxu0 0.0
    %3511 = vmatmul.mubr.f32.gmra.mxu0 %v3161
    %v3512 = vpop.f32.mrf.mxu0
    %v3513 = vadd.f32 %v3323, %v3512
    %v3514 = vpop.f32.mrf.mxu0
    %3515 = vmatprep.mubr.f32.mxu0 0.0
    %3516 = vmatmul.mubr.f32.gmra.mxu0 %v3162
    %v3517 = vpop.f32.mrf.mxu0
    %v3518 = vadd.f32 %v3328, %v3517
    %v3519 = vpop.f32.mrf.mxu0
    %3520 = vmatprep.mubr.f32.mxu0 0.0
    %3521 = vmatmul.mubr.f32.gmra.mxu0 %v3163
    %v3522 = vpop.f32.mrf.mxu0
    %v3523 = vadd.f32 %v3333, %v3522
    %v3524 = vpop.f32.mrf.mxu0
    %3525 = vmatprep.mubr.f32.mxu0 0.0
    %3526 = vmatmul.mubr.f32.gmra.mxu0 %v3164
    %v3527 = vpop.f32.mrf.mxu0
    %v3528 = vadd.f32 %v3338, %v3527
    %v3529 = vpop.f32.mrf.mxu0
    %3530 = vmatprep.mubr.f32.mxu0 0.0
    %3531 = vmatmul.mubr.f32.gmra.mxu0 %v3165
    %v3532 = vpop.f32.mrf.mxu0
    %v3533 = vadd.f32 %v3343, %v3532
    %v3534 = vpop.f32.mrf.mxu0
    %3535 = vmatprep.mubr.f32.mxu0 0.0
    %3536 = vmatmul.mubr.f32.gmra.mxu0 %v3166
    %v3537 = vpop.f32.mrf.mxu0
    %v3538 = vadd.f32 %v3348, %v3537
    %v3539 = vpop.f32.mrf.mxu0
    %3540 = vmatprep.mubr.f32.mxu0 0.0
    %3541 = vmatmul.mubr.f32.gmra.mxu0 %v3167
    %v3542 = vpop.f32.mrf.mxu0
    %v3543 = vadd.f32 %v3353, %v3542
    %v3544 = vpop.f32.mrf.mxu0
    %3545 = vmatprep.mubr.f32.mxu0 0.0
    %3546 = vmatmul.mubr.f32.gmra.mxu0 %v3168
    %v3547 = vpop.f32.mrf.mxu0
    %v3548 = vadd.f32 %v3358, %v3547
    %v3549 = vpop.f32.mrf.mxu0
    %3550 = vmatprep.mubr.f32.mxu0 0.0
    %3551 = vmatmul.mubr.f32.gmra.mxu0 %v3169
    %v3552 = vpop.f32.mrf.mxu0
    %v3553 = vadd.f32 %v3363, %v3552
    %v3554 = vpop.f32.mrf.mxu0
    %3555 = vmatprep.mubr.f32.mxu0 0.0
    %3556 = vmatmul.mubr.f32.gmra.mxu0 %v3170
    %v3557 = vpop.f32.mrf.mxu0
    %v3558 = vadd.f32 %v3368, %v3557
    %v3559 = vpop.f32.mrf.mxu0
    %3560 = vmatprep.mubr.f32.mxu0 0.0
    %3561 = vmatmul.mubr.f32.gmra.mxu0 %v3171
    %v3562 = vpop.f32.mrf.mxu0
    %v3563 = vadd.f32 %v3373, %v3562
    %v3564 = vpop.f32.mrf.mxu0
    %3565 = vmatprep.mubr.f32.mxu0 0.0
    %3566 = vmatmul.mubr.f32.gmra.mxu0 %v3172
    %v3567 = vpop.f32.mrf.mxu0
    %v3568 = vadd.f32 %v3378, %v3567
    %v3569 = vpop.f32.mrf.mxu0
    %3570 = vmatprep.mubr.f32.mxu0 0.0
    %3571 = vmatmul.mubr.f32.gmra.mxu0 %v3173
    %v3572 = vpop.f32.mrf.mxu0
    %v3573 = vadd.f32 %v3383, %v3572
    %v3574 = vpop.f32.mrf.mxu0
    %3575 = vmatprep.mubr.f32.mxu0 0.0
    %3576 = vmatmul.mubr.f32.gmra.mxu0 %v3174
    %v3577 = vpop.f32.mrf.mxu0
    %v3578 = vadd.f32 %v3388, %v3577
    %v3579 = vpop.f32.mrf.mxu0
    %3580 = vmatprep.mubr.f32.mxu0 0.0
    %3581 = vmatmul.mubr.f32.gmra.mxu0 %v3175
    %v3582 = vpop.f32.mrf.mxu0
    %v3583 = vadd.f32 %v3393, %v3582
    %v3584 = vpop.f32.mrf.mxu0
    %3585 = vmatprep.mubr.f32.mxu0 0.0
    %3586 = vmatmul.mubr.f32.gmra.mxu0 %v3176
    %v3587 = vpop.f32.mrf.mxu0
    %v3588 = vadd.f32 %v3398, %v3587
    %v3589 = vpop.f32.mrf.mxu0
    %3590 = vmatprep.mubr.f32.mxu0 0.0
    %3591 = vmatmul.mubr.f32.gmra.mxu0 %v3177
    %v3592 = vpop.f32.mrf.mxu0
    %v3593 = vadd.f32 %v3403, %v3592
    %v3594 = vpop.f32.mrf.mxu0
    %3595 = vmatprep.mubr.f32.mxu0 0.0
    %3596 = vmatmul.mubr.f32.gmra.mxu0 %v3178
    %v3597 = vpop.f32.mrf.mxu0
    %v3598 = vadd.f32 %v3408, %v3597
    %v3599 = vpop.f32.mrf.mxu0
    %3600 = vmatprep.mubr.f32.mxu0 0.0
    %3601 = vmatmul.mubr.f32.gmra.mxu0 %v3179
    %v3602 = vpop.f32.mrf.mxu0
    %v3603 = vadd.f32 %v3413, %v3602
    %v3604 = vpop.f32.mrf.mxu0
    %3605 = vmatprep.mubr.f32.mxu0 0.0
    %3606 = vmatmul.mubr.f32.gmra.mxu0 %v3180
    %v3607 = vpop.f32.mrf.mxu0
    %v3608 = vadd.f32 %v3418, %v3607
    %v3609 = vpop.f32.mrf.mxu0
    %3610 = vmatprep.mubr.f32.mxu0 0.0
    %3611 = vmatmul.mubr.f32.gmra.mxu0 %v3181
    %v3612 = vpop.f32.mrf.mxu0
    %v3613 = vadd.f32 %v3423, %v3612
    %v3614 = vpop.f32.mrf.mxu0
    %3615 = vmatprep.mubr.f32.mxu0 0.0
    %3616 = vmatmul.mubr.f32.gmra.mxu0 %v3182
    %v3617 = vpop.f32.mrf.mxu0
    %v3618 = vadd.f32 %v3428, %v3617
    %v3619 = vpop.f32.mrf.mxu0
    %3620 = vdwg.mxu0
    %v3621 = vld [vmem:[#allocation3 + $0x7] sm:$0xff]
    %v3622 = vld [vmem:[#allocation3 + $0xf] sm:$0xff]
    %v3623 = vld [vmem:[#allocation3 + $0x17] sm:$0xff]
    %v3624 = vld [vmem:[#allocation3 + $0x1f] sm:$0xff]
    %v3625 = vld [vmem:[#allocation3 + $0x27] sm:$0xff]
    %v3626 = vld [vmem:[#allocation3 + $0x2f] sm:$0xff]
    %v3627 = vld [vmem:[#allocation3 + $0x37] sm:$0xff]
    %v3628 = vld [vmem:[#allocation3 + $0x3f] sm:$0xff]
    %v3629 = vld [vmem:[#allocation3 + $0x47] sm:$0xff]
    %v3630 = vld [vmem:[#allocation3 + $0x4f] sm:$0xff]
    %v3631 = vld [vmem:[#allocation3 + $0x57] sm:$0xff]
    %v3632 = vld [vmem:[#allocation3 + $0x5f] sm:$0xff]
    %v3633 = vld [vmem:[#allocation3 + $0x67] sm:$0xff]
    %v3634 = vld [vmem:[#allocation3 + $0x6f] sm:$0xff]
    %v3635 = vld [vmem:[#allocation3 + $0x77] sm:$0xff]
    %v3636 = vld [vmem:[#allocation3 + $0x7f] sm:$0xff]
    %v3637 = vld [vmem:[#allocation3 + $0x87] sm:$0xff]
    %v3638 = vld [vmem:[#allocation3 + $0x8f] sm:$0xff]
    %v3639 = vld [vmem:[#allocation3 + $0x97] sm:$0xff]
    %v3640 = vld [vmem:[#allocation3 + $0x9f] sm:$0xff]
    %v3641 = vld [vmem:[#allocation3 + $0xa7] sm:$0xff]
    %v3642 = vld [vmem:[#allocation3 + $0xaf] sm:$0xff]
    %v3643 = vld [vmem:[#allocation3 + $0xb7] sm:$0xff]
    %v3644 = vld [vmem:[#allocation3 + $0xbf] sm:$0xff]
    %v3645 = vld [vmem:[#allocation3 + $0xc7] sm:$0xff]
    %s3646 = scalar_lea.vmem %s5, 256
    %v3647 = vld [vmem:[%s3646] sm:$0xff]
    %v3648 = vld [vmem:[%s3646 + $0x8] sm:$0xff]
    %v3649 = vld [vmem:[%s3646 + $0x10] sm:$0xff]
    %v3650 = vld [vmem:[%s3646 + $0x18] sm:$0xff]
    %v3651 = vld [vmem:[%s3646 + $0x20] sm:$0xff]
    %v3652 = vld [vmem:[%s3646 + $0x28] sm:$0xff]
    %v3653 = vld [vmem:[%s3646 + $0x30] sm:$0xff]
    %v3654 = vld [vmem:[%s3646 + $0x38] sm:$0xff]
    %v3655 = vld [vmem:[%s3646 + $0x40] sm:$0xff]
    %v3656 = vld [vmem:[%s3646 + $0x48] sm:$0xff]
    %v3657 = vld [vmem:[%s3646 + $0x50] sm:$0xff]
    %v3658 = vld [vmem:[%s3646 + $0x58] sm:$0xff]
    %v3659 = vld [vmem:[%s3646 + $0x60] sm:$0xff]
    %v3660 = vld [vmem:[%s3646 + $0x68] sm:$0xff]
    %v3661 = vld [vmem:[%s3646 + $0x70] sm:$0xff]
    %v3662 = vld [vmem:[%s3646 + $0x78] sm:$0xff]
    %3663 = vmatprep.subr.mxu0 0.0
    %3664 = vmatpush1.msra.mxu0 %v3662
    %3665 = vmatprep.subr.mxu0 0.0
    %3666 = vmatpush1.msra.mxu0 %v3661
    %3667 = vmatprep.subr.mxu0 0.0
    %3668 = vmatpush1.msra.mxu0 %v3660
    %3669 = vmatprep.subr.mxu0 0.0
    %3670 = vmatpush1.msra.mxu0 %v3659
    %3671 = vmatprep.subr.mxu0 0.0
    %3672 = vmatpush1.msra.mxu0 %v3658
    %3673 = vmatprep.subr.mxu0 0.0
    %3674 = vmatpush1.msra.mxu0 %v3657
    %3675 = vmatprep.subr.mxu0 0.0
    %3676 = vmatpush1.msra.mxu0 %v3656
    %3677 = vmatprep.subr.mxu0 0.0
    %3678 = vmatpush1.msra.mxu0 %v3655
    %3679 = vmatprep.subr.mxu0 0.0
    %3680 = vmatpush1.msra.mxu0 %v3654
    %3681 = vmatprep.subr.mxu0 0.0
    %3682 = vmatpush1.msra.mxu0 %v3653
    %3683 = vmatprep.subr.mxu0 0.0
    %3684 = vmatpush1.msra.mxu0 %v3652
    %3685 = vmatprep.subr.mxu0 0.0
    %3686 = vmatpush1.msra.mxu0 %v3651
    %3687 = vmatprep.subr.mxu0 0.0
    %3688 = vmatpush1.msra.mxu0 %v3650
    %3689 = vmatprep.subr.mxu0 0.0
    %3690 = vmatpush1.msra.mxu0 %v3649
    %3691 = vmatprep.subr.mxu0 0.0
    %3692 = vmatpush1.msra.mxu0 %v3648
    %3693 = vmatprep.subr.mxu0 0.0
    %3694 = vmatpush1.msra.mxu0 %v3647
    %3695 = vmatprep.subr.mxu0 0.0
    %3696 = vmatpush2.msra.mxu0 0.0
    %3697 = vmatprep.subr.mxu0 0.0
    %3698 = vmatpush2.msra.mxu0 0.0
    %3699 = vmatprep.subr.mxu0 0.0
    %3700 = vmatpush2.msra.mxu0 0.0
    %3701 = vmatprep.subr.mxu0 0.0
    %3702 = vmatpush2.msra.mxu0 0.0
    %3703 = vmatprep.subr.mxu0 0.0
    %3704 = vmatpush2.msra.mxu0 0.0
    %3705 = vmatprep.subr.mxu0 0.0
    %3706 = vmatpush2.msra.mxu0 0.0
    %3707 = vmatprep.subr.mxu0 0.0
    %3708 = vmatpush2.msra.mxu0 0.0
    %3709 = vmatprep.subr.mxu0 0.0
    %3710 = vmatpush2.msra.mxu0 0.0
    %3711 = vmatprep.subr.mxu0 0.0
    %3712 = vmatpush2.msra.mxu0 0.0
    %3713 = vmatprep.subr.mxu0 0.0
    %3714 = vmatpush2.msra.mxu0 0.0
    %3715 = vmatprep.subr.mxu0 0.0
    %3716 = vmatpush2.msra.mxu0 0.0
    %3717 = vmatprep.subr.mxu0 0.0
    %3718 = vmatpush2.msra.mxu0 0.0
    %3719 = vmatprep.subr.mxu0 0.0
    %3720 = vmatpush2.msra.mxu0 0.0
    %3721 = vmatprep.subr.mxu0 0.0
    %3722 = vmatpush2.msra.mxu0 0.0
    %3723 = vmatprep.subr.mxu0 0.0
    %3724 = vmatpush2.msra.mxu0 0.0
    %3725 = vmatprep.subr.mxu0 0.0
    %3726 = vmatpush2.msra.mxu0 0.0
    %3727 = vmatprep.mubr.f32.mxu0 0.0
    %3728 = vmatmul.mubr.f32.gmra.mxu0 %v3621
    %v3729 = vpop.f32.mrf.mxu0
    %v3730 = vadd.f32 0.0, %v3729
    %v3731 = vpop.f32.mrf.mxu0
    %3732 = vmatprep.mubr.f32.mxu0 0.0
    %3733 = vmatmul.mubr.f32.gmra.mxu0 %v3622
    %v3734 = vpop.f32.mrf.mxu0
    %v3735 = vadd.f32 0.0, %v3734
    %v3736 = vpop.f32.mrf.mxu0
    %3737 = vmatprep.mubr.f32.mxu0 0.0
    %3738 = vmatmul.mubr.f32.gmra.mxu0 %v3623
    %v3739 = vpop.f32.mrf.mxu0
    %v3740 = vadd.f32 0.0, %v3739
    %v3741 = vpop.f32.mrf.mxu0
    %3742 = vmatprep.mubr.f32.mxu0 0.0
    %3743 = vmatmul.mubr.f32.gmra.mxu0 %v3624
    %v3744 = vpop.f32.mrf.mxu0
    %v3745 = vadd.f32 0.0, %v3744
    %v3746 = vpop.f32.mrf.mxu0
    %3747 = vmatprep.mubr.f32.mxu0 0.0
    %3748 = vmatmul.mubr.f32.gmra.mxu0 %v3625
    %v3749 = vpop.f32.mrf.mxu0
    %v3750 = vadd.f32 0.0, %v3749
    %v3751 = vpop.f32.mrf.mxu0
    %3752 = vmatprep.mubr.f32.mxu0 0.0
    %3753 = vmatmul.mubr.f32.gmra.mxu0 %v3626
    %v3754 = vpop.f32.mrf.mxu0
    %v3755 = vadd.f32 0.0, %v3754
    %v3756 = vpop.f32.mrf.mxu0
    %3757 = vmatprep.mubr.f32.mxu0 0.0
    %3758 = vmatmul.mubr.f32.gmra.mxu0 %v3627
    %v3759 = vpop.f32.mrf.mxu0
    %v3760 = vadd.f32 0.0, %v3759
    %v3761 = vpop.f32.mrf.mxu0
    %3762 = vmatprep.mubr.f32.mxu0 0.0
    %3763 = vmatmul.mubr.f32.gmra.mxu0 %v3628
    %v3764 = vpop.f32.mrf.mxu0
    %v3765 = vadd.f32 0.0, %v3764
    %v3766 = vpop.f32.mrf.mxu0
    %3767 = vmatprep.mubr.f32.mxu0 0.0
    %3768 = vmatmul.mubr.f32.gmra.mxu0 %v3629
    %v3769 = vpop.f32.mrf.mxu0
    %v3770 = vadd.f32 0.0, %v3769
    %v3771 = vpop.f32.mrf.mxu0
    %3772 = vmatprep.mubr.f32.mxu0 0.0
    %3773 = vmatmul.mubr.f32.gmra.mxu0 %v3630
    %v3774 = vpop.f32.mrf.mxu0
    %v3775 = vadd.f32 0.0, %v3774
    %v3776 = vpop.f32.mrf.mxu0
    %3777 = vmatprep.mubr.f32.mxu0 0.0
    %3778 = vmatmul.mubr.f32.gmra.mxu0 %v3631
    %v3779 = vpop.f32.mrf.mxu0
    %v3780 = vadd.f32 0.0, %v3779
    %v3781 = vpop.f32.mrf.mxu0
    %3782 = vmatprep.mubr.f32.mxu0 0.0
    %3783 = vmatmul.mubr.f32.gmra.mxu0 %v3632
    %v3784 = vpop.f32.mrf.mxu0
    %v3785 = vadd.f32 0.0, %v3784
    %v3786 = vpop.f32.mrf.mxu0
    %3787 = vmatprep.mubr.f32.mxu0 0.0
    %3788 = vmatmul.mubr.f32.gmra.mxu0 %v3633
    %v3789 = vpop.f32.mrf.mxu0
    %v3790 = vadd.f32 0.0, %v3789
    %v3791 = vpop.f32.mrf.mxu0
    %3792 = vmatprep.mubr.f32.mxu0 0.0
    %3793 = vmatmul.mubr.f32.gmra.mxu0 %v3634
    %v3794 = vpop.f32.mrf.mxu0
    %v3795 = vadd.f32 0.0, %v3794
    %v3796 = vpop.f32.mrf.mxu0
    %3797 = vmatprep.mubr.f32.mxu0 0.0
    %3798 = vmatmul.mubr.f32.gmra.mxu0 %v3635
    %v3799 = vpop.f32.mrf.mxu0
    %v3800 = vadd.f32 0.0, %v3799
    %v3801 = vpop.f32.mrf.mxu0
    %3802 = vmatprep.mubr.f32.mxu0 0.0
    %3803 = vmatmul.mubr.f32.gmra.mxu0 %v3636
    %v3804 = vpop.f32.mrf.mxu0
    %v3805 = vadd.f32 0.0, %v3804
    %v3806 = vpop.f32.mrf.mxu0
    %3807 = vmatprep.mubr.f32.mxu0 0.0
    %3808 = vmatmul.mubr.f32.gmra.mxu0 %v3637
    %v3809 = vpop.f32.mrf.mxu0
    %v3810 = vadd.f32 0.0, %v3809
    %v3811 = vpop.f32.mrf.mxu0
    %3812 = vmatprep.mubr.f32.mxu0 0.0
    %3813 = vmatmul.mubr.f32.gmra.mxu0 %v3638
    %v3814 = vpop.f32.mrf.mxu0
    %v3815 = vadd.f32 0.0, %v3814
    %v3816 = vpop.f32.mrf.mxu0
    %3817 = vmatprep.mubr.f32.mxu0 0.0
    %3818 = vmatmul.mubr.f32.gmra.mxu0 %v3639
    %v3819 = vpop.f32.mrf.mxu0
    %v3820 = vadd.f32 0.0, %v3819
    %v3821 = vpop.f32.mrf.mxu0
    %3822 = vmatprep.mubr.f32.mxu0 0.0
    %3823 = vmatmul.mubr.f32.gmra.mxu0 %v3640
    %v3824 = vpop.f32.mrf.mxu0
    %v3825 = vadd.f32 0.0, %v3824
    %v3826 = vpop.f32.mrf.mxu0
    %3827 = vmatprep.mubr.f32.mxu0 0.0
    %3828 = vmatmul.mubr.f32.gmra.mxu0 %v3641
    %v3829 = vpop.f32.mrf.mxu0
    %v3830 = vadd.f32 0.0, %v3829
    %v3831 = vpop.f32.mrf.mxu0
    %3832 = vmatprep.mubr.f32.mxu0 0.0
    %3833 = vmatmul.mubr.f32.gmra.mxu0 %v3642
    %v3834 = vpop.f32.mrf.mxu0
    %v3835 = vadd.f32 0.0, %v3834
    %v3836 = vpop.f32.mrf.mxu0
    %3837 = vmatprep.mubr.f32.mxu0 0.0
    %3838 = vmatmul.mubr.f32.gmra.mxu0 %v3643
    %v3839 = vpop.f32.mrf.mxu0
    %v3840 = vadd.f32 0.0, %v3839
    %v3841 = vpop.f32.mrf.mxu0
    %3842 = vmatprep.mubr.f32.mxu0 0.0
    %3843 = vmatmul.mubr.f32.gmra.mxu0 %v3644
    %v3844 = vpop.f32.mrf.mxu0
    %v3845 = vadd.f32 0.0, %v3844
    %v3846 = vpop.f32.mrf.mxu0
    %3847 = vmatprep.mubr.f32.mxu0 0.0
    %3848 = vmatmul.mubr.f32.gmra.mxu0 %v3645
    %v3849 = vpop.f32.mrf.mxu0
    %v3850 = vadd.f32 0.0, %v3849
    %v3851 = vpop.f32.mrf.mxu0
    %3852 = vdwg.mxu0
    %v3853 = vadd.f32 %v3498, %v3730
    %v3854 = vadd.f32 %v3503, %v3735
    %v3855 = vadd.f32 %v3508, %v3740
    %v3856 = vadd.f32 %v3513, %v3745
    %v3857 = vadd.f32 %v3518, %v3750
    %v3858 = vadd.f32 %v3523, %v3755
    %v3859 = vadd.f32 %v3528, %v3760
    %v3860 = vadd.f32 %v3533, %v3765
    %v3861 = vadd.f32 %v3538, %v3770
    %v3862 = vadd.f32 %v3543, %v3775
    %v3863 = vadd.f32 %v3548, %v3780
    %v3864 = vadd.f32 %v3553, %v3785
    %v3865 = vadd.f32 %v3558, %v3790
    %v3866 = vadd.f32 %v3563, %v3795
    %v3867 = vadd.f32 %v3568, %v3800
    %v3868 = vadd.f32 %v3573, %v3805
    %v3869 = vadd.f32 %v3578, %v3810
    %v3870 = vadd.f32 %v3583, %v3815
    %v3871 = vadd.f32 %v3588, %v3820
    %v3872 = vadd.f32 %v3593, %v3825
    %v3873 = vadd.f32 %v3598, %v3830
    %v3874 = vadd.f32 %v3603, %v3835
    %v3875 = vadd.f32 %v3608, %v3840
    %v3876 = vadd.f32 %v3613, %v3845
    %v3877 = vadd.f32 %v3618, %v3850
    %v3878 = vld [vmem:[#allocation3 + $0xf] sm:$0xff]
    %v3879 = vld [vmem:[#allocation3 + $0x17] sm:$0xff]
    %v3880 = vld [vmem:[#allocation3 + $0x1f] sm:$0xff]
    %v3881 = vld [vmem:[#allocation3 + $0x27] sm:$0xff]
    %v3882 = vld [vmem:[#allocation3 + $0x2f] sm:$0xff]
    %v3883 = vld [vmem:[#allocation3 + $0x37] sm:$0xff]
    %v3884 = vld [vmem:[#allocation3 + $0x3f] sm:$0xff]
    %v3885 = vld [vmem:[#allocation3 + $0x47] sm:$0xff]
    %v3886 = vld [vmem:[#allocation3 + $0x4f] sm:$0xff]
    %v3887 = vld [vmem:[#allocation3 + $0x57] sm:$0xff]
    %v3888 = vld [vmem:[#allocation3 + $0x5f] sm:$0xff]
    %v3889 = vld [vmem:[#allocation3 + $0x67] sm:$0xff]
    %v3890 = vld [vmem:[#allocation3 + $0x6f] sm:$0xff]
    %v3891 = vld [vmem:[#allocation3 + $0x77] sm:$0xff]
    %v3892 = vld [vmem:[#allocation3 + $0x7f] sm:$0xff]
    %v3893 = vld [vmem:[#allocation3 + $0x87] sm:$0xff]
    %v3894 = vld [vmem:[#allocation3 + $0x8f] sm:$0xff]
    %v3895 = vld [vmem:[#allocation3 + $0x97] sm:$0xff]
    %v3896 = vld [vmem:[#allocation3 + $0x9f] sm:$0xff]
    %v3897 = vld [vmem:[#allocation3 + $0xa7] sm:$0xff]
    %v3898 = vld [vmem:[#allocation3 + $0xaf] sm:$0xff]
    %v3899 = vld [vmem:[#allocation3 + $0xb7] sm:$0xff]
    %v3900 = vld [vmem:[#allocation3 + $0xbf] sm:$0xff]
    %v3901 = vld [vmem:[#allocation3 + $0xc7] sm:$0xff]
    %v3902 = vld [vmem:[#allocation3 + $0xcf] sm:$0xff]
    %s3903 = scalar_lea.vmem %s5, 384
    %v3904 = vld [vmem:[%s3903] sm:$0xff]
    %v3905 = vld [vmem:[%s3903 + $0x8] sm:$0xff]
    %v3906 = vld [vmem:[%s3903 + $0x10] sm:$0xff]
    %v3907 = vld [vmem:[%s3903 + $0x18] sm:$0xff]
    %v3908 = vld [vmem:[%s3903 + $0x20] sm:$0xff]
    %v3909 = vld [vmem:[%s3903 + $0x28] sm:$0xff]
    %v3910 = vld [vmem:[%s3903 + $0x30] sm:$0xff]
    %v3911 = vld [vmem:[%s3903 + $0x38] sm:$0xff]
    %v3912 = vld [vmem:[%s3903 + $0x40] sm:$0xff]
    %v3913 = vld [vmem:[%s3903 + $0x48] sm:$0xff]
    %v3914 = vld [vmem:[%s3903 + $0x50] sm:$0xff]
    %v3915 = vld [vmem:[%s3903 + $0x58] sm:$0xff]
    %v3916 = vld [vmem:[%s3903 + $0x60] sm:$0xff]
    %v3917 = vld [vmem:[%s3903 + $0x68] sm:$0xff]
    %v3918 = vld [vmem:[%s3903 + $0x70] sm:$0xff]
    %v3919 = vld [vmem:[%s3903 + $0x78] sm:$0xff]
    %3920 = vmatprep.subr.mxu0 0.0
    %3921 = vmatpush1.msra.mxu0 %v3919
    %3922 = vmatprep.subr.mxu0 0.0
    %3923 = vmatpush1.msra.mxu0 %v3918
    %3924 = vmatprep.subr.mxu0 0.0
    %3925 = vmatpush1.msra.mxu0 %v3917
    %3926 = vmatprep.subr.mxu0 0.0
    %3927 = vmatpush1.msra.mxu0 %v3916
    %3928 = vmatprep.subr.mxu0 0.0
    %3929 = vmatpush1.msra.mxu0 %v3915
    %3930 = vmatprep.subr.mxu0 0.0
    %3931 = vmatpush1.msra.mxu0 %v3914
    %3932 = vmatprep.subr.mxu0 0.0
    %3933 = vmatpush1.msra.mxu0 %v3913
    %3934 = vmatprep.subr.mxu0 0.0
    %3935 = vmatpush1.msra.mxu0 %v3912
    %3936 = vmatprep.subr.mxu0 0.0
    %3937 = vmatpush1.msra.mxu0 %v3911
    %3938 = vmatprep.subr.mxu0 0.0
    %3939 = vmatpush1.msra.mxu0 %v3910
    %3940 = vmatprep.subr.mxu0 0.0
    %3941 = vmatpush1.msra.mxu0 %v3909
    %3942 = vmatprep.subr.mxu0 0.0
    %3943 = vmatpush1.msra.mxu0 %v3908
    %3944 = vmatprep.subr.mxu0 0.0
    %3945 = vmatpush1.msra.mxu0 %v3907
    %3946 = vmatprep.subr.mxu0 0.0
    %3947 = vmatpush1.msra.mxu0 %v3906
    %3948 = vmatprep.subr.mxu0 0.0
    %3949 = vmatpush1.msra.mxu0 %v3905
    %3950 = vmatprep.subr.mxu0 0.0
    %3951 = vmatpush1.msra.mxu0 %v3904
    %3952 = vmatprep.subr.mxu0 0.0
    %3953 = vmatpush2.msra.mxu0 0.0
    %3954 = vmatprep.subr.mxu0 0.0
    %3955 = vmatpush2.msra.mxu0 0.0
    %3956 = vmatprep.subr.mxu0 0.0
    %3957 = vmatpush2.msra.mxu0 0.0
    %3958 = vmatprep.subr.mxu0 0.0
    %3959 = vmatpush2.msra.mxu0 0.0
    %3960 = vmatprep.subr.mxu0 0.0
    %3961 = vmatpush2.msra.mxu0 0.0
    %3962 = vmatprep.subr.mxu0 0.0
    %3963 = vmatpush2.msra.mxu0 0.0
    %3964 = vmatprep.subr.mxu0 0.0
    %3965 = vmatpush2.msra.mxu0 0.0
    %3966 = vmatprep.subr.mxu0 0.0
    %3967 = vmatpush2.msra.mxu0 0.0
    %3968 = vmatprep.subr.mxu0 0.0
    %3969 = vmatpush2.msra.mxu0 0.0
    %3970 = vmatprep.subr.mxu0 0.0
    %3971 = vmatpush2.msra.mxu0 0.0
    %3972 = vmatprep.subr.mxu0 0.0
    %3973 = vmatpush2.msra.mxu0 0.0
    %3974 = vmatprep.subr.mxu0 0.0
    %3975 = vmatpush2.msra.mxu0 0.0
    %3976 = vmatprep.subr.mxu0 0.0
    %3977 = vmatpush2.msra.mxu0 0.0
    %3978 = vmatprep.subr.mxu0 0.0
    %3979 = vmatpush2.msra.mxu0 0.0
    %3980 = vmatprep.subr.mxu0 0.0
    %3981 = vmatpush2.msra.mxu0 0.0
    %3982 = vmatprep.subr.mxu0 0.0
    %3983 = vmatpush2.msra.mxu0 0.0
    %3984 = vmatprep.mubr.f32.mxu0 0.0
    %3985 = vmatmul.mubr.f32.gmra.mxu0 %v3878
    %v3986 = vpop.f32.mrf.mxu0
    %v3987 = vadd.f32 0.0, %v3986
    %v3988 = vpop.f32.mrf.mxu0
    %3989 = vmatprep.mubr.f32.mxu0 0.0
    %3990 = vmatmul.mubr.f32.gmra.mxu0 %v3879
    %v3991 = vpop.f32.mrf.mxu0
    %v3992 = vadd.f32 0.0, %v3991
    %v3993 = vpop.f32.mrf.mxu0
    %3994 = vmatprep.mubr.f32.mxu0 0.0
    %3995 = vmatmul.mubr.f32.gmra.mxu0 %v3880
    %v3996 = vpop.f32.mrf.mxu0
    %v3997 = vadd.f32 0.0, %v3996
    %v3998 = vpop.f32.mrf.mxu0
    %3999 = vmatprep.mubr.f32.mxu0 0.0
    %4000 = vmatmul.mubr.f32.gmra.mxu0 %v3881
    %v4001 = vpop.f32.mrf.mxu0
    %v4002 = vadd.f32 0.0, %v4001
    %v4003 = vpop.f32.mrf.mxu0
    %4004 = vmatprep.mubr.f32.mxu0 0.0
    %4005 = vmatmul.mubr.f32.gmra.mxu0 %v3882
    %v4006 = vpop.f32.mrf.mxu0
    %v4007 = vadd.f32 0.0, %v4006
    %v4008 = vpop.f32.mrf.mxu0
    %4009 = vmatprep.mubr.f32.mxu0 0.0
    %4010 = vmatmul.mubr.f32.gmra.mxu0 %v3883
    %v4011 = vpop.f32.mrf.mxu0
    %v4012 = vadd.f32 0.0, %v4011
    %v4013 = vpop.f32.mrf.mxu0
    %4014 = vmatprep.mubr.f32.mxu0 0.0
    %4015 = vmatmul.mubr.f32.gmra.mxu0 %v3884
    %v4016 = vpop.f32.mrf.mxu0
    %v4017 = vadd.f32 0.0, %v4016
    %v4018 = vpop.f32.mrf.mxu0
    %4019 = vmatprep.mubr.f32.mxu0 0.0
    %4020 = vmatmul.mubr.f32.gmra.mxu0 %v3885
    %v4021 = vpop.f32.mrf.mxu0
    %v4022 = vadd.f32 0.0, %v4021
    %v4023 = vpop.f32.mrf.mxu0
    %4024 = vmatprep.mubr.f32.mxu0 0.0
    %4025 = vmatmul.mubr.f32.gmra.mxu0 %v3886
    %v4026 = vpop.f32.mrf.mxu0
    %v4027 = vadd.f32 0.0, %v4026
    %v4028 = vpop.f32.mrf.mxu0
    %4029 = vmatprep.mubr.f32.mxu0 0.0
    %4030 = vmatmul.mubr.f32.gmra.mxu0 %v3887
    %v4031 = vpop.f32.mrf.mxu0
    %v4032 = vadd.f32 0.0, %v4031
    %v4033 = vpop.f32.mrf.mxu0
    %4034 = vmatprep.mubr.f32.mxu0 0.0
    %4035 = vmatmul.mubr.f32.gmra.mxu0 %v3888
    %v4036 = vpop.f32.mrf.mxu0
    %v4037 = vadd.f32 0.0, %v4036
    %v4038 = vpop.f32.mrf.mxu0
    %4039 = vmatprep.mubr.f32.mxu0 0.0
    %4040 = vmatmul.mubr.f32.gmra.mxu0 %v3889
    %v4041 = vpop.f32.mrf.mxu0
    %v4042 = vadd.f32 0.0, %v4041
    %v4043 = vpop.f32.mrf.mxu0
    %4044 = vmatprep.mubr.f32.mxu0 0.0
    %4045 = vmatmul.mubr.f32.gmra.mxu0 %v3890
    %v4046 = vpop.f32.mrf.mxu0
    %v4047 = vadd.f32 0.0, %v4046
    %v4048 = vpop.f32.mrf.mxu0
    %4049 = vmatprep.mubr.f32.mxu0 0.0
    %4050 = vmatmul.mubr.f32.gmra.mxu0 %v3891
    %v4051 = vpop.f32.mrf.mxu0
    %v4052 = vadd.f32 0.0, %v4051
    %v4053 = vpop.f32.mrf.mxu0
    %4054 = vmatprep.mubr.f32.mxu0 0.0
    %4055 = vmatmul.mubr.f32.gmra.mxu0 %v3892
    %v4056 = vpop.f32.mrf.mxu0
    %v4057 = vadd.f32 0.0, %v4056
    %v4058 = vpop.f32.mrf.mxu0
    %4059 = vmatprep.mubr.f32.mxu0 0.0
    %4060 = vmatmul.mubr.f32.gmra.mxu0 %v3893
    %v4061 = vpop.f32.mrf.mxu0
    %v4062 = vadd.f32 0.0, %v4061
    %v4063 = vpop.f32.mrf.mxu0
    %4064 = vmatprep.mubr.f32.mxu0 0.0
    %4065 = vmatmul.mubr.f32.gmra.mxu0 %v3894
    %v4066 = vpop.f32.mrf.mxu0
    %v4067 = vadd.f32 0.0, %v4066
    %v4068 = vpop.f32.mrf.mxu0
    %4069 = vmatprep.mubr.f32.mxu0 0.0
    %4070 = vmatmul.mubr.f32.gmra.mxu0 %v3895
    %v4071 = vpop.f32.mrf.mxu0
    %v4072 = vadd.f32 0.0, %v4071
    %v4073 = vpop.f32.mrf.mxu0
    %4074 = vmatprep.mubr.f32.mxu0 0.0
    %4075 = vmatmul.mubr.f32.gmra.mxu0 %v3896
    %v4076 = vpop.f32.mrf.mxu0
    %v4077 = vadd.f32 0.0, %v4076
    %v4078 = vpop.f32.mrf.mxu0
    %4079 = vmatprep.mubr.f32.mxu0 0.0
    %4080 = vmatmul.mubr.f32.gmra.mxu0 %v3897
    %v4081 = vpop.f32.mrf.mxu0
    %v4082 = vadd.f32 0.0, %v4081
    %v4083 = vpop.f32.mrf.mxu0
    %4084 = vmatprep.mubr.f32.mxu0 0.0
    %4085 = vmatmul.mubr.f32.gmra.mxu0 %v3898
    %v4086 = vpop.f32.mrf.mxu0
    %v4087 = vadd.f32 0.0, %v4086
    %v4088 = vpop.f32.mrf.mxu0
    %4089 = vmatprep.mubr.f32.mxu0 0.0
    %4090 = vmatmul.mubr.f32.gmra.mxu0 %v3899
    %v4091 = vpop.f32.mrf.mxu0
    %v4092 = vadd.f32 0.0, %v4091
    %v4093 = vpop.f32.mrf.mxu0
    %4094 = vmatprep.mubr.f32.mxu0 0.0
    %4095 = vmatmul.mubr.f32.gmra.mxu0 %v3900
    %v4096 = vpop.f32.mrf.mxu0
    %v4097 = vadd.f32 0.0, %v4096
    %v4098 = vpop.f32.mrf.mxu0
    %4099 = vmatprep.mubr.f32.mxu0 0.0
    %4100 = vmatmul.mubr.f32.gmra.mxu0 %v3901
    %v4101 = vpop.f32.mrf.mxu0
    %v4102 = vadd.f32 0.0, %v4101
    %v4103 = vpop.f32.mrf.mxu0
    %4104 = vmatprep.mubr.f32.mxu0 0.0
    %4105 = vmatmul.mubr.f32.gmra.mxu0 %v3902
    %v4106 = vpop.f32.mrf.mxu0
    %v4107 = vadd.f32 0.0, %v4106
    %v4108 = vpop.f32.mrf.mxu0
    %4109 = vdwg.mxu0
    %v4110 = vadd.f32 %v3853, %v3987
    %v4111 = vadd.f32 %v3854, %v3992
    %v4112 = vadd.f32 %v3855, %v3997
    %v4113 = vadd.f32 %v3856, %v4002
    %v4114 = vadd.f32 %v3857, %v4007
    %v4115 = vadd.f32 %v3858, %v4012
    %v4116 = vadd.f32 %v3859, %v4017
    %v4117 = vadd.f32 %v3860, %v4022
    %v4118 = vadd.f32 %v3861, %v4027
    %v4119 = vadd.f32 %v3862, %v4032
    %v4120 = vadd.f32 %v3863, %v4037
    %v4121 = vadd.f32 %v3864, %v4042
    %v4122 = vadd.f32 %v3865, %v4047
    %v4123 = vadd.f32 %v3866, %v4052
    %v4124 = vadd.f32 %v3867, %v4057
    %v4125 = vadd.f32 %v3868, %v4062
    %v4126 = vadd.f32 %v3869, %v4067
    %v4127 = vadd.f32 %v3870, %v4072
    %v4128 = vadd.f32 %v3871, %v4077
    %v4129 = vadd.f32 %v3872, %v4082
    %v4130 = vadd.f32 %v3873, %v4087
    %v4131 = vadd.f32 %v3874, %v4092
    %v4132 = vadd.f32 %v3875, %v4097
    %v4133 = vadd.f32 %v3876, %v4102
    %v4134 = vadd.f32 %v3877, %v4107
    %v4135 = vld [vmem:[#allocation3 + $0x10] sm:$0xff]
    %v4136 = vld [vmem:[#allocation3 + $0x18] sm:$0xff]
    %v4137 = vld [vmem:[#allocation3 + $0x20] sm:$0xff]
    %v4138 = vld [vmem:[#allocation3 + $0x28] sm:$0xff]
    %v4139 = vld [vmem:[#allocation3 + $0x30] sm:$0xff]
    %v4140 = vld [vmem:[#allocation3 + $0x38] sm:$0xff]
    %v4141 = vld [vmem:[#allocation3 + $0x40] sm:$0xff]
    %v4142 = vld [vmem:[#allocation3 + $0x48] sm:$0xff]
    %v4143 = vld [vmem:[#allocation3 + $0x50] sm:$0xff]
    %v4144 = vld [vmem:[#allocation3 + $0x58] sm:$0xff]
    %v4145 = vld [vmem:[#allocation3 + $0x60] sm:$0xff]
    %v4146 = vld [vmem:[#allocation3 + $0x68] sm:$0xff]
    %v4147 = vld [vmem:[#allocation3 + $0x70] sm:$0xff]
    %v4148 = vld [vmem:[#allocation3 + $0x78] sm:$0xff]
    %v4149 = vld [vmem:[#allocation3 + $0x80] sm:$0xff]
    %v4150 = vld [vmem:[#allocation3 + $0x88] sm:$0xff]
    %v4151 = vld [vmem:[#allocation3 + $0x90] sm:$0xff]
    %v4152 = vld [vmem:[#allocation3 + $0x98] sm:$0xff]
    %v4153 = vld [vmem:[#allocation3 + $0xa0] sm:$0xff]
    %v4154 = vld [vmem:[#allocation3 + $0xa8] sm:$0xff]
    %v4155 = vld [vmem:[#allocation3 + $0xb0] sm:$0xff]
    %v4156 = vld [vmem:[#allocation3 + $0xb8] sm:$0xff]
    %v4157 = vld [vmem:[#allocation3 + $0xc0] sm:$0xff]
    %v4158 = vld [vmem:[#allocation3 + $0xc8] sm:$0xff]
    %v4159 = vld [vmem:[#allocation3 + $0xd0] sm:$0xff]
    %s4160 = scalar_lea.vmem %s5, 512
    %v4161 = vld [vmem:[%s4160] sm:$0xff]
    %v4162 = vld [vmem:[%s4160 + $0x8] sm:$0xff]
    %v4163 = vld [vmem:[%s4160 + $0x10] sm:$0xff]
    %v4164 = vld [vmem:[%s4160 + $0x18] sm:$0xff]
    %v4165 = vld [vmem:[%s4160 + $0x20] sm:$0xff]
    %v4166 = vld [vmem:[%s4160 + $0x28] sm:$0xff]
    %v4167 = vld [vmem:[%s4160 + $0x30] sm:$0xff]
    %v4168 = vld [vmem:[%s4160 + $0x38] sm:$0xff]
    %v4169 = vld [vmem:[%s4160 + $0x40] sm:$0xff]
    %v4170 = vld [vmem:[%s4160 + $0x48] sm:$0xff]
    %v4171 = vld [vmem:[%s4160 + $0x50] sm:$0xff]
    %v4172 = vld [vmem:[%s4160 + $0x58] sm:$0xff]
    %v4173 = vld [vmem:[%s4160 + $0x60] sm:$0xff]
    %v4174 = vld [vmem:[%s4160 + $0x68] sm:$0xff]
    %v4175 = vld [vmem:[%s4160 + $0x70] sm:$0xff]
    %v4176 = vld [vmem:[%s4160 + $0x78] sm:$0xff]
    %4177 = vmatprep.subr.mxu0 0.0
    %4178 = vmatpush1.msra.mxu0 %v4176
    %4179 = vmatprep.subr.mxu0 0.0
    %4180 = vmatpush1.msra.mxu0 %v4175
    %4181 = vmatprep.subr.mxu0 0.0
    %4182 = vmatpush1.msra.mxu0 %v4174
    %4183 = vmatprep.subr.mxu0 0.0
    %4184 = vmatpush1.msra.mxu0 %v4173
    %4185 = vmatprep.subr.mxu0 0.0
    %4186 = vmatpush1.msra.mxu0 %v4172
    %4187 = vmatprep.subr.mxu0 0.0
    %4188 = vmatpush1.msra.mxu0 %v4171
    %4189 = vmatprep.subr.mxu0 0.0
    %4190 = vmatpush1.msra.mxu0 %v4170
    %4191 = vmatprep.subr.mxu0 0.0
    %4192 = vmatpush1.msra.mxu0 %v4169
    %4193 = vmatprep.subr.mxu0 0.0
    %4194 = vmatpush1.msra.mxu0 %v4168
    %4195 = vmatprep.subr.mxu0 0.0
    %4196 = vmatpush1.msra.mxu0 %v4167
    %4197 = vmatprep.subr.mxu0 0.0
    %4198 = vmatpush1.msra.mxu0 %v4166
    %4199 = vmatprep.subr.mxu0 0.0
    %4200 = vmatpush1.msra.mxu0 %v4165
    %4201 = vmatprep.subr.mxu0 0.0
    %4202 = vmatpush1.msra.mxu0 %v4164
    %4203 = vmatprep.subr.mxu0 0.0
    %4204 = vmatpush1.msra.mxu0 %v4163
    %4205 = vmatprep.subr.mxu0 0.0
    %4206 = vmatpush1.msra.mxu0 %v4162
    %4207 = vmatprep.subr.mxu0 0.0
    %4208 = vmatpush1.msra.mxu0 %v4161
    %4209 = vmatprep.subr.mxu0 0.0
    %4210 = vmatpush2.msra.mxu0 0.0
    %4211 = vmatprep.subr.mxu0 0.0
    %4212 = vmatpush2.msra.mxu0 0.0
    %4213 = vmatprep.subr.mxu0 0.0
    %4214 = vmatpush2.msra.mxu0 0.0
    %4215 = vmatprep.subr.mxu0 0.0
    %4216 = vmatpush2.msra.mxu0 0.0
    %4217 = vmatprep.subr.mxu0 0.0
    %4218 = vmatpush2.msra.mxu0 0.0
    %4219 = vmatprep.subr.mxu0 0.0
    %4220 = vmatpush2.msra.mxu0 0.0
    %4221 = vmatprep.subr.mxu0 0.0
    %4222 = vmatpush2.msra.mxu0 0.0
    %4223 = vmatprep.subr.mxu0 0.0
    %4224 = vmatpush2.msra.mxu0 0.0
    %4225 = vmatprep.subr.mxu0 0.0
    %4226 = vmatpush2.msra.mxu0 0.0
    %4227 = vmatprep.subr.mxu0 0.0
    %4228 = vmatpush2.msra.mxu0 0.0
    %4229 = vmatprep.subr.mxu0 0.0
    %4230 = vmatpush2.msra.mxu0 0.0
    %4231 = vmatprep.subr.mxu0 0.0
    %4232 = vmatpush2.msra.mxu0 0.0
    %4233 = vmatprep.subr.mxu0 0.0
    %4234 = vmatpush2.msra.mxu0 0.0
    %4235 = vmatprep.subr.mxu0 0.0
    %4236 = vmatpush2.msra.mxu0 0.0
    %4237 = vmatprep.subr.mxu0 0.0
    %4238 = vmatpush2.msra.mxu0 0.0
    %4239 = vmatprep.subr.mxu0 0.0
    %4240 = vmatpush2.msra.mxu0 0.0
    %4241 = vmatprep.mubr.f32.mxu0 0.0
    %4242 = vmatmul.mubr.f32.gmra.mxu0 %v4135
    %v4243 = vpop.f32.mrf.mxu0
    %v4244 = vadd.f32 0.0, %v4243
    %v4245 = vpop.f32.mrf.mxu0
    %4246 = vmatprep.mubr.f32.mxu0 0.0
    %4247 = vmatmul.mubr.f32.gmra.mxu0 %v4136
    %v4248 = vpop.f32.mrf.mxu0
    %v4249 = vadd.f32 0.0, %v4248
    %v4250 = vpop.f32.mrf.mxu0
    %4251 = vmatprep.mubr.f32.mxu0 0.0
    %4252 = vmatmul.mubr.f32.gmra.mxu0 %v4137
    %v4253 = vpop.f32.mrf.mxu0
    %v4254 = vadd.f32 0.0, %v4253
    %v4255 = vpop.f32.mrf.mxu0
    %4256 = vmatprep.mubr.f32.mxu0 0.0
    %4257 = vmatmul.mubr.f32.gmra.mxu0 %v4138
    %v4258 = vpop.f32.mrf.mxu0
    %v4259 = vadd.f32 0.0, %v4258
    %v4260 = vpop.f32.mrf.mxu0
    %4261 = vmatprep.mubr.f32.mxu0 0.0
    %4262 = vmatmul.mubr.f32.gmra.mxu0 %v4139
    %v4263 = vpop.f32.mrf.mxu0
    %v4264 = vadd.f32 0.0, %v4263
    %v4265 = vpop.f32.mrf.mxu0
    %4266 = vmatprep.mubr.f32.mxu0 0.0
    %4267 = vmatmul.mubr.f32.gmra.mxu0 %v4140
    %v4268 = vpop.f32.mrf.mxu0
    %v4269 = vadd.f32 0.0, %v4268
    %v4270 = vpop.f32.mrf.mxu0
    %4271 = vmatprep.mubr.f32.mxu0 0.0
    %4272 = vmatmul.mubr.f32.gmra.mxu0 %v4141
    %v4273 = vpop.f32.mrf.mxu0
    %v4274 = vadd.f32 0.0, %v4273
    %v4275 = vpop.f32.mrf.mxu0
    %4276 = vmatprep.mubr.f32.mxu0 0.0
    %4277 = vmatmul.mubr.f32.gmra.mxu0 %v4142
    %v4278 = vpop.f32.mrf.mxu0
    %v4279 = vadd.f32 0.0, %v4278
    %v4280 = vpop.f32.mrf.mxu0
    %4281 = vmatprep.mubr.f32.mxu0 0.0
    %4282 = vmatmul.mubr.f32.gmra.mxu0 %v4143
    %v4283 = vpop.f32.mrf.mxu0
    %v4284 = vadd.f32 0.0, %v4283
    %v4285 = vpop.f32.mrf.mxu0
    %4286 = vmatprep.mubr.f32.mxu0 0.0
    %4287 = vmatmul.mubr.f32.gmra.mxu0 %v4144
    %v4288 = vpop.f32.mrf.mxu0
    %v4289 = vadd.f32 0.0, %v4288
    %v4290 = vpop.f32.mrf.mxu0
    %4291 = vmatprep.mubr.f32.mxu0 0.0
    %4292 = vmatmul.mubr.f32.gmra.mxu0 %v4145
    %v4293 = vpop.f32.mrf.mxu0
    %v4294 = vadd.f32 0.0, %v4293
    %v4295 = vpop.f32.mrf.mxu0
    %4296 = vmatprep.mubr.f32.mxu0 0.0
    %4297 = vmatmul.mubr.f32.gmra.mxu0 %v4146
    %v4298 = vpop.f32.mrf.mxu0
    %v4299 = vadd.f32 0.0, %v4298
    %v4300 = vpop.f32.mrf.mxu0
    %4301 = vmatprep.mubr.f32.mxu0 0.0
    %4302 = vmatmul.mubr.f32.gmra.mxu0 %v4147
    %v4303 = vpop.f32.mrf.mxu0
    %v4304 = vadd.f32 0.0, %v4303
    %v4305 = vpop.f32.mrf.mxu0
    %4306 = vmatprep.mubr.f32.mxu0 0.0
    %4307 = vmatmul.mubr.f32.gmra.mxu0 %v4148
    %v4308 = vpop.f32.mrf.mxu0
    %v4309 = vadd.f32 0.0, %v4308
    %v4310 = vpop.f32.mrf.mxu0
    %4311 = vmatprep.mubr.f32.mxu0 0.0
    %4312 = vmatmul.mubr.f32.gmra.mxu0 %v4149
    %v4313 = vpop.f32.mrf.mxu0
    %v4314 = vadd.f32 0.0, %v4313
    %v4315 = vpop.f32.mrf.mxu0
    %4316 = vmatprep.mubr.f32.mxu0 0.0
    %4317 = vmatmul.mubr.f32.gmra.mxu0 %v4150
    %v4318 = vpop.f32.mrf.mxu0
    %v4319 = vadd.f32 0.0, %v4318
    %v4320 = vpop.f32.mrf.mxu0
    %4321 = vmatprep.mubr.f32.mxu0 0.0
    %4322 = vmatmul.mubr.f32.gmra.mxu0 %v4151
    %v4323 = vpop.f32.mrf.mxu0
    %v4324 = vadd.f32 0.0, %v4323
    %v4325 = vpop.f32.mrf.mxu0
    %4326 = vmatprep.mubr.f32.mxu0 0.0
    %4327 = vmatmul.mubr.f32.gmra.mxu0 %v4152
    %v4328 = vpop.f32.mrf.mxu0
    %v4329 = vadd.f32 0.0, %v4328
    %v4330 = vpop.f32.mrf.mxu0
    %4331 = vmatprep.mubr.f32.mxu0 0.0
    %4332 = vmatmul.mubr.f32.gmra.mxu0 %v4153
    %v4333 = vpop.f32.mrf.mxu0
    %v4334 = vadd.f32 0.0, %v4333
    %v4335 = vpop.f32.mrf.mxu0
    %4336 = vmatprep.mubr.f32.mxu0 0.0
    %4337 = vmatmul.mubr.f32.gmra.mxu0 %v4154
    %v4338 = vpop.f32.mrf.mxu0
    %v4339 = vadd.f32 0.0, %v4338
    %v4340 = vpop.f32.mrf.mxu0
    %4341 = vmatprep.mubr.f32.mxu0 0.0
    %4342 = vmatmul.mubr.f32.gmra.mxu0 %v4155
    %v4343 = vpop.f32.mrf.mxu0
    %v4344 = vadd.f32 0.0, %v4343
    %v4345 = vpop.f32.mrf.mxu0
    %4346 = vmatprep.mubr.f32.mxu0 0.0
    %4347 = vmatmul.mubr.f32.gmra.mxu0 %v4156
    %v4348 = vpop.f32.mrf.mxu0
    %v4349 = vadd.f32 0.0, %v4348
    %v4350 = vpop.f32.mrf.mxu0
    %4351 = vmatprep.mubr.f32.mxu0 0.0
    %4352 = vmatmul.mubr.f32.gmra.mxu0 %v4157
    %v4353 = vpop.f32.mrf.mxu0
    %v4354 = vadd.f32 0.0, %v4353
    %v4355 = vpop.f32.mrf.mxu0
    %4356 = vmatprep.mubr.f32.mxu0 0.0
    %4357 = vmatmul.mubr.f32.gmra.mxu0 %v4158
    %v4358 = vpop.f32.mrf.mxu0
    %v4359 = vadd.f32 0.0, %v4358
    %v4360 = vpop.f32.mrf.mxu0
    %4361 = vmatprep.mubr.f32.mxu0 0.0
    %4362 = vmatmul.mubr.f32.gmra.mxu0 %v4159
    %v4363 = vpop.f32.mrf.mxu0
    %v4364 = vadd.f32 0.0, %v4363
    %v4365 = vpop.f32.mrf.mxu0
    %4366 = vdwg.mxu0
    %v4367 = vadd.f32 %v4110, %v4244
    %v4368 = vadd.f32 %v4111, %v4249
    %v4369 = vadd.f32 %v4112, %v4254
    %v4370 = vadd.f32 %v4113, %v4259
    %v4371 = vadd.f32 %v4114, %v4264
    %v4372 = vadd.f32 %v4115, %v4269
    %v4373 = vadd.f32 %v4116, %v4274
    %v4374 = vadd.f32 %v4117, %v4279
    %v4375 = vadd.f32 %v4118, %v4284
    %v4376 = vadd.f32 %v4119, %v4289
    %v4377 = vadd.f32 %v4120, %v4294
    %v4378 = vadd.f32 %v4121, %v4299
    %v4379 = vadd.f32 %v4122, %v4304
    %v4380 = vadd.f32 %v4123, %v4309
    %v4381 = vadd.f32 %v4124, %v4314
    %v4382 = vadd.f32 %v4125, %v4319
    %v4383 = vadd.f32 %v4126, %v4324
    %v4384 = vadd.f32 %v4127, %v4329
    %v4385 = vadd.f32 %v4128, %v4334
    %v4386 = vadd.f32 %v4129, %v4339
    %v4387 = vadd.f32 %v4130, %v4344
    %v4388 = vadd.f32 %v4131, %v4349
    %v4389 = vadd.f32 %v4132, %v4354
    %v4390 = vadd.f32 %v4133, %v4359
    %v4391 = vadd.f32 %v4134, %v4364
    %v4392 = vld [vmem:[#allocation3 + $0x11] sm:$0xff]
    %v4393 = vld [vmem:[#allocation3 + $0x19] sm:$0xff]
    %v4394 = vld [vmem:[#allocation3 + $0x21] sm:$0xff]
    %v4395 = vld [vmem:[#allocation3 + $0x29] sm:$0xff]
    %v4396 = vld [vmem:[#allocation3 + $0x31] sm:$0xff]
    %v4397 = vld [vmem:[#allocation3 + $0x39] sm:$0xff]
    %v4398 = vld [vmem:[#allocation3 + $0x41] sm:$0xff]
    %v4399 = vld [vmem:[#allocation3 + $0x49] sm:$0xff]
    %v4400 = vld [vmem:[#allocation3 + $0x51] sm:$0xff]
    %v4401 = vld [vmem:[#allocation3 + $0x59] sm:$0xff]
    %v4402 = vld [vmem:[#allocation3 + $0x61] sm:$0xff]
    %v4403 = vld [vmem:[#allocation3 + $0x69] sm:$0xff]
    %v4404 = vld [vmem:[#allocation3 + $0x71] sm:$0xff]
    %v4405 = vld [vmem:[#allocation3 + $0x79] sm:$0xff]
    %v4406 = vld [vmem:[#allocation3 + $0x81] sm:$0xff]
    %v4407 = vld [vmem:[#allocation3 + $0x89] sm:$0xff]
    %v4408 = vld [vmem:[#allocation3 + $0x91] sm:$0xff]
    %v4409 = vld [vmem:[#allocation3 + $0x99] sm:$0xff]
    %v4410 = vld [vmem:[#allocation3 + $0xa1] sm:$0xff]
    %v4411 = vld [vmem:[#allocation3 + $0xa9] sm:$0xff]
    %v4412 = vld [vmem:[#allocation3 + $0xb1] sm:$0xff]
    %v4413 = vld [vmem:[#allocation3 + $0xb9] sm:$0xff]
    %v4414 = vld [vmem:[#allocation3 + $0xc1] sm:$0xff]
    %v4415 = vld [vmem:[#allocation3 + $0xc9] sm:$0xff]
    %v4416 = vld [vmem:[#allocation3 + $0xd1] sm:$0xff]
    %s4417 = scalar_lea.vmem %s5, 640
    %v4418 = vld [vmem:[%s4417] sm:$0xff]
    %v4419 = vld [vmem:[%s4417 + $0x8] sm:$0xff]
    %v4420 = vld [vmem:[%s4417 + $0x10] sm:$0xff]
    %v4421 = vld [vmem:[%s4417 + $0x18] sm:$0xff]
    %v4422 = vld [vmem:[%s4417 + $0x20] sm:$0xff]
    %v4423 = vld [vmem:[%s4417 + $0x28] sm:$0xff]
    %v4424 = vld [vmem:[%s4417 + $0x30] sm:$0xff]
    %v4425 = vld [vmem:[%s4417 + $0x38] sm:$0xff]
    %v4426 = vld [vmem:[%s4417 + $0x40] sm:$0xff]
    %v4427 = vld [vmem:[%s4417 + $0x48] sm:$0xff]
    %v4428 = vld [vmem:[%s4417 + $0x50] sm:$0xff]
    %v4429 = vld [vmem:[%s4417 + $0x58] sm:$0xff]
    %v4430 = vld [vmem:[%s4417 + $0x60] sm:$0xff]
    %v4431 = vld [vmem:[%s4417 + $0x68] sm:$0xff]
    %v4432 = vld [vmem:[%s4417 + $0x70] sm:$0xff]
    %v4433 = vld [vmem:[%s4417 + $0x78] sm:$0xff]
    %4434 = vmatprep.subr.mxu0 0.0
    %4435 = vmatpush1.msra.mxu0 %v4433
    %4436 = vmatprep.subr.mxu0 0.0
    %4437 = vmatpush1.msra.mxu0 %v4432
    %4438 = vmatprep.subr.mxu0 0.0
    %4439 = vmatpush1.msra.mxu0 %v4431
    %4440 = vmatprep.subr.mxu0 0.0
    %4441 = vmatpush1.msra.mxu0 %v4430
    %4442 = vmatprep.subr.mxu0 0.0
    %4443 = vmatpush1.msra.mxu0 %v4429
    %4444 = vmatprep.subr.mxu0 0.0
    %4445 = vmatpush1.msra.mxu0 %v4428
    %4446 = vmatprep.subr.mxu0 0.0
    %4447 = vmatpush1.msra.mxu0 %v4427
    %4448 = vmatprep.subr.mxu0 0.0
    %4449 = vmatpush1.msra.mxu0 %v4426
    %4450 = vmatprep.subr.mxu0 0.0
    %4451 = vmatpush1.msra.mxu0 %v4425
    %4452 = vmatprep.subr.mxu0 0.0
    %4453 = vmatpush1.msra.mxu0 %v4424
    %4454 = vmatprep.subr.mxu0 0.0
    %4455 = vmatpush1.msra.mxu0 %v4423
    %4456 = vmatprep.subr.mxu0 0.0
    %4457 = vmatpush1.msra.mxu0 %v4422
    %4458 = vmatprep.subr.mxu0 0.0
    %4459 = vmatpush1.msra.mxu0 %v4421
    %4460 = vmatprep.subr.mxu0 0.0
    %4461 = vmatpush1.msra.mxu0 %v4420
    %4462 = vmatprep.subr.mxu0 0.0
    %4463 = vmatpush1.msra.mxu0 %v4419
    %4464 = vmatprep.subr.mxu0 0.0
    %4465 = vmatpush1.msra.mxu0 %v4418
    %4466 = vmatprep.subr.mxu0 0.0
    %4467 = vmatpush2.msra.mxu0 0.0
    %4468 = vmatprep.subr.mxu0 0.0
    %4469 = vmatpush2.msra.mxu0 0.0
    %4470 = vmatprep.subr.mxu0 0.0
    %4471 = vmatpush2.msra.mxu0 0.0
    %4472 = vmatprep.subr.mxu0 0.0
    %4473 = vmatpush2.msra.mxu0 0.0
    %4474 = vmatprep.subr.mxu0 0.0
    %4475 = vmatpush2.msra.mxu0 0.0
    %4476 = vmatprep.subr.mxu0 0.0
    %4477 = vmatpush2.msra.mxu0 0.0
    %4478 = vmatprep.subr.mxu0 0.0
    %4479 = vmatpush2.msra.mxu0 0.0
    %4480 = vmatprep.subr.mxu0 0.0
    %4481 = vmatpush2.msra.mxu0 0.0
    %4482 = vmatprep.subr.mxu0 0.0
    %4483 = vmatpush2.msra.mxu0 0.0
    %4484 = vmatprep.subr.mxu0 0.0
    %4485 = vmatpush2.msra.mxu0 0.0
    %4486 = vmatprep.subr.mxu0 0.0
    %4487 = vmatpush2.msra.mxu0 0.0
    %4488 = vmatprep.subr.mxu0 0.0
    %4489 = vmatpush2.msra.mxu0 0.0
    %4490 = vmatprep.subr.mxu0 0.0
    %4491 = vmatpush2.msra.mxu0 0.0
    %4492 = vmatprep.subr.mxu0 0.0
    %4493 = vmatpush2.msra.mxu0 0.0
    %4494 = vmatprep.subr.mxu0 0.0
    %4495 = vmatpush2.msra.mxu0 0.0
    %4496 = vmatprep.subr.mxu0 0.0
    %4497 = vmatpush2.msra.mxu0 0.0
    %4498 = vmatprep.mubr.f32.mxu0 0.0
    %4499 = vmatmul.mubr.f32.gmra.mxu0 %v4392
    %v4500 = vpop.f32.mrf.mxu0
    %v4501 = vadd.f32 0.0, %v4500
    %v4502 = vpop.f32.mrf.mxu0
    %4503 = vmatprep.mubr.f32.mxu0 0.0
    %4504 = vmatmul.mubr.f32.gmra.mxu0 %v4393
    %v4505 = vpop.f32.mrf.mxu0
    %v4506 = vadd.f32 0.0, %v4505
    %v4507 = vpop.f32.mrf.mxu0
    %4508 = vmatprep.mubr.f32.mxu0 0.0
    %4509 = vmatmul.mubr.f32.gmra.mxu0 %v4394
    %v4510 = vpop.f32.mrf.mxu0
    %v4511 = vadd.f32 0.0, %v4510
    %v4512 = vpop.f32.mrf.mxu0
    %4513 = vmatprep.mubr.f32.mxu0 0.0
    %4514 = vmatmul.mubr.f32.gmra.mxu0 %v4395
    %v4515 = vpop.f32.mrf.mxu0
    %v4516 = vadd.f32 0.0, %v4515
    %v4517 = vpop.f32.mrf.mxu0
    %4518 = vmatprep.mubr.f32.mxu0 0.0
    %4519 = vmatmul.mubr.f32.gmra.mxu0 %v4396
    %v4520 = vpop.f32.mrf.mxu0
    %v4521 = vadd.f32 0.0, %v4520
    %v4522 = vpop.f32.mrf.mxu0
    %4523 = vmatprep.mubr.f32.mxu0 0.0
    %4524 = vmatmul.mubr.f32.gmra.mxu0 %v4397
    %v4525 = vpop.f32.mrf.mxu0
    %v4526 = vadd.f32 0.0, %v4525
    %v4527 = vpop.f32.mrf.mxu0
    %4528 = vmatprep.mubr.f32.mxu0 0.0
    %4529 = vmatmul.mubr.f32.gmra.mxu0 %v4398
    %v4530 = vpop.f32.mrf.mxu0
    %v4531 = vadd.f32 0.0, %v4530
    %v4532 = vpop.f32.mrf.mxu0
    %4533 = vmatprep.mubr.f32.mxu0 0.0
    %4534 = vmatmul.mubr.f32.gmra.mxu0 %v4399
    %v4535 = vpop.f32.mrf.mxu0
    %v4536 = vadd.f32 0.0, %v4535
    %v4537 = vpop.f32.mrf.mxu0
    %4538 = vmatprep.mubr.f32.mxu0 0.0
    %4539 = vmatmul.mubr.f32.gmra.mxu0 %v4400
    %v4540 = vpop.f32.mrf.mxu0
    %v4541 = vadd.f32 0.0, %v4540
    %v4542 = vpop.f32.mrf.mxu0
    %4543 = vmatprep.mubr.f32.mxu0 0.0
    %4544 = vmatmul.mubr.f32.gmra.mxu0 %v4401
    %v4545 = vpop.f32.mrf.mxu0
    %v4546 = vadd.f32 0.0, %v4545
    %v4547 = vpop.f32.mrf.mxu0
    %4548 = vmatprep.mubr.f32.mxu0 0.0
    %4549 = vmatmul.mubr.f32.gmra.mxu0 %v4402
    %v4550 = vpop.f32.mrf.mxu0
    %v4551 = vadd.f32 0.0, %v4550
    %v4552 = vpop.f32.mrf.mxu0
    %4553 = vmatprep.mubr.f32.mxu0 0.0
    %4554 = vmatmul.mubr.f32.gmra.mxu0 %v4403
    %v4555 = vpop.f32.mrf.mxu0
    %v4556 = vadd.f32 0.0, %v4555
    %v4557 = vpop.f32.mrf.mxu0
    %4558 = vmatprep.mubr.f32.mxu0 0.0
    %4559 = vmatmul.mubr.f32.gmra.mxu0 %v4404
    %v4560 = vpop.f32.mrf.mxu0
    %v4561 = vadd.f32 0.0, %v4560
    %v4562 = vpop.f32.mrf.mxu0
    %4563 = vmatprep.mubr.f32.mxu0 0.0
    %4564 = vmatmul.mubr.f32.gmra.mxu0 %v4405
    %v4565 = vpop.f32.mrf.mxu0
    %v4566 = vadd.f32 0.0, %v4565
    %v4567 = vpop.f32.mrf.mxu0
    %4568 = vmatprep.mubr.f32.mxu0 0.0
    %4569 = vmatmul.mubr.f32.gmra.mxu0 %v4406
    %v4570 = vpop.f32.mrf.mxu0
    %v4571 = vadd.f32 0.0, %v4570
    %v4572 = vpop.f32.mrf.mxu0
    %4573 = vmatprep.mubr.f32.mxu0 0.0
    %4574 = vmatmul.mubr.f32.gmra.mxu0 %v4407
    %v4575 = vpop.f32.mrf.mxu0
    %v4576 = vadd.f32 0.0, %v4575
    %v4577 = vpop.f32.mrf.mxu0
    %4578 = vmatprep.mubr.f32.mxu0 0.0
    %4579 = vmatmul.mubr.f32.gmra.mxu0 %v4408
    %v4580 = vpop.f32.mrf.mxu0
    %v4581 = vadd.f32 0.0, %v4580
    %v4582 = vpop.f32.mrf.mxu0
    %4583 = vmatprep.mubr.f32.mxu0 0.0
    %4584 = vmatmul.mubr.f32.gmra.mxu0 %v4409
    %v4585 = vpop.f32.mrf.mxu0
    %v4586 = vadd.f32 0.0, %v4585
    %v4587 = vpop.f32.mrf.mxu0
    %4588 = vmatprep.mubr.f32.mxu0 0.0
    %4589 = vmatmul.mubr.f32.gmra.mxu0 %v4410
    %v4590 = vpop.f32.mrf.mxu0
    %v4591 = vadd.f32 0.0, %v4590
    %v4592 = vpop.f32.mrf.mxu0
    %4593 = vmatprep.mubr.f32.mxu0 0.0
    %4594 = vmatmul.mubr.f32.gmra.mxu0 %v4411
    %v4595 = vpop.f32.mrf.mxu0
    %v4596 = vadd.f32 0.0, %v4595
    %v4597 = vpop.f32.mrf.mxu0
    %4598 = vmatprep.mubr.f32.mxu0 0.0
    %4599 = vmatmul.mubr.f32.gmra.mxu0 %v4412
    %v4600 = vpop.f32.mrf.mxu0
    %v4601 = vadd.f32 0.0, %v4600
    %v4602 = vpop.f32.mrf.mxu0
    %4603 = vmatprep.mubr.f32.mxu0 0.0
    %4604 = vmatmul.mubr.f32.gmra.mxu0 %v4413
    %v4605 = vpop.f32.mrf.mxu0
    %v4606 = vadd.f32 0.0, %v4605
    %v4607 = vpop.f32.mrf.mxu0
    %4608 = vmatprep.mubr.f32.mxu0 0.0
    %4609 = vmatmul.mubr.f32.gmra.mxu0 %v4414
    %v4610 = vpop.f32.mrf.mxu0
    %v4611 = vadd.f32 0.0, %v4610
    %v4612 = vpop.f32.mrf.mxu0
    %4613 = vmatprep.mubr.f32.mxu0 0.0
    %4614 = vmatmul.mubr.f32.gmra.mxu0 %v4415
    %v4615 = vpop.f32.mrf.mxu0
    %v4616 = vadd.f32 0.0, %v4615
    %v4617 = vpop.f32.mrf.mxu0
    %4618 = vmatprep.mubr.f32.mxu0 0.0
    %4619 = vmatmul.mubr.f32.gmra.mxu0 %v4416
    %v4620 = vpop.f32.mrf.mxu0
    %v4621 = vadd.f32 0.0, %v4620
    %v4622 = vpop.f32.mrf.mxu0
    %4623 = vdwg.mxu0
    %v4624 = vadd.f32 %v4367, %v4501
    %v4625 = vadd.f32 %v4368, %v4506
    %v4626 = vadd.f32 %v4369, %v4511
    %v4627 = vadd.f32 %v4370, %v4516
    %v4628 = vadd.f32 %v4371, %v4521
    %v4629 = vadd.f32 %v4372, %v4526
    %v4630 = vadd.f32 %v4373, %v4531
    %v4631 = vadd.f32 %v4374, %v4536
    %v4632 = vadd.f32 %v4375, %v4541
    %v4633 = vadd.f32 %v4376, %v4546
    %v4634 = vadd.f32 %v4377, %v4551
    %v4635 = vadd.f32 %v4378, %v4556
    %v4636 = vadd.f32 %v4379, %v4561
    %v4637 = vadd.f32 %v4380, %v4566
    %v4638 = vadd.f32 %v4381, %v4571
    %v4639 = vadd.f32 %v4382, %v4576
    %v4640 = vadd.f32 %v4383, %v4581
    %v4641 = vadd.f32 %v4384, %v4586
    %v4642 = vadd.f32 %v4385, %v4591
    %v4643 = vadd.f32 %v4386, %v4596
    %v4644 = vadd.f32 %v4387, %v4601
    %v4645 = vadd.f32 %v4388, %v4606
    %v4646 = vadd.f32 %v4389, %v4611
    %v4647 = vadd.f32 %v4390, %v4616
    %v4648 = vadd.f32 %v4391, %v4621
    %v4649 = vld [vmem:[#allocation3 + $0x19] sm:$0xff]
    %v4650 = vld [vmem:[#allocation3 + $0x21] sm:$0xff]
    %v4651 = vld [vmem:[#allocation3 + $0x29] sm:$0xff]
    %v4652 = vld [vmem:[#allocation3 + $0x31] sm:$0xff]
    %v4653 = vld [vmem:[#allocation3 + $0x39] sm:$0xff]
    %v4654 = vld [vmem:[#allocation3 + $0x41] sm:$0xff]
    %v4655 = vld [vmem:[#allocation3 + $0x49] sm:$0xff]
    %v4656 = vld [vmem:[#allocation3 + $0x51] sm:$0xff]
    %v4657 = vld [vmem:[#allocation3 + $0x59] sm:$0xff]
    %v4658 = vld [vmem:[#allocation3 + $0x61] sm:$0xff]
    %v4659 = vld [vmem:[#allocation3 + $0x69] sm:$0xff]
    %v4660 = vld [vmem:[#allocation3 + $0x71] sm:$0xff]
    %v4661 = vld [vmem:[#allocation3 + $0x79] sm:$0xff]
    %v4662 = vld [vmem:[#allocation3 + $0x81] sm:$0xff]
    %v4663 = vld [vmem:[#allocation3 + $0x89] sm:$0xff]
    %v4664 = vld [vmem:[#allocation3 + $0x91] sm:$0xff]
    %v4665 = vld [vmem:[#allocation3 + $0x99] sm:$0xff]
    %v4666 = vld [vmem:[#allocation3 + $0xa1] sm:$0xff]
    %v4667 = vld [vmem:[#allocation3 + $0xa9] sm:$0xff]
    %v4668 = vld [vmem:[#allocation3 + $0xb1] sm:$0xff]
    %v4669 = vld [vmem:[#allocation3 + $0xb9] sm:$0xff]
    %v4670 = vld [vmem:[#allocation3 + $0xc1] sm:$0xff]
    %v4671 = vld [vmem:[#allocation3 + $0xc9] sm:$0xff]
    %v4672 = vld [vmem:[#allocation3 + $0xd1] sm:$0xff]
    %v4673 = vld [vmem:[#allocation3 + $0xd9] sm:$0xff]
    %s4674 = scalar_lea.vmem %s5, 768
    %v4675 = vld [vmem:[%s4674] sm:$0xff]
    %v4676 = vld [vmem:[%s4674 + $0x8] sm:$0xff]
    %v4677 = vld [vmem:[%s4674 + $0x10] sm:$0xff]
    %v4678 = vld [vmem:[%s4674 + $0x18] sm:$0xff]
    %v4679 = vld [vmem:[%s4674 + $0x20] sm:$0xff]
    %v4680 = vld [vmem:[%s4674 + $0x28] sm:$0xff]
    %v4681 = vld [vmem:[%s4674 + $0x30] sm:$0xff]
    %v4682 = vld [vmem:[%s4674 + $0x38] sm:$0xff]
    %v4683 = vld [vmem:[%s4674 + $0x40] sm:$0xff]
    %v4684 = vld [vmem:[%s4674 + $0x48] sm:$0xff]
    %v4685 = vld [vmem:[%s4674 + $0x50] sm:$0xff]
    %v4686 = vld [vmem:[%s4674 + $0x58] sm:$0xff]
    %v4687 = vld [vmem:[%s4674 + $0x60] sm:$0xff]
    %v4688 = vld [vmem:[%s4674 + $0x68] sm:$0xff]
    %v4689 = vld [vmem:[%s4674 + $0x70] sm:$0xff]
    %v4690 = vld [vmem:[%s4674 + $0x78] sm:$0xff]
    %4691 = vmatprep.subr.mxu0 0.0
    %4692 = vmatpush1.msra.mxu0 %v4690
    %4693 = vmatprep.subr.mxu0 0.0
    %4694 = vmatpush1.msra.mxu0 %v4689
    %4695 = vmatprep.subr.mxu0 0.0
    %4696 = vmatpush1.msra.mxu0 %v4688
    %4697 = vmatprep.subr.mxu0 0.0
    %4698 = vmatpush1.msra.mxu0 %v4687
    %4699 = vmatprep.subr.mxu0 0.0
    %4700 = vmatpush1.msra.mxu0 %v4686
    %4701 = vmatprep.subr.mxu0 0.0
    %4702 = vmatpush1.msra.mxu0 %v4685
    %4703 = vmatprep.subr.mxu0 0.0
    %4704 = vmatpush1.msra.mxu0 %v4684
    %4705 = vmatprep.subr.mxu0 0.0
    %4706 = vmatpush1.msra.mxu0 %v4683
    %4707 = vmatprep.subr.mxu0 0.0
    %4708 = vmatpush1.msra.mxu0 %v4682
    %4709 = vmatprep.subr.mxu0 0.0
    %4710 = vmatpush1.msra.mxu0 %v4681
    %4711 = vmatprep.subr.mxu0 0.0
    %4712 = vmatpush1.msra.mxu0 %v4680
    %4713 = vmatprep.subr.mxu0 0.0
    %4714 = vmatpush1.msra.mxu0 %v4679
    %4715 = vmatprep.subr.mxu0 0.0
    %4716 = vmatpush1.msra.mxu0 %v4678
    %4717 = vmatprep.subr.mxu0 0.0
    %4718 = vmatpush1.msra.mxu0 %v4677
    %4719 = vmatprep.subr.mxu0 0.0
    %4720 = vmatpush1.msra.mxu0 %v4676
    %4721 = vmatprep.subr.mxu0 0.0
    %4722 = vmatpush1.msra.mxu0 %v4675
    %4723 = vmatprep.subr.mxu0 0.0
    %4724 = vmatpush2.msra.mxu0 0.0
    %4725 = vmatprep.subr.mxu0 0.0
    %4726 = vmatpush2.msra.mxu0 0.0
    %4727 = vmatprep.subr.mxu0 0.0
    %4728 = vmatpush2.msra.mxu0 0.0
    %4729 = vmatprep.subr.mxu0 0.0
    %4730 = vmatpush2.msra.mxu0 0.0
    %4731 = vmatprep.subr.mxu0 0.0
    %4732 = vmatpush2.msra.mxu0 0.0
    %4733 = vmatprep.subr.mxu0 0.0
    %4734 = vmatpush2.msra.mxu0 0.0
    %4735 = vmatprep.subr.mxu0 0.0
    %4736 = vmatpush2.msra.mxu0 0.0
    %4737 = vmatprep.subr.mxu0 0.0
    %4738 = vmatpush2.msra.mxu0 0.0
    %4739 = vmatprep.subr.mxu0 0.0
    %4740 = vmatpush2.msra.mxu0 0.0
    %4741 = vmatprep.subr.mxu0 0.0
    %4742 = vmatpush2.msra.mxu0 0.0
    %4743 = vmatprep.subr.mxu0 0.0
    %4744 = vmatpush2.msra.mxu0 0.0
    %4745 = vmatprep.subr.mxu0 0.0
    %4746 = vmatpush2.msra.mxu0 0.0
    %4747 = vmatprep.subr.mxu0 0.0
    %4748 = vmatpush2.msra.mxu0 0.0
    %4749 = vmatprep.subr.mxu0 0.0
    %4750 = vmatpush2.msra.mxu0 0.0
    %4751 = vmatprep.subr.mxu0 0.0
    %4752 = vmatpush2.msra.mxu0 0.0
    %4753 = vmatprep.subr.mxu0 0.0
    %4754 = vmatpush2.msra.mxu0 0.0
    %4755 = vmatprep.mubr.f32.mxu0 0.0
    %4756 = vmatmul.mubr.f32.gmra.mxu0 %v4649
    %v4757 = vpop.f32.mrf.mxu0
    %v4758 = vadd.f32 0.0, %v4757
    %v4759 = vpop.f32.mrf.mxu0
    %4760 = vmatprep.mubr.f32.mxu0 0.0
    %4761 = vmatmul.mubr.f32.gmra.mxu0 %v4650
    %v4762 = vpop.f32.mrf.mxu0
    %v4763 = vadd.f32 0.0, %v4762
    %v4764 = vpop.f32.mrf.mxu0
    %4765 = vmatprep.mubr.f32.mxu0 0.0
    %4766 = vmatmul.mubr.f32.gmra.mxu0 %v4651
    %v4767 = vpop.f32.mrf.mxu0
    %v4768 = vadd.f32 0.0, %v4767
    %v4769 = vpop.f32.mrf.mxu0
    %4770 = vmatprep.mubr.f32.mxu0 0.0
    %4771 = vmatmul.mubr.f32.gmra.mxu0 %v4652
    %v4772 = vpop.f32.mrf.mxu0
    %v4773 = vadd.f32 0.0, %v4772
    %v4774 = vpop.f32.mrf.mxu0
    %4775 = vmatprep.mubr.f32.mxu0 0.0
    %4776 = vmatmul.mubr.f32.gmra.mxu0 %v4653
    %v4777 = vpop.f32.mrf.mxu0
    %v4778 = vadd.f32 0.0, %v4777
    %v4779 = vpop.f32.mrf.mxu0
    %4780 = vmatprep.mubr.f32.mxu0 0.0
    %4781 = vmatmul.mubr.f32.gmra.mxu0 %v4654
    %v4782 = vpop.f32.mrf.mxu0
    %v4783 = vadd.f32 0.0, %v4782
    %v4784 = vpop.f32.mrf.mxu0
    %4785 = vmatprep.mubr.f32.mxu0 0.0
    %4786 = vmatmul.mubr.f32.gmra.mxu0 %v4655
    %v4787 = vpop.f32.mrf.mxu0
    %v4788 = vadd.f32 0.0, %v4787
    %v4789 = vpop.f32.mrf.mxu0
    %4790 = vmatprep.mubr.f32.mxu0 0.0
    %4791 = vmatmul.mubr.f32.gmra.mxu0 %v4656
    %v4792 = vpop.f32.mrf.mxu0
    %v4793 = vadd.f32 0.0, %v4792
    %v4794 = vpop.f32.mrf.mxu0
    %4795 = vmatprep.mubr.f32.mxu0 0.0
    %4796 = vmatmul.mubr.f32.gmra.mxu0 %v4657
    %v4797 = vpop.f32.mrf.mxu0
    %v4798 = vadd.f32 0.0, %v4797
    %v4799 = vpop.f32.mrf.mxu0
    %4800 = vmatprep.mubr.f32.mxu0 0.0
    %4801 = vmatmul.mubr.f32.gmra.mxu0 %v4658
    %v4802 = vpop.f32.mrf.mxu0
    %v4803 = vadd.f32 0.0, %v4802
    %v4804 = vpop.f32.mrf.mxu0
    %4805 = vmatprep.mubr.f32.mxu0 0.0
    %4806 = vmatmul.mubr.f32.gmra.mxu0 %v4659
    %v4807 = vpop.f32.mrf.mxu0
    %v4808 = vadd.f32 0.0, %v4807
    %v4809 = vpop.f32.mrf.mxu0
    %4810 = vmatprep.mubr.f32.mxu0 0.0
    %4811 = vmatmul.mubr.f32.gmra.mxu0 %v4660
    %v4812 = vpop.f32.mrf.mxu0
    %v4813 = vadd.f32 0.0, %v4812
    %v4814 = vpop.f32.mrf.mxu0
    %4815 = vmatprep.mubr.f32.mxu0 0.0
    %4816 = vmatmul.mubr.f32.gmra.mxu0 %v4661
    %v4817 = vpop.f32.mrf.mxu0
    %v4818 = vadd.f32 0.0, %v4817
    %v4819 = vpop.f32.mrf.mxu0
    %4820 = vmatprep.mubr.f32.mxu0 0.0
    %4821 = vmatmul.mubr.f32.gmra.mxu0 %v4662
    %v4822 = vpop.f32.mrf.mxu0
    %v4823 = vadd.f32 0.0, %v4822
    %v4824 = vpop.f32.mrf.mxu0
    %4825 = vmatprep.mubr.f32.mxu0 0.0
    %4826 = vmatmul.mubr.f32.gmra.mxu0 %v4663
    %v4827 = vpop.f32.mrf.mxu0
    %v4828 = vadd.f32 0.0, %v4827
    %v4829 = vpop.f32.mrf.mxu0
    %4830 = vmatprep.mubr.f32.mxu0 0.0
    %4831 = vmatmul.mubr.f32.gmra.mxu0 %v4664
    %v4832 = vpop.f32.mrf.mxu0
    %v4833 = vadd.f32 0.0, %v4832
    %v4834 = vpop.f32.mrf.mxu0
    %4835 = vmatprep.mubr.f32.mxu0 0.0
    %4836 = vmatmul.mubr.f32.gmra.mxu0 %v4665
    %v4837 = vpop.f32.mrf.mxu0
    %v4838 = vadd.f32 0.0, %v4837
    %v4839 = vpop.f32.mrf.mxu0
    %4840 = vmatprep.mubr.f32.mxu0 0.0
    %4841 = vmatmul.mubr.f32.gmra.mxu0 %v4666
    %v4842 = vpop.f32.mrf.mxu0
    %v4843 = vadd.f32 0.0, %v4842
    %v4844 = vpop.f32.mrf.mxu0
    %4845 = vmatprep.mubr.f32.mxu0 0.0
    %4846 = vmatmul.mubr.f32.gmra.mxu0 %v4667
    %v4847 = vpop.f32.mrf.mxu0
    %v4848 = vadd.f32 0.0, %v4847
    %v4849 = vpop.f32.mrf.mxu0
    %4850 = vmatprep.mubr.f32.mxu0 0.0
    %4851 = vmatmul.mubr.f32.gmra.mxu0 %v4668
    %v4852 = vpop.f32.mrf.mxu0
    %v4853 = vadd.f32 0.0, %v4852
    %v4854 = vpop.f32.mrf.mxu0
    %4855 = vmatprep.mubr.f32.mxu0 0.0
    %4856 = vmatmul.mubr.f32.gmra.mxu0 %v4669
    %v4857 = vpop.f32.mrf.mxu0
    %v4858 = vadd.f32 0.0, %v4857
    %v4859 = vpop.f32.mrf.mxu0
    %4860 = vmatprep.mubr.f32.mxu0 0.0
    %4861 = vmatmul.mubr.f32.gmra.mxu0 %v4670
    %v4862 = vpop.f32.mrf.mxu0
    %v4863 = vadd.f32 0.0, %v4862
    %v4864 = vpop.f32.mrf.mxu0
    %4865 = vmatprep.mubr.f32.mxu0 0.0
    %4866 = vmatmul.mubr.f32.gmra.mxu0 %v4671
    %v4867 = vpop.f32.mrf.mxu0
    %v4868 = vadd.f32 0.0, %v4867
    %v4869 = vpop.f32.mrf.mxu0
    %4870 = vmatprep.mubr.f32.mxu0 0.0
    %4871 = vmatmul.mubr.f32.gmra.mxu0 %v4672
    %v4872 = vpop.f32.mrf.mxu0
    %v4873 = vadd.f32 0.0, %v4872
    %v4874 = vpop.f32.mrf.mxu0
    %4875 = vmatprep.mubr.f32.mxu0 0.0
    %4876 = vmatmul.mubr.f32.gmra.mxu0 %v4673
    %v4877 = vpop.f32.mrf.mxu0
    %v4878 = vadd.f32 0.0, %v4877
    %v4879 = vpop.f32.mrf.mxu0
    %4880 = vdwg.mxu0
    %v4881 = vadd.f32 %v4624, %v4758
    %v4882 = vadd.f32 %v4625, %v4763
    %v4883 = vadd.f32 %v4626, %v4768
    %v4884 = vadd.f32 %v4627, %v4773
    %v4885 = vadd.f32 %v4628, %v4778
    %v4886 = vadd.f32 %v4629, %v4783
    %v4887 = vadd.f32 %v4630, %v4788
    %v4888 = vadd.f32 %v4631, %v4793
    %v4889 = vadd.f32 %v4632, %v4798
    %v4890 = vadd.f32 %v4633, %v4803
    %v4891 = vadd.f32 %v4634, %v4808
    %v4892 = vadd.f32 %v4635, %v4813
    %v4893 = vadd.f32 %v4636, %v4818
    %v4894 = vadd.f32 %v4637, %v4823
    %v4895 = vadd.f32 %v4638, %v4828
    %v4896 = vadd.f32 %v4639, %v4833
    %v4897 = vadd.f32 %v4640, %v4838
    %v4898 = vadd.f32 %v4641, %v4843
    %v4899 = vadd.f32 %v4642, %v4848
    %v4900 = vadd.f32 %v4643, %v4853
    %v4901 = vadd.f32 %v4644, %v4858
    %v4902 = vadd.f32 %v4645, %v4863
    %v4903 = vadd.f32 %v4646, %v4868
    %v4904 = vadd.f32 %v4647, %v4873
    %v4905 = vadd.f32 %v4648, %v4878
    %v4906 = vld [vmem:[#allocation3 + $0x1a] sm:$0xff]
    %v4907 = vld [vmem:[#allocation3 + $0x22] sm:$0xff]
    %v4908 = vld [vmem:[#allocation3 + $0x2a] sm:$0xff]
    %v4909 = vld [vmem:[#allocation3 + $0x32] sm:$0xff]
    %v4910 = vld [vmem:[#allocation3 + $0x3a] sm:$0xff]
    %v4911 = vld [vmem:[#allocation3 + $0x42] sm:$0xff]
    %v4912 = vld [vmem:[#allocation3 + $0x4a] sm:$0xff]
    %v4913 = vld [vmem:[#allocation3 + $0x52] sm:$0xff]
    %v4914 = vld [vmem:[#allocation3 + $0x5a] sm:$0xff]
    %v4915 = vld [vmem:[#allocation3 + $0x62] sm:$0xff]
    %v4916 = vld [vmem:[#allocation3 + $0x6a] sm:$0xff]
    %v4917 = vld [vmem:[#allocation3 + $0x72] sm:$0xff]
    %v4918 = vld [vmem:[#allocation3 + $0x7a] sm:$0xff]
    %v4919 = vld [vmem:[#allocation3 + $0x82] sm:$0xff]
    %v4920 = vld [vmem:[#allocation3 + $0x8a] sm:$0xff]
    %v4921 = vld [vmem:[#allocation3 + $0x92] sm:$0xff]
    %v4922 = vld [vmem:[#allocation3 + $0x9a] sm:$0xff]
    %v4923 = vld [vmem:[#allocation3 + $0xa2] sm:$0xff]
    %v4924 = vld [vmem:[#allocation3 + $0xaa] sm:$0xff]
    %v4925 = vld [vmem:[#allocation3 + $0xb2] sm:$0xff]
    %v4926 = vld [vmem:[#allocation3 + $0xba] sm:$0xff]
    %v4927 = vld [vmem:[#allocation3 + $0xc2] sm:$0xff]
    %v4928 = vld [vmem:[#allocation3 + $0xca] sm:$0xff]
    %v4929 = vld [vmem:[#allocation3 + $0xd2] sm:$0xff]
    %v4930 = vld [vmem:[#allocation3 + $0xda] sm:$0xff]
    %s4931 = scalar_lea.vmem %s5, 896
    %v4932 = vld [vmem:[%s4931] sm:$0xff]
    %v4933 = vld [vmem:[%s4931 + $0x8] sm:$0xff]
    %v4934 = vld [vmem:[%s4931 + $0x10] sm:$0xff]
    %v4935 = vld [vmem:[%s4931 + $0x18] sm:$0xff]
    %v4936 = vld [vmem:[%s4931 + $0x20] sm:$0xff]
    %v4937 = vld [vmem:[%s4931 + $0x28] sm:$0xff]
    %v4938 = vld [vmem:[%s4931 + $0x30] sm:$0xff]
    %v4939 = vld [vmem:[%s4931 + $0x38] sm:$0xff]
    %v4940 = vld [vmem:[%s4931 + $0x40] sm:$0xff]
    %v4941 = vld [vmem:[%s4931 + $0x48] sm:$0xff]
    %v4942 = vld [vmem:[%s4931 + $0x50] sm:$0xff]
    %v4943 = vld [vmem:[%s4931 + $0x58] sm:$0xff]
    %v4944 = vld [vmem:[%s4931 + $0x60] sm:$0xff]
    %v4945 = vld [vmem:[%s4931 + $0x68] sm:$0xff]
    %v4946 = vld [vmem:[%s4931 + $0x70] sm:$0xff]
    %v4947 = vld [vmem:[%s4931 + $0x78] sm:$0xff]
    %4948 = vmatprep.subr.mxu0 0.0
    %4949 = vmatpush1.msra.mxu0 %v4947
    %4950 = vmatprep.subr.mxu0 0.0
    %4951 = vmatpush1.msra.mxu0 %v4946
    %4952 = vmatprep.subr.mxu0 0.0
    %4953 = vmatpush1.msra.mxu0 %v4945
    %4954 = vmatprep.subr.mxu0 0.0
    %4955 = vmatpush1.msra.mxu0 %v4944
    %4956 = vmatprep.subr.mxu0 0.0
    %4957 = vmatpush1.msra.mxu0 %v4943
    %4958 = vmatprep.subr.mxu0 0.0
    %4959 = vmatpush1.msra.mxu0 %v4942
    %4960 = vmatprep.subr.mxu0 0.0
    %4961 = vmatpush1.msra.mxu0 %v4941
    %4962 = vmatprep.subr.mxu0 0.0
    %4963 = vmatpush1.msra.mxu0 %v4940
    %4964 = vmatprep.subr.mxu0 0.0
    %4965 = vmatpush1.msra.mxu0 %v4939
    %4966 = vmatprep.subr.mxu0 0.0
    %4967 = vmatpush1.msra.mxu0 %v4938
    %4968 = vmatprep.subr.mxu0 0.0
    %4969 = vmatpush1.msra.mxu0 %v4937
    %4970 = vmatprep.subr.mxu0 0.0
    %4971 = vmatpush1.msra.mxu0 %v4936
    %4972 = vmatprep.subr.mxu0 0.0
    %4973 = vmatpush1.msra.mxu0 %v4935
    %4974 = vmatprep.subr.mxu0 0.0
    %4975 = vmatpush1.msra.mxu0 %v4934
    %4976 = vmatprep.subr.mxu0 0.0
    %4977 = vmatpush1.msra.mxu0 %v4933
    %4978 = vmatprep.subr.mxu0 0.0
    %4979 = vmatpush1.msra.mxu0 %v4932
    %4980 = vmatprep.subr.mxu0 0.0
    %4981 = vmatpush2.msra.mxu0 0.0
    %4982 = vmatprep.subr.mxu0 0.0
    %4983 = vmatpush2.msra.mxu0 0.0
    %4984 = vmatprep.subr.mxu0 0.0
    %4985 = vmatpush2.msra.mxu0 0.0
    %4986 = vmatprep.subr.mxu0 0.0
    %4987 = vmatpush2.msra.mxu0 0.0
    %4988 = vmatprep.subr.mxu0 0.0
    %4989 = vmatpush2.msra.mxu0 0.0
    %4990 = vmatprep.subr.mxu0 0.0
    %4991 = vmatpush2.msra.mxu0 0.0
    %4992 = vmatprep.subr.mxu0 0.0
    %4993 = vmatpush2.msra.mxu0 0.0
    %4994 = vmatprep.subr.mxu0 0.0
    %4995 = vmatpush2.msra.mxu0 0.0
    %4996 = vmatprep.subr.mxu0 0.0
    %4997 = vmatpush2.msra.mxu0 0.0
    %4998 = vmatprep.subr.mxu0 0.0
    %4999 = vmatpush2.msra.mxu0 0.0
    %5000 = vmatprep.subr.mxu0 0.0
    %5001 = vmatpush2.msra.mxu0 0.0
    %5002 = vmatprep.subr.mxu0 0.0
    %5003 = vmatpush2.msra.mxu0 0.0
    %5004 = vmatprep.subr.mxu0 0.0
    %5005 = vmatpush2.msra.mxu0 0.0
    %5006 = vmatprep.subr.mxu0 0.0
    %5007 = vmatpush2.msra.mxu0 0.0
    %5008 = vmatprep.subr.mxu0 0.0
    %5009 = vmatpush2.msra.mxu0 0.0
    %5010 = vmatprep.subr.mxu0 0.0
    %5011 = vmatpush2.msra.mxu0 0.0
    %5012 = vmatprep.mubr.f32.mxu0 0.0
    %5013 = vmatmul.mubr.f32.gmra.mxu0 %v4906
    %v5014 = vpop.f32.mrf.mxu0
    %v5015 = vadd.f32 0.0, %v5014
    %v5016 = vpop.f32.mrf.mxu0
    %5017 = vmatprep.mubr.f32.mxu0 0.0
    %5018 = vmatmul.mubr.f32.gmra.mxu0 %v4907
    %v5019 = vpop.f32.mrf.mxu0
    %v5020 = vadd.f32 0.0, %v5019
    %v5021 = vpop.f32.mrf.mxu0
    %5022 = vmatprep.mubr.f32.mxu0 0.0
    %5023 = vmatmul.mubr.f32.gmra.mxu0 %v4908
    %v5024 = vpop.f32.mrf.mxu0
    %v5025 = vadd.f32 0.0, %v5024
    %v5026 = vpop.f32.mrf.mxu0
    %5027 = vmatprep.mubr.f32.mxu0 0.0
    %5028 = vmatmul.mubr.f32.gmra.mxu0 %v4909
    %v5029 = vpop.f32.mrf.mxu0
    %v5030 = vadd.f32 0.0, %v5029
    %v5031 = vpop.f32.mrf.mxu0
    %5032 = vmatprep.mubr.f32.mxu0 0.0
    %5033 = vmatmul.mubr.f32.gmra.mxu0 %v4910
    %v5034 = vpop.f32.mrf.mxu0
    %v5035 = vadd.f32 0.0, %v5034
    %v5036 = vpop.f32.mrf.mxu0
    %5037 = vmatprep.mubr.f32.mxu0 0.0
    %5038 = vmatmul.mubr.f32.gmra.mxu0 %v4911
    %v5039 = vpop.f32.mrf.mxu0
    %v5040 = vadd.f32 0.0, %v5039
    %v5041 = vpop.f32.mrf.mxu0
    %5042 = vmatprep.mubr.f32.mxu0 0.0
    %5043 = vmatmul.mubr.f32.gmra.mxu0 %v4912
    %v5044 = vpop.f32.mrf.mxu0
    %v5045 = vadd.f32 0.0, %v5044
    %v5046 = vpop.f32.mrf.mxu0
    %5047 = vmatprep.mubr.f32.mxu0 0.0
    %5048 = vmatmul.mubr.f32.gmra.mxu0 %v4913
    %v5049 = vpop.f32.mrf.mxu0
    %v5050 = vadd.f32 0.0, %v5049
    %v5051 = vpop.f32.mrf.mxu0
    %5052 = vmatprep.mubr.f32.mxu0 0.0
    %5053 = vmatmul.mubr.f32.gmra.mxu0 %v4914
    %v5054 = vpop.f32.mrf.mxu0
    %v5055 = vadd.f32 0.0, %v5054
    %v5056 = vpop.f32.mrf.mxu0
    %5057 = vmatprep.mubr.f32.mxu0 0.0
    %5058 = vmatmul.mubr.f32.gmra.mxu0 %v4915
    %v5059 = vpop.f32.mrf.mxu0
    %v5060 = vadd.f32 0.0, %v5059
    %v5061 = vpop.f32.mrf.mxu0
    %5062 = vmatprep.mubr.f32.mxu0 0.0
    %5063 = vmatmul.mubr.f32.gmra.mxu0 %v4916
    %v5064 = vpop.f32.mrf.mxu0
    %v5065 = vadd.f32 0.0, %v5064
    %v5066 = vpop.f32.mrf.mxu0
    %5067 = vmatprep.mubr.f32.mxu0 0.0
    %5068 = vmatmul.mubr.f32.gmra.mxu0 %v4917
    %v5069 = vpop.f32.mrf.mxu0
    %v5070 = vadd.f32 0.0, %v5069
    %v5071 = vpop.f32.mrf.mxu0
    %5072 = vmatprep.mubr.f32.mxu0 0.0
    %5073 = vmatmul.mubr.f32.gmra.mxu0 %v4918
    %v5074 = vpop.f32.mrf.mxu0
    %v5075 = vadd.f32 0.0, %v5074
    %v5076 = vpop.f32.mrf.mxu0
    %5077 = vmatprep.mubr.f32.mxu0 0.0
    %5078 = vmatmul.mubr.f32.gmra.mxu0 %v4919
    %v5079 = vpop.f32.mrf.mxu0
    %v5080 = vadd.f32 0.0, %v5079
    %v5081 = vpop.f32.mrf.mxu0
    %5082 = vmatprep.mubr.f32.mxu0 0.0
    %5083 = vmatmul.mubr.f32.gmra.mxu0 %v4920
    %v5084 = vpop.f32.mrf.mxu0
    %v5085 = vadd.f32 0.0, %v5084
    %v5086 = vpop.f32.mrf.mxu0
    %5087 = vmatprep.mubr.f32.mxu0 0.0
    %5088 = vmatmul.mubr.f32.gmra.mxu0 %v4921
    %v5089 = vpop.f32.mrf.mxu0
    %v5090 = vadd.f32 0.0, %v5089
    %v5091 = vpop.f32.mrf.mxu0
    %5092 = vmatprep.mubr.f32.mxu0 0.0
    %5093 = vmatmul.mubr.f32.gmra.mxu0 %v4922
    %v5094 = vpop.f32.mrf.mxu0
    %v5095 = vadd.f32 0.0, %v5094
    %v5096 = vpop.f32.mrf.mxu0
    %5097 = vmatprep.mubr.f32.mxu0 0.0
    %5098 = vmatmul.mubr.f32.gmra.mxu0 %v4923
    %v5099 = vpop.f32.mrf.mxu0
    %v5100 = vadd.f32 0.0, %v5099
    %v5101 = vpop.f32.mrf.mxu0
    %5102 = vmatprep.mubr.f32.mxu0 0.0
    %5103 = vmatmul.mubr.f32.gmra.mxu0 %v4924
    %v5104 = vpop.f32.mrf.mxu0
    %v5105 = vadd.f32 0.0, %v5104
    %v5106 = vpop.f32.mrf.mxu0
    %5107 = vmatprep.mubr.f32.mxu0 0.0
    %5108 = vmatmul.mubr.f32.gmra.mxu0 %v4925
    %v5109 = vpop.f32.mrf.mxu0
    %v5110 = vadd.f32 0.0, %v5109
    %v5111 = vpop.f32.mrf.mxu0
    %5112 = vmatprep.mubr.f32.mxu0 0.0
    %5113 = vmatmul.mubr.f32.gmra.mxu0 %v4926
    %v5114 = vpop.f32.mrf.mxu0
    %v5115 = vadd.f32 0.0, %v5114
    %v5116 = vpop.f32.mrf.mxu0
    %5117 = vmatprep.mubr.f32.mxu0 0.0
    %5118 = vmatmul.mubr.f32.gmra.mxu0 %v4927
    %v5119 = vpop.f32.mrf.mxu0
    %v5120 = vadd.f32 0.0, %v5119
    %v5121 = vpop.f32.mrf.mxu0
    %5122 = vmatprep.mubr.f32.mxu0 0.0
    %5123 = vmatmul.mubr.f32.gmra.mxu0 %v4928
    %v5124 = vpop.f32.mrf.mxu0
    %v5125 = vadd.f32 0.0, %v5124
    %v5126 = vpop.f32.mrf.mxu0
    %5127 = vmatprep.mubr.f32.mxu0 0.0
    %5128 = vmatmul.mubr.f32.gmra.mxu0 %v4929
    %v5129 = vpop.f32.mrf.mxu0
    %v5130 = vadd.f32 0.0, %v5129
    %v5131 = vpop.f32.mrf.mxu0
    %5132 = vmatprep.mubr.f32.mxu0 0.0
    %5133 = vmatmul.mubr.f32.gmra.mxu0 %v4930
    %v5134 = vpop.f32.mrf.mxu0
    %v5135 = vadd.f32 0.0, %v5134
    %v5136 = vpop.f32.mrf.mxu0
    %5137 = vdwg.mxu0
    %v5138 = vadd.f32 %v4881, %v5015
    %v5139 = vadd.f32 %v4882, %v5020
    %v5140 = vadd.f32 %v4883, %v5025
    %v5141 = vadd.f32 %v4884, %v5030
    %v5142 = vadd.f32 %v4885, %v5035
    %v5143 = vadd.f32 %v4886, %v5040
    %v5144 = vadd.f32 %v4887, %v5045
    %v5145 = vadd.f32 %v4888, %v5050
    %v5146 = vadd.f32 %v4889, %v5055
    %v5147 = vadd.f32 %v4890, %v5060
    %v5148 = vadd.f32 %v4891, %v5065
    %v5149 = vadd.f32 %v4892, %v5070
    %v5150 = vadd.f32 %v4893, %v5075
    %v5151 = vadd.f32 %v4894, %v5080
    %v5152 = vadd.f32 %v4895, %v5085
    %v5153 = vadd.f32 %v4896, %v5090
    %v5154 = vadd.f32 %v4897, %v5095
    %v5155 = vadd.f32 %v4898, %v5100
    %v5156 = vadd.f32 %v4899, %v5105
    %v5157 = vadd.f32 %v4900, %v5110
    %v5158 = vadd.f32 %v4901, %v5115
    %v5159 = vadd.f32 %v4902, %v5120
    %v5160 = vadd.f32 %v4903, %v5125
    %v5161 = vadd.f32 %v4904, %v5130
    %v5162 = vadd.f32 %v4905, %v5135
    %v5163 = vld [vmem:[#allocation3 + $0x1b] sm:$0xff]
    %v5164 = vld [vmem:[#allocation3 + $0x23] sm:$0xff]
    %v5165 = vld [vmem:[#allocation3 + $0x2b] sm:$0xff]
    %v5166 = vld [vmem:[#allocation3 + $0x33] sm:$0xff]
    %v5167 = vld [vmem:[#allocation3 + $0x3b] sm:$0xff]
    %v5168 = vld [vmem:[#allocation3 + $0x43] sm:$0xff]
    %v5169 = vld [vmem:[#allocation3 + $0x4b] sm:$0xff]
    %v5170 = vld [vmem:[#allocation3 + $0x53] sm:$0xff]
    %v5171 = vld [vmem:[#allocation3 + $0x5b] sm:$0xff]
    %v5172 = vld [vmem:[#allocation3 + $0x63] sm:$0xff]
    %v5173 = vld [vmem:[#allocation3 + $0x6b] sm:$0xff]
    %v5174 = vld [vmem:[#allocation3 + $0x73] sm:$0xff]
    %v5175 = vld [vmem:[#allocation3 + $0x7b] sm:$0xff]
    %v5176 = vld [vmem:[#allocation3 + $0x83] sm:$0xff]
    %v5177 = vld [vmem:[#allocation3 + $0x8b] sm:$0xff]
    %v5178 = vld [vmem:[#allocation3 + $0x93] sm:$0xff]
    %v5179 = vld [vmem:[#allocation3 + $0x9b] sm:$0xff]
    %v5180 = vld [vmem:[#allocation3 + $0xa3] sm:$0xff]
    %v5181 = vld [vmem:[#allocation3 + $0xab] sm:$0xff]
    %v5182 = vld [vmem:[#allocation3 + $0xb3] sm:$0xff]
    %v5183 = vld [vmem:[#allocation3 + $0xbb] sm:$0xff]
    %v5184 = vld [vmem:[#allocation3 + $0xc3] sm:$0xff]
    %v5185 = vld [vmem:[#allocation3 + $0xcb] sm:$0xff]
    %v5186 = vld [vmem:[#allocation3 + $0xd3] sm:$0xff]
    %v5187 = vld [vmem:[#allocation3 + $0xdb] sm:$0xff]
    %s5188 = scalar_lea.vmem %s5, 1024
    %v5189 = vld [vmem:[%s5188] sm:$0xff]
    %v5190 = vld [vmem:[%s5188 + $0x8] sm:$0xff]
    %v5191 = vld [vmem:[%s5188 + $0x10] sm:$0xff]
    %v5192 = vld [vmem:[%s5188 + $0x18] sm:$0xff]
    %v5193 = vld [vmem:[%s5188 + $0x20] sm:$0xff]
    %v5194 = vld [vmem:[%s5188 + $0x28] sm:$0xff]
    %v5195 = vld [vmem:[%s5188 + $0x30] sm:$0xff]
    %v5196 = vld [vmem:[%s5188 + $0x38] sm:$0xff]
    %v5197 = vld [vmem:[%s5188 + $0x40] sm:$0xff]
    %v5198 = vld [vmem:[%s5188 + $0x48] sm:$0xff]
    %v5199 = vld [vmem:[%s5188 + $0x50] sm:$0xff]
    %v5200 = vld [vmem:[%s5188 + $0x58] sm:$0xff]
    %v5201 = vld [vmem:[%s5188 + $0x60] sm:$0xff]
    %v5202 = vld [vmem:[%s5188 + $0x68] sm:$0xff]
    %v5203 = vld [vmem:[%s5188 + $0x70] sm:$0xff]
    %v5204 = vld [vmem:[%s5188 + $0x78] sm:$0xff]
    %5205 = vmatprep.subr.mxu0 0.0
    %5206 = vmatpush1.msra.mxu0 %v5204
    %5207 = vmatprep.subr.mxu0 0.0
    %5208 = vmatpush1.msra.mxu0 %v5203
    %5209 = vmatprep.subr.mxu0 0.0
    %5210 = vmatpush1.msra.mxu0 %v5202
    %5211 = vmatprep.subr.mxu0 0.0
    %5212 = vmatpush1.msra.mxu0 %v5201
    %5213 = vmatprep.subr.mxu0 0.0
    %5214 = vmatpush1.msra.mxu0 %v5200
    %5215 = vmatprep.subr.mxu0 0.0
    %5216 = vmatpush1.msra.mxu0 %v5199
    %5217 = vmatprep.subr.mxu0 0.0
    %5218 = vmatpush1.msra.mxu0 %v5198
    %5219 = vmatprep.subr.mxu0 0.0
    %5220 = vmatpush1.msra.mxu0 %v5197
    %5221 = vmatprep.subr.mxu0 0.0
    %5222 = vmatpush1.msra.mxu0 %v5196
    %5223 = vmatprep.subr.mxu0 0.0
    %5224 = vmatpush1.msra.mxu0 %v5195
    %5225 = vmatprep.subr.mxu0 0.0
    %5226 = vmatpush1.msra.mxu0 %v5194
    %5227 = vmatprep.subr.mxu0 0.0
    %5228 = vmatpush1.msra.mxu0 %v5193
    %5229 = vmatprep.subr.mxu0 0.0
    %5230 = vmatpush1.msra.mxu0 %v5192
    %5231 = vmatprep.subr.mxu0 0.0
    %5232 = vmatpush1.msra.mxu0 %v5191
    %5233 = vmatprep.subr.mxu0 0.0
    %5234 = vmatpush1.msra.mxu0 %v5190
    %5235 = vmatprep.subr.mxu0 0.0
    %5236 = vmatpush1.msra.mxu0 %v5189
    %5237 = vmatprep.subr.mxu0 0.0
    %5238 = vmatpush2.msra.mxu0 0.0
    %5239 = vmatprep.subr.mxu0 0.0
    %5240 = vmatpush2.msra.mxu0 0.0
    %5241 = vmatprep.subr.mxu0 0.0
    %5242 = vmatpush2.msra.mxu0 0.0
    %5243 = vmatprep.subr.mxu0 0.0
    %5244 = vmatpush2.msra.mxu0 0.0
    %5245 = vmatprep.subr.mxu0 0.0
    %5246 = vmatpush2.msra.mxu0 0.0
    %5247 = vmatprep.subr.mxu0 0.0
    %5248 = vmatpush2.msra.mxu0 0.0
    %5249 = vmatprep.subr.mxu0 0.0
    %5250 = vmatpush2.msra.mxu0 0.0
    %5251 = vmatprep.subr.mxu0 0.0
    %5252 = vmatpush2.msra.mxu0 0.0
    %5253 = vmatprep.subr.mxu0 0.0
    %5254 = vmatpush2.msra.mxu0 0.0
    %5255 = vmatprep.subr.mxu0 0.0
    %5256 = vmatpush2.msra.mxu0 0.0
    %5257 = vmatprep.subr.mxu0 0.0
    %5258 = vmatpush2.msra.mxu0 0.0
    %5259 = vmatprep.subr.mxu0 0.0
    %5260 = vmatpush2.msra.mxu0 0.0
    %5261 = vmatprep.subr.mxu0 0.0
    %5262 = vmatpush2.msra.mxu0 0.0
    %5263 = vmatprep.subr.mxu0 0.0
    %5264 = vmatpush2.msra.mxu0 0.0
    %5265 = vmatprep.subr.mxu0 0.0
    %5266 = vmatpush2.msra.mxu0 0.0
    %5267 = vmatprep.subr.mxu0 0.0
    %5268 = vmatpush2.msra.mxu0 0.0
    %5269 = vmatprep.mubr.f32.mxu0 0.0
    %5270 = vmatmul.mubr.f32.gmra.mxu0 %v5163
    %v5271 = vpop.f32.mrf.mxu0
    %v5272 = vadd.f32 0.0, %v5271
    %v5273 = vpop.f32.mrf.mxu0
    %5274 = vmatprep.mubr.f32.mxu0 0.0
    %5275 = vmatmul.mubr.f32.gmra.mxu0 %v5164
    %v5276 = vpop.f32.mrf.mxu0
    %v5277 = vadd.f32 0.0, %v5276
    %v5278 = vpop.f32.mrf.mxu0
    %5279 = vmatprep.mubr.f32.mxu0 0.0
    %5280 = vmatmul.mubr.f32.gmra.mxu0 %v5165
    %v5281 = vpop.f32.mrf.mxu0
    %v5282 = vadd.f32 0.0, %v5281
    %v5283 = vpop.f32.mrf.mxu0
    %5284 = vmatprep.mubr.f32.mxu0 0.0
    %5285 = vmatmul.mubr.f32.gmra.mxu0 %v5166
    %v5286 = vpop.f32.mrf.mxu0
    %v5287 = vadd.f32 0.0, %v5286
    %v5288 = vpop.f32.mrf.mxu0
    %5289 = vmatprep.mubr.f32.mxu0 0.0
    %5290 = vmatmul.mubr.f32.gmra.mxu0 %v5167
    %v5291 = vpop.f32.mrf.mxu0
    %v5292 = vadd.f32 0.0, %v5291
    %v5293 = vpop.f32.mrf.mxu0
    %5294 = vmatprep.mubr.f32.mxu0 0.0
    %5295 = vmatmul.mubr.f32.gmra.mxu0 %v5168
    %v5296 = vpop.f32.mrf.mxu0
    %v5297 = vadd.f32 0.0, %v5296
    %v5298 = vpop.f32.mrf.mxu0
    %5299 = vmatprep.mubr.f32.mxu0 0.0
    %5300 = vmatmul.mubr.f32.gmra.mxu0 %v5169
    %v5301 = vpop.f32.mrf.mxu0
    %v5302 = vadd.f32 0.0, %v5301
    %v5303 = vpop.f32.mrf.mxu0
    %5304 = vmatprep.mubr.f32.mxu0 0.0
    %5305 = vmatmul.mubr.f32.gmra.mxu0 %v5170
    %v5306 = vpop.f32.mrf.mxu0
    %v5307 = vadd.f32 0.0, %v5306
    %v5308 = vpop.f32.mrf.mxu0
    %5309 = vmatprep.mubr.f32.mxu0 0.0
    %5310 = vmatmul.mubr.f32.gmra.mxu0 %v5171
    %v5311 = vpop.f32.mrf.mxu0
    %v5312 = vadd.f32 0.0, %v5311
    %v5313 = vpop.f32.mrf.mxu0
    %5314 = vmatprep.mubr.f32.mxu0 0.0
    %5315 = vmatmul.mubr.f32.gmra.mxu0 %v5172
    %v5316 = vpop.f32.mrf.mxu0
    %v5317 = vadd.f32 0.0, %v5316
    %v5318 = vpop.f32.mrf.mxu0
    %5319 = vmatprep.mubr.f32.mxu0 0.0
    %5320 = vmatmul.mubr.f32.gmra.mxu0 %v5173
    %v5321 = vpop.f32.mrf.mxu0
    %v5322 = vadd.f32 0.0, %v5321
    %v5323 = vpop.f32.mrf.mxu0
    %5324 = vmatprep.mubr.f32.mxu0 0.0
    %5325 = vmatmul.mubr.f32.gmra.mxu0 %v5174
    %v5326 = vpop.f32.mrf.mxu0
    %v5327 = vadd.f32 0.0, %v5326
    %v5328 = vpop.f32.mrf.mxu0
    %5329 = vmatprep.mubr.f32.mxu0 0.0
    %5330 = vmatmul.mubr.f32.gmra.mxu0 %v5175
    %v5331 = vpop.f32.mrf.mxu0
    %v5332 = vadd.f32 0.0, %v5331
    %v5333 = vpop.f32.mrf.mxu0
    %5334 = vmatprep.mubr.f32.mxu0 0.0
    %5335 = vmatmul.mubr.f32.gmra.mxu0 %v5176
    %v5336 = vpop.f32.mrf.mxu0
    %v5337 = vadd.f32 0.0, %v5336
    %v5338 = vpop.f32.mrf.mxu0
    %5339 = vmatprep.mubr.f32.mxu0 0.0
    %5340 = vmatmul.mubr.f32.gmra.mxu0 %v5177
    %v5341 = vpop.f32.mrf.mxu0
    %v5342 = vadd.f32 0.0, %v5341
    %v5343 = vpop.f32.mrf.mxu0
    %5344 = vmatprep.mubr.f32.mxu0 0.0
    %5345 = vmatmul.mubr.f32.gmra.mxu0 %v5178
    %v5346 = vpop.f32.mrf.mxu0
    %v5347 = vadd.f32 0.0, %v5346
    %v5348 = vpop.f32.mrf.mxu0
    %5349 = vmatprep.mubr.f32.mxu0 0.0
    %5350 = vmatmul.mubr.f32.gmra.mxu0 %v5179
    %v5351 = vpop.f32.mrf.mxu0
    %v5352 = vadd.f32 0.0, %v5351
    %v5353 = vpop.f32.mrf.mxu0
    %5354 = vmatprep.mubr.f32.mxu0 0.0
    %5355 = vmatmul.mubr.f32.gmra.mxu0 %v5180
    %v5356 = vpop.f32.mrf.mxu0
    %v5357 = vadd.f32 0.0, %v5356
    %v5358 = vpop.f32.mrf.mxu0
    %5359 = vmatprep.mubr.f32.mxu0 0.0
    %5360 = vmatmul.mubr.f32.gmra.mxu0 %v5181
    %v5361 = vpop.f32.mrf.mxu0
    %v5362 = vadd.f32 0.0, %v5361
    %v5363 = vpop.f32.mrf.mxu0
    %5364 = vmatprep.mubr.f32.mxu0 0.0
    %5365 = vmatmul.mubr.f32.gmra.mxu0 %v5182
    %v5366 = vpop.f32.mrf.mxu0
    %v5367 = vadd.f32 0.0, %v5366
    %v5368 = vpop.f32.mrf.mxu0
    %5369 = vmatprep.mubr.f32.mxu0 0.0
    %5370 = vmatmul.mubr.f32.gmra.mxu0 %v5183
    %v5371 = vpop.f32.mrf.mxu0
    %v5372 = vadd.f32 0.0, %v5371
    %v5373 = vpop.f32.mrf.mxu0
    %5374 = vmatprep.mubr.f32.mxu0 0.0
    %5375 = vmatmul.mubr.f32.gmra.mxu0 %v5184
    %v5376 = vpop.f32.mrf.mxu0
    %v5377 = vadd.f32 0.0, %v5376
    %v5378 = vpop.f32.mrf.mxu0
    %5379 = vmatprep.mubr.f32.mxu0 0.0
    %5380 = vmatmul.mubr.f32.gmra.mxu0 %v5185
    %v5381 = vpop.f32.mrf.mxu0
    %v5382 = vadd.f32 0.0, %v5381
    %v5383 = vpop.f32.mrf.mxu0
    %5384 = vmatprep.mubr.f32.mxu0 0.0
    %5385 = vmatmul.mubr.f32.gmra.mxu0 %v5186
    %v5386 = vpop.f32.mrf.mxu0
    %v5387 = vadd.f32 0.0, %v5386
    %v5388 = vpop.f32.mrf.mxu0
    %5389 = vmatprep.mubr.f32.mxu0 0.0
    %5390 = vmatmul.mubr.f32.gmra.mxu0 %v5187
    %v5391 = vpop.f32.mrf.mxu0
    %v5392 = vadd.f32 0.0, %v5391
    %v5393 = vpop.f32.mrf.mxu0
    %5394 = vdwg.mxu0
    %v5395 = vadd.f32 %v5138, %v5272
    %v5396 = vadd.f32 %v5139, %v5277
    %v5397 = vadd.f32 %v5140, %v5282
    %v5398 = vadd.f32 %v5141, %v5287
    %v5399 = vadd.f32 %v5142, %v5292
    %v5400 = vadd.f32 %v5143, %v5297
    %v5401 = vadd.f32 %v5144, %v5302
    %v5402 = vadd.f32 %v5145, %v5307
    %v5403 = vadd.f32 %v5146, %v5312
    %v5404 = vadd.f32 %v5147, %v5317
    %v5405 = vadd.f32 %v5148, %v5322
    %v5406 = vadd.f32 %v5149, %v5327
    %v5407 = vadd.f32 %v5150, %v5332
    %v5408 = vadd.f32 %v5151, %v5337
    %v5409 = vadd.f32 %v5152, %v5342
    %v5410 = vadd.f32 %v5153, %v5347
    %v5411 = vadd.f32 %v5154, %v5352
    %v5412 = vadd.f32 %v5155, %v5357
    %v5413 = vadd.f32 %v5156, %v5362
    %v5414 = vadd.f32 %v5157, %v5367
    %v5415 = vadd.f32 %v5158, %v5372
    %v5416 = vadd.f32 %v5159, %v5377
    %v5417 = vadd.f32 %v5160, %v5382
    %v5418 = vadd.f32 %v5161, %v5387
    %v5419 = vadd.f32 %v5162, %v5392
    %v5420 = vld [vmem:[%s6] sm:$0x1]
    %v5422 = vlaneseq
    %v5423 = vshrl.u32 %v5422, 7
    %v5424 = vsub.s32 0, %v5423
    %v5425 = vrot.slane %v5420, %v5424
    %v5427 = vadd.f32 %v5395, %v5425
    %v5428 = vadd.f32 %v5396, %v5425
    %v5429 = vadd.f32 %v5397, %v5425
    %v5430 = vadd.f32 %v5398, %v5425
    %v5431 = vadd.f32 %v5399, %v5425
    %v5432 = vadd.f32 %v5400, %v5425
    %v5433 = vadd.f32 %v5401, %v5425
    %v5434 = vadd.f32 %v5402, %v5425
    %v5435 = vadd.f32 %v5403, %v5425
    %v5436 = vadd.f32 %v5404, %v5425
    %v5437 = vadd.f32 %v5405, %v5425
    %v5438 = vadd.f32 %v5406, %v5425
    %v5439 = vadd.f32 %v5407, %v5425
    %v5440 = vadd.f32 %v5408, %v5425
    %v5441 = vadd.f32 %v5409, %v5425
    %v5442 = vadd.f32 %v5410, %v5425
    %v5443 = vadd.f32 %v5411, %v5425
    %v5444 = vadd.f32 %v5412, %v5425
    %v5445 = vadd.f32 %v5413, %v5425
    %v5446 = vadd.f32 %v5414, %v5425
    %v5447 = vadd.f32 %v5415, %v5425
    %v5448 = vadd.f32 %v5416, %v5425
    %v5449 = vadd.f32 %v5417, %v5425
    %v5450 = vadd.f32 %v5418, %v5425
    %v5451 = vadd.f32 %v5419, %v5425
    %v5452 = vsub.f32 0.0, %v5427
    %v5453 = vsub.f32 0.0, %v5428
    %v5454 = vsub.f32 0.0, %v5429
    %v5455 = vsub.f32 0.0, %v5430
    %v5456 = vsub.f32 0.0, %v5431
    %v5457 = vsub.f32 0.0, %v5432
    %v5458 = vsub.f32 0.0, %v5433
    %v5459 = vsub.f32 0.0, %v5434
    %v5460 = vsub.f32 0.0, %v5435
    %v5461 = vsub.f32 0.0, %v5436
    %v5462 = vsub.f32 0.0, %v5437
    %v5463 = vsub.f32 0.0, %v5438
    %v5464 = vsub.f32 0.0, %v5439
    %v5465 = vsub.f32 0.0, %v5440
    %v5466 = vsub.f32 0.0, %v5441
    %v5467 = vsub.f32 0.0, %v5442
    %v5468 = vsub.f32 0.0, %v5443
    %v5469 = vsub.f32 0.0, %v5444
    %v5470 = vsub.f32 0.0, %v5445
    %v5471 = vsub.f32 0.0, %v5446
    %v5472 = vsub.f32 0.0, %v5447
    %v5473 = vsub.f32 0.0, %v5448
    %v5474 = vsub.f32 0.0, %v5449
    %v5475 = vsub.f32 0.0, %v5450
    %v5476 = vsub.f32 0.0, %v5451
    %v5477 = vmul.f32 %v5452, 1.442695
    %v5478 = vpow.pop %v5477
    %v5479 = vmul.f32 %v5453, 1.442695
    %v5480 = vpow.pop %v5479
    %v5481 = vmul.f32 %v5454, 1.442695
    %v5482 = vpow.pop %v5481
    %v5483 = vmul.f32 %v5455, 1.442695
    %v5484 = vpow.pop %v5483
    %v5485 = vmul.f32 %v5456, 1.442695
    %v5486 = vpow.pop %v5485
    %v5487 = vmul.f32 %v5457, 1.442695
    %v5488 = vpow.pop %v5487
    %v5489 = vmul.f32 %v5458, 1.442695
    %v5490 = vpow.pop %v5489
    %v5491 = vmul.f32 %v5459, 1.442695
    %v5492 = vpow.pop %v5491
    %v5493 = vmul.f32 %v5460, 1.442695
    %v5494 = vpow.pop %v5493
    %v5495 = vmul.f32 %v5461, 1.442695
    %v5496 = vpow.pop %v5495
    %v5497 = vmul.f32 %v5462, 1.442695
    %v5498 = vpow.pop %v5497
    %v5499 = vmul.f32 %v5463, 1.442695
    %v5500 = vpow.pop %v5499
    %v5501 = vmul.f32 %v5464, 1.442695
    %v5502 = vpow.pop %v5501
    %v5503 = vmul.f32 %v5465, 1.442695
    %v5504 = vpow.pop %v5503
    %v5505 = vmul.f32 %v5466, 1.442695
    %v5506 = vpow.pop %v5505
    %v5507 = vmul.f32 %v5467, 1.442695
    %v5508 = vpow.pop %v5507
    %v5509 = vmul.f32 %v5468, 1.442695
    %v5510 = vpow.pop %v5509
    %v5511 = vmul.f32 %v5469, 1.442695
    %v5512 = vpow.pop %v5511
    %v5513 = vmul.f32 %v5470, 1.442695
    %v5514 = vpow.pop %v5513
    %v5515 = vmul.f32 %v5471, 1.442695
    %v5516 = vpow.pop %v5515
    %v5517 = vmul.f32 %v5472, 1.442695
    %v5518 = vpow.pop %v5517
    %v5519 = vmul.f32 %v5473, 1.442695
    %v5520 = vpow.pop %v5519
    %v5521 = vmul.f32 %v5474, 1.442695
    %v5522 = vpow.pop %v5521
    %v5523 = vmul.f32 %v5475, 1.442695
    %v5524 = vpow.pop %v5523
    %v5525 = vmul.f32 %v5476, 1.442695
    %v5526 = vpow.pop %v5525
    %v5527 = vadd.f32 %v5478, 1.0
    %v5528 = vadd.f32 %v5480, 1.0
    %v5529 = vadd.f32 %v5482, 1.0
    %v5530 = vadd.f32 %v5484, 1.0
    %v5531 = vadd.f32 %v5486, 1.0
    %v5532 = vadd.f32 %v5488, 1.0
    %v5533 = vadd.f32 %v5490, 1.0
    %v5534 = vadd.f32 %v5492, 1.0
    %v5535 = vadd.f32 %v5494, 1.0
    %v5536 = vadd.f32 %v5496, 1.0
    %v5537 = vadd.f32 %v5498, 1.0
    %v5538 = vadd.f32 %v5500, 1.0
    %v5539 = vadd.f32 %v5502, 1.0
    %v5540 = vadd.f32 %v5504, 1.0
    %v5541 = vadd.f32 %v5506, 1.0
    %v5542 = vadd.f32 %v5508, 1.0
    %v5543 = vadd.f32 %v5510, 1.0
    %v5544 = vadd.f32 %v5512, 1.0
    %v5545 = vadd.f32 %v5514, 1.0
    %v5546 = vadd.f32 %v5516, 1.0
    %v5547 = vadd.f32 %v5518, 1.0
    %v5548 = vadd.f32 %v5520, 1.0
    %v5549 = vadd.f32 %v5522, 1.0
    %v5550 = vadd.f32 %v5524, 1.0
    %v5551 = vadd.f32 %v5526, 1.0
    %v5552 = vrcp.pop %v5527
    %v5553 = vrcp.pop %v5528
    %v5554 = vrcp.pop %v5529
    %v5555 = vrcp.pop %v5530
    %v5556 = vrcp.pop %v5531
    %v5557 = vrcp.pop %v5532
    %v5558 = vrcp.pop %v5533
    %v5559 = vrcp.pop %v5534
    %v5560 = vrcp.pop %v5535
    %v5561 = vrcp.pop %v5536
    %v5562 = vrcp.pop %v5537
    %v5563 = vrcp.pop %v5538
    %v5564 = vrcp.pop %v5539
    %v5565 = vrcp.pop %v5540
    %v5566 = vrcp.pop %v5541
    %v5567 = vrcp.pop %v5542
    %v5568 = vrcp.pop %v5543
    %v5569 = vrcp.pop %v5544
    %v5570 = vrcp.pop %v5545
    %v5571 = vrcp.pop %v5546
    %v5572 = vrcp.pop %v5547
    %v5573 = vrcp.pop %v5548
    %v5574 = vrcp.pop %v5549
    %v5575 = vrcp.pop %v5550
    %v5576 = vrcp.pop %v5551
    %v5577 = vmul.f32 %v5427, %v5552
    %v5578 = vmul.f32 %v5428, %v5553
    %v5579 = vmul.f32 %v5429, %v5554
    %v5580 = vmul.f32 %v5430, %v5555
    %v5581 = vmul.f32 %v5431, %v5556
    %v5582 = vmul.f32 %v5432, %v5557
    %v5583 = vmul.f32 %v5433, %v5558
    %v5584 = vmul.f32 %v5434, %v5559
    %v5585 = vmul.f32 %v5435, %v5560
    %v5586 = vmul.f32 %v5436, %v5561
    %v5587 = vmul.f32 %v5437, %v5562
    %v5588 = vmul.f32 %v5438, %v5563
    %v5589 = vmul.f32 %v5439, %v5564
    %v5590 = vmul.f32 %v5440, %v5565
    %v5591 = vmul.f32 %v5441, %v5566
    %v5592 = vmul.f32 %v5442, %v5567
    %v5593 = vmul.f32 %v5443, %v5568
    %v5594 = vmul.f32 %v5444, %v5569
    %v5595 = vmul.f32 %v5445, %v5570
    %v5596 = vmul.f32 %v5446, %v5571
    %v5597 = vmul.f32 %v5447, %v5572
    %v5598 = vmul.f32 %v5448, %v5573
    %v5599 = vmul.f32 %v5449, %v5574
    %v5600 = vmul.f32 %v5450, %v5575
    %v5601 = vmul.f32 %v5451, %v5576
    %v5602 = vsel %vm589, %v5577, 0.0
    %v5603 = vsel %vm590, %v5578, 0.0
    %v5604 = vsel %vm591, %v5579, 0.0
    %v5605 = vsel %vm592, %v5580, 0.0
    %v5606 = vsel %vm593, %v5581, 0.0
    %v5607 = vsel %vm594, %v5582, 0.0
    %v5608 = vsel %vm595, %v5583, 0.0
    %v5609 = vsel %vm596, %v5584, 0.0
    %v5610 = vsel %vm597, %v5585, 0.0
    %v5611 = vsel %vm598, %v5586, 0.0
    %v5612 = vsel %vm599, %v5587, 0.0
    %v5613 = vsel %vm600, %v5588, 0.0
    %v5614 = vsel %vm601, %v5589, 0.0
    %v5615 = vsel %vm602, %v5590, 0.0
    %v5616 = vsel %vm603, %v5591, 0.0
    %v5617 = vsel %vm604, %v5592, 0.0
    %v5618 = vsel %vm605, %v5593, 0.0
    %v5619 = vsel %vm606, %v5594, 0.0
    %v5620 = vsel %vm607, %v5595, 0.0
    %v5621 = vsel %vm608, %v5596, 0.0
    %v5622 = vsel %vm609, %v5597, 0.0
    %v5623 = vsel %vm610, %v5598, 0.0
    %v5624 = vsel %vm611, %v5599, 0.0
    %v5625 = vsel %vm612, %v5600, 0.0
    %v5626 = vsel %vm613, %v5601, 0.0
    %5627 = vst [vmem:[#allocation2 + $0x10] sm:$0xff] %v5602
    %5628 = vst [vmem:[#allocation2 + $0x18] sm:$0xff] %v5603
    %5629 = vst [vmem:[#allocation2 + $0x20] sm:$0xff] %v5604
    %5630 = vst [vmem:[#allocation2 + $0x28] sm:$0xff] %v5605
    %5631 = vst [vmem:[#allocation2 + $0x30] sm:$0xff] %v5606
    %5632 = vst [vmem:[#allocation2 + $0x38] sm:$0xff] %v5607
    %5633 = vst [vmem:[#allocation2 + $0x40] sm:$0xff] %v5608
    %5634 = vst [vmem:[#allocation2 + $0x48] sm:$0xff] %v5609
    %5635 = vst [vmem:[#allocation2 + $0x50] sm:$0xff] %v5610
    %5636 = vst [vmem:[#allocation2 + $0x58] sm:$0xff] %v5611
    %5637 = vst [vmem:[#allocation2 + $0x60] sm:$0xff] %v5612
    %5638 = vst [vmem:[#allocation2 + $0x68] sm:$0xff] %v5613
    %5639 = vst [vmem:[#allocation2 + $0x70] sm:$0xff] %v5614
    %5640 = vst [vmem:[#allocation2 + $0x78] sm:$0xff] %v5615
    %5641 = vst [vmem:[#allocation2 + $0x80] sm:$0xff] %v5616
    %5642 = vst [vmem:[#allocation2 + $0x88] sm:$0xff] %v5617
    %5643 = vst [vmem:[#allocation2 + $0x90] sm:$0xff] %v5618
    %5644 = vst [vmem:[#allocation2 + $0x98] sm:$0xff] %v5619
    %5645 = vst [vmem:[#allocation2 + $0xa0] sm:$0xff] %v5620
    %5646 = vst [vmem:[#allocation2 + $0xa8] sm:$0xff] %v5621
    %5647 = vst [vmem:[#allocation2 + $0xb0] sm:$0xff] %v5622
    %5648 = vst [vmem:[#allocation2 + $0xb8] sm:$0xff] %v5623
    %5649 = vst [vmem:[#allocation2 + $0xc0] sm:$0xff] %v5624
    %5650 = vst [vmem:[#allocation2 + $0xc8] sm:$0xff] %v5625
    %5651 = vst [vmem:[#allocation2 + $0xd0] sm:$0xff] %v5626
    %v5652 = vld [vmem:[#allocation2 + $0x5] sm:$0xff]
    %v5653 = vld [vmem:[#allocation2 + $0xd] sm:$0xff]
    %v5654 = vld [vmem:[#allocation2 + $0x15] sm:$0xff]
    %v5655 = vld [vmem:[#allocation2 + $0x1d] sm:$0xff]
    %v5656 = vld [vmem:[#allocation2 + $0x25] sm:$0xff]
    %v5657 = vld [vmem:[#allocation2 + $0x2d] sm:$0xff]
    %v5658 = vld [vmem:[#allocation2 + $0x35] sm:$0xff]
    %v5659 = vld [vmem:[#allocation2 + $0x3d] sm:$0xff]
    %v5660 = vld [vmem:[#allocation2 + $0x45] sm:$0xff]
    %v5661 = vld [vmem:[#allocation2 + $0x4d] sm:$0xff]
    %v5662 = vld [vmem:[#allocation2 + $0x55] sm:$0xff]
    %v5663 = vld [vmem:[#allocation2 + $0x5d] sm:$0xff]
    %v5664 = vld [vmem:[#allocation2 + $0x65] sm:$0xff]
    %v5665 = vld [vmem:[#allocation2 + $0x6d] sm:$0xff]
    %v5666 = vld [vmem:[#allocation2 + $0x75] sm:$0xff]
    %v5667 = vld [vmem:[#allocation2 + $0x7d] sm:$0xff]
    %v5668 = vld [vmem:[#allocation2 + $0x85] sm:$0xff]
    %v5669 = vld [vmem:[#allocation2 + $0x8d] sm:$0xff]
    %v5670 = vld [vmem:[#allocation2 + $0x95] sm:$0xff]
    %v5671 = vld [vmem:[#allocation2 + $0x9d] sm:$0xff]
    %v5672 = vld [vmem:[#allocation2 + $0xa5] sm:$0xff]
    %v5673 = vld [vmem:[#allocation2 + $0xad] sm:$0xff]
    %v5674 = vld [vmem:[#allocation2 + $0xb5] sm:$0xff]
    %v5675 = vld [vmem:[#allocation2 + $0xbd] sm:$0xff]
    %v5676 = vld [vmem:[#allocation2 + $0xc5] sm:$0xff]
    %v5677 = vld [vmem:[%s7] sm:$0xff]
    %v5678 = vld [vmem:[%s7 + $0x8] sm:$0xff]
    %v5679 = vld [vmem:[%s7 + $0x10] sm:$0xff]
    %v5680 = vld [vmem:[%s7 + $0x18] sm:$0xff]
    %v5681 = vld [vmem:[%s7 + $0x20] sm:$0xff]
    %v5682 = vld [vmem:[%s7 + $0x28] sm:$0xff]
    %v5683 = vld [vmem:[%s7 + $0x30] sm:$0xff]
    %v5684 = vld [vmem:[%s7 + $0x38] sm:$0xff]
    %v5685 = vld [vmem:[%s7 + $0x40] sm:$0xff]
    %v5686 = vld [vmem:[%s7 + $0x48] sm:$0xff]
    %v5687 = vld [vmem:[%s7 + $0x50] sm:$0xff]
    %v5688 = vld [vmem:[%s7 + $0x58] sm:$0xff]
    %v5689 = vld [vmem:[%s7 + $0x60] sm:$0xff]
    %v5690 = vld [vmem:[%s7 + $0x68] sm:$0xff]
    %v5691 = vld [vmem:[%s7 + $0x70] sm:$0xff]
    %v5692 = vld [vmem:[%s7 + $0x78] sm:$0xff]
    %v5693 = vld [vmem:[#allocation2 + $0x6] sm:$0xff]
    %v5694 = vld [vmem:[#allocation2 + $0xe] sm:$0xff]
    %v5695 = vld [vmem:[#allocation2 + $0x16] sm:$0xff]
    %v5696 = vld [vmem:[#allocation2 + $0x1e] sm:$0xff]
    %v5697 = vld [vmem:[#allocation2 + $0x26] sm:$0xff]
    %v5698 = vld [vmem:[#allocation2 + $0x2e] sm:$0xff]
    %v5699 = vld [vmem:[#allocation2 + $0x36] sm:$0xff]
    %v5700 = vld [vmem:[#allocation2 + $0x3e] sm:$0xff]
    %v5701 = vld [vmem:[#allocation2 + $0x46] sm:$0xff]
    %v5702 = vld [vmem:[#allocation2 + $0x4e] sm:$0xff]
    %v5703 = vld [vmem:[#allocation2 + $0x56] sm:$0xff]
    %v5704 = vld [vmem:[#allocation2 + $0x5e] sm:$0xff]
    %v5705 = vld [vmem:[#allocation2 + $0x66] sm:$0xff]
    %v5706 = vld [vmem:[#allocation2 + $0x6e] sm:$0xff]
    %v5707 = vld [vmem:[#allocation2 + $0x76] sm:$0xff]
    %v5708 = vld [vmem:[#allocation2 + $0x7e] sm:$0xff]
    %v5709 = vld [vmem:[#allocation2 + $0x86] sm:$0xff]
    %v5710 = vld [vmem:[#allocation2 + $0x8e] sm:$0xff]
    %v5711 = vld [vmem:[#allocation2 + $0x96] sm:$0xff]
    %v5712 = vld [vmem:[#allocation2 + $0x9e] sm:$0xff]
    %v5713 = vld [vmem:[#allocation2 + $0xa6] sm:$0xff]
    %v5714 = vld [vmem:[#allocation2 + $0xae] sm:$0xff]
    %v5715 = vld [vmem:[#allocation2 + $0xb6] sm:$0xff]
    %v5716 = vld [vmem:[#allocation2 + $0xbe] sm:$0xff]
    %v5717 = vld [vmem:[#allocation2 + $0xc6] sm:$0xff]
    %s5718 = scalar_lea.vmem %s7, 128
    %v5719 = vld [vmem:[%s5718] sm:$0xff]
    %v5720 = vld [vmem:[%s5718 + $0x8] sm:$0xff]
    %v5721 = vld [vmem:[%s5718 + $0x10] sm:$0xff]
    %v5722 = vld [vmem:[%s5718 + $0x18] sm:$0xff]
    %v5723 = vld [vmem:[%s5718 + $0x20] sm:$0xff]
    %v5724 = vld [vmem:[%s5718 + $0x28] sm:$0xff]
    %v5725 = vld [vmem:[%s5718 + $0x30] sm:$0xff]
    %v5726 = vld [vmem:[%s5718 + $0x38] sm:$0xff]
    %v5727 = vld [vmem:[%s5718 + $0x40] sm:$0xff]
    %v5728 = vld [vmem:[%s5718 + $0x48] sm:$0xff]
    %v5729 = vld [vmem:[%s5718 + $0x50] sm:$0xff]
    %v5730 = vld [vmem:[%s5718 + $0x58] sm:$0xff]
    %v5731 = vld [vmem:[%s5718 + $0x60] sm:$0xff]
    %v5732 = vld [vmem:[%s5718 + $0x68] sm:$0xff]
    %v5733 = vld [vmem:[%s5718 + $0x70] sm:$0xff]
    %v5734 = vld [vmem:[%s5718 + $0x78] sm:$0xff]
    %5735 = vmatprep.subr.mxu0 0.0
    %5736 = vmatpush1.msra.mxu0 %v5734
    %5737 = vmatprep.subr.mxu0 0.0
    %5738 = vmatpush1.msra.mxu0 %v5733
    %5739 = vmatprep.subr.mxu0 0.0
    %5740 = vmatpush1.msra.mxu0 %v5732
    %5741 = vmatprep.subr.mxu0 0.0
    %5742 = vmatpush1.msra.mxu0 %v5731
    %5743 = vmatprep.subr.mxu0 0.0
    %5744 = vmatpush1.msra.mxu0 %v5730
    %5745 = vmatprep.subr.mxu0 0.0
    %5746 = vmatpush1.msra.mxu0 %v5729
    %5747 = vmatprep.subr.mxu0 0.0
    %5748 = vmatpush1.msra.mxu0 %v5728
    %5749 = vmatprep.subr.mxu0 0.0
    %5750 = vmatpush1.msra.mxu0 %v5727
    %5751 = vmatprep.subr.mxu0 0.0
    %5752 = vmatpush1.msra.mxu0 %v5726
    %5753 = vmatprep.subr.mxu0 0.0
    %5754 = vmatpush1.msra.mxu0 %v5725
    %5755 = vmatprep.subr.mxu0 0.0
    %5756 = vmatpush1.msra.mxu0 %v5724
    %5757 = vmatprep.subr.mxu0 0.0
    %5758 = vmatpush1.msra.mxu0 %v5723
    %5759 = vmatprep.subr.mxu0 0.0
    %5760 = vmatpush1.msra.mxu0 %v5722
    %5761 = vmatprep.subr.mxu0 0.0
    %5762 = vmatpush1.msra.mxu0 %v5721
    %5763 = vmatprep.subr.mxu0 0.0
    %5764 = vmatpush1.msra.mxu0 %v5720
    %5765 = vmatprep.subr.mxu0 0.0
    %5766 = vmatpush1.msra.mxu0 %v5719
    %5767 = vmatprep.subr.mxu0 0.0
    %5768 = vmatpush2.msra.mxu0 0.0
    %5769 = vmatprep.subr.mxu0 0.0
    %5770 = vmatpush2.msra.mxu0 0.0
    %5771 = vmatprep.subr.mxu0 0.0
    %5772 = vmatpush2.msra.mxu0 0.0
    %5773 = vmatprep.subr.mxu0 0.0
    %5774 = vmatpush2.msra.mxu0 0.0
    %5775 = vmatprep.subr.mxu0 0.0
    %5776 = vmatpush2.msra.mxu0 0.0
    %5777 = vmatprep.subr.mxu0 0.0
    %5778 = vmatpush2.msra.mxu0 0.0
    %5779 = vmatprep.subr.mxu0 0.0
    %5780 = vmatpush2.msra.mxu0 0.0
    %5781 = vmatprep.subr.mxu0 0.0
    %5782 = vmatpush2.msra.mxu0 0.0
    %5783 = vmatprep.subr.mxu0 0.0
    %5784 = vmatpush2.msra.mxu0 0.0
    %5785 = vmatprep.subr.mxu0 0.0
    %5786 = vmatpush2.msra.mxu0 0.0
    %5787 = vmatprep.subr.mxu0 0.0
    %5788 = vmatpush2.msra.mxu0 0.0
    %5789 = vmatprep.subr.mxu0 0.0
    %5790 = vmatpush2.msra.mxu0 0.0
    %5791 = vmatprep.subr.mxu0 0.0
    %5792 = vmatpush2.msra.mxu0 0.0
    %5793 = vmatprep.subr.mxu0 0.0
    %5794 = vmatpush2.msra.mxu0 0.0
    %5795 = vmatprep.subr.mxu0 0.0
    %5796 = vmatpush2.msra.mxu0 0.0
    %5797 = vmatprep.subr.mxu0 0.0
    %5798 = vmatpush2.msra.mxu0 0.0
    %5799 = vmatprep.mubr.f32.mxu0 0.0
    %5800 = vmatmul.mubr.f32.gmra.mxu0 %v5693
    %v5801 = vpop.f32.mrf.mxu0
    %v5802 = vadd.f32 0.0, %v5801
    %v5803 = vpop.f32.mrf.mxu0
    %5804 = vmatprep.mubr.f32.mxu0 0.0
    %5805 = vmatmul.mubr.f32.gmra.mxu0 %v5694
    %v5806 = vpop.f32.mrf.mxu0
    %v5807 = vadd.f32 0.0, %v5806
    %v5808 = vpop.f32.mrf.mxu0
    %5809 = vmatprep.mubr.f32.mxu0 0.0
    %5810 = vmatmul.mubr.f32.gmra.mxu0 %v5695
    %v5811 = vpop.f32.mrf.mxu0
    %v5812 = vadd.f32 0.0, %v5811
    %v5813 = vpop.f32.mrf.mxu0
    %5814 = vmatprep.mubr.f32.mxu0 0.0
    %5815 = vmatmul.mubr.f32.gmra.mxu0 %v5696
    %v5816 = vpop.f32.mrf.mxu0
    %v5817 = vadd.f32 0.0, %v5816
    %v5818 = vpop.f32.mrf.mxu0
    %5819 = vmatprep.mubr.f32.mxu0 0.0
    %5820 = vmatmul.mubr.f32.gmra.mxu0 %v5697
    %v5821 = vpop.f32.mrf.mxu0
    %v5822 = vadd.f32 0.0, %v5821
    %v5823 = vpop.f32.mrf.mxu0
    %5824 = vmatprep.mubr.f32.mxu0 0.0
    %5825 = vmatmul.mubr.f32.gmra.mxu0 %v5698
    %v5826 = vpop.f32.mrf.mxu0
    %v5827 = vadd.f32 0.0, %v5826
    %v5828 = vpop.f32.mrf.mxu0
    %5829 = vmatprep.mubr.f32.mxu0 0.0
    %5830 = vmatmul.mubr.f32.gmra.mxu0 %v5699
    %v5831 = vpop.f32.mrf.mxu0
    %v5832 = vadd.f32 0.0, %v5831
    %v5833 = vpop.f32.mrf.mxu0
    %5834 = vmatprep.mubr.f32.mxu0 0.0
    %5835 = vmatmul.mubr.f32.gmra.mxu0 %v5700
    %v5836 = vpop.f32.mrf.mxu0
    %v5837 = vadd.f32 0.0, %v5836
    %v5838 = vpop.f32.mrf.mxu0
    %5839 = vmatprep.mubr.f32.mxu0 0.0
    %5840 = vmatmul.mubr.f32.gmra.mxu0 %v5701
    %v5841 = vpop.f32.mrf.mxu0
    %v5842 = vadd.f32 0.0, %v5841
    %v5843 = vpop.f32.mrf.mxu0
    %5844 = vmatprep.mubr.f32.mxu0 0.0
    %5845 = vmatmul.mubr.f32.gmra.mxu0 %v5702
    %v5846 = vpop.f32.mrf.mxu0
    %v5847 = vadd.f32 0.0, %v5846
    %v5848 = vpop.f32.mrf.mxu0
    %5849 = vmatprep.mubr.f32.mxu0 0.0
    %5850 = vmatmul.mubr.f32.gmra.mxu0 %v5703
    %v5851 = vpop.f32.mrf.mxu0
    %v5852 = vadd.f32 0.0, %v5851
    %v5853 = vpop.f32.mrf.mxu0
    %5854 = vmatprep.mubr.f32.mxu0 0.0
    %5855 = vmatmul.mubr.f32.gmra.mxu0 %v5704
    %v5856 = vpop.f32.mrf.mxu0
    %v5857 = vadd.f32 0.0, %v5856
    %v5858 = vpop.f32.mrf.mxu0
    %5859 = vmatprep.mubr.f32.mxu0 0.0
    %5860 = vmatmul.mubr.f32.gmra.mxu0 %v5705
    %v5861 = vpop.f32.mrf.mxu0
    %v5862 = vadd.f32 0.0, %v5861
    %v5863 = vpop.f32.mrf.mxu0
    %5864 = vmatprep.mubr.f32.mxu0 0.0
    %5865 = vmatmul.mubr.f32.gmra.mxu0 %v5706
    %v5866 = vpop.f32.mrf.mxu0
    %v5867 = vadd.f32 0.0, %v5866
    %v5868 = vpop.f32.mrf.mxu0
    %5869 = vmatprep.mubr.f32.mxu0 0.0
    %5870 = vmatmul.mubr.f32.gmra.mxu0 %v5707
    %v5871 = vpop.f32.mrf.mxu0
    %v5872 = vadd.f32 0.0, %v5871
    %v5873 = vpop.f32.mrf.mxu0
    %5874 = vmatprep.mubr.f32.mxu0 0.0
    %5875 = vmatmul.mubr.f32.gmra.mxu0 %v5708
    %v5876 = vpop.f32.mrf.mxu0
    %v5877 = vadd.f32 0.0, %v5876
    %v5878 = vpop.f32.mrf.mxu0
    %5879 = vmatprep.mubr.f32.mxu0 0.0
    %5880 = vmatmul.mubr.f32.gmra.mxu0 %v5709
    %v5881 = vpop.f32.mrf.mxu0
    %v5882 = vadd.f32 0.0, %v5881
    %v5883 = vpop.f32.mrf.mxu0
    %5884 = vmatprep.mubr.f32.mxu0 0.0
    %5885 = vmatmul.mubr.f32.gmra.mxu0 %v5710
    %v5886 = vpop.f32.mrf.mxu0
    %v5887 = vadd.f32 0.0, %v5886
    %v5888 = vpop.f32.mrf.mxu0
    %5889 = vmatprep.mubr.f32.mxu0 0.0
    %5890 = vmatmul.mubr.f32.gmra.mxu0 %v5711
    %v5891 = vpop.f32.mrf.mxu0
    %v5892 = vadd.f32 0.0, %v5891
    %v5893 = vpop.f32.mrf.mxu0
    %5894 = vmatprep.mubr.f32.mxu0 0.0
    %5895 = vmatmul.mubr.f32.gmra.mxu0 %v5712
    %v5896 = vpop.f32.mrf.mxu0
    %v5897 = vadd.f32 0.0, %v5896
    %v5898 = vpop.f32.mrf.mxu0
    %5899 = vmatprep.mubr.f32.mxu0 0.0
    %5900 = vmatmul.mubr.f32.gmra.mxu0 %v5713
    %v5901 = vpop.f32.mrf.mxu0
    %v5902 = vadd.f32 0.0, %v5901
    %v5903 = vpop.f32.mrf.mxu0
    %5904 = vmatprep.mubr.f32.mxu0 0.0
    %5905 = vmatmul.mubr.f32.gmra.mxu0 %v5714
    %v5906 = vpop.f32.mrf.mxu0
    %v5907 = vadd.f32 0.0, %v5906
    %v5908 = vpop.f32.mrf.mxu0
    %5909 = vmatprep.mubr.f32.mxu0 0.0
    %5910 = vmatmul.mubr.f32.gmra.mxu0 %v5715
    %v5911 = vpop.f32.mrf.mxu0
    %v5912 = vadd.f32 0.0, %v5911
    %v5913 = vpop.f32.mrf.mxu0
    %5914 = vmatprep.mubr.f32.mxu0 0.0
    %5915 = vmatmul.mubr.f32.gmra.mxu0 %v5716
    %v5916 = vpop.f32.mrf.mxu0
    %v5917 = vadd.f32 0.0, %v5916
    %v5918 = vpop.f32.mrf.mxu0
    %5919 = vmatprep.mubr.f32.mxu0 0.0
    %5920 = vmatmul.mubr.f32.gmra.mxu0 %v5717
    %v5921 = vpop.f32.mrf.mxu0
    %v5922 = vadd.f32 0.0, %v5921
    %v5923 = vpop.f32.mrf.mxu0
    %5924 = vdwg.mxu0
    %5925 = vmatprep.subr.mxu0 0.0
    %5926 = vmatpush1.msra.mxu0 %v5692
    %5927 = vmatprep.subr.mxu0 0.0
    %5928 = vmatpush1.msra.mxu0 %v5691
    %5929 = vmatprep.subr.mxu0 0.0
    %5930 = vmatpush1.msra.mxu0 %v5690
    %5931 = vmatprep.subr.mxu0 0.0
    %5932 = vmatpush1.msra.mxu0 %v5689
    %5933 = vmatprep.subr.mxu0 0.0
    %5934 = vmatpush1.msra.mxu0 %v5688
    %5935 = vmatprep.subr.mxu0 0.0
    %5936 = vmatpush1.msra.mxu0 %v5687
    %5937 = vmatprep.subr.mxu0 0.0
    %5938 = vmatpush1.msra.mxu0 %v5686
    %5939 = vmatprep.subr.mxu0 0.0
    %5940 = vmatpush1.msra.mxu0 %v5685
    %5941 = vmatprep.subr.mxu0 0.0
    %5942 = vmatpush1.msra.mxu0 %v5684
    %5943 = vmatprep.subr.mxu0 0.0
    %5944 = vmatpush1.msra.mxu0 %v5683
    %5945 = vmatprep.subr.mxu0 0.0
    %5946 = vmatpush1.msra.mxu0 %v5682
    %5947 = vmatprep.subr.mxu0 0.0
    %5948 = vmatpush1.msra.mxu0 %v5681
    %5949 = vmatprep.subr.mxu0 0.0
    %5950 = vmatpush1.msra.mxu0 %v5680
    %5951 = vmatprep.subr.mxu0 0.0
    %5952 = vmatpush1.msra.mxu0 %v5679
    %5953 = vmatprep.subr.mxu0 0.0
    %5954 = vmatpush1.msra.mxu0 %v5678
    %5955 = vmatprep.subr.mxu0 0.0
    %5956 = vmatpush1.msra.mxu0 %v5677
    %5957 = vmatprep.subr.mxu0 0.0
    %5958 = vmatpush2.msra.mxu0 0.0
    %5959 = vmatprep.subr.mxu0 0.0
    %5960 = vmatpush2.msra.mxu0 0.0
    %5961 = vmatprep.subr.mxu0 0.0
    %5962 = vmatpush2.msra.mxu0 0.0
    %5963 = vmatprep.subr.mxu0 0.0
    %5964 = vmatpush2.msra.mxu0 0.0
    %5965 = vmatprep.subr.mxu0 0.0
    %5966 = vmatpush2.msra.mxu0 0.0
    %5967 = vmatprep.subr.mxu0 0.0
    %5968 = vmatpush2.msra.mxu0 0.0
    %5969 = vmatprep.subr.mxu0 0.0
    %5970 = vmatpush2.msra.mxu0 0.0
    %5971 = vmatprep.subr.mxu0 0.0
    %5972 = vmatpush2.msra.mxu0 0.0
    %5973 = vmatprep.subr.mxu0 0.0
    %5974 = vmatpush2.msra.mxu0 0.0
    %5975 = vmatprep.subr.mxu0 0.0
    %5976 = vmatpush2.msra.mxu0 0.0
    %5977 = vmatprep.subr.mxu0 0.0
    %5978 = vmatpush2.msra.mxu0 0.0
    %5979 = vmatprep.subr.mxu0 0.0
    %5980 = vmatpush2.msra.mxu0 0.0
    %5981 = vmatprep.subr.mxu0 0.0
    %5982 = vmatpush2.msra.mxu0 0.0
    %5983 = vmatprep.subr.mxu0 0.0
    %5984 = vmatpush2.msra.mxu0 0.0
    %5985 = vmatprep.subr.mxu0 0.0
    %5986 = vmatpush2.msra.mxu0 0.0
    %5987 = vmatprep.subr.mxu0 0.0
    %5988 = vmatpush2.msra.mxu0 0.0
    %5989 = vmatprep.mubr.f32.mxu0 0.0
    %5990 = vmatmul.mubr.f32.gmra.mxu0 %v5652
    %v5991 = vpop.f32.mrf.mxu0
    %v5992 = vadd.f32 %v5802, %v5991
    %v5993 = vpop.f32.mrf.mxu0
    %5994 = vmatprep.mubr.f32.mxu0 0.0
    %5995 = vmatmul.mubr.f32.gmra.mxu0 %v5653
    %v5996 = vpop.f32.mrf.mxu0
    %v5997 = vadd.f32 %v5807, %v5996
    %v5998 = vpop.f32.mrf.mxu0
    %5999 = vmatprep.mubr.f32.mxu0 0.0
    %6000 = vmatmul.mubr.f32.gmra.mxu0 %v5654
    %v6001 = vpop.f32.mrf.mxu0
    %v6002 = vadd.f32 %v5812, %v6001
    %v6003 = vpop.f32.mrf.mxu0
    %6004 = vmatprep.mubr.f32.mxu0 0.0
    %6005 = vmatmul.mubr.f32.gmra.mxu0 %v5655
    %v6006 = vpop.f32.mrf.mxu0
    %v6007 = vadd.f32 %v5817, %v6006
    %v6008 = vpop.f32.mrf.mxu0
    %6009 = vmatprep.mubr.f32.mxu0 0.0
    %6010 = vmatmul.mubr.f32.gmra.mxu0 %v5656
    %v6011 = vpop.f32.mrf.mxu0
    %v6012 = vadd.f32 %v5822, %v6011
    %v6013 = vpop.f32.mrf.mxu0
    %6014 = vmatprep.mubr.f32.mxu0 0.0
    %6015 = vmatmul.mubr.f32.gmra.mxu0 %v5657
    %v6016 = vpop.f32.mrf.mxu0
    %v6017 = vadd.f32 %v5827, %v6016
    %v6018 = vpop.f32.mrf.mxu0
    %6019 = vmatprep.mubr.f32.mxu0 0.0
    %6020 = vmatmul.mubr.f32.gmra.mxu0 %v5658
    %v6021 = vpop.f32.mrf.mxu0
    %v6022 = vadd.f32 %v5832, %v6021
    %v6023 = vpop.f32.mrf.mxu0
    %6024 = vmatprep.mubr.f32.mxu0 0.0
    %6025 = vmatmul.mubr.f32.gmra.mxu0 %v5659
    %v6026 = vpop.f32.mrf.mxu0
    %v6027 = vadd.f32 %v5837, %v6026
    %v6028 = vpop.f32.mrf.mxu0
    %6029 = vmatprep.mubr.f32.mxu0 0.0
    %6030 = vmatmul.mubr.f32.gmra.mxu0 %v5660
    %v6031 = vpop.f32.mrf.mxu0
    %v6032 = vadd.f32 %v5842, %v6031
    %v6033 = vpop.f32.mrf.mxu0
    %6034 = vmatprep.mubr.f32.mxu0 0.0
    %6035 = vmatmul.mubr.f32.gmra.mxu0 %v5661
    %v6036 = vpop.f32.mrf.mxu0
    %v6037 = vadd.f32 %v5847, %v6036
    %v6038 = vpop.f32.mrf.mxu0
    %6039 = vmatprep.mubr.f32.mxu0 0.0
    %6040 = vmatmul.mubr.f32.gmra.mxu0 %v5662
    %v6041 = vpop.f32.mrf.mxu0
    %v6042 = vadd.f32 %v5852, %v6041
    %v6043 = vpop.f32.mrf.mxu0
    %6044 = vmatprep.mubr.f32.mxu0 0.0
    %6045 = vmatmul.mubr.f32.gmra.mxu0 %v5663
    %v6046 = vpop.f32.mrf.mxu0
    %v6047 = vadd.f32 %v5857, %v6046
    %v6048 = vpop.f32.mrf.mxu0
    %6049 = vmatprep.mubr.f32.mxu0 0.0
    %6050 = vmatmul.mubr.f32.gmra.mxu0 %v5664
    %v6051 = vpop.f32.mrf.mxu0
    %v6052 = vadd.f32 %v5862, %v6051
    %v6053 = vpop.f32.mrf.mxu0
    %6054 = vmatprep.mubr.f32.mxu0 0.0
    %6055 = vmatmul.mubr.f32.gmra.mxu0 %v5665
    %v6056 = vpop.f32.mrf.mxu0
    %v6057 = vadd.f32 %v5867, %v6056
    %v6058 = vpop.f32.mrf.mxu0
    %6059 = vmatprep.mubr.f32.mxu0 0.0
    %6060 = vmatmul.mubr.f32.gmra.mxu0 %v5666
    %v6061 = vpop.f32.mrf.mxu0
    %v6062 = vadd.f32 %v5872, %v6061
    %v6063 = vpop.f32.mrf.mxu0
    %6064 = vmatprep.mubr.f32.mxu0 0.0
    %6065 = vmatmul.mubr.f32.gmra.mxu0 %v5667
    %v6066 = vpop.f32.mrf.mxu0
    %v6067 = vadd.f32 %v5877, %v6066
    %v6068 = vpop.f32.mrf.mxu0
    %6069 = vmatprep.mubr.f32.mxu0 0.0
    %6070 = vmatmul.mubr.f32.gmra.mxu0 %v5668
    %v6071 = vpop.f32.mrf.mxu0
    %v6072 = vadd.f32 %v5882, %v6071
    %v6073 = vpop.f32.mrf.mxu0
    %6074 = vmatprep.mubr.f32.mxu0 0.0
    %6075 = vmatmul.mubr.f32.gmra.mxu0 %v5669
    %v6076 = vpop.f32.mrf.mxu0
    %v6077 = vadd.f32 %v5887, %v6076
    %v6078 = vpop.f32.mrf.mxu0
    %6079 = vmatprep.mubr.f32.mxu0 0.0
    %6080 = vmatmul.mubr.f32.gmra.mxu0 %v5670
    %v6081 = vpop.f32.mrf.mxu0
    %v6082 = vadd.f32 %v5892, %v6081
    %v6083 = vpop.f32.mrf.mxu0
    %6084 = vmatprep.mubr.f32.mxu0 0.0
    %6085 = vmatmul.mubr.f32.gmra.mxu0 %v5671
    %v6086 = vpop.f32.mrf.mxu0
    %v6087 = vadd.f32 %v5897, %v6086
    %v6088 = vpop.f32.mrf.mxu0
    %6089 = vmatprep.mubr.f32.mxu0 0.0
    %6090 = vmatmul.mubr.f32.gmra.mxu0 %v5672
    %v6091 = vpop.f32.mrf.mxu0
    %v6092 = vadd.f32 %v5902, %v6091
    %v6093 = vpop.f32.mrf.mxu0
    %6094 = vmatprep.mubr.f32.mxu0 0.0
    %6095 = vmatmul.mubr.f32.gmra.mxu0 %v5673
    %v6096 = vpop.f32.mrf.mxu0
    %v6097 = vadd.f32 %v5907, %v6096
    %v6098 = vpop.f32.mrf.mxu0
    %6099 = vmatprep.mubr.f32.mxu0 0.0
    %6100 = vmatmul.mubr.f32.gmra.mxu0 %v5674
    %v6101 = vpop.f32.mrf.mxu0
    %v6102 = vadd.f32 %v5912, %v6101
    %v6103 = vpop.f32.mrf.mxu0
    %6104 = vmatprep.mubr.f32.mxu0 0.0
    %6105 = vmatmul.mubr.f32.gmra.mxu0 %v5675
    %v6106 = vpop.f32.mrf.mxu0
    %v6107 = vadd.f32 %v5917, %v6106
    %v6108 = vpop.f32.mrf.mxu0
    %6109 = vmatprep.mubr.f32.mxu0 0.0
    %6110 = vmatmul.mubr.f32.gmra.mxu0 %v5676
    %v6111 = vpop.f32.mrf.mxu0
    %v6112 = vadd.f32 %v5922, %v6111
    %v6113 = vpop.f32.mrf.mxu0
    %6114 = vdwg.mxu0
    %v6115 = vld [vmem:[#allocation2 + $0x7] sm:$0xff]
    %v6116 = vld [vmem:[#allocation2 + $0xf] sm:$0xff]
    %v6117 = vld [vmem:[#allocation2 + $0x17] sm:$0xff]
    %v6118 = vld [vmem:[#allocation2 + $0x1f] sm:$0xff]
    %v6119 = vld [vmem:[#allocation2 + $0x27] sm:$0xff]
    %v6120 = vld [vmem:[#allocation2 + $0x2f] sm:$0xff]
    %v6121 = vld [vmem:[#allocation2 + $0x37] sm:$0xff]
    %v6122 = vld [vmem:[#allocation2 + $0x3f] sm:$0xff]
    %v6123 = vld [vmem:[#allocation2 + $0x47] sm:$0xff]
    %v6124 = vld [vmem:[#allocation2 + $0x4f] sm:$0xff]
    %v6125 = vld [vmem:[#allocation2 + $0x57] sm:$0xff]
    %v6126 = vld [vmem:[#allocation2 + $0x5f] sm:$0xff]
    %v6127 = vld [vmem:[#allocation2 + $0x67] sm:$0xff]
    %v6128 = vld [vmem:[#allocation2 + $0x6f] sm:$0xff]
    %v6129 = vld [vmem:[#allocation2 + $0x77] sm:$0xff]
    %v6130 = vld [vmem:[#allocation2 + $0x7f] sm:$0xff]
    %v6131 = vld [vmem:[#allocation2 + $0x87] sm:$0xff]
    %v6132 = vld [vmem:[#allocation2 + $0x8f] sm:$0xff]
    %v6133 = vld [vmem:[#allocation2 + $0x97] sm:$0xff]
    %v6134 = vld [vmem:[#allocation2 + $0x9f] sm:$0xff]
    %v6135 = vld [vmem:[#allocation2 + $0xa7] sm:$0xff]
    %v6136 = vld [vmem:[#allocation2 + $0xaf] sm:$0xff]
    %v6137 = vld [vmem:[#allocation2 + $0xb7] sm:$0xff]
    %v6138 = vld [vmem:[#allocation2 + $0xbf] sm:$0xff]
    %v6139 = vld [vmem:[#allocation2 + $0xc7] sm:$0xff]
    %s6140 = scalar_lea.vmem %s7, 256
    %v6141 = vld [vmem:[%s6140] sm:$0xff]
    %v6142 = vld [vmem:[%s6140 + $0x8] sm:$0xff]
    %v6143 = vld [vmem:[%s6140 + $0x10] sm:$0xff]
    %v6144 = vld [vmem:[%s6140 + $0x18] sm:$0xff]
    %v6145 = vld [vmem:[%s6140 + $0x20] sm:$0xff]
    %v6146 = vld [vmem:[%s6140 + $0x28] sm:$0xff]
    %v6147 = vld [vmem:[%s6140 + $0x30] sm:$0xff]
    %v6148 = vld [vmem:[%s6140 + $0x38] sm:$0xff]
    %v6149 = vld [vmem:[%s6140 + $0x40] sm:$0xff]
    %v6150 = vld [vmem:[%s6140 + $0x48] sm:$0xff]
    %v6151 = vld [vmem:[%s6140 + $0x50] sm:$0xff]
    %v6152 = vld [vmem:[%s6140 + $0x58] sm:$0xff]
    %v6153 = vld [vmem:[%s6140 + $0x60] sm:$0xff]
    %v6154 = vld [vmem:[%s6140 + $0x68] sm:$0xff]
    %v6155 = vld [vmem:[%s6140 + $0x70] sm:$0xff]
    %v6156 = vld [vmem:[%s6140 + $0x78] sm:$0xff]
    %6157 = vmatprep.subr.mxu0 0.0
    %6158 = vmatpush1.msra.mxu0 %v6156
    %6159 = vmatprep.subr.mxu0 0.0
    %6160 = vmatpush1.msra.mxu0 %v6155
    %6161 = vmatprep.subr.mxu0 0.0
    %6162 = vmatpush1.msra.mxu0 %v6154
    %6163 = vmatprep.subr.mxu0 0.0
    %6164 = vmatpush1.msra.mxu0 %v6153
    %6165 = vmatprep.subr.mxu0 0.0
    %6166 = vmatpush1.msra.mxu0 %v6152
    %6167 = vmatprep.subr.mxu0 0.0
    %6168 = vmatpush1.msra.mxu0 %v6151
    %6169 = vmatprep.subr.mxu0 0.0
    %6170 = vmatpush1.msra.mxu0 %v6150
    %6171 = vmatprep.subr.mxu0 0.0
    %6172 = vmatpush1.msra.mxu0 %v6149
    %6173 = vmatprep.subr.mxu0 0.0
    %6174 = vmatpush1.msra.mxu0 %v6148
    %6175 = vmatprep.subr.mxu0 0.0
    %6176 = vmatpush1.msra.mxu0 %v6147
    %6177 = vmatprep.subr.mxu0 0.0
    %6178 = vmatpush1.msra.mxu0 %v6146
    %6179 = vmatprep.subr.mxu0 0.0
    %6180 = vmatpush1.msra.mxu0 %v6145
    %6181 = vmatprep.subr.mxu0 0.0
    %6182 = vmatpush1.msra.mxu0 %v6144
    %6183 = vmatprep.subr.mxu0 0.0
    %6184 = vmatpush1.msra.mxu0 %v6143
    %6185 = vmatprep.subr.mxu0 0.0
    %6186 = vmatpush1.msra.mxu0 %v6142
    %6187 = vmatprep.subr.mxu0 0.0
    %6188 = vmatpush1.msra.mxu0 %v6141
    %6189 = vmatprep.subr.mxu0 0.0
    %6190 = vmatpush2.msra.mxu0 0.0
    %6191 = vmatprep.subr.mxu0 0.0
    %6192 = vmatpush2.msra.mxu0 0.0
    %6193 = vmatprep.subr.mxu0 0.0
    %6194 = vmatpush2.msra.mxu0 0.0
    %6195 = vmatprep.subr.mxu0 0.0
    %6196 = vmatpush2.msra.mxu0 0.0
    %6197 = vmatprep.subr.mxu0 0.0
    %6198 = vmatpush2.msra.mxu0 0.0
    %6199 = vmatprep.subr.mxu0 0.0
    %6200 = vmatpush2.msra.mxu0 0.0
    %6201 = vmatprep.subr.mxu0 0.0
    %6202 = vmatpush2.msra.mxu0 0.0
    %6203 = vmatprep.subr.mxu0 0.0
    %6204 = vmatpush2.msra.mxu0 0.0
    %6205 = vmatprep.subr.mxu0 0.0
    %6206 = vmatpush2.msra.mxu0 0.0
    %6207 = vmatprep.subr.mxu0 0.0
    %6208 = vmatpush2.msra.mxu0 0.0
    %6209 = vmatprep.subr.mxu0 0.0
    %6210 = vmatpush2.msra.mxu0 0.0
    %6211 = vmatprep.subr.mxu0 0.0
    %6212 = vmatpush2.msra.mxu0 0.0
    %6213 = vmatprep.subr.mxu0 0.0
    %6214 = vmatpush2.msra.mxu0 0.0
    %6215 = vmatprep.subr.mxu0 0.0
    %6216 = vmatpush2.msra.mxu0 0.0
    %6217 = vmatprep.subr.mxu0 0.0
    %6218 = vmatpush2.msra.mxu0 0.0
    %6219 = vmatprep.subr.mxu0 0.0
    %6220 = vmatpush2.msra.mxu0 0.0
    %6221 = vmatprep.mubr.f32.mxu0 0.0
    %6222 = vmatmul.mubr.f32.gmra.mxu0 %v6115
    %v6223 = vpop.f32.mrf.mxu0
    %v6224 = vadd.f32 0.0, %v6223
    %v6225 = vpop.f32.mrf.mxu0
    %6226 = vmatprep.mubr.f32.mxu0 0.0
    %6227 = vmatmul.mubr.f32.gmra.mxu0 %v6116
    %v6228 = vpop.f32.mrf.mxu0
    %v6229 = vadd.f32 0.0, %v6228
    %v6230 = vpop.f32.mrf.mxu0
    %6231 = vmatprep.mubr.f32.mxu0 0.0
    %6232 = vmatmul.mubr.f32.gmra.mxu0 %v6117
    %v6233 = vpop.f32.mrf.mxu0
    %v6234 = vadd.f32 0.0, %v6233
    %v6235 = vpop.f32.mrf.mxu0
    %6236 = vmatprep.mubr.f32.mxu0 0.0
    %6237 = vmatmul.mubr.f32.gmra.mxu0 %v6118
    %v6238 = vpop.f32.mrf.mxu0
    %v6239 = vadd.f32 0.0, %v6238
    %v6240 = vpop.f32.mrf.mxu0
    %6241 = vmatprep.mubr.f32.mxu0 0.0
    %6242 = vmatmul.mubr.f32.gmra.mxu0 %v6119
    %v6243 = vpop.f32.mrf.mxu0
    %v6244 = vadd.f32 0.0, %v6243
    %v6245 = vpop.f32.mrf.mxu0
    %6246 = vmatprep.mubr.f32.mxu0 0.0
    %6247 = vmatmul.mubr.f32.gmra.mxu0 %v6120
    %v6248 = vpop.f32.mrf.mxu0
    %v6249 = vadd.f32 0.0, %v6248
    %v6250 = vpop.f32.mrf.mxu0
    %6251 = vmatprep.mubr.f32.mxu0 0.0
    %6252 = vmatmul.mubr.f32.gmra.mxu0 %v6121
    %v6253 = vpop.f32.mrf.mxu0
    %v6254 = vadd.f32 0.0, %v6253
    %v6255 = vpop.f32.mrf.mxu0
    %6256 = vmatprep.mubr.f32.mxu0 0.0
    %6257 = vmatmul.mubr.f32.gmra.mxu0 %v6122
    %v6258 = vpop.f32.mrf.mxu0
    %v6259 = vadd.f32 0.0, %v6258
    %v6260 = vpop.f32.mrf.mxu0
    %6261 = vmatprep.mubr.f32.mxu0 0.0
    %6262 = vmatmul.mubr.f32.gmra.mxu0 %v6123
    %v6263 = vpop.f32.mrf.mxu0
    %v6264 = vadd.f32 0.0, %v6263
    %v6265 = vpop.f32.mrf.mxu0
    %6266 = vmatprep.mubr.f32.mxu0 0.0
    %6267 = vmatmul.mubr.f32.gmra.mxu0 %v6124
    %v6268 = vpop.f32.mrf.mxu0
    %v6269 = vadd.f32 0.0, %v6268
    %v6270 = vpop.f32.mrf.mxu0
    %6271 = vmatprep.mubr.f32.mxu0 0.0
    %6272 = vmatmul.mubr.f32.gmra.mxu0 %v6125
    %v6273 = vpop.f32.mrf.mxu0
    %v6274 = vadd.f32 0.0, %v6273
    %v6275 = vpop.f32.mrf.mxu0
    %6276 = vmatprep.mubr.f32.mxu0 0.0
    %6277 = vmatmul.mubr.f32.gmra.mxu0 %v6126
    %v6278 = vpop.f32.mrf.mxu0
    %v6279 = vadd.f32 0.0, %v6278
    %v6280 = vpop.f32.mrf.mxu0
    %6281 = vmatprep.mubr.f32.mxu0 0.0
    %6282 = vmatmul.mubr.f32.gmra.mxu0 %v6127
    %v6283 = vpop.f32.mrf.mxu0
    %v6284 = vadd.f32 0.0, %v6283
    %v6285 = vpop.f32.mrf.mxu0
    %6286 = vmatprep.mubr.f32.mxu0 0.0
    %6287 = vmatmul.mubr.f32.gmra.mxu0 %v6128
    %v6288 = vpop.f32.mrf.mxu0
    %v6289 = vadd.f32 0.0, %v6288
    %v6290 = vpop.f32.mrf.mxu0
    %6291 = vmatprep.mubr.f32.mxu0 0.0
    %6292 = vmatmul.mubr.f32.gmra.mxu0 %v6129
    %v6293 = vpop.f32.mrf.mxu0
    %v6294 = vadd.f32 0.0, %v6293
    %v6295 = vpop.f32.mrf.mxu0
    %6296 = vmatprep.mubr.f32.mxu0 0.0
    %6297 = vmatmul.mubr.f32.gmra.mxu0 %v6130
    %v6298 = vpop.f32.mrf.mxu0
    %v6299 = vadd.f32 0.0, %v6298
    %v6300 = vpop.f32.mrf.mxu0
    %6301 = vmatprep.mubr.f32.mxu0 0.0
    %6302 = vmatmul.mubr.f32.gmra.mxu0 %v6131
    %v6303 = vpop.f32.mrf.mxu0
    %v6304 = vadd.f32 0.0, %v6303
    %v6305 = vpop.f32.mrf.mxu0
    %6306 = vmatprep.mubr.f32.mxu0 0.0
    %6307 = vmatmul.mubr.f32.gmra.mxu0 %v6132
    %v6308 = vpop.f32.mrf.mxu0
    %v6309 = vadd.f32 0.0, %v6308
    %v6310 = vpop.f32.mrf.mxu0
    %6311 = vmatprep.mubr.f32.mxu0 0.0
    %6312 = vmatmul.mubr.f32.gmra.mxu0 %v6133
    %v6313 = vpop.f32.mrf.mxu0
    %v6314 = vadd.f32 0.0, %v6313
    %v6315 = vpop.f32.mrf.mxu0
    %6316 = vmatprep.mubr.f32.mxu0 0.0
    %6317 = vmatmul.mubr.f32.gmra.mxu0 %v6134
    %v6318 = vpop.f32.mrf.mxu0
    %v6319 = vadd.f32 0.0, %v6318
    %v6320 = vpop.f32.mrf.mxu0
    %6321 = vmatprep.mubr.f32.mxu0 0.0
    %6322 = vmatmul.mubr.f32.gmra.mxu0 %v6135
    %v6323 = vpop.f32.mrf.mxu0
    %v6324 = vadd.f32 0.0, %v6323
    %v6325 = vpop.f32.mrf.mxu0
    %6326 = vmatprep.mubr.f32.mxu0 0.0
    %6327 = vmatmul.mubr.f32.gmra.mxu0 %v6136
    %v6328 = vpop.f32.mrf.mxu0
    %v6329 = vadd.f32 0.0, %v6328
    %v6330 = vpop.f32.mrf.mxu0
    %6331 = vmatprep.mubr.f32.mxu0 0.0
    %6332 = vmatmul.mubr.f32.gmra.mxu0 %v6137
    %v6333 = vpop.f32.mrf.mxu0
    %v6334 = vadd.f32 0.0, %v6333
    %v6335 = vpop.f32.mrf.mxu0
    %6336 = vmatprep.mubr.f32.mxu0 0.0
    %6337 = vmatmul.mubr.f32.gmra.mxu0 %v6138
    %v6338 = vpop.f32.mrf.mxu0
    %v6339 = vadd.f32 0.0, %v6338
    %v6340 = vpop.f32.mrf.mxu0
    %6341 = vmatprep.mubr.f32.mxu0 0.0
    %6342 = vmatmul.mubr.f32.gmra.mxu0 %v6139
    %v6343 = vpop.f32.mrf.mxu0
    %v6344 = vadd.f32 0.0, %v6343
    %v6345 = vpop.f32.mrf.mxu0
    %6346 = vdwg.mxu0
    %v6347 = vadd.f32 %v5992, %v6224
    %v6348 = vadd.f32 %v5997, %v6229
    %v6349 = vadd.f32 %v6002, %v6234
    %v6350 = vadd.f32 %v6007, %v6239
    %v6351 = vadd.f32 %v6012, %v6244
    %v6352 = vadd.f32 %v6017, %v6249
    %v6353 = vadd.f32 %v6022, %v6254
    %v6354 = vadd.f32 %v6027, %v6259
    %v6355 = vadd.f32 %v6032, %v6264
    %v6356 = vadd.f32 %v6037, %v6269
    %v6357 = vadd.f32 %v6042, %v6274
    %v6358 = vadd.f32 %v6047, %v6279
    %v6359 = vadd.f32 %v6052, %v6284
    %v6360 = vadd.f32 %v6057, %v6289
    %v6361 = vadd.f32 %v6062, %v6294
    %v6362 = vadd.f32 %v6067, %v6299
    %v6363 = vadd.f32 %v6072, %v6304
    %v6364 = vadd.f32 %v6077, %v6309
    %v6365 = vadd.f32 %v6082, %v6314
    %v6366 = vadd.f32 %v6087, %v6319
    %v6367 = vadd.f32 %v6092, %v6324
    %v6368 = vadd.f32 %v6097, %v6329
    %v6369 = vadd.f32 %v6102, %v6334
    %v6370 = vadd.f32 %v6107, %v6339
    %v6371 = vadd.f32 %v6112, %v6344
    %v6372 = vld [vmem:[#allocation2 + $0xf] sm:$0xff]
    %v6373 = vld [vmem:[#allocation2 + $0x17] sm:$0xff]
    %v6374 = vld [vmem:[#allocation2 + $0x1f] sm:$0xff]
    %v6375 = vld [vmem:[#allocation2 + $0x27] sm:$0xff]
    %v6376 = vld [vmem:[#allocation2 + $0x2f] sm:$0xff]
    %v6377 = vld [vmem:[#allocation2 + $0x37] sm:$0xff]
    %v6378 = vld [vmem:[#allocation2 + $0x3f] sm:$0xff]
    %v6379 = vld [vmem:[#allocation2 + $0x47] sm:$0xff]
    %v6380 = vld [vmem:[#allocation2 + $0x4f] sm:$0xff]
    %v6381 = vld [vmem:[#allocation2 + $0x57] sm:$0xff]
    %v6382 = vld [vmem:[#allocation2 + $0x5f] sm:$0xff]
    %v6383 = vld [vmem:[#allocation2 + $0x67] sm:$0xff]
    %v6384 = vld [vmem:[#allocation2 + $0x6f] sm:$0xff]
    %v6385 = vld [vmem:[#allocation2 + $0x77] sm:$0xff]
    %v6386 = vld [vmem:[#allocation2 + $0x7f] sm:$0xff]
    %v6387 = vld [vmem:[#allocation2 + $0x87] sm:$0xff]
    %v6388 = vld [vmem:[#allocation2 + $0x8f] sm:$0xff]
    %v6389 = vld [vmem:[#allocation2 + $0x97] sm:$0xff]
    %v6390 = vld [vmem:[#allocation2 + $0x9f] sm:$0xff]
    %v6391 = vld [vmem:[#allocation2 + $0xa7] sm:$0xff]
    %v6392 = vld [vmem:[#allocation2 + $0xaf] sm:$0xff]
    %v6393 = vld [vmem:[#allocation2 + $0xb7] sm:$0xff]
    %v6394 = vld [vmem:[#allocation2 + $0xbf] sm:$0xff]
    %v6395 = vld [vmem:[#allocation2 + $0xc7] sm:$0xff]
    %v6396 = vld [vmem:[#allocation2 + $0xcf] sm:$0xff]
    %s6397 = scalar_lea.vmem %s7, 384
    %v6398 = vld [vmem:[%s6397] sm:$0xff]
    %v6399 = vld [vmem:[%s6397 + $0x8] sm:$0xff]
    %v6400 = vld [vmem:[%s6397 + $0x10] sm:$0xff]
    %v6401 = vld [vmem:[%s6397 + $0x18] sm:$0xff]
    %v6402 = vld [vmem:[%s6397 + $0x20] sm:$0xff]
    %v6403 = vld [vmem:[%s6397 + $0x28] sm:$0xff]
    %v6404 = vld [vmem:[%s6397 + $0x30] sm:$0xff]
    %v6405 = vld [vmem:[%s6397 + $0x38] sm:$0xff]
    %v6406 = vld [vmem:[%s6397 + $0x40] sm:$0xff]
    %v6407 = vld [vmem:[%s6397 + $0x48] sm:$0xff]
    %v6408 = vld [vmem:[%s6397 + $0x50] sm:$0xff]
    %v6409 = vld [vmem:[%s6397 + $0x58] sm:$0xff]
    %v6410 = vld [vmem:[%s6397 + $0x60] sm:$0xff]
    %v6411 = vld [vmem:[%s6397 + $0x68] sm:$0xff]
    %v6412 = vld [vmem:[%s6397 + $0x70] sm:$0xff]
    %v6413 = vld [vmem:[%s6397 + $0x78] sm:$0xff]
    %6414 = vmatprep.subr.mxu0 0.0
    %6415 = vmatpush1.msra.mxu0 %v6413
    %6416 = vmatprep.subr.mxu0 0.0
    %6417 = vmatpush1.msra.mxu0 %v6412
    %6418 = vmatprep.subr.mxu0 0.0
    %6419 = vmatpush1.msra.mxu0 %v6411
    %6420 = vmatprep.subr.mxu0 0.0
    %6421 = vmatpush1.msra.mxu0 %v6410
    %6422 = vmatprep.subr.mxu0 0.0
    %6423 = vmatpush1.msra.mxu0 %v6409
    %6424 = vmatprep.subr.mxu0 0.0
    %6425 = vmatpush1.msra.mxu0 %v6408
    %6426 = vmatprep.subr.mxu0 0.0
    %6427 = vmatpush1.msra.mxu0 %v6407
    %6428 = vmatprep.subr.mxu0 0.0
    %6429 = vmatpush1.msra.mxu0 %v6406
    %6430 = vmatprep.subr.mxu0 0.0
    %6431 = vmatpush1.msra.mxu0 %v6405
    %6432 = vmatprep.subr.mxu0 0.0
    %6433 = vmatpush1.msra.mxu0 %v6404
    %6434 = vmatprep.subr.mxu0 0.0
    %6435 = vmatpush1.msra.mxu0 %v6403
    %6436 = vmatprep.subr.mxu0 0.0
    %6437 = vmatpush1.msra.mxu0 %v6402
    %6438 = vmatprep.subr.mxu0 0.0
    %6439 = vmatpush1.msra.mxu0 %v6401
    %6440 = vmatprep.subr.mxu0 0.0
    %6441 = vmatpush1.msra.mxu0 %v6400
    %6442 = vmatprep.subr.mxu0 0.0
    %6443 = vmatpush1.msra.mxu0 %v6399
    %6444 = vmatprep.subr.mxu0 0.0
    %6445 = vmatpush1.msra.mxu0 %v6398
    %6446 = vmatprep.subr.mxu0 0.0
    %6447 = vmatpush2.msra.mxu0 0.0
    %6448 = vmatprep.subr.mxu0 0.0
    %6449 = vmatpush2.msra.mxu0 0.0
    %6450 = vmatprep.subr.mxu0 0.0
    %6451 = vmatpush2.msra.mxu0 0.0
    %6452 = vmatprep.subr.mxu0 0.0
    %6453 = vmatpush2.msra.mxu0 0.0
    %6454 = vmatprep.subr.mxu0 0.0
    %6455 = vmatpush2.msra.mxu0 0.0
    %6456 = vmatprep.subr.mxu0 0.0
    %6457 = vmatpush2.msra.mxu0 0.0
    %6458 = vmatprep.subr.mxu0 0.0
    %6459 = vmatpush2.msra.mxu0 0.0
    %6460 = vmatprep.subr.mxu0 0.0
    %6461 = vmatpush2.msra.mxu0 0.0
    %6462 = vmatprep.subr.mxu0 0.0
    %6463 = vmatpush2.msra.mxu0 0.0
    %6464 = vmatprep.subr.mxu0 0.0
    %6465 = vmatpush2.msra.mxu0 0.0
    %6466 = vmatprep.subr.mxu0 0.0
    %6467 = vmatpush2.msra.mxu0 0.0
    %6468 = vmatprep.subr.mxu0 0.0
    %6469 = vmatpush2.msra.mxu0 0.0
    %6470 = vmatprep.subr.mxu0 0.0
    %6471 = vmatpush2.msra.mxu0 0.0
    %6472 = vmatprep.subr.mxu0 0.0
    %6473 = vmatpush2.msra.mxu0 0.0
    %6474 = vmatprep.subr.mxu0 0.0
    %6475 = vmatpush2.msra.mxu0 0.0
    %6476 = vmatprep.subr.mxu0 0.0
    %6477 = vmatpush2.msra.mxu0 0.0
    %6478 = vmatprep.mubr.f32.mxu0 0.0
    %6479 = vmatmul.mubr.f32.gmra.mxu0 %v6372
    %v6480 = vpop.f32.mrf.mxu0
    %v6481 = vadd.f32 0.0, %v6480
    %v6482 = vpop.f32.mrf.mxu0
    %6483 = vmatprep.mubr.f32.mxu0 0.0
    %6484 = vmatmul.mubr.f32.gmra.mxu0 %v6373
    %v6485 = vpop.f32.mrf.mxu0
    %v6486 = vadd.f32 0.0, %v6485
    %v6487 = vpop.f32.mrf.mxu0
    %6488 = vmatprep.mubr.f32.mxu0 0.0
    %6489 = vmatmul.mubr.f32.gmra.mxu0 %v6374
    %v6490 = vpop.f32.mrf.mxu0
    %v6491 = vadd.f32 0.0, %v6490
    %v6492 = vpop.f32.mrf.mxu0
    %6493 = vmatprep.mubr.f32.mxu0 0.0
    %6494 = vmatmul.mubr.f32.gmra.mxu0 %v6375
    %v6495 = vpop.f32.mrf.mxu0
    %v6496 = vadd.f32 0.0, %v6495
    %v6497 = vpop.f32.mrf.mxu0
    %6498 = vmatprep.mubr.f32.mxu0 0.0
    %6499 = vmatmul.mubr.f32.gmra.mxu0 %v6376
    %v6500 = vpop.f32.mrf.mxu0
    %v6501 = vadd.f32 0.0, %v6500
    %v6502 = vpop.f32.mrf.mxu0
    %6503 = vmatprep.mubr.f32.mxu0 0.0
    %6504 = vmatmul.mubr.f32.gmra.mxu0 %v6377
    %v6505 = vpop.f32.mrf.mxu0
    %v6506 = vadd.f32 0.0, %v6505
    %v6507 = vpop.f32.mrf.mxu0
    %6508 = vmatprep.mubr.f32.mxu0 0.0
    %6509 = vmatmul.mubr.f32.gmra.mxu0 %v6378
    %v6510 = vpop.f32.mrf.mxu0
    %v6511 = vadd.f32 0.0, %v6510
    %v6512 = vpop.f32.mrf.mxu0
    %6513 = vmatprep.mubr.f32.mxu0 0.0
    %6514 = vmatmul.mubr.f32.gmra.mxu0 %v6379
    %v6515 = vpop.f32.mrf.mxu0
    %v6516 = vadd.f32 0.0, %v6515
    %v6517 = vpop.f32.mrf.mxu0
    %6518 = vmatprep.mubr.f32.mxu0 0.0
    %6519 = vmatmul.mubr.f32.gmra.mxu0 %v6380
    %v6520 = vpop.f32.mrf.mxu0
    %v6521 = vadd.f32 0.0, %v6520
    %v6522 = vpop.f32.mrf.mxu0
    %6523 = vmatprep.mubr.f32.mxu0 0.0
    %6524 = vmatmul.mubr.f32.gmra.mxu0 %v6381
    %v6525 = vpop.f32.mrf.mxu0
    %v6526 = vadd.f32 0.0, %v6525
    %v6527 = vpop.f32.mrf.mxu0
    %6528 = vmatprep.mubr.f32.mxu0 0.0
    %6529 = vmatmul.mubr.f32.gmra.mxu0 %v6382
    %v6530 = vpop.f32.mrf.mxu0
    %v6531 = vadd.f32 0.0, %v6530
    %v6532 = vpop.f32.mrf.mxu0
    %6533 = vmatprep.mubr.f32.mxu0 0.0
    %6534 = vmatmul.mubr.f32.gmra.mxu0 %v6383
    %v6535 = vpop.f32.mrf.mxu0
    %v6536 = vadd.f32 0.0, %v6535
    %v6537 = vpop.f32.mrf.mxu0
    %6538 = vmatprep.mubr.f32.mxu0 0.0
    %6539 = vmatmul.mubr.f32.gmra.mxu0 %v6384
    %v6540 = vpop.f32.mrf.mxu0
    %v6541 = vadd.f32 0.0, %v6540
    %v6542 = vpop.f32.mrf.mxu0
    %6543 = vmatprep.mubr.f32.mxu0 0.0
    %6544 = vmatmul.mubr.f32.gmra.mxu0 %v6385
    %v6545 = vpop.f32.mrf.mxu0
    %v6546 = vadd.f32 0.0, %v6545
    %v6547 = vpop.f32.mrf.mxu0
    %6548 = vmatprep.mubr.f32.mxu0 0.0
    %6549 = vmatmul.mubr.f32.gmra.mxu0 %v6386
    %v6550 = vpop.f32.mrf.mxu0
    %v6551 = vadd.f32 0.0, %v6550
    %v6552 = vpop.f32.mrf.mxu0
    %6553 = vmatprep.mubr.f32.mxu0 0.0
    %6554 = vmatmul.mubr.f32.gmra.mxu0 %v6387
    %v6555 = vpop.f32.mrf.mxu0
    %v6556 = vadd.f32 0.0, %v6555
    %v6557 = vpop.f32.mrf.mxu0
    %6558 = vmatprep.mubr.f32.mxu0 0.0
    %6559 = vmatmul.mubr.f32.gmra.mxu0 %v6388
    %v6560 = vpop.f32.mrf.mxu0
    %v6561 = vadd.f32 0.0, %v6560
    %v6562 = vpop.f32.mrf.mxu0
    %6563 = vmatprep.mubr.f32.mxu0 0.0
    %6564 = vmatmul.mubr.f32.gmra.mxu0 %v6389
    %v6565 = vpop.f32.mrf.mxu0
    %v6566 = vadd.f32 0.0, %v6565
    %v6567 = vpop.f32.mrf.mxu0
    %6568 = vmatprep.mubr.f32.mxu0 0.0
    %6569 = vmatmul.mubr.f32.gmra.mxu0 %v6390
    %v6570 = vpop.f32.mrf.mxu0
    %v6571 = vadd.f32 0.0, %v6570
    %v6572 = vpop.f32.mrf.mxu0
    %6573 = vmatprep.mubr.f32.mxu0 0.0
    %6574 = vmatmul.mubr.f32.gmra.mxu0 %v6391
    %v6575 = vpop.f32.mrf.mxu0
    %v6576 = vadd.f32 0.0, %v6575
    %v6577 = vpop.f32.mrf.mxu0
    %6578 = vmatprep.mubr.f32.mxu0 0.0
    %6579 = vmatmul.mubr.f32.gmra.mxu0 %v6392
    %v6580 = vpop.f32.mrf.mxu0
    %v6581 = vadd.f32 0.0, %v6580
    %v6582 = vpop.f32.mrf.mxu0
    %6583 = vmatprep.mubr.f32.mxu0 0.0
    %6584 = vmatmul.mubr.f32.gmra.mxu0 %v6393
    %v6585 = vpop.f32.mrf.mxu0
    %v6586 = vadd.f32 0.0, %v6585
    %v6587 = vpop.f32.mrf.mxu0
    %6588 = vmatprep.mubr.f32.mxu0 0.0
    %6589 = vmatmul.mubr.f32.gmra.mxu0 %v6394
    %v6590 = vpop.f32.mrf.mxu0
    %v6591 = vadd.f32 0.0, %v6590
    %v6592 = vpop.f32.mrf.mxu0
    %6593 = vmatprep.mubr.f32.mxu0 0.0
    %6594 = vmatmul.mubr.f32.gmra.mxu0 %v6395
    %v6595 = vpop.f32.mrf.mxu0
    %v6596 = vadd.f32 0.0, %v6595
    %v6597 = vpop.f32.mrf.mxu0
    %6598 = vmatprep.mubr.f32.mxu0 0.0
    %6599 = vmatmul.mubr.f32.gmra.mxu0 %v6396
    %v6600 = vpop.f32.mrf.mxu0
    %v6601 = vadd.f32 0.0, %v6600
    %v6602 = vpop.f32.mrf.mxu0
    %6603 = vdwg.mxu0
    %v6604 = vadd.f32 %v6347, %v6481
    %v6605 = vadd.f32 %v6348, %v6486
    %v6606 = vadd.f32 %v6349, %v6491
    %v6607 = vadd.f32 %v6350, %v6496
    %v6608 = vadd.f32 %v6351, %v6501
    %v6609 = vadd.f32 %v6352, %v6506
    %v6610 = vadd.f32 %v6353, %v6511
    %v6611 = vadd.f32 %v6354, %v6516
    %v6612 = vadd.f32 %v6355, %v6521
    %v6613 = vadd.f32 %v6356, %v6526
    %v6614 = vadd.f32 %v6357, %v6531
    %v6615 = vadd.f32 %v6358, %v6536
    %v6616 = vadd.f32 %v6359, %v6541
    %v6617 = vadd.f32 %v6360, %v6546
    %v6618 = vadd.f32 %v6361, %v6551
    %v6619 = vadd.f32 %v6362, %v6556
    %v6620 = vadd.f32 %v6363, %v6561
    %v6621 = vadd.f32 %v6364, %v6566
    %v6622 = vadd.f32 %v6365, %v6571
    %v6623 = vadd.f32 %v6366, %v6576
    %v6624 = vadd.f32 %v6367, %v6581
    %v6625 = vadd.f32 %v6368, %v6586
    %v6626 = vadd.f32 %v6369, %v6591
    %v6627 = vadd.f32 %v6370, %v6596
    %v6628 = vadd.f32 %v6371, %v6601
    %v6629 = vld [vmem:[#allocation2 + $0x10] sm:$0xff]
    %v6630 = vld [vmem:[#allocation2 + $0x18] sm:$0xff]
    %v6631 = vld [vmem:[#allocation2 + $0x20] sm:$0xff]
    %v6632 = vld [vmem:[#allocation2 + $0x28] sm:$0xff]
    %v6633 = vld [vmem:[#allocation2 + $0x30] sm:$0xff]
    %v6634 = vld [vmem:[#allocation2 + $0x38] sm:$0xff]
    %v6635 = vld [vmem:[#allocation2 + $0x40] sm:$0xff]
    %v6636 = vld [vmem:[#allocation2 + $0x48] sm:$0xff]
    %v6637 = vld [vmem:[#allocation2 + $0x50] sm:$0xff]
    %v6638 = vld [vmem:[#allocation2 + $0x58] sm:$0xff]
    %v6639 = vld [vmem:[#allocation2 + $0x60] sm:$0xff]
    %v6640 = vld [vmem:[#allocation2 + $0x68] sm:$0xff]
    %v6641 = vld [vmem:[#allocation2 + $0x70] sm:$0xff]
    %v6642 = vld [vmem:[#allocation2 + $0x78] sm:$0xff]
    %v6643 = vld [vmem:[#allocation2 + $0x80] sm:$0xff]
    %v6644 = vld [vmem:[#allocation2 + $0x88] sm:$0xff]
    %v6645 = vld [vmem:[#allocation2 + $0x90] sm:$0xff]
    %v6646 = vld [vmem:[#allocation2 + $0x98] sm:$0xff]
    %v6647 = vld [vmem:[#allocation2 + $0xa0] sm:$0xff]
    %v6648 = vld [vmem:[#allocation2 + $0xa8] sm:$0xff]
    %v6649 = vld [vmem:[#allocation2 + $0xb0] sm:$0xff]
    %v6650 = vld [vmem:[#allocation2 + $0xb8] sm:$0xff]
    %v6651 = vld [vmem:[#allocation2 + $0xc0] sm:$0xff]
    %v6652 = vld [vmem:[#allocation2 + $0xc8] sm:$0xff]
    %v6653 = vld [vmem:[#allocation2 + $0xd0] sm:$0xff]
    %s6654 = scalar_lea.vmem %s7, 512
    %v6655 = vld [vmem:[%s6654] sm:$0xff]
    %v6656 = vld [vmem:[%s6654 + $0x8] sm:$0xff]
    %v6657 = vld [vmem:[%s6654 + $0x10] sm:$0xff]
    %v6658 = vld [vmem:[%s6654 + $0x18] sm:$0xff]
    %v6659 = vld [vmem:[%s6654 + $0x20] sm:$0xff]
    %v6660 = vld [vmem:[%s6654 + $0x28] sm:$0xff]
    %v6661 = vld [vmem:[%s6654 + $0x30] sm:$0xff]
    %v6662 = vld [vmem:[%s6654 + $0x38] sm:$0xff]
    %v6663 = vld [vmem:[%s6654 + $0x40] sm:$0xff]
    %v6664 = vld [vmem:[%s6654 + $0x48] sm:$0xff]
    %v6665 = vld [vmem:[%s6654 + $0x50] sm:$0xff]
    %v6666 = vld [vmem:[%s6654 + $0x58] sm:$0xff]
    %v6667 = vld [vmem:[%s6654 + $0x60] sm:$0xff]
    %v6668 = vld [vmem:[%s6654 + $0x68] sm:$0xff]
    %v6669 = vld [vmem:[%s6654 + $0x70] sm:$0xff]
    %v6670 = vld [vmem:[%s6654 + $0x78] sm:$0xff]
    %6671 = vmatprep.subr.mxu0 0.0
    %6672 = vmatpush1.msra.mxu0 %v6670
    %6673 = vmatprep.subr.mxu0 0.0
    %6674 = vmatpush1.msra.mxu0 %v6669
    %6675 = vmatprep.subr.mxu0 0.0
    %6676 = vmatpush1.msra.mxu0 %v6668
    %6677 = vmatprep.subr.mxu0 0.0
    %6678 = vmatpush1.msra.mxu0 %v6667
    %6679 = vmatprep.subr.mxu0 0.0
    %6680 = vmatpush1.msra.mxu0 %v6666
    %6681 = vmatprep.subr.mxu0 0.0
    %6682 = vmatpush1.msra.mxu0 %v6665
    %6683 = vmatprep.subr.mxu0 0.0
    %6684 = vmatpush1.msra.mxu0 %v6664
    %6685 = vmatprep.subr.mxu0 0.0
    %6686 = vmatpush1.msra.mxu0 %v6663
    %6687 = vmatprep.subr.mxu0 0.0
    %6688 = vmatpush1.msra.mxu0 %v6662
    %6689 = vmatprep.subr.mxu0 0.0
    %6690 = vmatpush1.msra.mxu0 %v6661
    %6691 = vmatprep.subr.mxu0 0.0
    %6692 = vmatpush1.msra.mxu0 %v6660
    %6693 = vmatprep.subr.mxu0 0.0
    %6694 = vmatpush1.msra.mxu0 %v6659
    %6695 = vmatprep.subr.mxu0 0.0
    %6696 = vmatpush1.msra.mxu0 %v6658
    %6697 = vmatprep.subr.mxu0 0.0
    %6698 = vmatpush1.msra.mxu0 %v6657
    %6699 = vmatprep.subr.mxu0 0.0
    %6700 = vmatpush1.msra.mxu0 %v6656
    %6701 = vmatprep.subr.mxu0 0.0
    %6702 = vmatpush1.msra.mxu0 %v6655
    %6703 = vmatprep.subr.mxu0 0.0
    %6704 = vmatpush2.msra.mxu0 0.0
    %6705 = vmatprep.subr.mxu0 0.0
    %6706 = vmatpush2.msra.mxu0 0.0
    %6707 = vmatprep.subr.mxu0 0.0
    %6708 = vmatpush2.msra.mxu0 0.0
    %6709 = vmatprep.subr.mxu0 0.0
    %6710 = vmatpush2.msra.mxu0 0.0
    %6711 = vmatprep.subr.mxu0 0.0
    %6712 = vmatpush2.msra.mxu0 0.0
    %6713 = vmatprep.subr.mxu0 0.0
    %6714 = vmatpush2.msra.mxu0 0.0
    %6715 = vmatprep.subr.mxu0 0.0
    %6716 = vmatpush2.msra.mxu0 0.0
    %6717 = vmatprep.subr.mxu0 0.0
    %6718 = vmatpush2.msra.mxu0 0.0
    %6719 = vmatprep.subr.mxu0 0.0
    %6720 = vmatpush2.msra.mxu0 0.0
    %6721 = vmatprep.subr.mxu0 0.0
    %6722 = vmatpush2.msra.mxu0 0.0
    %6723 = vmatprep.subr.mxu0 0.0
    %6724 = vmatpush2.msra.mxu0 0.0
    %6725 = vmatprep.subr.mxu0 0.0
    %6726 = vmatpush2.msra.mxu0 0.0
    %6727 = vmatprep.subr.mxu0 0.0
    %6728 = vmatpush2.msra.mxu0 0.0
    %6729 = vmatprep.subr.mxu0 0.0
    %6730 = vmatpush2.msra.mxu0 0.0
    %6731 = vmatprep.subr.mxu0 0.0
    %6732 = vmatpush2.msra.mxu0 0.0
    %6733 = vmatprep.subr.mxu0 0.0
    %6734 = vmatpush2.msra.mxu0 0.0
    %6735 = vmatprep.mubr.f32.mxu0 0.0
    %6736 = vmatmul.mubr.f32.gmra.mxu0 %v6629
    %v6737 = vpop.f32.mrf.mxu0
    %v6738 = vadd.f32 0.0, %v6737
    %v6739 = vpop.f32.mrf.mxu0
    %6740 = vmatprep.mubr.f32.mxu0 0.0
    %6741 = vmatmul.mubr.f32.gmra.mxu0 %v6630
    %v6742 = vpop.f32.mrf.mxu0
    %v6743 = vadd.f32 0.0, %v6742
    %v6744 = vpop.f32.mrf.mxu0
    %6745 = vmatprep.mubr.f32.mxu0 0.0
    %6746 = vmatmul.mubr.f32.gmra.mxu0 %v6631
    %v6747 = vpop.f32.mrf.mxu0
    %v6748 = vadd.f32 0.0, %v6747
    %v6749 = vpop.f32.mrf.mxu0
    %6750 = vmatprep.mubr.f32.mxu0 0.0
    %6751 = vmatmul.mubr.f32.gmra.mxu0 %v6632
    %v6752 = vpop.f32.mrf.mxu0
    %v6753 = vadd.f32 0.0, %v6752
    %v6754 = vpop.f32.mrf.mxu0
    %6755 = vmatprep.mubr.f32.mxu0 0.0
    %6756 = vmatmul.mubr.f32.gmra.mxu0 %v6633
    %v6757 = vpop.f32.mrf.mxu0
    %v6758 = vadd.f32 0.0, %v6757
    %v6759 = vpop.f32.mrf.mxu0
    %6760 = vmatprep.mubr.f32.mxu0 0.0
    %6761 = vmatmul.mubr.f32.gmra.mxu0 %v6634
    %v6762 = vpop.f32.mrf.mxu0
    %v6763 = vadd.f32 0.0, %v6762
    %v6764 = vpop.f32.mrf.mxu0
    %6765 = vmatprep.mubr.f32.mxu0 0.0
    %6766 = vmatmul.mubr.f32.gmra.mxu0 %v6635
    %v6767 = vpop.f32.mrf.mxu0
    %v6768 = vadd.f32 0.0, %v6767
    %v6769 = vpop.f32.mrf.mxu0
    %6770 = vmatprep.mubr.f32.mxu0 0.0
    %6771 = vmatmul.mubr.f32.gmra.mxu0 %v6636
    %v6772 = vpop.f32.mrf.mxu0
    %v6773 = vadd.f32 0.0, %v6772
    %v6774 = vpop.f32.mrf.mxu0
    %6775 = vmatprep.mubr.f32.mxu0 0.0
    %6776 = vmatmul.mubr.f32.gmra.mxu0 %v6637
    %v6777 = vpop.f32.mrf.mxu0
    %v6778 = vadd.f32 0.0, %v6777
    %v6779 = vpop.f32.mrf.mxu0
    %6780 = vmatprep.mubr.f32.mxu0 0.0
    %6781 = vmatmul.mubr.f32.gmra.mxu0 %v6638
    %v6782 = vpop.f32.mrf.mxu0
    %v6783 = vadd.f32 0.0, %v6782
    %v6784 = vpop.f32.mrf.mxu0
    %6785 = vmatprep.mubr.f32.mxu0 0.0
    %6786 = vmatmul.mubr.f32.gmra.mxu0 %v6639
    %v6787 = vpop.f32.mrf.mxu0
    %v6788 = vadd.f32 0.0, %v6787
    %v6789 = vpop.f32.mrf.mxu0
    %6790 = vmatprep.mubr.f32.mxu0 0.0
    %6791 = vmatmul.mubr.f32.gmra.mxu0 %v6640
    %v6792 = vpop.f32.mrf.mxu0
    %v6793 = vadd.f32 0.0, %v6792
    %v6794 = vpop.f32.mrf.mxu0
    %6795 = vmatprep.mubr.f32.mxu0 0.0
    %6796 = vmatmul.mubr.f32.gmra.mxu0 %v6641
    %v6797 = vpop.f32.mrf.mxu0
    %v6798 = vadd.f32 0.0, %v6797
    %v6799 = vpop.f32.mrf.mxu0
    %6800 = vmatprep.mubr.f32.mxu0 0.0
    %6801 = vmatmul.mubr.f32.gmra.mxu0 %v6642
    %v6802 = vpop.f32.mrf.mxu0
    %v6803 = vadd.f32 0.0, %v6802
    %v6804 = vpop.f32.mrf.mxu0
    %6805 = vmatprep.mubr.f32.mxu0 0.0
    %6806 = vmatmul.mubr.f32.gmra.mxu0 %v6643
    %v6807 = vpop.f32.mrf.mxu0
    %v6808 = vadd.f32 0.0, %v6807
    %v6809 = vpop.f32.mrf.mxu0
    %6810 = vmatprep.mubr.f32.mxu0 0.0
    %6811 = vmatmul.mubr.f32.gmra.mxu0 %v6644
    %v6812 = vpop.f32.mrf.mxu0
    %v6813 = vadd.f32 0.0, %v6812
    %v6814 = vpop.f32.mrf.mxu0
    %6815 = vmatprep.mubr.f32.mxu0 0.0
    %6816 = vmatmul.mubr.f32.gmra.mxu0 %v6645
    %v6817 = vpop.f32.mrf.mxu0
    %v6818 = vadd.f32 0.0, %v6817
    %v6819 = vpop.f32.mrf.mxu0
    %6820 = vmatprep.mubr.f32.mxu0 0.0
    %6821 = vmatmul.mubr.f32.gmra.mxu0 %v6646
    %v6822 = vpop.f32.mrf.mxu0
    %v6823 = vadd.f32 0.0, %v6822
    %v6824 = vpop.f32.mrf.mxu0
    %6825 = vmatprep.mubr.f32.mxu0 0.0
    %6826 = vmatmul.mubr.f32.gmra.mxu0 %v6647
    %v6827 = vpop.f32.mrf.mxu0
    %v6828 = vadd.f32 0.0, %v6827
    %v6829 = vpop.f32.mrf.mxu0
    %6830 = vmatprep.mubr.f32.mxu0 0.0
    %6831 = vmatmul.mubr.f32.gmra.mxu0 %v6648
    %v6832 = vpop.f32.mrf.mxu0
    %v6833 = vadd.f32 0.0, %v6832
    %v6834 = vpop.f32.mrf.mxu0
    %6835 = vmatprep.mubr.f32.mxu0 0.0
    %6836 = vmatmul.mubr.f32.gmra.mxu0 %v6649
    %v6837 = vpop.f32.mrf.mxu0
    %v6838 = vadd.f32 0.0, %v6837
    %v6839 = vpop.f32.mrf.mxu0
    %6840 = vmatprep.mubr.f32.mxu0 0.0
    %6841 = vmatmul.mubr.f32.gmra.mxu0 %v6650
    %v6842 = vpop.f32.mrf.mxu0
    %v6843 = vadd.f32 0.0, %v6842
    %v6844 = vpop.f32.mrf.mxu0
    %6845 = vmatprep.mubr.f32.mxu0 0.0
    %6846 = vmatmul.mubr.f32.gmra.mxu0 %v6651
    %v6847 = vpop.f32.mrf.mxu0
    %v6848 = vadd.f32 0.0, %v6847
    %v6849 = vpop.f32.mrf.mxu0
    %6850 = vmatprep.mubr.f32.mxu0 0.0
    %6851 = vmatmul.mubr.f32.gmra.mxu0 %v6652
    %v6852 = vpop.f32.mrf.mxu0
    %v6853 = vadd.f32 0.0, %v6852
    %v6854 = vpop.f32.mrf.mxu0
    %6855 = vmatprep.mubr.f32.mxu0 0.0
    %6856 = vmatmul.mubr.f32.gmra.mxu0 %v6653
    %v6857 = vpop.f32.mrf.mxu0
    %v6858 = vadd.f32 0.0, %v6857
    %v6859 = vpop.f32.mrf.mxu0
    %6860 = vdwg.mxu0
    %v6861 = vadd.f32 %v6604, %v6738
    %v6862 = vadd.f32 %v6605, %v6743
    %v6863 = vadd.f32 %v6606, %v6748
    %v6864 = vadd.f32 %v6607, %v6753
    %v6865 = vadd.f32 %v6608, %v6758
    %v6866 = vadd.f32 %v6609, %v6763
    %v6867 = vadd.f32 %v6610, %v6768
    %v6868 = vadd.f32 %v6611, %v6773
    %v6869 = vadd.f32 %v6612, %v6778
    %v6870 = vadd.f32 %v6613, %v6783
    %v6871 = vadd.f32 %v6614, %v6788
    %v6872 = vadd.f32 %v6615, %v6793
    %v6873 = vadd.f32 %v6616, %v6798
    %v6874 = vadd.f32 %v6617, %v6803
    %v6875 = vadd.f32 %v6618, %v6808
    %v6876 = vadd.f32 %v6619, %v6813
    %v6877 = vadd.f32 %v6620, %v6818
    %v6878 = vadd.f32 %v6621, %v6823
    %v6879 = vadd.f32 %v6622, %v6828
    %v6880 = vadd.f32 %v6623, %v6833
    %v6881 = vadd.f32 %v6624, %v6838
    %v6882 = vadd.f32 %v6625, %v6843
    %v6883 = vadd.f32 %v6626, %v6848
    %v6884 = vadd.f32 %v6627, %v6853
    %v6885 = vadd.f32 %v6628, %v6858
    %v6886 = vld [vmem:[#allocation2 + $0x11] sm:$0xff]
    %v6887 = vld [vmem:[#allocation2 + $0x19] sm:$0xff]
    %v6888 = vld [vmem:[#allocation2 + $0x21] sm:$0xff]
    %v6889 = vld [vmem:[#allocation2 + $0x29] sm:$0xff]
    %v6890 = vld [vmem:[#allocation2 + $0x31] sm:$0xff]
    %v6891 = vld [vmem:[#allocation2 + $0x39] sm:$0xff]
    %v6892 = vld [vmem:[#allocation2 + $0x41] sm:$0xff]
    %v6893 = vld [vmem:[#allocation2 + $0x49] sm:$0xff]
    %v6894 = vld [vmem:[#allocation2 + $0x51] sm:$0xff]
    %v6895 = vld [vmem:[#allocation2 + $0x59] sm:$0xff]
    %v6896 = vld [vmem:[#allocation2 + $0x61] sm:$0xff]
    %v6897 = vld [vmem:[#allocation2 + $0x69] sm:$0xff]
    %v6898 = vld [vmem:[#allocation2 + $0x71] sm:$0xff]
    %v6899 = vld [vmem:[#allocation2 + $0x79] sm:$0xff]
    %v6900 = vld [vmem:[#allocation2 + $0x81] sm:$0xff]
    %v6901 = vld [vmem:[#allocation2 + $0x89] sm:$0xff]
    %v6902 = vld [vmem:[#allocation2 + $0x91] sm:$0xff]
    %v6903 = vld [vmem:[#allocation2 + $0x99] sm:$0xff]
    %v6904 = vld [vmem:[#allocation2 + $0xa1] sm:$0xff]
    %v6905 = vld [vmem:[#allocation2 + $0xa9] sm:$0xff]
    %v6906 = vld [vmem:[#allocation2 + $0xb1] sm:$0xff]
    %v6907 = vld [vmem:[#allocation2 + $0xb9] sm:$0xff]
    %v6908 = vld [vmem:[#allocation2 + $0xc1] sm:$0xff]
    %v6909 = vld [vmem:[#allocation2 + $0xc9] sm:$0xff]
    %v6910 = vld [vmem:[#allocation2 + $0xd1] sm:$0xff]
    %s6911 = scalar_lea.vmem %s7, 640
    %v6912 = vld [vmem:[%s6911] sm:$0xff]
    %v6913 = vld [vmem:[%s6911 + $0x8] sm:$0xff]
    %v6914 = vld [vmem:[%s6911 + $0x10] sm:$0xff]
    %v6915 = vld [vmem:[%s6911 + $0x18] sm:$0xff]
    %v6916 = vld [vmem:[%s6911 + $0x20] sm:$0xff]
    %v6917 = vld [vmem:[%s6911 + $0x28] sm:$0xff]
    %v6918 = vld [vmem:[%s6911 + $0x30] sm:$0xff]
    %v6919 = vld [vmem:[%s6911 + $0x38] sm:$0xff]
    %v6920 = vld [vmem:[%s6911 + $0x40] sm:$0xff]
    %v6921 = vld [vmem:[%s6911 + $0x48] sm:$0xff]
    %v6922 = vld [vmem:[%s6911 + $0x50] sm:$0xff]
    %v6923 = vld [vmem:[%s6911 + $0x58] sm:$0xff]
    %v6924 = vld [vmem:[%s6911 + $0x60] sm:$0xff]
    %v6925 = vld [vmem:[%s6911 + $0x68] sm:$0xff]
    %v6926 = vld [vmem:[%s6911 + $0x70] sm:$0xff]
    %v6927 = vld [vmem:[%s6911 + $0x78] sm:$0xff]
    %6928 = vmatprep.subr.mxu0 0.0
    %6929 = vmatpush1.msra.mxu0 %v6927
    %6930 = vmatprep.subr.mxu0 0.0
    %6931 = vmatpush1.msra.mxu0 %v6926
    %6932 = vmatprep.subr.mxu0 0.0
    %6933 = vmatpush1.msra.mxu0 %v6925
    %6934 = vmatprep.subr.mxu0 0.0
    %6935 = vmatpush1.msra.mxu0 %v6924
    %6936 = vmatprep.subr.mxu0 0.0
    %6937 = vmatpush1.msra.mxu0 %v6923
    %6938 = vmatprep.subr.mxu0 0.0
    %6939 = vmatpush1.msra.mxu0 %v6922
    %6940 = vmatprep.subr.mxu0 0.0
    %6941 = vmatpush1.msra.mxu0 %v6921
    %6942 = vmatprep.subr.mxu0 0.0
    %6943 = vmatpush1.msra.mxu0 %v6920
    %6944 = vmatprep.subr.mxu0 0.0
    %6945 = vmatpush1.msra.mxu0 %v6919
    %6946 = vmatprep.subr.mxu0 0.0
    %6947 = vmatpush1.msra.mxu0 %v6918
    %6948 = vmatprep.subr.mxu0 0.0
    %6949 = vmatpush1.msra.mxu0 %v6917
    %6950 = vmatprep.subr.mxu0 0.0
    %6951 = vmatpush1.msra.mxu0 %v6916
    %6952 = vmatprep.subr.mxu0 0.0
    %6953 = vmatpush1.msra.mxu0 %v6915
    %6954 = vmatprep.subr.mxu0 0.0
    %6955 = vmatpush1.msra.mxu0 %v6914
    %6956 = vmatprep.subr.mxu0 0.0
    %6957 = vmatpush1.msra.mxu0 %v6913
    %6958 = vmatprep.subr.mxu0 0.0
    %6959 = vmatpush1.msra.mxu0 %v6912
    %6960 = vmatprep.subr.mxu0 0.0
    %6961 = vmatpush2.msra.mxu0 0.0
    %6962 = vmatprep.subr.mxu0 0.0
    %6963 = vmatpush2.msra.mxu0 0.0
    %6964 = vmatprep.subr.mxu0 0.0
    %6965 = vmatpush2.msra.mxu0 0.0
    %6966 = vmatprep.subr.mxu0 0.0
    %6967 = vmatpush2.msra.mxu0 0.0
    %6968 = vmatprep.subr.mxu0 0.0
    %6969 = vmatpush2.msra.mxu0 0.0
    %6970 = vmatprep.subr.mxu0 0.0
    %6971 = vmatpush2.msra.mxu0 0.0
    %6972 = vmatprep.subr.mxu0 0.0
    %6973 = vmatpush2.msra.mxu0 0.0
    %6974 = vmatprep.subr.mxu0 0.0
    %6975 = vmatpush2.msra.mxu0 0.0
    %6976 = vmatprep.subr.mxu0 0.0
    %6977 = vmatpush2.msra.mxu0 0.0
    %6978 = vmatprep.subr.mxu0 0.0
    %6979 = vmatpush2.msra.mxu0 0.0
    %6980 = vmatprep.subr.mxu0 0.0
    %6981 = vmatpush2.msra.mxu0 0.0
    %6982 = vmatprep.subr.mxu0 0.0
    %6983 = vmatpush2.msra.mxu0 0.0
    %6984 = vmatprep.subr.mxu0 0.0
    %6985 = vmatpush2.msra.mxu0 0.0
    %6986 = vmatprep.subr.mxu0 0.0
    %6987 = vmatpush2.msra.mxu0 0.0
    %6988 = vmatprep.subr.mxu0 0.0
    %6989 = vmatpush2.msra.mxu0 0.0
    %6990 = vmatprep.subr.mxu0 0.0
    %6991 = vmatpush2.msra.mxu0 0.0
    %6992 = vmatprep.mubr.f32.mxu0 0.0
    %6993 = vmatmul.mubr.f32.gmra.mxu0 %v6886
    %v6994 = vpop.f32.mrf.mxu0
    %v6995 = vadd.f32 0.0, %v6994
    %v6996 = vpop.f32.mrf.mxu0
    %6997 = vmatprep.mubr.f32.mxu0 0.0
    %6998 = vmatmul.mubr.f32.gmra.mxu0 %v6887
    %v6999 = vpop.f32.mrf.mxu0
    %v7000 = vadd.f32 0.0, %v6999
    %v7001 = vpop.f32.mrf.mxu0
    %7002 = vmatprep.mubr.f32.mxu0 0.0
    %7003 = vmatmul.mubr.f32.gmra.mxu0 %v6888
    %v7004 = vpop.f32.mrf.mxu0
    %v7005 = vadd.f32 0.0, %v7004
    %v7006 = vpop.f32.mrf.mxu0
    %7007 = vmatprep.mubr.f32.mxu0 0.0
    %7008 = vmatmul.mubr.f32.gmra.mxu0 %v6889
    %v7009 = vpop.f32.mrf.mxu0
    %v7010 = vadd.f32 0.0, %v7009
    %v7011 = vpop.f32.mrf.mxu0
    %7012 = vmatprep.mubr.f32.mxu0 0.0
    %7013 = vmatmul.mubr.f32.gmra.mxu0 %v6890
    %v7014 = vpop.f32.mrf.mxu0
    %v7015 = vadd.f32 0.0, %v7014
    %v7016 = vpop.f32.mrf.mxu0
    %7017 = vmatprep.mubr.f32.mxu0 0.0
    %7018 = vmatmul.mubr.f32.gmra.mxu0 %v6891
    %v7019 = vpop.f32.mrf.mxu0
    %v7020 = vadd.f32 0.0, %v7019
    %v7021 = vpop.f32.mrf.mxu0
    %7022 = vmatprep.mubr.f32.mxu0 0.0
    %7023 = vmatmul.mubr.f32.gmra.mxu0 %v6892
    %v7024 = vpop.f32.mrf.mxu0
    %v7025 = vadd.f32 0.0, %v7024
    %v7026 = vpop.f32.mrf.mxu0
    %7027 = vmatprep.mubr.f32.mxu0 0.0
    %7028 = vmatmul.mubr.f32.gmra.mxu0 %v6893
    %v7029 = vpop.f32.mrf.mxu0
    %v7030 = vadd.f32 0.0, %v7029
    %v7031 = vpop.f32.mrf.mxu0
    %7032 = vmatprep.mubr.f32.mxu0 0.0
    %7033 = vmatmul.mubr.f32.gmra.mxu0 %v6894
    %v7034 = vpop.f32.mrf.mxu0
    %v7035 = vadd.f32 0.0, %v7034
    %v7036 = vpop.f32.mrf.mxu0
    %7037 = vmatprep.mubr.f32.mxu0 0.0
    %7038 = vmatmul.mubr.f32.gmra.mxu0 %v6895
    %v7039 = vpop.f32.mrf.mxu0
    %v7040 = vadd.f32 0.0, %v7039
    %v7041 = vpop.f32.mrf.mxu0
    %7042 = vmatprep.mubr.f32.mxu0 0.0
    %7043 = vmatmul.mubr.f32.gmra.mxu0 %v6896
    %v7044 = vpop.f32.mrf.mxu0
    %v7045 = vadd.f32 0.0, %v7044
    %v7046 = vpop.f32.mrf.mxu0
    %7047 = vmatprep.mubr.f32.mxu0 0.0
    %7048 = vmatmul.mubr.f32.gmra.mxu0 %v6897
    %v7049 = vpop.f32.mrf.mxu0
    %v7050 = vadd.f32 0.0, %v7049
    %v7051 = vpop.f32.mrf.mxu0
    %7052 = vmatprep.mubr.f32.mxu0 0.0
    %7053 = vmatmul.mubr.f32.gmra.mxu0 %v6898
    %v7054 = vpop.f32.mrf.mxu0
    %v7055 = vadd.f32 0.0, %v7054
    %v7056 = vpop.f32.mrf.mxu0
    %7057 = vmatprep.mubr.f32.mxu0 0.0
    %7058 = vmatmul.mubr.f32.gmra.mxu0 %v6899
    %v7059 = vpop.f32.mrf.mxu0
    %v7060 = vadd.f32 0.0, %v7059
    %v7061 = vpop.f32.mrf.mxu0
    %7062 = vmatprep.mubr.f32.mxu0 0.0
    %7063 = vmatmul.mubr.f32.gmra.mxu0 %v6900
    %v7064 = vpop.f32.mrf.mxu0
    %v7065 = vadd.f32 0.0, %v7064
    %v7066 = vpop.f32.mrf.mxu0
    %7067 = vmatprep.mubr.f32.mxu0 0.0
    %7068 = vmatmul.mubr.f32.gmra.mxu0 %v6901
    %v7069 = vpop.f32.mrf.mxu0
    %v7070 = vadd.f32 0.0, %v7069
    %v7071 = vpop.f32.mrf.mxu0
    %7072 = vmatprep.mubr.f32.mxu0 0.0
    %7073 = vmatmul.mubr.f32.gmra.mxu0 %v6902
    %v7074 = vpop.f32.mrf.mxu0
    %v7075 = vadd.f32 0.0, %v7074
    %v7076 = vpop.f32.mrf.mxu0
    %7077 = vmatprep.mubr.f32.mxu0 0.0
    %7078 = vmatmul.mubr.f32.gmra.mxu0 %v6903
    %v7079 = vpop.f32.mrf.mxu0
    %v7080 = vadd.f32 0.0, %v7079
    %v7081 = vpop.f32.mrf.mxu0
    %7082 = vmatprep.mubr.f32.mxu0 0.0
    %7083 = vmatmul.mubr.f32.gmra.mxu0 %v6904
    %v7084 = vpop.f32.mrf.mxu0
    %v7085 = vadd.f32 0.0, %v7084
    %v7086 = vpop.f32.mrf.mxu0
    %7087 = vmatprep.mubr.f32.mxu0 0.0
    %7088 = vmatmul.mubr.f32.gmra.mxu0 %v6905
    %v7089 = vpop.f32.mrf.mxu0
    %v7090 = vadd.f32 0.0, %v7089
    %v7091 = vpop.f32.mrf.mxu0
    %7092 = vmatprep.mubr.f32.mxu0 0.0
    %7093 = vmatmul.mubr.f32.gmra.mxu0 %v6906
    %v7094 = vpop.f32.mrf.mxu0
    %v7095 = vadd.f32 0.0, %v7094
    %v7096 = vpop.f32.mrf.mxu0
    %7097 = vmatprep.mubr.f32.mxu0 0.0
    %7098 = vmatmul.mubr.f32.gmra.mxu0 %v6907
    %v7099 = vpop.f32.mrf.mxu0
    %v7100 = vadd.f32 0.0, %v7099
    %v7101 = vpop.f32.mrf.mxu0
    %7102 = vmatprep.mubr.f32.mxu0 0.0
    %7103 = vmatmul.mubr.f32.gmra.mxu0 %v6908
    %v7104 = vpop.f32.mrf.mxu0
    %v7105 = vadd.f32 0.0, %v7104
    %v7106 = vpop.f32.mrf.mxu0
    %7107 = vmatprep.mubr.f32.mxu0 0.0
    %7108 = vmatmul.mubr.f32.gmra.mxu0 %v6909
    %v7109 = vpop.f32.mrf.mxu0
    %v7110 = vadd.f32 0.0, %v7109
    %v7111 = vpop.f32.mrf.mxu0
    %7112 = vmatprep.mubr.f32.mxu0 0.0
    %7113 = vmatmul.mubr.f32.gmra.mxu0 %v6910
    %v7114 = vpop.f32.mrf.mxu0
    %v7115 = vadd.f32 0.0, %v7114
    %v7116 = vpop.f32.mrf.mxu0
    %7117 = vdwg.mxu0
    %v7118 = vadd.f32 %v6861, %v6995
    %v7119 = vadd.f32 %v6862, %v7000
    %v7120 = vadd.f32 %v6863, %v7005
    %v7121 = vadd.f32 %v6864, %v7010
    %v7122 = vadd.f32 %v6865, %v7015
    %v7123 = vadd.f32 %v6866, %v7020
    %v7124 = vadd.f32 %v6867, %v7025
    %v7125 = vadd.f32 %v6868, %v7030
    %v7126 = vadd.f32 %v6869, %v7035
    %v7127 = vadd.f32 %v6870, %v7040
    %v7128 = vadd.f32 %v6871, %v7045
    %v7129 = vadd.f32 %v6872, %v7050
    %v7130 = vadd.f32 %v6873, %v7055
    %v7131 = vadd.f32 %v6874, %v7060
    %v7132 = vadd.f32 %v6875, %v7065
    %v7133 = vadd.f32 %v6876, %v7070
    %v7134 = vadd.f32 %v6877, %v7075
    %v7135 = vadd.f32 %v6878, %v7080
    %v7136 = vadd.f32 %v6879, %v7085
    %v7137 = vadd.f32 %v6880, %v7090
    %v7138 = vadd.f32 %v6881, %v7095
    %v7139 = vadd.f32 %v6882, %v7100
    %v7140 = vadd.f32 %v6883, %v7105
    %v7141 = vadd.f32 %v6884, %v7110
    %v7142 = vadd.f32 %v6885, %v7115
    %v7143 = vld [vmem:[#allocation2 + $0x19] sm:$0xff]
    %v7144 = vld [vmem:[#allocation2 + $0x21] sm:$0xff]
    %v7145 = vld [vmem:[#allocation2 + $0x29] sm:$0xff]
    %v7146 = vld [vmem:[#allocation2 + $0x31] sm:$0xff]
    %v7147 = vld [vmem:[#allocation2 + $0x39] sm:$0xff]
    %v7148 = vld [vmem:[#allocation2 + $0x41] sm:$0xff]
    %v7149 = vld [vmem:[#allocation2 + $0x49] sm:$0xff]
    %v7150 = vld [vmem:[#allocation2 + $0x51] sm:$0xff]
    %v7151 = vld [vmem:[#allocation2 + $0x59] sm:$0xff]
    %v7152 = vld [vmem:[#allocation2 + $0x61] sm:$0xff]
    %v7153 = vld [vmem:[#allocation2 + $0x69] sm:$0xff]
    %v7154 = vld [vmem:[#allocation2 + $0x71] sm:$0xff]
    %v7155 = vld [vmem:[#allocation2 + $0x79] sm:$0xff]
    %v7156 = vld [vmem:[#allocation2 + $0x81] sm:$0xff]
    %v7157 = vld [vmem:[#allocation2 + $0x89] sm:$0xff]
    %v7158 = vld [vmem:[#allocation2 + $0x91] sm:$0xff]
    %v7159 = vld [vmem:[#allocation2 + $0x99] sm:$0xff]
    %v7160 = vld [vmem:[#allocation2 + $0xa1] sm:$0xff]
    %v7161 = vld [vmem:[#allocation2 + $0xa9] sm:$0xff]
    %v7162 = vld [vmem:[#allocation2 + $0xb1] sm:$0xff]
    %v7163 = vld [vmem:[#allocation2 + $0xb9] sm:$0xff]
    %v7164 = vld [vmem:[#allocation2 + $0xc1] sm:$0xff]
    %v7165 = vld [vmem:[#allocation2 + $0xc9] sm:$0xff]
    %v7166 = vld [vmem:[#allocation2 + $0xd1] sm:$0xff]
    %v7167 = vld [vmem:[#allocation2 + $0xd9] sm:$0xff]
    %s7168 = scalar_lea.vmem %s7, 768
    %v7169 = vld [vmem:[%s7168] sm:$0xff]
    %v7170 = vld [vmem:[%s7168 + $0x8] sm:$0xff]
    %v7171 = vld [vmem:[%s7168 + $0x10] sm:$0xff]
    %v7172 = vld [vmem:[%s7168 + $0x18] sm:$0xff]
    %v7173 = vld [vmem:[%s7168 + $0x20] sm:$0xff]
    %v7174 = vld [vmem:[%s7168 + $0x28] sm:$0xff]
    %v7175 = vld [vmem:[%s7168 + $0x30] sm:$0xff]
    %v7176 = vld [vmem:[%s7168 + $0x38] sm:$0xff]
    %v7177 = vld [vmem:[%s7168 + $0x40] sm:$0xff]
    %v7178 = vld [vmem:[%s7168 + $0x48] sm:$0xff]
    %v7179 = vld [vmem:[%s7168 + $0x50] sm:$0xff]
    %v7180 = vld [vmem:[%s7168 + $0x58] sm:$0xff]
    %v7181 = vld [vmem:[%s7168 + $0x60] sm:$0xff]
    %v7182 = vld [vmem:[%s7168 + $0x68] sm:$0xff]
    %v7183 = vld [vmem:[%s7168 + $0x70] sm:$0xff]
    %v7184 = vld [vmem:[%s7168 + $0x78] sm:$0xff]
    %7185 = vmatprep.subr.mxu0 0.0
    %7186 = vmatpush1.msra.mxu0 %v7184
    %7187 = vmatprep.subr.mxu0 0.0
    %7188 = vmatpush1.msra.mxu0 %v7183
    %7189 = vmatprep.subr.mxu0 0.0
    %7190 = vmatpush1.msra.mxu0 %v7182
    %7191 = vmatprep.subr.mxu0 0.0
    %7192 = vmatpush1.msra.mxu0 %v7181
    %7193 = vmatprep.subr.mxu0 0.0
    %7194 = vmatpush1.msra.mxu0 %v7180
    %7195 = vmatprep.subr.mxu0 0.0
    %7196 = vmatpush1.msra.mxu0 %v7179
    %7197 = vmatprep.subr.mxu0 0.0
    %7198 = vmatpush1.msra.mxu0 %v7178
    %7199 = vmatprep.subr.mxu0 0.0
    %7200 = vmatpush1.msra.mxu0 %v7177
    %7201 = vmatprep.subr.mxu0 0.0
    %7202 = vmatpush1.msra.mxu0 %v7176
    %7203 = vmatprep.subr.mxu0 0.0
    %7204 = vmatpush1.msra.mxu0 %v7175
    %7205 = vmatprep.subr.mxu0 0.0
    %7206 = vmatpush1.msra.mxu0 %v7174
    %7207 = vmatprep.subr.mxu0 0.0
    %7208 = vmatpush1.msra.mxu0 %v7173
    %7209 = vmatprep.subr.mxu0 0.0
    %7210 = vmatpush1.msra.mxu0 %v7172
    %7211 = vmatprep.subr.mxu0 0.0
    %7212 = vmatpush1.msra.mxu0 %v7171
    %7213 = vmatprep.subr.mxu0 0.0
    %7214 = vmatpush1.msra.mxu0 %v7170
    %7215 = vmatprep.subr.mxu0 0.0
    %7216 = vmatpush1.msra.mxu0 %v7169
    %7217 = vmatprep.subr.mxu0 0.0
    %7218 = vmatpush2.msra.mxu0 0.0
    %7219 = vmatprep.subr.mxu0 0.0
    %7220 = vmatpush2.msra.mxu0 0.0
    %7221 = vmatprep.subr.mxu0 0.0
    %7222 = vmatpush2.msra.mxu0 0.0
    %7223 = vmatprep.subr.mxu0 0.0
    %7224 = vmatpush2.msra.mxu0 0.0
    %7225 = vmatprep.subr.mxu0 0.0
    %7226 = vmatpush2.msra.mxu0 0.0
    %7227 = vmatprep.subr.mxu0 0.0
    %7228 = vmatpush2.msra.mxu0 0.0
    %7229 = vmatprep.subr.mxu0 0.0
    %7230 = vmatpush2.msra.mxu0 0.0
    %7231 = vmatprep.subr.mxu0 0.0
    %7232 = vmatpush2.msra.mxu0 0.0
    %7233 = vmatprep.subr.mxu0 0.0
    %7234 = vmatpush2.msra.mxu0 0.0
    %7235 = vmatprep.subr.mxu0 0.0
    %7236 = vmatpush2.msra.mxu0 0.0
    %7237 = vmatprep.subr.mxu0 0.0
    %7238 = vmatpush2.msra.mxu0 0.0
    %7239 = vmatprep.subr.mxu0 0.0
    %7240 = vmatpush2.msra.mxu0 0.0
    %7241 = vmatprep.subr.mxu0 0.0
    %7242 = vmatpush2.msra.mxu0 0.0
    %7243 = vmatprep.subr.mxu0 0.0
    %7244 = vmatpush2.msra.mxu0 0.0
    %7245 = vmatprep.subr.mxu0 0.0
    %7246 = vmatpush2.msra.mxu0 0.0
    %7247 = vmatprep.subr.mxu0 0.0
    %7248 = vmatpush2.msra.mxu0 0.0
    %7249 = vmatprep.mubr.f32.mxu0 0.0
    %7250 = vmatmul.mubr.f32.gmra.mxu0 %v7143
    %v7251 = vpop.f32.mrf.mxu0
    %v7252 = vadd.f32 0.0, %v7251
    %v7253 = vpop.f32.mrf.mxu0
    %7254 = vmatprep.mubr.f32.mxu0 0.0
    %7255 = vmatmul.mubr.f32.gmra.mxu0 %v7144
    %v7256 = vpop.f32.mrf.mxu0
    %v7257 = vadd.f32 0.0, %v7256
    %v7258 = vpop.f32.mrf.mxu0
    %7259 = vmatprep.mubr.f32.mxu0 0.0
    %7260 = vmatmul.mubr.f32.gmra.mxu0 %v7145
    %v7261 = vpop.f32.mrf.mxu0
    %v7262 = vadd.f32 0.0, %v7261
    %v7263 = vpop.f32.mrf.mxu0
    %7264 = vmatprep.mubr.f32.mxu0 0.0
    %7265 = vmatmul.mubr.f32.gmra.mxu0 %v7146
    %v7266 = vpop.f32.mrf.mxu0
    %v7267 = vadd.f32 0.0, %v7266
    %v7268 = vpop.f32.mrf.mxu0
    %7269 = vmatprep.mubr.f32.mxu0 0.0
    %7270 = vmatmul.mubr.f32.gmra.mxu0 %v7147
    %v7271 = vpop.f32.mrf.mxu0
    %v7272 = vadd.f32 0.0, %v7271
    %v7273 = vpop.f32.mrf.mxu0
    %7274 = vmatprep.mubr.f32.mxu0 0.0
    %7275 = vmatmul.mubr.f32.gmra.mxu0 %v7148
    %v7276 = vpop.f32.mrf.mxu0
    %v7277 = vadd.f32 0.0, %v7276
    %v7278 = vpop.f32.mrf.mxu0
    %7279 = vmatprep.mubr.f32.mxu0 0.0
    %7280 = vmatmul.mubr.f32.gmra.mxu0 %v7149
    %v7281 = vpop.f32.mrf.mxu0
    %v7282 = vadd.f32 0.0, %v7281
    %v7283 = vpop.f32.mrf.mxu0
    %7284 = vmatprep.mubr.f32.mxu0 0.0
    %7285 = vmatmul.mubr.f32.gmra.mxu0 %v7150
    %v7286 = vpop.f32.mrf.mxu0
    %v7287 = vadd.f32 0.0, %v7286
    %v7288 = vpop.f32.mrf.mxu0
    %7289 = vmatprep.mubr.f32.mxu0 0.0
    %7290 = vmatmul.mubr.f32.gmra.mxu0 %v7151
    %v7291 = vpop.f32.mrf.mxu0
    %v7292 = vadd.f32 0.0, %v7291
    %v7293 = vpop.f32.mrf.mxu0
    %7294 = vmatprep.mubr.f32.mxu0 0.0
    %7295 = vmatmul.mubr.f32.gmra.mxu0 %v7152
    %v7296 = vpop.f32.mrf.mxu0
    %v7297 = vadd.f32 0.0, %v7296
    %v7298 = vpop.f32.mrf.mxu0
    %7299 = vmatprep.mubr.f32.mxu0 0.0
    %7300 = vmatmul.mubr.f32.gmra.mxu0 %v7153
    %v7301 = vpop.f32.mrf.mxu0
    %v7302 = vadd.f32 0.0, %v7301
    %v7303 = vpop.f32.mrf.mxu0
    %7304 = vmatprep.mubr.f32.mxu0 0.0
    %7305 = vmatmul.mubr.f32.gmra.mxu0 %v7154
    %v7306 = vpop.f32.mrf.mxu0
    %v7307 = vadd.f32 0.0, %v7306
    %v7308 = vpop.f32.mrf.mxu0
    %7309 = vmatprep.mubr.f32.mxu0 0.0
    %7310 = vmatmul.mubr.f32.gmra.mxu0 %v7155
    %v7311 = vpop.f32.mrf.mxu0
    %v7312 = vadd.f32 0.0, %v7311
    %v7313 = vpop.f32.mrf.mxu0
    %7314 = vmatprep.mubr.f32.mxu0 0.0
    %7315 = vmatmul.mubr.f32.gmra.mxu0 %v7156
    %v7316 = vpop.f32.mrf.mxu0
    %v7317 = vadd.f32 0.0, %v7316
    %v7318 = vpop.f32.mrf.mxu0
    %7319 = vmatprep.mubr.f32.mxu0 0.0
    %7320 = vmatmul.mubr.f32.gmra.mxu0 %v7157
    %v7321 = vpop.f32.mrf.mxu0
    %v7322 = vadd.f32 0.0, %v7321
    %v7323 = vpop.f32.mrf.mxu0
    %7324 = vmatprep.mubr.f32.mxu0 0.0
    %7325 = vmatmul.mubr.f32.gmra.mxu0 %v7158
    %v7326 = vpop.f32.mrf.mxu0
    %v7327 = vadd.f32 0.0, %v7326
    %v7328 = vpop.f32.mrf.mxu0
    %7329 = vmatprep.mubr.f32.mxu0 0.0
    %7330 = vmatmul.mubr.f32.gmra.mxu0 %v7159
    %v7331 = vpop.f32.mrf.mxu0
    %v7332 = vadd.f32 0.0, %v7331
    %v7333 = vpop.f32.mrf.mxu0
    %7334 = vmatprep.mubr.f32.mxu0 0.0
    %7335 = vmatmul.mubr.f32.gmra.mxu0 %v7160
    %v7336 = vpop.f32.mrf.mxu0
    %v7337 = vadd.f32 0.0, %v7336
    %v7338 = vpop.f32.mrf.mxu0
    %7339 = vmatprep.mubr.f32.mxu0 0.0
    %7340 = vmatmul.mubr.f32.gmra.mxu0 %v7161
    %v7341 = vpop.f32.mrf.mxu0
    %v7342 = vadd.f32 0.0, %v7341
    %v7343 = vpop.f32.mrf.mxu0
    %7344 = vmatprep.mubr.f32.mxu0 0.0
    %7345 = vmatmul.mubr.f32.gmra.mxu0 %v7162
    %v7346 = vpop.f32.mrf.mxu0
    %v7347 = vadd.f32 0.0, %v7346
    %v7348 = vpop.f32.mrf.mxu0
    %7349 = vmatprep.mubr.f32.mxu0 0.0
    %7350 = vmatmul.mubr.f32.gmra.mxu0 %v7163
    %v7351 = vpop.f32.mrf.mxu0
    %v7352 = vadd.f32 0.0, %v7351
    %v7353 = vpop.f32.mrf.mxu0
    %7354 = vmatprep.mubr.f32.mxu0 0.0
    %7355 = vmatmul.mubr.f32.gmra.mxu0 %v7164
    %v7356 = vpop.f32.mrf.mxu0
    %v7357 = vadd.f32 0.0, %v7356
    %v7358 = vpop.f32.mrf.mxu0
    %7359 = vmatprep.mubr.f32.mxu0 0.0
    %7360 = vmatmul.mubr.f32.gmra.mxu0 %v7165
    %v7361 = vpop.f32.mrf.mxu0
    %v7362 = vadd.f32 0.0, %v7361
    %v7363 = vpop.f32.mrf.mxu0
    %7364 = vmatprep.mubr.f32.mxu0 0.0
    %7365 = vmatmul.mubr.f32.gmra.mxu0 %v7166
    %v7366 = vpop.f32.mrf.mxu0
    %v7367 = vadd.f32 0.0, %v7366
    %v7368 = vpop.f32.mrf.mxu0
    %7369 = vmatprep.mubr.f32.mxu0 0.0
    %7370 = vmatmul.mubr.f32.gmra.mxu0 %v7167
    %v7371 = vpop.f32.mrf.mxu0
    %v7372 = vadd.f32 0.0, %v7371
    %v7373 = vpop.f32.mrf.mxu0
    %7374 = vdwg.mxu0
    %v7375 = vadd.f32 %v7118, %v7252
    %v7376 = vadd.f32 %v7119, %v7257
    %v7377 = vadd.f32 %v7120, %v7262
    %v7378 = vadd.f32 %v7121, %v7267
    %v7379 = vadd.f32 %v7122, %v7272
    %v7380 = vadd.f32 %v7123, %v7277
    %v7381 = vadd.f32 %v7124, %v7282
    %v7382 = vadd.f32 %v7125, %v7287
    %v7383 = vadd.f32 %v7126, %v7292
    %v7384 = vadd.f32 %v7127, %v7297
    %v7385 = vadd.f32 %v7128, %v7302
    %v7386 = vadd.f32 %v7129, %v7307
    %v7387 = vadd.f32 %v7130, %v7312
    %v7388 = vadd.f32 %v7131, %v7317
    %v7389 = vadd.f32 %v7132, %v7322
    %v7390 = vadd.f32 %v7133, %v7327
    %v7391 = vadd.f32 %v7134, %v7332
    %v7392 = vadd.f32 %v7135, %v7337
    %v7393 = vadd.f32 %v7136, %v7342
    %v7394 = vadd.f32 %v7137, %v7347
    %v7395 = vadd.f32 %v7138, %v7352
    %v7396 = vadd.f32 %v7139, %v7357
    %v7397 = vadd.f32 %v7140, %v7362
    %v7398 = vadd.f32 %v7141, %v7367
    %v7399 = vadd.f32 %v7142, %v7372
    %v7400 = vld [vmem:[#allocation2 + $0x1a] sm:$0xff]
    %v7401 = vld [vmem:[#allocation2 + $0x22] sm:$0xff]
    %v7402 = vld [vmem:[#allocation2 + $0x2a] sm:$0xff]
    %v7403 = vld [vmem:[#allocation2 + $0x32] sm:$0xff]
    %v7404 = vld [vmem:[#allocation2 + $0x3a] sm:$0xff]
    %v7405 = vld [vmem:[#allocation2 + $0x42] sm:$0xff]
    %v7406 = vld [vmem:[#allocation2 + $0x4a] sm:$0xff]
    %v7407 = vld [vmem:[#allocation2 + $0x52] sm:$0xff]
    %v7408 = vld [vmem:[#allocation2 + $0x5a] sm:$0xff]
    %v7409 = vld [vmem:[#allocation2 + $0x62] sm:$0xff]
    %v7410 = vld [vmem:[#allocation2 + $0x6a] sm:$0xff]
    %v7411 = vld [vmem:[#allocation2 + $0x72] sm:$0xff]
    %v7412 = vld [vmem:[#allocation2 + $0x7a] sm:$0xff]
    %v7413 = vld [vmem:[#allocation2 + $0x82] sm:$0xff]
    %v7414 = vld [vmem:[#allocation2 + $0x8a] sm:$0xff]
    %v7415 = vld [vmem:[#allocation2 + $0x92] sm:$0xff]
    %v7416 = vld [vmem:[#allocation2 + $0x9a] sm:$0xff]
    %v7417 = vld [vmem:[#allocation2 + $0xa2] sm:$0xff]
    %v7418 = vld [vmem:[#allocation2 + $0xaa] sm:$0xff]
    %v7419 = vld [vmem:[#allocation2 + $0xb2] sm:$0xff]
    %v7420 = vld [vmem:[#allocation2 + $0xba] sm:$0xff]
    %v7421 = vld [vmem:[#allocation2 + $0xc2] sm:$0xff]
    %v7422 = vld [vmem:[#allocation2 + $0xca] sm:$0xff]
    %v7423 = vld [vmem:[#allocation2 + $0xd2] sm:$0xff]
    %v7424 = vld [vmem:[#allocation2 + $0xda] sm:$0xff]
    %s7425 = scalar_lea.vmem %s7, 896
    %v7426 = vld [vmem:[%s7425] sm:$0xff]
    %v7427 = vld [vmem:[%s7425 + $0x8] sm:$0xff]
    %v7428 = vld [vmem:[%s7425 + $0x10] sm:$0xff]
    %v7429 = vld [vmem:[%s7425 + $0x18] sm:$0xff]
    %v7430 = vld [vmem:[%s7425 + $0x20] sm:$0xff]
    %v7431 = vld [vmem:[%s7425 + $0x28] sm:$0xff]
    %v7432 = vld [vmem:[%s7425 + $0x30] sm:$0xff]
    %v7433 = vld [vmem:[%s7425 + $0x38] sm:$0xff]
    %v7434 = vld [vmem:[%s7425 + $0x40] sm:$0xff]
    %v7435 = vld [vmem:[%s7425 + $0x48] sm:$0xff]
    %v7436 = vld [vmem:[%s7425 + $0x50] sm:$0xff]
    %v7437 = vld [vmem:[%s7425 + $0x58] sm:$0xff]
    %v7438 = vld [vmem:[%s7425 + $0x60] sm:$0xff]
    %v7439 = vld [vmem:[%s7425 + $0x68] sm:$0xff]
    %v7440 = vld [vmem:[%s7425 + $0x70] sm:$0xff]
    %v7441 = vld [vmem:[%s7425 + $0x78] sm:$0xff]
    %7442 = vmatprep.subr.mxu0 0.0
    %7443 = vmatpush1.msra.mxu0 %v7441
    %7444 = vmatprep.subr.mxu0 0.0
    %7445 = vmatpush1.msra.mxu0 %v7440
    %7446 = vmatprep.subr.mxu0 0.0
    %7447 = vmatpush1.msra.mxu0 %v7439
    %7448 = vmatprep.subr.mxu0 0.0
    %7449 = vmatpush1.msra.mxu0 %v7438
    %7450 = vmatprep.subr.mxu0 0.0
    %7451 = vmatpush1.msra.mxu0 %v7437
    %7452 = vmatprep.subr.mxu0 0.0
    %7453 = vmatpush1.msra.mxu0 %v7436
    %7454 = vmatprep.subr.mxu0 0.0
    %7455 = vmatpush1.msra.mxu0 %v7435
    %7456 = vmatprep.subr.mxu0 0.0
    %7457 = vmatpush1.msra.mxu0 %v7434
    %7458 = vmatprep.subr.mxu0 0.0
    %7459 = vmatpush1.msra.mxu0 %v7433
    %7460 = vmatprep.subr.mxu0 0.0
    %7461 = vmatpush1.msra.mxu0 %v7432
    %7462 = vmatprep.subr.mxu0 0.0
    %7463 = vmatpush1.msra.mxu0 %v7431
    %7464 = vmatprep.subr.mxu0 0.0
    %7465 = vmatpush1.msra.mxu0 %v7430
    %7466 = vmatprep.subr.mxu0 0.0
    %7467 = vmatpush1.msra.mxu0 %v7429
    %7468 = vmatprep.subr.mxu0 0.0
    %7469 = vmatpush1.msra.mxu0 %v7428
    %7470 = vmatprep.subr.mxu0 0.0
    %7471 = vmatpush1.msra.mxu0 %v7427
    %7472 = vmatprep.subr.mxu0 0.0
    %7473 = vmatpush1.msra.mxu0 %v7426
    %7474 = vmatprep.subr.mxu0 0.0
    %7475 = vmatpush2.msra.mxu0 0.0
    %7476 = vmatprep.subr.mxu0 0.0
    %7477 = vmatpush2.msra.mxu0 0.0
    %7478 = vmatprep.subr.mxu0 0.0
    %7479 = vmatpush2.msra.mxu0 0.0
    %7480 = vmatprep.subr.mxu0 0.0
    %7481 = vmatpush2.msra.mxu0 0.0
    %7482 = vmatprep.subr.mxu0 0.0
    %7483 = vmatpush2.msra.mxu0 0.0
    %7484 = vmatprep.subr.mxu0 0.0
    %7485 = vmatpush2.msra.mxu0 0.0
    %7486 = vmatprep.subr.mxu0 0.0
    %7487 = vmatpush2.msra.mxu0 0.0
    %7488 = vmatprep.subr.mxu0 0.0
    %7489 = vmatpush2.msra.mxu0 0.0
    %7490 = vmatprep.subr.mxu0 0.0
    %7491 = vmatpush2.msra.mxu0 0.0
    %7492 = vmatprep.subr.mxu0 0.0
    %7493 = vmatpush2.msra.mxu0 0.0
    %7494 = vmatprep.subr.mxu0 0.0
    %7495 = vmatpush2.msra.mxu0 0.0
    %7496 = vmatprep.subr.mxu0 0.0
    %7497 = vmatpush2.msra.mxu0 0.0
    %7498 = vmatprep.subr.mxu0 0.0
    %7499 = vmatpush2.msra.mxu0 0.0
    %7500 = vmatprep.subr.mxu0 0.0
    %7501 = vmatpush2.msra.mxu0 0.0
    %7502 = vmatprep.subr.mxu0 0.0
    %7503 = vmatpush2.msra.mxu0 0.0
    %7504 = vmatprep.subr.mxu0 0.0
    %7505 = vmatpush2.msra.mxu0 0.0
    %7506 = vmatprep.mubr.f32.mxu0 0.0
    %7507 = vmatmul.mubr.f32.gmra.mxu0 %v7400
    %v7508 = vpop.f32.mrf.mxu0
    %v7509 = vadd.f32 0.0, %v7508
    %v7510 = vpop.f32.mrf.mxu0
    %7511 = vmatprep.mubr.f32.mxu0 0.0
    %7512 = vmatmul.mubr.f32.gmra.mxu0 %v7401
    %v7513 = vpop.f32.mrf.mxu0
    %v7514 = vadd.f32 0.0, %v7513
    %v7515 = vpop.f32.mrf.mxu0
    %7516 = vmatprep.mubr.f32.mxu0 0.0
    %7517 = vmatmul.mubr.f32.gmra.mxu0 %v7402
    %v7518 = vpop.f32.mrf.mxu0
    %v7519 = vadd.f32 0.0, %v7518
    %v7520 = vpop.f32.mrf.mxu0
    %7521 = vmatprep.mubr.f32.mxu0 0.0
    %7522 = vmatmul.mubr.f32.gmra.mxu0 %v7403
    %v7523 = vpop.f32.mrf.mxu0
    %v7524 = vadd.f32 0.0, %v7523
    %v7525 = vpop.f32.mrf.mxu0
    %7526 = vmatprep.mubr.f32.mxu0 0.0
    %7527 = vmatmul.mubr.f32.gmra.mxu0 %v7404
    %v7528 = vpop.f32.mrf.mxu0
    %v7529 = vadd.f32 0.0, %v7528
    %v7530 = vpop.f32.mrf.mxu0
    %7531 = vmatprep.mubr.f32.mxu0 0.0
    %7532 = vmatmul.mubr.f32.gmra.mxu0 %v7405
    %v7533 = vpop.f32.mrf.mxu0
    %v7534 = vadd.f32 0.0, %v7533
    %v7535 = vpop.f32.mrf.mxu0
    %7536 = vmatprep.mubr.f32.mxu0 0.0
    %7537 = vmatmul.mubr.f32.gmra.mxu0 %v7406
    %v7538 = vpop.f32.mrf.mxu0
    %v7539 = vadd.f32 0.0, %v7538
    %v7540 = vpop.f32.mrf.mxu0
    %7541 = vmatprep.mubr.f32.mxu0 0.0
    %7542 = vmatmul.mubr.f32.gmra.mxu0 %v7407
    %v7543 = vpop.f32.mrf.mxu0
    %v7544 = vadd.f32 0.0, %v7543
    %v7545 = vpop.f32.mrf.mxu0
    %7546 = vmatprep.mubr.f32.mxu0 0.0
    %7547 = vmatmul.mubr.f32.gmra.mxu0 %v7408
    %v7548 = vpop.f32.mrf.mxu0
    %v7549 = vadd.f32 0.0, %v7548
    %v7550 = vpop.f32.mrf.mxu0
    %7551 = vmatprep.mubr.f32.mxu0 0.0
    %7552 = vmatmul.mubr.f32.gmra.mxu0 %v7409
    %v7553 = vpop.f32.mrf.mxu0
    %v7554 = vadd.f32 0.0, %v7553
    %v7555 = vpop.f32.mrf.mxu0
    %7556 = vmatprep.mubr.f32.mxu0 0.0
    %7557 = vmatmul.mubr.f32.gmra.mxu0 %v7410
    %v7558 = vpop.f32.mrf.mxu0
    %v7559 = vadd.f32 0.0, %v7558
    %v7560 = vpop.f32.mrf.mxu0
    %7561 = vmatprep.mubr.f32.mxu0 0.0
    %7562 = vmatmul.mubr.f32.gmra.mxu0 %v7411
    %v7563 = vpop.f32.mrf.mxu0
    %v7564 = vadd.f32 0.0, %v7563
    %v7565 = vpop.f32.mrf.mxu0
    %7566 = vmatprep.mubr.f32.mxu0 0.0
    %7567 = vmatmul.mubr.f32.gmra.mxu0 %v7412
    %v7568 = vpop.f32.mrf.mxu0
    %v7569 = vadd.f32 0.0, %v7568
    %v7570 = vpop.f32.mrf.mxu0
    %7571 = vmatprep.mubr.f32.mxu0 0.0
    %7572 = vmatmul.mubr.f32.gmra.mxu0 %v7413
    %v7573 = vpop.f32.mrf.mxu0
    %v7574 = vadd.f32 0.0, %v7573
    %v7575 = vpop.f32.mrf.mxu0
    %7576 = vmatprep.mubr.f32.mxu0 0.0
    %7577 = vmatmul.mubr.f32.gmra.mxu0 %v7414
    %v7578 = vpop.f32.mrf.mxu0
    %v7579 = vadd.f32 0.0, %v7578
    %v7580 = vpop.f32.mrf.mxu0
    %7581 = vmatprep.mubr.f32.mxu0 0.0
    %7582 = vmatmul.mubr.f32.gmra.mxu0 %v7415
    %v7583 = vpop.f32.mrf.mxu0
    %v7584 = vadd.f32 0.0, %v7583
    %v7585 = vpop.f32.mrf.mxu0
    %7586 = vmatprep.mubr.f32.mxu0 0.0
    %7587 = vmatmul.mubr.f32.gmra.mxu0 %v7416
    %v7588 = vpop.f32.mrf.mxu0
    %v7589 = vadd.f32 0.0, %v7588
    %v7590 = vpop.f32.mrf.mxu0
    %7591 = vmatprep.mubr.f32.mxu0 0.0
    %7592 = vmatmul.mubr.f32.gmra.mxu0 %v7417
    %v7593 = vpop.f32.mrf.mxu0
    %v7594 = vadd.f32 0.0, %v7593
    %v7595 = vpop.f32.mrf.mxu0
    %7596 = vmatprep.mubr.f32.mxu0 0.0
    %7597 = vmatmul.mubr.f32.gmra.mxu0 %v7418
    %v7598 = vpop.f32.mrf.mxu0
    %v7599 = vadd.f32 0.0, %v7598
    %v7600 = vpop.f32.mrf.mxu0
    %7601 = vmatprep.mubr.f32.mxu0 0.0
    %7602 = vmatmul.mubr.f32.gmra.mxu0 %v7419
    %v7603 = vpop.f32.mrf.mxu0
    %v7604 = vadd.f32 0.0, %v7603
    %v7605 = vpop.f32.mrf.mxu0
    %7606 = vmatprep.mubr.f32.mxu0 0.0
    %7607 = vmatmul.mubr.f32.gmra.mxu0 %v7420
    %v7608 = vpop.f32.mrf.mxu0
    %v7609 = vadd.f32 0.0, %v7608
    %v7610 = vpop.f32.mrf.mxu0
    %7611 = vmatprep.mubr.f32.mxu0 0.0
    %7612 = vmatmul.mubr.f32.gmra.mxu0 %v7421
    %v7613 = vpop.f32.mrf.mxu0
    %v7614 = vadd.f32 0.0, %v7613
    %v7615 = vpop.f32.mrf.mxu0
    %7616 = vmatprep.mubr.f32.mxu0 0.0
    %7617 = vmatmul.mubr.f32.gmra.mxu0 %v7422
    %v7618 = vpop.f32.mrf.mxu0
    %v7619 = vadd.f32 0.0, %v7618
    %v7620 = vpop.f32.mrf.mxu0
    %7621 = vmatprep.mubr.f32.mxu0 0.0
    %7622 = vmatmul.mubr.f32.gmra.mxu0 %v7423
    %v7623 = vpop.f32.mrf.mxu0
    %v7624 = vadd.f32 0.0, %v7623
    %v7625 = vpop.f32.mrf.mxu0
    %7626 = vmatprep.mubr.f32.mxu0 0.0
    %7627 = vmatmul.mubr.f32.gmra.mxu0 %v7424
    %v7628 = vpop.f32.mrf.mxu0
    %v7629 = vadd.f32 0.0, %v7628
    %v7630 = vpop.f32.mrf.mxu0
    %7631 = vdwg.mxu0
    %v7632 = vadd.f32 %v7375, %v7509
    %v7633 = vadd.f32 %v7376, %v7514
    %v7634 = vadd.f32 %v7377, %v7519
    %v7635 = vadd.f32 %v7378, %v7524
    %v7636 = vadd.f32 %v7379, %v7529
    %v7637 = vadd.f32 %v7380, %v7534
    %v7638 = vadd.f32 %v7381, %v7539
    %v7639 = vadd.f32 %v7382, %v7544
    %v7640 = vadd.f32 %v7383, %v7549
    %v7641 = vadd.f32 %v7384, %v7554
    %v7642 = vadd.f32 %v7385, %v7559
    %v7643 = vadd.f32 %v7386, %v7564
    %v7644 = vadd.f32 %v7387, %v7569
    %v7645 = vadd.f32 %v7388, %v7574
    %v7646 = vadd.f32 %v7389, %v7579
    %v7647 = vadd.f32 %v7390, %v7584
    %v7648 = vadd.f32 %v7391, %v7589
    %v7649 = vadd.f32 %v7392, %v7594
    %v7650 = vadd.f32 %v7393, %v7599
    %v7651 = vadd.f32 %v7394, %v7604
    %v7652 = vadd.f32 %v7395, %v7609
    %v7653 = vadd.f32 %v7396, %v7614
    %v7654 = vadd.f32 %v7397, %v7619
    %v7655 = vadd.f32 %v7398, %v7624
    %v7656 = vadd.f32 %v7399, %v7629
    %v7657 = vld [vmem:[#allocation2 + $0x1b] sm:$0xff]
    %v7658 = vld [vmem:[#allocation2 + $0x23] sm:$0xff]
    %v7659 = vld [vmem:[#allocation2 + $0x2b] sm:$0xff]
    %v7660 = vld [vmem:[#allocation2 + $0x33] sm:$0xff]
    %v7661 = vld [vmem:[#allocation2 + $0x3b] sm:$0xff]
    %v7662 = vld [vmem:[#allocation2 + $0x43] sm:$0xff]
    %v7663 = vld [vmem:[#allocation2 + $0x4b] sm:$0xff]
    %v7664 = vld [vmem:[#allocation2 + $0x53] sm:$0xff]
    %v7665 = vld [vmem:[#allocation2 + $0x5b] sm:$0xff]
    %v7666 = vld [vmem:[#allocation2 + $0x63] sm:$0xff]
    %v7667 = vld [vmem:[#allocation2 + $0x6b] sm:$0xff]
    %v7668 = vld [vmem:[#allocation2 + $0x73] sm:$0xff]
    %v7669 = vld [vmem:[#allocation2 + $0x7b] sm:$0xff]
    %v7670 = vld [vmem:[#allocation2 + $0x83] sm:$0xff]
    %v7671 = vld [vmem:[#allocation2 + $0x8b] sm:$0xff]
    %v7672 = vld [vmem:[#allocation2 + $0x93] sm:$0xff]
    %v7673 = vld [vmem:[#allocation2 + $0x9b] sm:$0xff]
    %v7674 = vld [vmem:[#allocation2 + $0xa3] sm:$0xff]
    %v7675 = vld [vmem:[#allocation2 + $0xab] sm:$0xff]
    %v7676 = vld [vmem:[#allocation2 + $0xb3] sm:$0xff]
    %v7677 = vld [vmem:[#allocation2 + $0xbb] sm:$0xff]
    %v7678 = vld [vmem:[#allocation2 + $0xc3] sm:$0xff]
    %v7679 = vld [vmem:[#allocation2 + $0xcb] sm:$0xff]
    %v7680 = vld [vmem:[#allocation2 + $0xd3] sm:$0xff]
    %v7681 = vld [vmem:[#allocation2 + $0xdb] sm:$0xff]
    %s7682 = scalar_lea.vmem %s7, 1024
    %v7683 = vld [vmem:[%s7682] sm:$0xff]
    %v7684 = vld [vmem:[%s7682 + $0x8] sm:$0xff]
    %v7685 = vld [vmem:[%s7682 + $0x10] sm:$0xff]
    %v7686 = vld [vmem:[%s7682 + $0x18] sm:$0xff]
    %v7687 = vld [vmem:[%s7682 + $0x20] sm:$0xff]
    %v7688 = vld [vmem:[%s7682 + $0x28] sm:$0xff]
    %v7689 = vld [vmem:[%s7682 + $0x30] sm:$0xff]
    %v7690 = vld [vmem:[%s7682 + $0x38] sm:$0xff]
    %v7691 = vld [vmem:[%s7682 + $0x40] sm:$0xff]
    %v7692 = vld [vmem:[%s7682 + $0x48] sm:$0xff]
    %v7693 = vld [vmem:[%s7682 + $0x50] sm:$0xff]
    %v7694 = vld [vmem:[%s7682 + $0x58] sm:$0xff]
    %v7695 = vld [vmem:[%s7682 + $0x60] sm:$0xff]
    %v7696 = vld [vmem:[%s7682 + $0x68] sm:$0xff]
    %v7697 = vld [vmem:[%s7682 + $0x70] sm:$0xff]
    %v7698 = vld [vmem:[%s7682 + $0x78] sm:$0xff]
    %7699 = vmatprep.subr.mxu0 0.0
    %7700 = vmatpush1.msra.mxu0 %v7698
    %7701 = vmatprep.subr.mxu0 0.0
    %7702 = vmatpush1.msra.mxu0 %v7697
    %7703 = vmatprep.subr.mxu0 0.0
    %7704 = vmatpush1.msra.mxu0 %v7696
    %7705 = vmatprep.subr.mxu0 0.0
    %7706 = vmatpush1.msra.mxu0 %v7695
    %7707 = vmatprep.subr.mxu0 0.0
    %7708 = vmatpush1.msra.mxu0 %v7694
    %7709 = vmatprep.subr.mxu0 0.0
    %7710 = vmatpush1.msra.mxu0 %v7693
    %7711 = vmatprep.subr.mxu0 0.0
    %7712 = vmatpush1.msra.mxu0 %v7692
    %7713 = vmatprep.subr.mxu0 0.0
    %7714 = vmatpush1.msra.mxu0 %v7691
    %7715 = vmatprep.subr.mxu0 0.0
    %7716 = vmatpush1.msra.mxu0 %v7690
    %7717 = vmatprep.subr.mxu0 0.0
    %7718 = vmatpush1.msra.mxu0 %v7689
    %7719 = vmatprep.subr.mxu0 0.0
    %7720 = vmatpush1.msra.mxu0 %v7688
    %7721 = vmatprep.subr.mxu0 0.0
    %7722 = vmatpush1.msra.mxu0 %v7687
    %7723 = vmatprep.subr.mxu0 0.0
    %7724 = vmatpush1.msra.mxu0 %v7686
    %7725 = vmatprep.subr.mxu0 0.0
    %7726 = vmatpush1.msra.mxu0 %v7685
    %7727 = vmatprep.subr.mxu0 0.0
    %7728 = vmatpush1.msra.mxu0 %v7684
    %7729 = vmatprep.subr.mxu0 0.0
    %7730 = vmatpush1.msra.mxu0 %v7683
    %7731 = vmatprep.subr.mxu0 0.0
    %7732 = vmatpush2.msra.mxu0 0.0
    %7733 = vmatprep.subr.mxu0 0.0
    %7734 = vmatpush2.msra.mxu0 0.0
    %7735 = vmatprep.subr.mxu0 0.0
    %7736 = vmatpush2.msra.mxu0 0.0
    %7737 = vmatprep.subr.mxu0 0.0
    %7738 = vmatpush2.msra.mxu0 0.0
    %7739 = vmatprep.subr.mxu0 0.0
    %7740 = vmatpush2.msra.mxu0 0.0
    %7741 = vmatprep.subr.mxu0 0.0
    %7742 = vmatpush2.msra.mxu0 0.0
    %7743 = vmatprep.subr.mxu0 0.0
    %7744 = vmatpush2.msra.mxu0 0.0
    %7745 = vmatprep.subr.mxu0 0.0
    %7746 = vmatpush2.msra.mxu0 0.0
    %7747 = vmatprep.subr.mxu0 0.0
    %7748 = vmatpush2.msra.mxu0 0.0
    %7749 = vmatprep.subr.mxu0 0.0
    %7750 = vmatpush2.msra.mxu0 0.0
    %7751 = vmatprep.subr.mxu0 0.0
    %7752 = vmatpush2.msra.mxu0 0.0
    %7753 = vmatprep.subr.mxu0 0.0
    %7754 = vmatpush2.msra.mxu0 0.0
    %7755 = vmatprep.subr.mxu0 0.0
    %7756 = vmatpush2.msra.mxu0 0.0
    %7757 = vmatprep.subr.mxu0 0.0
    %7758 = vmatpush2.msra.mxu0 0.0
    %7759 = vmatprep.subr.mxu0 0.0
    %7760 = vmatpush2.msra.mxu0 0.0
    %7761 = vmatprep.subr.mxu0 0.0
    %7762 = vmatpush2.msra.mxu0 0.0
    %7763 = vmatprep.mubr.f32.mxu0 0.0
    %7764 = vmatmul.mubr.f32.gmra.mxu0 %v7657
    %v7765 = vpop.f32.mrf.mxu0
    %v7766 = vadd.f32 0.0, %v7765
    %v7767 = vpop.f32.mrf.mxu0
    %7768 = vmatprep.mubr.f32.mxu0 0.0
    %7769 = vmatmul.mubr.f32.gmra.mxu0 %v7658
    %v7770 = vpop.f32.mrf.mxu0
    %v7771 = vadd.f32 0.0, %v7770
    %v7772 = vpop.f32.mrf.mxu0
    %7773 = vmatprep.mubr.f32.mxu0 0.0
    %7774 = vmatmul.mubr.f32.gmra.mxu0 %v7659
    %v7775 = vpop.f32.mrf.mxu0
    %v7776 = vadd.f32 0.0, %v7775
    %v7777 = vpop.f32.mrf.mxu0
    %7778 = vmatprep.mubr.f32.mxu0 0.0
    %7779 = vmatmul.mubr.f32.gmra.mxu0 %v7660
    %v7780 = vpop.f32.mrf.mxu0
    %v7781 = vadd.f32 0.0, %v7780
    %v7782 = vpop.f32.mrf.mxu0
    %7783 = vmatprep.mubr.f32.mxu0 0.0
    %7784 = vmatmul.mubr.f32.gmra.mxu0 %v7661
    %v7785 = vpop.f32.mrf.mxu0
    %v7786 = vadd.f32 0.0, %v7785
    %v7787 = vpop.f32.mrf.mxu0
    %7788 = vmatprep.mubr.f32.mxu0 0.0
    %7789 = vmatmul.mubr.f32.gmra.mxu0 %v7662
    %v7790 = vpop.f32.mrf.mxu0
    %v7791 = vadd.f32 0.0, %v7790
    %v7792 = vpop.f32.mrf.mxu0
    %7793 = vmatprep.mubr.f32.mxu0 0.0
    %7794 = vmatmul.mubr.f32.gmra.mxu0 %v7663
    %v7795 = vpop.f32.mrf.mxu0
    %v7796 = vadd.f32 0.0, %v7795
    %v7797 = vpop.f32.mrf.mxu0
    %7798 = vmatprep.mubr.f32.mxu0 0.0
    %7799 = vmatmul.mubr.f32.gmra.mxu0 %v7664
    %v7800 = vpop.f32.mrf.mxu0
    %v7801 = vadd.f32 0.0, %v7800
    %v7802 = vpop.f32.mrf.mxu0
    %7803 = vmatprep.mubr.f32.mxu0 0.0
    %7804 = vmatmul.mubr.f32.gmra.mxu0 %v7665
    %v7805 = vpop.f32.mrf.mxu0
    %v7806 = vadd.f32 0.0, %v7805
    %v7807 = vpop.f32.mrf.mxu0
    %7808 = vmatprep.mubr.f32.mxu0 0.0
    %7809 = vmatmul.mubr.f32.gmra.mxu0 %v7666
    %v7810 = vpop.f32.mrf.mxu0
    %v7811 = vadd.f32 0.0, %v7810
    %v7812 = vpop.f32.mrf.mxu0
    %7813 = vmatprep.mubr.f32.mxu0 0.0
    %7814 = vmatmul.mubr.f32.gmra.mxu0 %v7667
    %v7815 = vpop.f32.mrf.mxu0
    %v7816 = vadd.f32 0.0, %v7815
    %v7817 = vpop.f32.mrf.mxu0
    %7818 = vmatprep.mubr.f32.mxu0 0.0
    %7819 = vmatmul.mubr.f32.gmra.mxu0 %v7668
    %v7820 = vpop.f32.mrf.mxu0
    %v7821 = vadd.f32 0.0, %v7820
    %v7822 = vpop.f32.mrf.mxu0
    %7823 = vmatprep.mubr.f32.mxu0 0.0
    %7824 = vmatmul.mubr.f32.gmra.mxu0 %v7669
    %v7825 = vpop.f32.mrf.mxu0
    %v7826 = vadd.f32 0.0, %v7825
    %v7827 = vpop.f32.mrf.mxu0
    %7828 = vmatprep.mubr.f32.mxu0 0.0
    %7829 = vmatmul.mubr.f32.gmra.mxu0 %v7670
    %v7830 = vpop.f32.mrf.mxu0
    %v7831 = vadd.f32 0.0, %v7830
    %v7832 = vpop.f32.mrf.mxu0
    %7833 = vmatprep.mubr.f32.mxu0 0.0
    %7834 = vmatmul.mubr.f32.gmra.mxu0 %v7671
    %v7835 = vpop.f32.mrf.mxu0
    %v7836 = vadd.f32 0.0, %v7835
    %v7837 = vpop.f32.mrf.mxu0
    %7838 = vmatprep.mubr.f32.mxu0 0.0
    %7839 = vmatmul.mubr.f32.gmra.mxu0 %v7672
    %v7840 = vpop.f32.mrf.mxu0
    %v7841 = vadd.f32 0.0, %v7840
    %v7842 = vpop.f32.mrf.mxu0
    %7843 = vmatprep.mubr.f32.mxu0 0.0
    %7844 = vmatmul.mubr.f32.gmra.mxu0 %v7673
    %v7845 = vpop.f32.mrf.mxu0
    %v7846 = vadd.f32 0.0, %v7845
    %v7847 = vpop.f32.mrf.mxu0
    %7848 = vmatprep.mubr.f32.mxu0 0.0
    %7849 = vmatmul.mubr.f32.gmra.mxu0 %v7674
    %v7850 = vpop.f32.mrf.mxu0
    %v7851 = vadd.f32 0.0, %v7850
    %v7852 = vpop.f32.mrf.mxu0
    %7853 = vmatprep.mubr.f32.mxu0 0.0
    %7854 = vmatmul.mubr.f32.gmra.mxu0 %v7675
    %v7855 = vpop.f32.mrf.mxu0
    %v7856 = vadd.f32 0.0, %v7855
    %v7857 = vpop.f32.mrf.mxu0
    %7858 = vmatprep.mubr.f32.mxu0 0.0
    %7859 = vmatmul.mubr.f32.gmra.mxu0 %v7676
    %v7860 = vpop.f32.mrf.mxu0
    %v7861 = vadd.f32 0.0, %v7860
    %v7862 = vpop.f32.mrf.mxu0
    %7863 = vmatprep.mubr.f32.mxu0 0.0
    %7864 = vmatmul.mubr.f32.gmra.mxu0 %v7677
    %v7865 = vpop.f32.mrf.mxu0
    %v7866 = vadd.f32 0.0, %v7865
    %v7867 = vpop.f32.mrf.mxu0
    %7868 = vmatprep.mubr.f32.mxu0 0.0
    %7869 = vmatmul.mubr.f32.gmra.mxu0 %v7678
    %v7870 = vpop.f32.mrf.mxu0
    %v7871 = vadd.f32 0.0, %v7870
    %v7872 = vpop.f32.mrf.mxu0
    %7873 = vmatprep.mubr.f32.mxu0 0.0
    %7874 = vmatmul.mubr.f32.gmra.mxu0 %v7679
    %v7875 = vpop.f32.mrf.mxu0
    %v7876 = vadd.f32 0.0, %v7875
    %v7877 = vpop.f32.mrf.mxu0
    %7878 = vmatprep.mubr.f32.mxu0 0.0
    %7879 = vmatmul.mubr.f32.gmra.mxu0 %v7680
    %v7880 = vpop.f32.mrf.mxu0
    %v7881 = vadd.f32 0.0, %v7880
    %v7882 = vpop.f32.mrf.mxu0
    %7883 = vmatprep.mubr.f32.mxu0 0.0
    %7884 = vmatmul.mubr.f32.gmra.mxu0 %v7681
    %v7885 = vpop.f32.mrf.mxu0
    %v7886 = vadd.f32 0.0, %v7885
    %v7887 = vpop.f32.mrf.mxu0
    %7888 = vdwg.mxu0
    %v7889 = vadd.f32 %v7632, %v7766
    %v7890 = vadd.f32 %v7633, %v7771
    %v7891 = vadd.f32 %v7634, %v7776
    %v7892 = vadd.f32 %v7635, %v7781
    %v7893 = vadd.f32 %v7636, %v7786
    %v7894 = vadd.f32 %v7637, %v7791
    %v7895 = vadd.f32 %v7638, %v7796
    %v7896 = vadd.f32 %v7639, %v7801
    %v7897 = vadd.f32 %v7640, %v7806
    %v7898 = vadd.f32 %v7641, %v7811
    %v7899 = vadd.f32 %v7642, %v7816
    %v7900 = vadd.f32 %v7643, %v7821
    %v7901 = vadd.f32 %v7644, %v7826
    %v7902 = vadd.f32 %v7645, %v7831
    %v7903 = vadd.f32 %v7646, %v7836
    %v7904 = vadd.f32 %v7647, %v7841
    %v7905 = vadd.f32 %v7648, %v7846
    %v7906 = vadd.f32 %v7649, %v7851
    %v7907 = vadd.f32 %v7650, %v7856
    %v7908 = vadd.f32 %v7651, %v7861
    %v7909 = vadd.f32 %v7652, %v7866
    %v7910 = vadd.f32 %v7653, %v7871
    %v7911 = vadd.f32 %v7654, %v7876
    %v7912 = vadd.f32 %v7655, %v7881
    %v7913 = vadd.f32 %v7656, %v7886
    %v7914 = vld [vmem:[%s8] sm:$0x1]
    %v7916 = vlaneseq
    %v7917 = vshrl.u32 %v7916, 7
    %v7918 = vsub.s32 0, %v7917
    %v7919 = vrot.slane %v7914, %v7918
    %v7921 = vadd.f32 %v7889, %v7919
    %v7922 = vadd.f32 %v7890, %v7919
    %v7923 = vadd.f32 %v7891, %v7919
    %v7924 = vadd.f32 %v7892, %v7919
    %v7925 = vadd.f32 %v7893, %v7919
    %v7926 = vadd.f32 %v7894, %v7919
    %v7927 = vadd.f32 %v7895, %v7919
    %v7928 = vadd.f32 %v7896, %v7919
    %v7929 = vadd.f32 %v7897, %v7919
    %v7930 = vadd.f32 %v7898, %v7919
    %v7931 = vadd.f32 %v7899, %v7919
    %v7932 = vadd.f32 %v7900, %v7919
    %v7933 = vadd.f32 %v7901, %v7919
    %v7934 = vadd.f32 %v7902, %v7919
    %v7935 = vadd.f32 %v7903, %v7919
    %v7936 = vadd.f32 %v7904, %v7919
    %v7937 = vadd.f32 %v7905, %v7919
    %v7938 = vadd.f32 %v7906, %v7919
    %v7939 = vadd.f32 %v7907, %v7919
    %v7940 = vadd.f32 %v7908, %v7919
    %v7941 = vadd.f32 %v7909, %v7919
    %v7942 = vadd.f32 %v7910, %v7919
    %v7943 = vadd.f32 %v7911, %v7919
    %v7944 = vadd.f32 %v7912, %v7919
    %v7945 = vadd.f32 %v7913, %v7919
    %v7946 = vsub.f32 0.0, %v7921
    %v7947 = vsub.f32 0.0, %v7922
    %v7948 = vsub.f32 0.0, %v7923
    %v7949 = vsub.f32 0.0, %v7924
    %v7950 = vsub.f32 0.0, %v7925
    %v7951 = vsub.f32 0.0, %v7926
    %v7952 = vsub.f32 0.0, %v7927
    %v7953 = vsub.f32 0.0, %v7928
    %v7954 = vsub.f32 0.0, %v7929
    %v7955 = vsub.f32 0.0, %v7930
    %v7956 = vsub.f32 0.0, %v7931
    %v7957 = vsub.f32 0.0, %v7932
    %v7958 = vsub.f32 0.0, %v7933
    %v7959 = vsub.f32 0.0, %v7934
    %v7960 = vsub.f32 0.0, %v7935
    %v7961 = vsub.f32 0.0, %v7936
    %v7962 = vsub.f32 0.0, %v7937
    %v7963 = vsub.f32 0.0, %v7938
    %v7964 = vsub.f32 0.0, %v7939
    %v7965 = vsub.f32 0.0, %v7940
    %v7966 = vsub.f32 0.0, %v7941
    %v7967 = vsub.f32 0.0, %v7942
    %v7968 = vsub.f32 0.0, %v7943
    %v7969 = vsub.f32 0.0, %v7944
    %v7970 = vsub.f32 0.0, %v7945
    %v7971 = vmul.f32 %v7946, 1.442695
    %v7972 = vpow.pop %v7971
    %v7973 = vmul.f32 %v7947, 1.442695
    %v7974 = vpow.pop %v7973
    %v7975 = vmul.f32 %v7948, 1.442695
    %v7976 = vpow.pop %v7975
    %v7977 = vmul.f32 %v7949, 1.442695
    %v7978 = vpow.pop %v7977
    %v7979 = vmul.f32 %v7950, 1.442695
    %v7980 = vpow.pop %v7979
    %v7981 = vmul.f32 %v7951, 1.442695
    %v7982 = vpow.pop %v7981
    %v7983 = vmul.f32 %v7952, 1.442695
    %v7984 = vpow.pop %v7983
    %v7985 = vmul.f32 %v7953, 1.442695
    %v7986 = vpow.pop %v7985
    %v7987 = vmul.f32 %v7954, 1.442695
    %v7988 = vpow.pop %v7987
    %v7989 = vmul.f32 %v7955, 1.442695
    %v7990 = vpow.pop %v7989
    %v7991 = vmul.f32 %v7956, 1.442695
    %v7992 = vpow.pop %v7991
    %v7993 = vmul.f32 %v7957, 1.442695
    %v7994 = vpow.pop %v7993
    %v7995 = vmul.f32 %v7958, 1.442695
    %v7996 = vpow.pop %v7995
    %v7997 = vmul.f32 %v7959, 1.442695
    %v7998 = vpow.pop %v7997
    %v7999 = vmul.f32 %v7960, 1.442695
    %v8000 = vpow.pop %v7999
    %v8001 = vmul.f32 %v7961, 1.442695
    %v8002 = vpow.pop %v8001
    %v8003 = vmul.f32 %v7962, 1.442695
    %v8004 = vpow.pop %v8003
    %v8005 = vmul.f32 %v7963, 1.442695
    %v8006 = vpow.pop %v8005
    %v8007 = vmul.f32 %v7964, 1.442695
    %v8008 = vpow.pop %v8007
    %v8009 = vmul.f32 %v7965, 1.442695
    %v8010 = vpow.pop %v8009
    %v8011 = vmul.f32 %v7966, 1.442695
    %v8012 = vpow.pop %v8011
    %v8013 = vmul.f32 %v7967, 1.442695
    %v8014 = vpow.pop %v8013
    %v8015 = vmul.f32 %v7968, 1.442695
    %v8016 = vpow.pop %v8015
    %v8017 = vmul.f32 %v7969, 1.442695
    %v8018 = vpow.pop %v8017
    %v8019 = vmul.f32 %v7970, 1.442695
    %v8020 = vpow.pop %v8019
    %v8021 = vadd.f32 %v7972, 1.0
    %v8022 = vadd.f32 %v7974, 1.0
    %v8023 = vadd.f32 %v7976, 1.0
    %v8024 = vadd.f32 %v7978, 1.0
    %v8025 = vadd.f32 %v7980, 1.0
    %v8026 = vadd.f32 %v7982, 1.0
    %v8027 = vadd.f32 %v7984, 1.0
    %v8028 = vadd.f32 %v7986, 1.0
    %v8029 = vadd.f32 %v7988, 1.0
    %v8030 = vadd.f32 %v7990, 1.0
    %v8031 = vadd.f32 %v7992, 1.0
    %v8032 = vadd.f32 %v7994, 1.0
    %v8033 = vadd.f32 %v7996, 1.0
    %v8034 = vadd.f32 %v7998, 1.0
    %v8035 = vadd.f32 %v8000, 1.0
    %v8036 = vadd.f32 %v8002, 1.0
    %v8037 = vadd.f32 %v8004, 1.0
    %v8038 = vadd.f32 %v8006, 1.0
    %v8039 = vadd.f32 %v8008, 1.0
    %v8040 = vadd.f32 %v8010, 1.0
    %v8041 = vadd.f32 %v8012, 1.0
    %v8042 = vadd.f32 %v8014, 1.0
    %v8043 = vadd.f32 %v8016, 1.0
    %v8044 = vadd.f32 %v8018, 1.0
    %v8045 = vadd.f32 %v8020, 1.0
    %v8046 = vrcp.pop %v8021
    %v8047 = vrcp.pop %v8022
    %v8048 = vrcp.pop %v8023
    %v8049 = vrcp.pop %v8024
    %v8050 = vrcp.pop %v8025
    %v8051 = vrcp.pop %v8026
    %v8052 = vrcp.pop %v8027
    %v8053 = vrcp.pop %v8028
    %v8054 = vrcp.pop %v8029
    %v8055 = vrcp.pop %v8030
    %v8056 = vrcp.pop %v8031
    %v8057 = vrcp.pop %v8032
    %v8058 = vrcp.pop %v8033
    %v8059 = vrcp.pop %v8034
    %v8060 = vrcp.pop %v8035
    %v8061 = vrcp.pop %v8036
    %v8062 = vrcp.pop %v8037
    %v8063 = vrcp.pop %v8038
    %v8064 = vrcp.pop %v8039
    %v8065 = vrcp.pop %v8040
    %v8066 = vrcp.pop %v8041
    %v8067 = vrcp.pop %v8042
    %v8068 = vrcp.pop %v8043
    %v8069 = vrcp.pop %v8044
    %v8070 = vrcp.pop %v8045
    %v8071 = vmul.f32 %v7921, %v8046
    %v8072 = vmul.f32 %v7922, %v8047
    %v8073 = vmul.f32 %v7923, %v8048
    %v8074 = vmul.f32 %v7924, %v8049
    %v8075 = vmul.f32 %v7925, %v8050
    %v8076 = vmul.f32 %v7926, %v8051
    %v8077 = vmul.f32 %v7927, %v8052
    %v8078 = vmul.f32 %v7928, %v8053
    %v8079 = vmul.f32 %v7929, %v8054
    %v8080 = vmul.f32 %v7930, %v8055
    %v8081 = vmul.f32 %v7931, %v8056
    %v8082 = vmul.f32 %v7932, %v8057
    %v8083 = vmul.f32 %v7933, %v8058
    %v8084 = vmul.f32 %v7934, %v8059
    %v8085 = vmul.f32 %v7935, %v8060
    %v8086 = vmul.f32 %v7936, %v8061
    %v8087 = vmul.f32 %v7937, %v8062
    %v8088 = vmul.f32 %v7938, %v8063
    %v8089 = vmul.f32 %v7939, %v8064
    %v8090 = vmul.f32 %v7940, %v8065
    %v8091 = vmul.f32 %v7941, %v8066
    %v8092 = vmul.f32 %v7942, %v8067
    %v8093 = vmul.f32 %v7943, %v8068
    %v8094 = vmul.f32 %v7944, %v8069
    %v8095 = vmul.f32 %v7945, %v8070
    %v8096 = vsel %vm589, %v8071, 0.0
    %v8097 = vsel %vm590, %v8072, 0.0
    %v8098 = vsel %vm591, %v8073, 0.0
    %v8099 = vsel %vm592, %v8074, 0.0
    %v8100 = vsel %vm593, %v8075, 0.0
    %v8101 = vsel %vm594, %v8076, 0.0
    %v8102 = vsel %vm595, %v8077, 0.0
    %v8103 = vsel %vm596, %v8078, 0.0
    %v8104 = vsel %vm597, %v8079, 0.0
    %v8105 = vsel %vm598, %v8080, 0.0
    %v8106 = vsel %vm599, %v8081, 0.0
    %v8107 = vsel %vm600, %v8082, 0.0
    %v8108 = vsel %vm601, %v8083, 0.0
    %v8109 = vsel %vm602, %v8084, 0.0
    %v8110 = vsel %vm603, %v8085, 0.0
    %v8111 = vsel %vm604, %v8086, 0.0
    %v8112 = vsel %vm605, %v8087, 0.0
    %v8113 = vsel %vm606, %v8088, 0.0
    %v8114 = vsel %vm607, %v8089, 0.0
    %v8115 = vsel %vm608, %v8090, 0.0
    %v8116 = vsel %vm609, %v8091, 0.0
    %v8117 = vsel %vm610, %v8092, 0.0
    %v8118 = vsel %vm611, %v8093, 0.0
    %v8119 = vsel %vm612, %v8094, 0.0
    %v8120 = vsel %vm613, %v8095, 0.0
    %v8121 = vld [vmem:[%s14] sm:$0xf]
    %v8124 = vunpack.c.l.s4 1983009808
    %v8125 = vunpack.c.0.s8 %v8124
    %v8126 = vlaneseq
    %v8127 = vshrl.u32 %v8126, 7
    %v8128 = vsub.s32 %v8125, %v8127
    %v8129 = vrot.slane %v8121, %v8128
    %v8130 = vcombine.high %v8129, %v8129
    %vm8132 = vcmask 588800
    %v8133 = vsel %vm8132, %v8130, 0
    %8135 = vmatprep.subr.mxu0 0.0
    %8136 = vmatpush1.msra.mxu0 %v8111
    %8137 = vmatprep.subr.mxu0 0.0
    %8138 = vmatpush1.msra.mxu0 %v8110
    %8139 = vmatprep.subr.mxu0 0.0
    %8140 = vmatpush1.msra.mxu0 %v8109
    %8141 = vmatprep.subr.mxu0 0.0
    %8142 = vmatpush1.msra.mxu0 %v8108
    %8143 = vmatprep.subr.mxu0 0.0
    %8144 = vmatpush1.msra.mxu0 %v8107
    %8145 = vmatprep.subr.mxu0 0.0
    %8146 = vmatpush1.msra.mxu0 %v8106
    %8147 = vmatprep.subr.mxu0 0.0
    %8148 = vmatpush1.msra.mxu0 %v8105
    %8149 = vmatprep.subr.mxu0 0.0
    %8150 = vmatpush1.msra.mxu0 %v8104
    %8151 = vmatprep.subr.mxu0 0.0
    %8152 = vmatpush1.msra.mxu0 %v8103
    %8153 = vmatprep.subr.mxu0 0.0
    %8154 = vmatpush1.msra.mxu0 %v8102
    %8155 = vmatprep.subr.mxu0 0.0
    %8156 = vmatpush1.msra.mxu0 %v8101
    %8157 = vmatprep.subr.mxu0 0.0
    %8158 = vmatpush1.msra.mxu0 %v8100
    %8159 = vmatprep.subr.mxu0 0.0
    %8160 = vmatpush1.msra.mxu0 %v8099
    %8161 = vmatprep.subr.mxu0 0.0
    %8162 = vmatpush1.msra.mxu0 %v8098
    %8163 = vmatprep.subr.mxu0 0.0
    %8164 = vmatpush1.msra.mxu0 %v8097
    %8165 = vmatprep.subr.mxu0 0.0
    %8166 = vmatpush1.msra.mxu0 %v8096
    %8167 = vmatprep.subr.mxu0 0.0
    %8168 = vmatpush2.msra.mxu0 0.0
    %8169 = vmatprep.subr.mxu0 0.0
    %8170 = vmatpush2.msra.mxu0 0.0
    %8171 = vmatprep.subr.mxu0 0.0
    %8172 = vmatpush2.msra.mxu0 0.0
    %8173 = vmatprep.subr.mxu0 0.0
    %8174 = vmatpush2.msra.mxu0 0.0
    %8175 = vmatprep.subr.mxu0 0.0
    %8176 = vmatpush2.msra.mxu0 0.0
    %8177 = vmatprep.subr.mxu0 0.0
    %8178 = vmatpush2.msra.mxu0 0.0
    %8179 = vmatprep.subr.mxu0 0.0
    %8180 = vmatpush2.msra.mxu0 0.0
    %8181 = vmatprep.subr.mxu0 0.0
    %8182 = vmatpush2.msra.mxu0 %v8120
    %8183 = vmatprep.subr.mxu0 0.0
    %8184 = vmatpush2.msra.mxu0 %v8119
    %8185 = vmatprep.subr.mxu0 0.0
    %8186 = vmatpush2.msra.mxu0 %v8118
    %8187 = vmatprep.subr.mxu0 0.0
    %8188 = vmatpush2.msra.mxu0 %v8117
    %8189 = vmatprep.subr.mxu0 0.0
    %8190 = vmatpush2.msra.mxu0 %v8116
    %8191 = vmatprep.subr.mxu0 0.0
    %8192 = vmatpush2.msra.mxu0 %v8115
    %8193 = vmatprep.subr.mxu0 0.0
    %8194 = vmatpush2.msra.mxu0 %v8114
    %8195 = vmatprep.subr.mxu0 0.0
    %8196 = vmatpush2.msra.mxu0 %v8113
    %8197 = vmatprep.subr.mxu0 0.0
    %8198 = vmatpush2.msra.mxu0 %v8112
    %8199 = vmatprep.mubr.f32.mxu0 %v8133
    %8200 = vmatmul.mubr.f32.gmra.mxu0 %v8129
    %v8201 = vpop.f32.mrf.mxu0
    %v8202 = vadd.f32 0.0, %v8201
    %v8203 = vpop.f32.mrf.mxu0
    %8204 = vdwg.mxu0
    %v8205 = vld [vmem:[%s9] sm:$0xff]
    %v8206 = vld [vmem:[%s9 + $0x8] sm:$0xff]
    %v8207 = vld [vmem:[%s9 + $0x10] sm:$0xff]
    %v8208 = vld [vmem:[%s9 + $0x18] sm:$0xff]
    %v8209 = vld [vmem:[%s9 + $0x20] sm:$0xff]
    %v8210 = vld [vmem:[%s9 + $0x28] sm:$0xff]
    %v8211 = vld [vmem:[%s9 + $0x30] sm:$0xff]
    %v8212 = vld [vmem:[%s9 + $0x38] sm:$0xff]
    %v8213 = vld [vmem:[%s9 + $0x40] sm:$0xff]
    %v8214 = vld [vmem:[%s9 + $0x48] sm:$0xff]
    %v8215 = vld [vmem:[%s9 + $0x50] sm:$0xff]
    %v8216 = vld [vmem:[%s9 + $0x58] sm:$0xff]
    %v8217 = vld [vmem:[%s9 + $0x60] sm:$0xff]
    %v8218 = vld [vmem:[%s9 + $0x68] sm:$0xff]
    %v8219 = vld [vmem:[%s9 + $0x70] sm:$0xff]
    %v8220 = vld [vmem:[%s9 + $0x78] sm:$0xff]
    %v8221 = vld [vmem:[%s10] sm:$0x1]
    %v8223 = vlaneseq
    %v8224 = vshrl.u32 %v8223, 7
    %v8225 = vsub.s32 0, %v8224
    %v8226 = vrot.slane %v8221, %v8225
    %8228 = vmatprep.subr.mxu0 0.0
    %8229 = vmatpush1.msra.mxu0 %v8220
    %8230 = vmatprep.subr.mxu0 0.0
    %8231 = vmatpush1.msra.mxu0 %v8219
    %8232 = vmatprep.subr.mxu0 0.0
    %8233 = vmatpush1.msra.mxu0 %v8218
    %8234 = vmatprep.subr.mxu0 0.0
    %8235 = vmatpush1.msra.mxu0 %v8217
    %8236 = vmatprep.subr.mxu0 0.0
    %8237 = vmatpush1.msra.mxu0 %v8216
    %8238 = vmatprep.subr.mxu0 0.0
    %8239 = vmatpush1.msra.mxu0 %v8215
    %8240 = vmatprep.subr.mxu0 0.0
    %8241 = vmatpush1.msra.mxu0 %v8214
    %8242 = vmatprep.subr.mxu0 0.0
    %8243 = vmatpush1.msra.mxu0 %v8213
    %8244 = vmatprep.subr.mxu0 0.0
    %8245 = vmatpush1.msra.mxu0 %v8212
    %8246 = vmatprep.subr.mxu0 0.0
    %8247 = vmatpush1.msra.mxu0 %v8211
    %8248 = vmatprep.subr.mxu0 0.0
    %8249 = vmatpush1.msra.mxu0 %v8210
    %8250 = vmatprep.subr.mxu0 0.0
    %8251 = vmatpush1.msra.mxu0 %v8209
    %8252 = vmatprep.subr.mxu0 0.0
    %8253 = vmatpush1.msra.mxu0 %v8208
    %8254 = vmatprep.subr.mxu0 0.0
    %8255 = vmatpush1.msra.mxu0 %v8207
    %8256 = vmatprep.subr.mxu0 0.0
    %8257 = vmatpush1.msra.mxu0 %v8206
    %8258 = vmatprep.subr.mxu0 0.0
    %8259 = vmatpush1.msra.mxu0 %v8205
    %8260 = vmatprep.subr.mxu0 0.0
    %8261 = vmatpush2.msra.mxu0 0.0
    %8262 = vmatprep.subr.mxu0 0.0
    %8263 = vmatpush2.msra.mxu0 0.0
    %8264 = vmatprep.subr.mxu0 0.0
    %8265 = vmatpush2.msra.mxu0 0.0
    %8266 = vmatprep.subr.mxu0 0.0
    %8267 = vmatpush2.msra.mxu0 0.0
    %8268 = vmatprep.subr.mxu0 0.0
    %8269 = vmatpush2.msra.mxu0 0.0
    %8270 = vmatprep.subr.mxu0 0.0
    %8271 = vmatpush2.msra.mxu0 0.0
    %8272 = vmatprep.subr.mxu0 0.0
    %8273 = vmatpush2.msra.mxu0 0.0
    %8274 = vmatprep.subr.mxu0 0.0
    %8275 = vmatpush2.msra.mxu0 0.0
    %8276 = vmatprep.subr.mxu0 0.0
    %8277 = vmatpush2.msra.mxu0 0.0
    %8278 = vmatprep.subr.mxu0 0.0
    %8279 = vmatpush2.msra.mxu0 0.0
    %8280 = vmatprep.subr.mxu0 0.0
    %8281 = vmatpush2.msra.mxu0 0.0
    %8282 = vmatprep.subr.mxu0 0.0
    %8283 = vmatpush2.msra.mxu0 0.0
    %8284 = vmatprep.subr.mxu0 0.0
    %8285 = vmatpush2.msra.mxu0 0.0
    %8286 = vmatprep.subr.mxu0 0.0
    %8287 = vmatpush2.msra.mxu0 0.0
    %8288 = vmatprep.subr.mxu0 0.0
    %8289 = vmatpush2.msra.mxu0 0.0
    %8290 = vmatprep.subr.mxu0 0.0
    %8291 = vmatpush2.msra.mxu0 0.0
    %8292 = vmatprep.mubr.f32.mxu0 0.0
    %8293 = vmatmul.mubr.f32.gmra.mxu0 %v8202
    %v8294 = vpop.f32.mrf.mxu0
    %v8295 = vadd.f32 %v8226, %v8294
    %v8296 = vpop.f32.mrf.mxu0
    %8297 = vdwg.mxu0
    %v8298 = vsub.f32 0.0, %v8295
    %v8299 = vmul.f32 %v8298, 1.442695
    %v8300 = vpow.pop %v8299
    %v8301 = vadd.f32 %v8300, 1.0
    %v8302 = vrcp.pop %v8301
    %v8303 = vmul.f32 %v8295, %v8302
    %v8304 = vld [vmem:[%s11] sm:$0xff]
    %v8305 = vld [vmem:[%s11 + $0x8] sm:$0xff]
    %v8306 = vld [vmem:[%s11 + $0x10] sm:$0xff]
    %v8307 = vld [vmem:[%s11 + $0x18] sm:$0xff]
    %v8308 = vld [vmem:[%s11 + $0x20] sm:$0xff]
    %v8309 = vld [vmem:[%s11 + $0x28] sm:$0xff]
    %v8310 = vld [vmem:[%s11 + $0x30] sm:$0xff]
    %v8311 = vld [vmem:[%s11 + $0x38] sm:$0xff]
    %v8312 = vld [vmem:[%s11 + $0x40] sm:$0xff]
    %v8313 = vld [vmem:[%s11 + $0x48] sm:$0xff]
    %v8314 = vld [vmem:[%s11 + $0x50] sm:$0xff]
    %v8315 = vld [vmem:[%s11 + $0x58] sm:$0xff]
    %v8316 = vld [vmem:[%s11 + $0x60] sm:$0xff]
    %v8317 = vld [vmem:[%s11 + $0x68] sm:$0xff]
    %v8318 = vld [vmem:[%s11 + $0x70] sm:$0xff]
    %v8319 = vld [vmem:[%s11 + $0x78] sm:$0xff]
    %v8320 = vld [vmem:[%s12] sm:$0x1]
    %v8322 = vlaneseq
    %v8323 = vshrl.u32 %v8322, 7
    %v8324 = vsub.s32 0, %v8323
    %v8325 = vrot.slane %v8320, %v8324
    %8327 = vmatprep.subr.mxu0 0.0
    %8328 = vmatpush1.msra.mxu0 %v8319
    %8329 = vmatprep.subr.mxu0 0.0
    %8330 = vmatpush1.msra.mxu0 %v8318
    %8331 = vmatprep.subr.mxu0 0.0
    %8332 = vmatpush1.msra.mxu0 %v8317
    %8333 = vmatprep.subr.mxu0 0.0
    %8334 = vmatpush1.msra.mxu0 %v8316
    %8335 = vmatprep.subr.mxu0 0.0
    %8336 = vmatpush1.msra.mxu0 %v8315
    %8337 = vmatprep.subr.mxu0 0.0
    %8338 = vmatpush1.msra.mxu0 %v8314
    %8339 = vmatprep.subr.mxu0 0.0
    %8340 = vmatpush1.msra.mxu0 %v8313
    %8341 = vmatprep.subr.mxu0 0.0
    %8342 = vmatpush1.msra.mxu0 %v8312
    %8343 = vmatprep.subr.mxu0 0.0
    %8344 = vmatpush1.msra.mxu0 %v8311
    %8345 = vmatprep.subr.mxu0 0.0
    %8346 = vmatpush1.msra.mxu0 %v8310
    %8347 = vmatprep.subr.mxu0 0.0
    %8348 = vmatpush1.msra.mxu0 %v8309
    %8349 = vmatprep.subr.mxu0 0.0
    %8350 = vmatpush1.msra.mxu0 %v8308
    %8351 = vmatprep.subr.mxu0 0.0
    %8352 = vmatpush1.msra.mxu0 %v8307
    %8353 = vmatprep.subr.mxu0 0.0
    %8354 = vmatpush1.msra.mxu0 %v8306
    %8355 = vmatprep.subr.mxu0 0.0
    %8356 = vmatpush1.msra.mxu0 %v8305
    %8357 = vmatprep.subr.mxu0 0.0
    %8358 = vmatpush1.msra.mxu0 %v8304
    %8359 = vmatprep.subr.mxu0 0.0
    %8360 = vmatpush2.msra.mxu0 0.0
    %8361 = vmatprep.subr.mxu0 0.0
    %8362 = vmatpush2.msra.mxu0 0.0
    %8363 = vmatprep.subr.mxu0 0.0
    %8364 = vmatpush2.msra.mxu0 0.0
    %8365 = vmatprep.subr.mxu0 0.0
    %8366 = vmatpush2.msra.mxu0 0.0
    %8367 = vmatprep.subr.mxu0 0.0
    %8368 = vmatpush2.msra.mxu0 0.0
    %8369 = vmatprep.subr.mxu0 0.0
    %8370 = vmatpush2.msra.mxu0 0.0
    %8371 = vmatprep.subr.mxu0 0.0
    %8372 = vmatpush2.msra.mxu0 0.0
    %8373 = vmatprep.subr.mxu0 0.0
    %8374 = vmatpush2.msra.mxu0 0.0
    %8375 = vmatprep.subr.mxu0 0.0
    %8376 = vmatpush2.msra.mxu0 0.0
    %8377 = vmatprep.subr.mxu0 0.0
    %8378 = vmatpush2.msra.mxu0 0.0
    %8379 = vmatprep.subr.mxu0 0.0
    %8380 = vmatpush2.msra.mxu0 0.0
    %8381 = vmatprep.subr.mxu0 0.0
    %8382 = vmatpush2.msra.mxu0 0.0
    %8383 = vmatprep.subr.mxu0 0.0
    %8384 = vmatpush2.msra.mxu0 0.0
    %8385 = vmatprep.subr.mxu0 0.0
    %8386 = vmatpush2.msra.mxu0 0.0
    %8387 = vmatprep.subr.mxu0 0.0
    %8388 = vmatpush2.msra.mxu0 0.0
    %8389 = vmatprep.subr.mxu0 0.0
    %8390 = vmatpush2.msra.mxu0 0.0
    %8391 = vmatprep.mubr.f32.mxu0 0.0
    %8392 = vmatmul.mubr.f32.gmra.mxu0 %v8303
    %v8393 = vpop.f32.mrf.mxu0
    %v8394 = vadd.f32 %v8325, %v8393
    %v8395 = vpop.f32.mrf.mxu0
    %8396 = vdwg.mxu0
    %vm8397 = vcmask 74752
    %8398 = vst.msk [vmem:[#allocation4] sm:$0x3] %vm8397, %v8394
    // Predicated region
    $region62: #{basic_image_model_forward.1} parent=1 // pred_check
      _
    $region63: #{basic_image_model_forward.1} parent=1 // pred_check_branch
      %8400 = sbr.rel (0) target = $region65
    $region64: #{basic_image_model_forward.1} parent=1 // pred_region
      %s8402 = ssub.s32 32, 32
      %8403 = vsyncadd [#allocation5], %s8402
      %s8405 = sshll.u32 [#allocation4], 4
      %s8406 = int_to_ptr.vmem [resolvable:$true] %s8405
      %8408 = dma.vmem_to_hbm [thread:$0]  %s8406, 32, %s15, [#allocation5]
    $region65: #{basic_image_model_forward.1} parent=1 // pred_fallthru
      _
    // Predicated region
    $region66: #{basic_image_model_forward.1} parent=1 // pred_check
      _
    $region67: #{basic_image_model_forward.1} parent=1 // pred_check_branch
      %8410 = sbr.rel (0) target = $region69
    $region68: #{basic_image_model_forward.1} parent=1 // pred_region
      %8411 = dma.done [#allocation5], 32
    $region69: #{basic_image_model_forward.1} parent=1 // pred_fallthru
      _
    %8412 = vsyncpa [#allocation5], 1

</llo_original>
